<compile_context>
chip_gen: v7x
topology: tpu7x:2x2x1
jax: 0.10.0
libtpu: 0.0.40
codegen_flags: <defaults>
</compile_context>

<pallas_src>
import functools

import jax
import jax.numpy as jnp
from jax.experimental import pallas as pl
from jax.experimental.pallas import tpu as pltpu


# -----------------------------------------------------------------------------
# Module buffers (same math as RotaryEncoding._compute_buffers; plain JAX glue)
# -----------------------------------------------------------------------------
def _compute_buffers(dim, base, length):
    inv_freq = 1.0 / (base ** (jnp.arange(0, dim, 2, dtype=jnp.float32) / dim))
    t = jnp.arange(length, dtype=jnp.float32)
    freqs = jnp.outer(t, inv_freq)          # (L, D//2)
    freqs = jnp.tile(freqs, (1, 2))         # (L, D)   == torch .repeat(1, 2)
    freqs = freqs[:, None, :]               # (L, 1, D)
    return jnp.sin(freqs), jnp.cos(freqs)


# -----------------------------------------------------------------------------
# Hardware / layout helpers
# -----------------------------------------------------------------------------
def _tpu_topology():
    """(TensorCores a 'parallel' grid axis can shard over, physical VMEM bytes)."""
    cores, vmem = 1, 64 * 2**20            # conservative default
    try:
        kind = jax.devices()[0].device_kind.lower()
    except Exception:
        return cores, vmem
    if "v7" in kind:
        cores, vmem = 2, 64 * 2**20
    elif "v5p" in kind or ("v4" in kind and "lite" not in kind):
        cores, vmem = 2, 128 * 2**20       # megacore
    elif "v5" in kind or "v6" in kind:
        cores, vmem = 1, 128 * 2**20
    return cores, vmem


def _sublane_quantum(itemsize):
    # 32-bit packs 8 rows per vreg sublane tile, 16-bit 16, 8-bit 32.
    return {4: 8, 2: 16, 1: 32}.get(itemsize, 8)


def _pad_to(n, q):
    return -(-n // q) * q


def _per_row_bytes(B, D, itemsize):
    """VMEM bytes per sequence row, using the real (padded) tile layout."""
    bp = _pad_to(B, _sublane_quantum(itemsize))   # sublane dim of the x blocks
    dp = _pad_to(D, 128)                          # lane dim
    stream = 4 * 2 * bp * dp * itemsize           # q,k in + out, double buffered
    trig = 2 * 2 * dp * 4                         # f32 sin/cos blocks, double buffered
    scratch = 4 * bp * dp * 4                     # f32 compute temporaries (rough)
    return stream + trig + scratch


def _choose_block_s(S, B, D, itemsize, num_cores, budget=24 * 2**20):
    """Largest sequence tile fitting the VMEM budget; even core-multiple step
    count on 2-TC chips, a single big block on 1-TC chips."""
    per_row = _per_row_bytes(B, D, itemsize)
    cap = min(1024, max(8, budget // per_row))
    if num_cores <= 1:
        ts = min(S, cap)
    else:
        nsteps = max(num_cores, pl.cdiv(S, cap))
        nsteps = -(-nsteps // num_cores) * num_cores    # multiple of the core count
        ts = pl.cdiv(S, nsteps)
    # Trig block rows sit in the sublane slot; trig is f32, so align to 8.
    # (The x blocks' sublane dim is B, which always spans its full extent.)
    ts = _pad_to(ts, 8)
    return S if ts >= S else ts


@functools.lru_cache(maxsize=None)
def _rank3_roll_supported(B, D):
    """AOT probe: does Mosaic lower pltpu.roll on a rank-3 (rows, B, D) f32 block?"""
    if D % 2 != 0:
        return False
    shape = (8, B, D)

    def probe(x_ref, o_ref):
        o_ref[...] = pltpu.roll(x_ref[...], shift=D // 2, axis=2)

    try:
        fn = pl.pallas_call(probe, out_shape=jax.ShapeDtypeStruct(shape, jnp.float32))
        jax.jit(fn).lower(jax.ShapeDtypeStruct(shape, jnp.float32)).compile()
        return True
    except Exception:
        return False


# -----------------------------------------------------------------------------
# Kernel
# -----------------------------------------------------------------------------
def _make_rotary_kernel(use_roll):
    def kernel(sin_ref, cos_ref, q_ref, k_ref, qo_ref, ko_ref):
        # sin_ref/cos_ref: (ts, D) f32 (sin already sign-folded for rotate_half).
        # q_ref/k_ref and outputs: (ts, B, D) in the caller's dtype.
        half = q_ref.shape[-1] // 2

        # Hoist the batch-broadcast trig views once; q and k both reuse them
        # (JAX does not CSE broadcast_in_dim).
        cos = cos_ref[...][:, None, :]      # (ts, 1, D)
        sin = sin_ref[...][:, None, :]      # (ts, 1, D)

        def apply(x_ref, o_ref):
            x = x_ref[...].astype(jnp.float32)   # FMA in f32, like the fp32 buffers
            if use_roll:
                # Shift by D/2, so rotation direction is irrelevant (XLU slot).
                rolled = pltpu.roll(x, shift=half, axis=2)
            else:
                rolled = jnp.concatenate([x[..., half:], x[..., :half]], axis=-1)
            o_ref[...] = (x * cos + rolled * sin).astype(o_ref.dtype)

        apply(q_ref, qo_ref)
        apply(k_ref, ko_ref)

    return kernel


# -----------------------------------------------------------------------------
# Module wrapper (buffers + sign-folded trig prepared once at init)
# -----------------------------------------------------------------------------
class RotaryEncoding:
    """JAX/Pallas port of the PyTorch RotaryEncoding module (forward only)."""

    def __init__(self, dim, *, max_length=1024, base=10000):
        self.dim = dim
        self.max_length = max_length
        sin, cos = _compute_buffers(dim, base, max_length)    # (L, 1, D) f32 buffers
        self.sin = sin
        self.cos = cos
        half = dim // 2
        sin2 = sin.reshape(max_length, dim)
        # Fold rotate_half's sign into sin once:
        #   rotate_half(x) * sin == half_roll(x) * concat(-sin[:, :half], sin[:, half:])
        self._sin_signed = jnp.concatenate([-sin2[:, :half], sin2[:, half:]], axis=-1)
        self._cos_flat = cos.reshape(max_length, dim)
        self._cache = {}

    def __call__(self, queries, keys):
        S, B, D = queries.shape
        if keys.shape != queries.shape:
            raise ValueError("queries and keys must share the (S, B, D) shape")
        if D != self.dim or S > self.max_length:
            raise ValueError("sequence length / feature dim outside buffer range")
        key = (S, B, D, jnp.dtype(queries.dtype).name, jnp.dtype(keys.dtype).name)
        entry = self._cache.get(key)
        if entry is None:
            entry = self._build(S, B, D, jnp.dtype(queries.dtype), jnp.dtype(keys.dtype))
            self._cache[key] = entry
        fn, sin_t, cos_t = entry
        return fn(sin_t, cos_t, queries, keys)

    def _build(self, S, B, D, q_dtype, k_dtype):
        itemsize = max(q_dtype.itemsize, k_dtype.itemsize)
        num_cores, vmem_cap = _tpu_topology()
        ts = _choose_block_s(S, B, D, itemsize, num_cores)

        # Full (max_length, D) tables are passed straight through (prep hoisted to
        # __init__); only a non-8-aligned full-sequence block needs an S-slice so
        # the trig block rows equal the array rows (built once and cached).
        if ts % 8 == 0 or ts == self.max_length:
            sin_t, cos_t = self._sin_signed, self._cos_flat
        else:
            sin_t, cos_t = self._sin_signed[:S], self._cos_flat[:S]

        use_roll = _rank3_roll_supported(B, D)

        grid = (pl.cdiv(S, ts),)
        trig_spec = pl.BlockSpec((ts, D), lambda i: (i, 0))
        x_spec = pl.BlockSpec((ts, B, D), lambda i: (i, 0, 0))

        working = _pad_to(ts, 8) * _per_row_bytes(B, D, itemsize)
        vmem_limit = int(min(max(working + 4 * 2**20, 16 * 2**20), (vmem_cap * 3) // 4))

        cost = pl.CostEstimate(
            flops=6 * S * B * D,                       # 2 tensors x (2 mul + 1 add)
            transcendentals=0,
            bytes_accessed=2 * S * B * D * (q_dtype.itemsize + k_dtype.itemsize)
            + 2 * S * D * 4,
        )

        fn = pl.pallas_call(
            _make_rotary_kernel(use_roll),
            out_shape=(
                jax.ShapeDtypeStruct((S, B, D), q_dtype),
                jax.ShapeDtypeStruct((S, B, D), k_dtype),
            ),
            grid_spec=pltpu.PrefetchScalarGridSpec(
                num_scalar_prefetch=0,
                grid=grid,
                in_specs=[trig_spec, trig_spec, x_spec, x_spec],
                out_specs=[x_spec, x_spec],
            ),
            compiler_params=pltpu.CompilerParams(
                dimension_semantics=("parallel",),
                vmem_limit_bytes=vmem_limit,
            ),
            cost_estimate=cost,
        )
        # TODO(synk): expose input_output_aliases={2: 0, 3: 1} for callers that can
        # rotate q/k in place (halves the op's HBM footprint, semantics unchanged).
        return jax.jit(fn), sin_t, cos_t


# -----------------------------------------------------------------------------
# Reference + self-test
# -----------------------------------------------------------------------------
def _reference(queries, keys, sin, cos):
    """Pure-JAX mirror of the PyTorch forward (fp32 buffers)."""
    def rotate_half(x):
        h = x.shape[-1] // 2
        return jnp.concatenate([-x[..., h:], x[..., :h]], axis=-1)

    def apply(x):
        return x * cos[: x.shape[0]] + rotate_half(x) * sin[: x.shape[0]]

    return apply(queries), apply(keys)


if __name__ == "__main__":
    base = 10000
    # (dim, max_length, S, B, dtype, tol): a lane/sublane-dense case, a small and
    # awkward case (B < 8, D < 128, S not 8-aligned), and a bf16 case exercising
    # the f32-accumulate / bf16-store path.
    cases = [
        (128, 512, 256, 8, jnp.float32, 1e-5),
        (32, 64, 12, 2, jnp.float32, 1e-5),
        (128, 256, 64, 16, jnp.bfloat16, 2e-2),
    ]

    key = jax.random.PRNGKey(0)
    for dim, max_length, S, B, dtype, tol in cases:
        rope = RotaryEncoding(dim, max_length=max_length, base=base)
        key, kq, kk = jax.random.split(key, 3)
        queries = jax.random.normal(kq, (S, B, dim), dtype=jnp.float32).astype(dtype)
        keys = jax.random.normal(kk, (S, B, dim), dtype=jnp.float32).astype(dtype)

        q_out, k_out = rope(queries, keys)
        jax.block_until_ready((q_out, k_out))

        q_ref, k_ref = _reference(
            queries.astype(jnp.float32), keys.astype(jnp.float32), rope.sin, rope.cos
        )
        assert jnp.allclose(q_out.astype(jnp.float32), q_ref, atol=tol, rtol=tol), (dim, S, B)
        assert jnp.allclose(k_out.astype(jnp.float32), k_ref, atol=tol, rtol=tol), (dim, S, B)

    print("KERNEL_OK")
</pallas_src>

<mosaic_0001>
module attributes {stable_mosaic.version = 11 : i64} {
  func.func @kernel(%arg0: i32, %arg1: memref<256x128xf32, #tpu.memory_space<vmem>>, %arg2: memref<256x128xf32, #tpu.memory_space<vmem>>, %arg3: memref<256x8x128xf32, #tpu.memory_space<vmem>>, %arg4: memref<256x8x128xf32, #tpu.memory_space<vmem>>, %arg5: memref<256x8x128xf32, #tpu.memory_space<vmem>>, %arg6: memref<256x8x128xf32, #tpu.memory_space<vmem>>) attributes {dimension_semantics = [#tpu.dimension_semantics<parallel>], iteration_bounds = array<i64: 1>, scalar_prefetch = 0 : i64, scratch_operands = 0 : i64, tpu.core_type = #tpu.core_type<tc>, window_params = [{transform_indices = @transform_0, window_bounds = array<i64: 256, 128>}, {transform_indices = @transform_1, window_bounds = array<i64: 256, 128>}, {transform_indices = @transform_2, window_bounds = array<i64: 256, 8, 128>}, {transform_indices = @transform_3, window_bounds = array<i64: 256, 8, 128>}, {transform_indices = @transform_4, window_bounds = array<i64: 256, 8, 128>}, {transform_indices = @transform_5, window_bounds = array<i64: 256, 8, 128>}]} {
    %c0 = arith.constant 0 : index
    %c0_0 = arith.constant 0 : index
    %0 = vector.load %arg2[%c0, %c0_0] : memref<256x128xf32, #tpu.memory_space<vmem>>, vector<256x128xf32>
    %1 = vector.shape_cast %0 : vector<256x128xf32> to vector<256x1x128xf32>
    %c0_1 = arith.constant 0 : index
    %c0_2 = arith.constant 0 : index
    %2 = vector.load %arg1[%c0_1, %c0_2] : memref<256x128xf32, #tpu.memory_space<vmem>>, vector<256x128xf32>
    %3 = vector.shape_cast %2 : vector<256x128xf32> to vector<256x1x128xf32>
    %c0_3 = arith.constant 0 : index
    %c0_4 = arith.constant 0 : index
    %c0_5 = arith.constant 0 : index
    %4 = vector.load %arg3[%c0_3, %c0_4, %c0_5] : memref<256x8x128xf32, #tpu.memory_space<vmem>>, vector<256x8x128xf32>
    %5 = vector.extract_strided_slice %4 {offsets = [0, 0, 64], sizes = [256, 8, 64], strides = [1, 1, 1]} : vector<256x8x128xf32> to vector<256x8x64xf32>
    %6 = vector.extract_strided_slice %4 {offsets = [0, 0, 0], sizes = [256, 8, 64], strides = [1, 1, 1]} : vector<256x8x128xf32> to vector<256x8x64xf32>
    %7 = tpu.concatenate %5, %6 in 2 : vector<256x8x64xf32>, vector<256x8x64xf32> -> vector<256x8x128xf32>
    %8 = vector.broadcast %1 : vector<256x1x128xf32> to vector<256x8x128xf32>
    %9 = arith.mulf %4, %8 : vector<256x8x128xf32>
    %10 = vector.broadcast %3 : vector<256x1x128xf32> to vector<256x8x128xf32>
    %11 = arith.mulf %7, %10 : vector<256x8x128xf32>
    %12 = arith.addf %9, %11 : vector<256x8x128xf32>
    %c0_6 = arith.constant 0 : index
    %c0_7 = arith.constant 0 : index
    %c0_8 = arith.constant 0 : index
    %13 = vector.load %arg5[%c0_6, %c0_7, %c0_8] : memref<256x8x128xf32, #tpu.memory_space<vmem>>, vector<256x8x128xf32>
    tpu.vector_store %arg5[%c0_6, %c0_7, %c0_8], %12 {strides = array<i32>} : memref<256x8x128xf32, #tpu.memory_space<vmem>>, vector<256x8x128xf32>,
    %c0_9 = arith.constant 0 : index
    %c0_10 = arith.constant 0 : index
    %c0_11 = arith.constant 0 : index
    %14 = vector.load %arg4[%c0_9, %c0_10, %c0_11] : memref<256x8x128xf32, #tpu.memory_space<vmem>>, vector<256x8x128xf32>
    %15 = vector.extract_strided_slice %14 {offsets = [0, 0, 64], sizes = [256, 8, 64], strides = [1, 1, 1]} : vector<256x8x128xf32> to vector<256x8x64xf32>
    %16 = vector.extract_strided_slice %14 {offsets = [0, 0, 0], sizes = [256, 8, 64], strides = [1, 1, 1]} : vector<256x8x128xf32> to vector<256x8x64xf32>
    %17 = tpu.concatenate %15, %16 in 2 : vector<256x8x64xf32>, vector<256x8x64xf32> -> vector<256x8x128xf32>
    %18 = vector.broadcast %1 : vector<256x1x128xf32> to vector<256x8x128xf32>
    %19 = arith.mulf %14, %18 : vector<256x8x128xf32>
    %20 = vector.broadcast %3 : vector<256x1x128xf32> to vector<256x8x128xf32>
    %21 = arith.mulf %17, %20 : vector<256x8x128xf32>
    %22 = arith.addf %19, %21 : vector<256x8x128xf32>
    %c0_12 = arith.constant 0 : index
    %c0_13 = arith.constant 0 : index
    %c0_14 = arith.constant 0 : index
    %23 = vector.load %arg6[%c0_12, %c0_13, %c0_14] : memref<256x8x128xf32, #tpu.memory_space<vmem>>, vector<256x8x128xf32>
    tpu.vector_store %arg6[%c0_12, %c0_13, %c0_14], %22 {strides = array<i32>} : memref<256x8x128xf32, #tpu.memory_space<vmem>>, vector<256x8x128xf32>,
    return
  }
  func.func @transform_0(%arg0: i32) -> (i32, i32) {
    %c0_i32 = arith.constant 0 : i32
    %c0_i32_0 = arith.constant 0 : i32
    return %arg0, %c0_i32 : i32, i32
  }
  func.func @transform_1(%arg0: i32) -> (i32, i32) {
    %c0_i32 = arith.constant 0 : i32
    %c0_i32_0 = arith.constant 0 : i32
    return %arg0, %c0_i32 : i32, i32
  }
  func.func @transform_2(%arg0: i32) -> (i32, i32, i32) {
    %c0_i32 = arith.constant 0 : i32
    %c0_i32_0 = arith.constant 0 : i32
    %c0_i32_1 = arith.constant 0 : i32
    return %arg0, %c0_i32, %c0_i32_0 : i32, i32, i32
  }
  func.func @transform_3(%arg0: i32) -> (i32, i32, i32) {
    %c0_i32 = arith.constant 0 : i32
    %c0_i32_0 = arith.constant 0 : i32
    %c0_i32_1 = arith.constant 0 : i32
    return %arg0, %c0_i32, %c0_i32_0 : i32, i32, i32
  }
  func.func @transform_4(%arg0: i32) -> (i32, i32, i32) {
    %c0_i32 = arith.constant 0 : i32
    %c0_i32_0 = arith.constant 0 : i32
    %c0_i32_1 = arith.constant 0 : i32
    return %arg0, %c0_i32, %c0_i32_0 : i32, i32, i32
  }
  func.func @transform_5(%arg0: i32) -> (i32, i32, i32) {
    %c0_i32 = arith.constant 0 : i32
    %c0_i32_0 = arith.constant 0 : i32
    %c0_i32_1 = arith.constant 0 : i32
    return %arg0, %c0_i32, %c0_i32_0 : i32, i32, i32
  }
}

</mosaic_0001>

<llo_original>
// kernel: tpu_custom_call.1
$region0: #{tpu_custom_call.1}
  #allocation0 [shape = 'u32[]', space=smem, size = 0x4, offset = 0x4, fixed_abs, tag = 'smem constant byte address 0x4 - core index']
  #allocation1 [shape = 'u32[144,128]{1,0:T(1,128)}', space=vmem, size = 0x12000, scoped, tag = 'internal scratch']
  %s0 = inlined_call_operand.hbm [shape: f32[512,128], index: 0, kind: input, shape index: {}]
  %s1 = inlined_call_operand.hbm [shape: f32[512,128], index: 1, kind: input, shape index: {}]
  %s2 = inlined_call_operand.hbm [shape: f32[256,8,128], index: 2, kind: input, shape index: {}]
  %s3 = inlined_call_operand.hbm [shape: f32[256,8,128], index: 3, kind: input, shape index: {}]
  %s4 = inlined_call_operand.hbm [shape: f32[256,8,128], index: 4, kind: output, shape index: {0}]
  %s5 = inlined_call_operand.hbm [shape: f32[256,8,128], index: 5, kind: output, shape index: {1}]
  %6 = xla_tuple %s4, %s5
  %s7 = sld [smem:[#allocation0]]
  $region50: #{tpu_custom_call.1} parent=0
    _
  %s9 = ssub.s32 1, %s7
  %s10 = scalar_select 0, %s9, %s7
  $region1: #{tpu_custom_call.1} parent=0
    #allocation2 [shape = 'u8[131072]{0}', space=vmem, size = 0x20000, scoped, tag = 'input window, operand 0, single buffered']
    #allocation3 [shape = 's32[1]{0}', space=sflag, size = 0x4, scoped, tag = 'scoped memory for tpu_custom_call.1']
    #allocation4 [shape = 's32[1]{0}', space=sflag, size = 0x4, scoped, tag = 'scoped memory for tpu_custom_call.1']
    #allocation5 [shape = 'u8[131072]{0}', space=vmem, size = 0x20000, scoped, tag = 'input window, operand 1, single buffered']
    #allocation6 [shape = 's32[1]{0}', space=sflag, size = 0x4, scoped, tag = 'scoped memory for tpu_custom_call.1']
    #allocation7 [shape = 'u8[1048576]{0}', space=vmem, size = 0x100000, scoped, tag = 'input window, operand 2, single buffered']
    #allocation8 [shape = 'u8[1048576]{0}', space=vmem, size = 0x100000, scoped, tag = 'input window, operand 3, single buffered']
    #allocation9 [shape = 's32[1]{0}', space=sflag, size = 0x4, scoped, tag = 'scoped memory for tpu_custom_call.1']
    #allocation10 [shape = 'u8[1048576]{0}', space=vmem, size = 0x100000, scoped, tag = 'output window, operand 0, single buffered']
    #allocation11 [shape = 'u8[1048576]{0}', space=vmem, size = 0x100000, scoped, tag = 'output window, operand 1, single buffered']
    #allocation12 [shape = 's32[1]{0}', space=sflag, size = 0x4, scoped, tag = 'scoped memory for tpu_custom_call.1']
    %11 = vsyncpa [#allocation3], 0
    %12 = vsyncpa [#allocation6], 0
    %13 = vsyncpa [#allocation9], 0
    %14 = vsyncpa [#allocation4], 0
    %15 = vsyncpa [#allocation12], 0
    // Predicated region
    $region2: #{tpu_custom_call.1} parent=1 // pred_check
      _
    $region3: #{tpu_custom_call.1} parent=1 // pred_check_branch
      %17 = sbr.rel (0) target = $region5
    $region4: #{tpu_custom_call.1} parent=1 // pred_region
      %s19 = ssub.s32 4096, 4096
      %20 = vsyncadd [#allocation3], %s19
      %s21 = sshll.u32 [#allocation2], 4
      %s22 = int_to_ptr.vmem [resolvable:$true] %s21
      %27 = dma.hbm_to_vmem [thread:$0]  %s0, 4096, %s22, [#allocation3], 128, 128, 8
    $region5: #{tpu_custom_call.1} parent=1 // pred_fallthru
      _
    // Predicated region
    $region6: #{tpu_custom_call.1} parent=1 // pred_check
      _
    $region7: #{tpu_custom_call.1} parent=1 // pred_check_branch
      %29 = sbr.rel (0) target = $region9
    $region8: #{tpu_custom_call.1} parent=1 // pred_region
      %s31 = ssub.s32 4096, 4096
      %32 = vsyncadd [#allocation6], %s31
      %s33 = sshll.u32 [#allocation5], 4
      %s34 = int_to_ptr.vmem [resolvable:$true] %s33
      %39 = dma.hbm_to_vmem [thread:$0]  %s1, 4096, %s34, [#allocation6], 128, 128, 8
    $region9: #{tpu_custom_call.1} parent=1 // pred_fallthru
      _
    // Predicated region
    $region10: #{tpu_custom_call.1} parent=1 // pred_check
      _
    $region11: #{tpu_custom_call.1} parent=1 // pred_check_branch
      %41 = sbr.rel (0) target = $region13
    $region12: #{tpu_custom_call.1} parent=1 // pred_region
      %s43 = ssub.s32 32768, 32768
      %44 = vsyncadd [#allocation6], %s43
      %s45 = sshll.u32 [#allocation7], 4
      %s46 = int_to_ptr.vmem [resolvable:$true] %s45
      %51 = dma.hbm_to_vmem [thread:$0]  %s2, 32768, %s46, [#allocation6], 128, 128, 8
    $region13: #{tpu_custom_call.1} parent=1 // pred_fallthru
      _
    // Predicated region
    $region14: #{tpu_custom_call.1} parent=1 // pred_check
      _
    $region15: #{tpu_custom_call.1} parent=1 // pred_check_branch
      %53 = sbr.rel (0) target = $region17
    $region16: #{tpu_custom_call.1} parent=1 // pred_region
      %s55 = ssub.s32 32768, 32768
      %56 = vsyncadd [#allocation9], %s55
      %s57 = sshll.u32 [#allocation8], 4
      %s58 = int_to_ptr.vmem [resolvable:$true] %s57
      %63 = dma.hbm_to_vmem [thread:$0]  %s3, 32768, %s58, [#allocation9], 128, 128, 8
    $region17: #{tpu_custom_call.1} parent=1 // pred_fallthru
      _
    // Predicated region
    $region18: #{tpu_custom_call.1} parent=1 // pred_check
      _
    $region19: #{tpu_custom_call.1} parent=1 // pred_check_branch
      %65 = sbr.rel (0) target = $region21
    $region20: #{tpu_custom_call.1} parent=1 // pred_region
      %66 = dma.done [#allocation3], 4096
    $region21: #{tpu_custom_call.1} parent=1 // pred_fallthru
      _
    // Predicated region
    $region22: #{tpu_custom_call.1} parent=1 // pred_check
      _
    $region23: #{tpu_custom_call.1} parent=1 // pred_check_branch
      %68 = sbr.rel (0) target = $region25
    $region24: #{tpu_custom_call.1} parent=1 // pred_region
      %69 = dma.done [#allocation6], 4096
    $region25: #{tpu_custom_call.1} parent=1 // pred_fallthru
      _
    // Predicated region
    $region26: #{tpu_custom_call.1} parent=1 // pred_check
      _
    $region27: #{tpu_custom_call.1} parent=1 // pred_check_branch
      %71 = sbr.rel (0) target = $region29
    $region28: #{tpu_custom_call.1} parent=1 // pred_region
      %72 = dma.done [#allocation6], 32768
    $region29: #{tpu_custom_call.1} parent=1 // pred_fallthru
      _
    // Predicated region
    $region30: #{tpu_custom_call.1} parent=1 // pred_check
      _
    $region31: #{tpu_custom_call.1} parent=1 // pred_check_branch
      %74 = sbr.rel (0) target = $region33
    $region32: #{tpu_custom_call.1} parent=1 // pred_region
      %75 = dma.done [#allocation9], 32768
    $region33: #{tpu_custom_call.1} parent=1 // pred_fallthru
      _
    %v76 = vld [vmem:[#allocation5] sm:$0xff]
    %v77 = vld [vmem:[#allocation5 + $0x8] sm:$0xff]
    %v78 = vld [vmem:[#allocation5 + $0x10] sm:$0xff]
    %v79 = vld [vmem:[#allocation5 + $0x18] sm:$0xff]
    %v80 = vld [vmem:[#allocation5 + $0x20] sm:$0xff]
    %v81 = vld [vmem:[#allocation5 + $0x28] sm:$0xff]
    %v82 = vld [vmem:[#allocation5 + $0x30] sm:$0xff]
    %v83 = vld [vmem:[#allocation5 + $0x38] sm:$0xff]
    %v84 = vld [vmem:[#allocation5 + $0x40] sm:$0xff]
    %v85 = vld [vmem:[#allocation5 + $0x48] sm:$0xff]
    %v86 = vld [vmem:[#allocation5 + $0x50] sm:$0xff]
    %v87 = vld [vmem:[#allocation5 + $0x58] sm:$0xff]
    %v88 = vld [vmem:[#allocation5 + $0x60] sm:$0xff]
    %v89 = vld [vmem:[#allocation5 + $0x68] sm:$0xff]
    %v90 = vld [vmem:[#allocation5 + $0x70] sm:$0xff]
    %v91 = vld [vmem:[#allocation5 + $0x78] sm:$0xff]
    %v92 = vld [vmem:[#allocation5 + $0x80] sm:$0xff]
    %v93 = vld [vmem:[#allocation5 + $0x88] sm:$0xff]
    %v94 = vld [vmem:[#allocation5 + $0x90] sm:$0xff]
    %v95 = vld [vmem:[#allocation5 + $0x98] sm:$0xff]
    %v96 = vld [vmem:[#allocation5 + $0xa0] sm:$0xff]
    %v97 = vld [vmem:[#allocation5 + $0xa8] sm:$0xff]
    %v98 = vld [vmem:[#allocation5 + $0xb0] sm:$0xff]
    %v99 = vld [vmem:[#allocation5 + $0xb8] sm:$0xff]
    %v100 = vld [vmem:[#allocation5 + $0xc0] sm:$0xff]
    %v101 = vld [vmem:[#allocation5 + $0xc8] sm:$0xff]
    %v102 = vld [vmem:[#allocation5 + $0xd0] sm:$0xff]
    %v103 = vld [vmem:[#allocation5 + $0xd8] sm:$0xff]
    %v104 = vld [vmem:[#allocation5 + $0xe0] sm:$0xff]
    %v105 = vld [vmem:[#allocation5 + $0xe8] sm:$0xff]
    %v106 = vld [vmem:[#allocation5 + $0xf0] sm:$0xff]
    %v107 = vld [vmem:[#allocation5 + $0xf8] sm:$0xff]
    %v140 = vcombine.high %v76, %v76
    %v142 = vunpack.c.l.s4 1966171168
    %v143 = vunpack.c.0.s8 %v142
    %v144 = vlaneseq
    %v145 = vshrl.u32 %v144, 7
    %v146 = vsub.s32 %v143, %v145
    %v147 = vrot.slane %v76, %v146
    %v149 = vunpack.c.l.s4 1966171168
    %v150 = vunpack.c.0.s8 %v149
    %v151 = vlaneseq
    %v152 = vshrl.u32 %v151, 7
    %v153 = vsub.s32 %v150, %v152
    %v154 = vrot.slane %v140, %v153
    %v155 = vcombine.high %v147, %v147
    %v156 = vcombine.high %v154, %v154
    %v158 = vunpack.c.l.s4 1966171168
    %v159 = vunpack.c.0.s8 %v158
    %v160 = vlaneseq
    %v161 = vshrl.u32 %v160, 7
    %v162 = vsub.s32 %v159, %v161
    %v163 = vrot.slane %v147, %v162
    %v165 = vunpack.c.l.s4 1966171168
    %v166 = vunpack.c.0.s8 %v165
    %v167 = vlaneseq
    %v168 = vshrl.u32 %v167, 7
    %v169 = vsub.s32 %v166, %v168
    %v170 = vrot.slane %v154, %v169
    %v172 = vunpack.c.l.s4 1966171168
    %v173 = vunpack.c.0.s8 %v172
    %v174 = vlaneseq
    %v175 = vshrl.u32 %v174, 7
    %v176 = vsub.s32 %v173, %v175
    %v177 = vrot.slane %v155, %v176
    %v179 = vunpack.c.l.s4 1966171168
    %v180 = vunpack.c.0.s8 %v179
    %v181 = vlaneseq
    %v182 = vshrl.u32 %v181, 7
    %v183 = vsub.s32 %v180, %v182
    %v184 = vrot.slane %v156, %v183
    %v185 = vcombine.high %v163, %v163
    %v186 = vcombine.high %v170, %v170
    %v187 = vcombine.high %v177, %v177
    %v188 = vcombine.high %v184, %v184
    %v189 = vcombine.high %v77, %v77
    %v191 = vunpack.c.l.s4 1966171168
    %v192 = vunpack.c.0.s8 %v191
    %v193 = vlaneseq
    %v194 = vshrl.u32 %v193, 7
    %v195 = vsub.s32 %v192, %v194
    %v196 = vrot.slane %v77, %v195
    %v198 = vunpack.c.l.s4 1966171168
    %v199 = vunpack.c.0.s8 %v198
    %v200 = vlaneseq
    %v201 = vshrl.u32 %v200, 7
    %v202 = vsub.s32 %v199, %v201
    %v203 = vrot.slane %v189, %v202
    %v204 = vcombine.high %v196, %v196
    %v205 = vcombine.high %v203, %v203
    %v207 = vunpack.c.l.s4 1966171168
    %v208 = vunpack.c.0.s8 %v207
    %v209 = vlaneseq
    %v210 = vshrl.u32 %v209, 7
    %v211 = vsub.s32 %v208, %v210
    %v212 = vrot.slane %v196, %v211
    %v214 = vunpack.c.l.s4 1966171168
    %v215 = vunpack.c.0.s8 %v214
    %v216 = vlaneseq
    %v217 = vshrl.u32 %v216, 7
    %v218 = vsub.s32 %v215, %v217
    %v219 = vrot.slane %v203, %v218
    %v221 = vunpack.c.l.s4 1966171168
    %v222 = vunpack.c.0.s8 %v221
    %v223 = vlaneseq
    %v224 = vshrl.u32 %v223, 7
    %v225 = vsub.s32 %v222, %v224
    %v226 = vrot.slane %v204, %v225
    %v228 = vunpack.c.l.s4 1966171168
    %v229 = vunpack.c.0.s8 %v228
    %v230 = vlaneseq
    %v231 = vshrl.u32 %v230, 7
    %v232 = vsub.s32 %v229, %v231
    %v233 = vrot.slane %v205, %v232
    %v234 = vcombine.high %v212, %v212
    %v235 = vcombine.high %v219, %v219
    %v236 = vcombine.high %v226, %v226
    %v237 = vcombine.high %v233, %v233
    %v238 = vcombine.high %v78, %v78
    %v240 = vunpack.c.l.s4 1966171168
    %v241 = vunpack.c.0.s8 %v240
    %v242 = vlaneseq
    %v243 = vshrl.u32 %v242, 7
    %v244 = vsub.s32 %v241, %v243
    %v245 = vrot.slane %v78, %v244
    %v247 = vunpack.c.l.s4 1966171168
    %v248 = vunpack.c.0.s8 %v247
    %v249 = vlaneseq
    %v250 = vshrl.u32 %v249, 7
    %v251 = vsub.s32 %v248, %v250
    %v252 = vrot.slane %v238, %v251
    %v253 = vcombine.high %v245, %v245
    %v254 = vcombine.high %v252, %v252
    %v256 = vunpack.c.l.s4 1966171168
    %v257 = vunpack.c.0.s8 %v256
    %v258 = vlaneseq
    %v259 = vshrl.u32 %v258, 7
    %v260 = vsub.s32 %v257, %v259
    %v261 = vrot.slane %v245, %v260
    %v263 = vunpack.c.l.s4 1966171168
    %v264 = vunpack.c.0.s8 %v263
    %v265 = vlaneseq
    %v266 = vshrl.u32 %v265, 7
    %v267 = vsub.s32 %v264, %v266
    %v268 = vrot.slane %v252, %v267
    %v270 = vunpack.c.l.s4 1966171168
    %v271 = vunpack.c.0.s8 %v270
    %v272 = vlaneseq
    %v273 = vshrl.u32 %v272, 7
    %v274 = vsub.s32 %v271, %v273
    %v275 = vrot.slane %v253, %v274
    %v277 = vunpack.c.l.s4 1966171168
    %v278 = vunpack.c.0.s8 %v277
    %v279 = vlaneseq
    %v280 = vshrl.u32 %v279, 7
    %v281 = vsub.s32 %v278, %v280
    %v282 = vrot.slane %v254, %v281
    %v283 = vcombine.high %v261, %v261
    %v284 = vcombine.high %v268, %v268
    %v285 = vcombine.high %v275, %v275
    %v286 = vcombine.high %v282, %v282
    %v287 = vcombine.high %v79, %v79
    %v289 = vunpack.c.l.s4 1966171168
    %v290 = vunpack.c.0.s8 %v289
    %v291 = vlaneseq
    %v292 = vshrl.u32 %v291, 7
    %v293 = vsub.s32 %v290, %v292
    %v294 = vrot.slane %v79, %v293
    %v296 = vunpack.c.l.s4 1966171168
    %v297 = vunpack.c.0.s8 %v296
    %v298 = vlaneseq
    %v299 = vshrl.u32 %v298, 7
    %v300 = vsub.s32 %v297, %v299
    %v301 = vrot.slane %v287, %v300
    %v302 = vcombine.high %v294, %v294
    %v303 = vcombine.high %v301, %v301
    %v305 = vunpack.c.l.s4 1966171168
    %v306 = vunpack.c.0.s8 %v305
    %v307 = vlaneseq
    %v308 = vshrl.u32 %v307, 7
    %v309 = vsub.s32 %v306, %v308
    %v310 = vrot.slane %v294, %v309
    %v312 = vunpack.c.l.s4 1966171168
    %v313 = vunpack.c.0.s8 %v312
    %v314 = vlaneseq
    %v315 = vshrl.u32 %v314, 7
    %v316 = vsub.s32 %v313, %v315
    %v317 = vrot.slane %v301, %v316
    %v319 = vunpack.c.l.s4 1966171168
    %v320 = vunpack.c.0.s8 %v319
    %v321 = vlaneseq
    %v322 = vshrl.u32 %v321, 7
    %v323 = vsub.s32 %v320, %v322
    %v324 = vrot.slane %v302, %v323
    %v326 = vunpack.c.l.s4 1966171168
    %v327 = vunpack.c.0.s8 %v326
    %v328 = vlaneseq
    %v329 = vshrl.u32 %v328, 7
    %v330 = vsub.s32 %v327, %v329
    %v331 = vrot.slane %v303, %v330
    %v332 = vcombine.high %v310, %v310
    %v333 = vcombine.high %v317, %v317
    %v334 = vcombine.high %v324, %v324
    %v335 = vcombine.high %v331, %v331
    %v336 = vcombine.high %v80, %v80
    %v338 = vunpack.c.l.s4 1966171168
    %v339 = vunpack.c.0.s8 %v338
    %v340 = vlaneseq
    %v341 = vshrl.u32 %v340, 7
    %v342 = vsub.s32 %v339, %v341
    %v343 = vrot.slane %v80, %v342
    %v345 = vunpack.c.l.s4 1966171168
    %v346 = vunpack.c.0.s8 %v345
    %v347 = vlaneseq
    %v348 = vshrl.u32 %v347, 7
    %v349 = vsub.s32 %v346, %v348
    %v350 = vrot.slane %v336, %v349
    %v351 = vcombine.high %v343, %v343
    %v352 = vcombine.high %v350, %v350
    %v354 = vunpack.c.l.s4 1966171168
    %v355 = vunpack.c.0.s8 %v354
    %v356 = vlaneseq
    %v357 = vshrl.u32 %v356, 7
    %v358 = vsub.s32 %v355, %v357
    %v359 = vrot.slane %v343, %v358
    %v361 = vunpack.c.l.s4 1966171168
    %v362 = vunpack.c.0.s8 %v361
    %v363 = vlaneseq
    %v364 = vshrl.u32 %v363, 7
    %v365 = vsub.s32 %v362, %v364
    %v366 = vrot.slane %v350, %v365
    %v368 = vunpack.c.l.s4 1966171168
    %v369 = vunpack.c.0.s8 %v368
    %v370 = vlaneseq
    %v371 = vshrl.u32 %v370, 7
    %v372 = vsub.s32 %v369, %v371
    %v373 = vrot.slane %v351, %v372
    %v375 = vunpack.c.l.s4 1966171168
    %v376 = vunpack.c.0.s8 %v375
    %v377 = vlaneseq
    %v378 = vshrl.u32 %v377, 7
    %v379 = vsub.s32 %v376, %v378
    %v380 = vrot.slane %v352, %v379
    %v381 = vcombine.high %v359, %v359
    %v382 = vcombine.high %v366, %v366
    %v383 = vcombine.high %v373, %v373
    %v384 = vcombine.high %v380, %v380
    %v385 = vcombine.high %v81, %v81
    %v387 = vunpack.c.l.s4 1966171168
    %v388 = vunpack.c.0.s8 %v387
    %v389 = vlaneseq
    %v390 = vshrl.u32 %v389, 7
    %v391 = vsub.s32 %v388, %v390
    %v392 = vrot.slane %v81, %v391
    %v394 = vunpack.c.l.s4 1966171168
    %v395 = vunpack.c.0.s8 %v394
    %v396 = vlaneseq
    %v397 = vshrl.u32 %v396, 7
    %v398 = vsub.s32 %v395, %v397
    %v399 = vrot.slane %v385, %v398
    %v400 = vcombine.high %v392, %v392
    %v401 = vcombine.high %v399, %v399
    %v403 = vunpack.c.l.s4 1966171168
    %v404 = vunpack.c.0.s8 %v403
    %v405 = vlaneseq
    %v406 = vshrl.u32 %v405, 7
    %v407 = vsub.s32 %v404, %v406
    %v408 = vrot.slane %v392, %v407
    %v410 = vunpack.c.l.s4 1966171168
    %v411 = vunpack.c.0.s8 %v410
    %v412 = vlaneseq
    %v413 = vshrl.u32 %v412, 7
    %v414 = vsub.s32 %v411, %v413
    %v415 = vrot.slane %v399, %v414
    %v417 = vunpack.c.l.s4 1966171168
    %v418 = vunpack.c.0.s8 %v417
    %v419 = vlaneseq
    %v420 = vshrl.u32 %v419, 7
    %v421 = vsub.s32 %v418, %v420
    %v422 = vrot.slane %v400, %v421
    %v424 = vunpack.c.l.s4 1966171168
    %v425 = vunpack.c.0.s8 %v424
    %v426 = vlaneseq
    %v427 = vshrl.u32 %v426, 7
    %v428 = vsub.s32 %v425, %v427
    %v429 = vrot.slane %v401, %v428
    %v430 = vcombine.high %v408, %v408
    %v431 = vcombine.high %v415, %v415
    %v432 = vcombine.high %v422, %v422
    %v433 = vcombine.high %v429, %v429
    %v434 = vcombine.high %v82, %v82
    %v436 = vunpack.c.l.s4 1966171168
    %v437 = vunpack.c.0.s8 %v436
    %v438 = vlaneseq
    %v439 = vshrl.u32 %v438, 7
    %v440 = vsub.s32 %v437, %v439
    %v441 = vrot.slane %v82, %v440
    %v443 = vunpack.c.l.s4 1966171168
    %v444 = vunpack.c.0.s8 %v443
    %v445 = vlaneseq
    %v446 = vshrl.u32 %v445, 7
    %v447 = vsub.s32 %v444, %v446
    %v448 = vrot.slane %v434, %v447
    %v449 = vcombine.high %v441, %v441
    %v450 = vcombine.high %v448, %v448
    %v452 = vunpack.c.l.s4 1966171168
    %v453 = vunpack.c.0.s8 %v452
    %v454 = vlaneseq
    %v455 = vshrl.u32 %v454, 7
    %v456 = vsub.s32 %v453, %v455
    %v457 = vrot.slane %v441, %v456
    %v459 = vunpack.c.l.s4 1966171168
    %v460 = vunpack.c.0.s8 %v459
    %v461 = vlaneseq
    %v462 = vshrl.u32 %v461, 7
    %v463 = vsub.s32 %v460, %v462
    %v464 = vrot.slane %v448, %v463
    %v466 = vunpack.c.l.s4 1966171168
    %v467 = vunpack.c.0.s8 %v466
    %v468 = vlaneseq
    %v469 = vshrl.u32 %v468, 7
    %v470 = vsub.s32 %v467, %v469
    %v471 = vrot.slane %v449, %v470
    %v473 = vunpack.c.l.s4 1966171168
    %v474 = vunpack.c.0.s8 %v473
    %v475 = vlaneseq
    %v476 = vshrl.u32 %v475, 7
    %v477 = vsub.s32 %v474, %v476
    %v478 = vrot.slane %v450, %v477
    %v479 = vcombine.high %v457, %v457
    %v480 = vcombine.high %v464, %v464
    %v481 = vcombine.high %v471, %v471
    %v482 = vcombine.high %v478, %v478
    %v483 = vcombine.high %v83, %v83
    %v485 = vunpack.c.l.s4 1966171168
    %v486 = vunpack.c.0.s8 %v485
    %v487 = vlaneseq
    %v488 = vshrl.u32 %v487, 7
    %v489 = vsub.s32 %v486, %v488
    %v490 = vrot.slane %v83, %v489
    %v492 = vunpack.c.l.s4 1966171168
    %v493 = vunpack.c.0.s8 %v492
    %v494 = vlaneseq
    %v495 = vshrl.u32 %v494, 7
    %v496 = vsub.s32 %v493, %v495
    %v497 = vrot.slane %v483, %v496
    %v498 = vcombine.high %v490, %v490
    %v499 = vcombine.high %v497, %v497
    %v501 = vunpack.c.l.s4 1966171168
    %v502 = vunpack.c.0.s8 %v501
    %v503 = vlaneseq
    %v504 = vshrl.u32 %v503, 7
    %v505 = vsub.s32 %v502, %v504
    %v506 = vrot.slane %v490, %v505
    %v508 = vunpack.c.l.s4 1966171168
    %v509 = vunpack.c.0.s8 %v508
    %v510 = vlaneseq
    %v511 = vshrl.u32 %v510, 7
    %v512 = vsub.s32 %v509, %v511
    %v513 = vrot.slane %v497, %v512
    %v515 = vunpack.c.l.s4 1966171168
    %v516 = vunpack.c.0.s8 %v515
    %v517 = vlaneseq
    %v518 = vshrl.u32 %v517, 7
    %v519 = vsub.s32 %v516, %v518
    %v520 = vrot.slane %v498, %v519
    %v522 = vunpack.c.l.s4 1966171168
    %v523 = vunpack.c.0.s8 %v522
    %v524 = vlaneseq
    %v525 = vshrl.u32 %v524, 7
    %v526 = vsub.s32 %v523, %v525
    %v527 = vrot.slane %v499, %v526
    %v528 = vcombine.high %v506, %v506
    %v529 = vcombine.high %v513, %v513
    %v530 = vcombine.high %v520, %v520
    %v531 = vcombine.high %v527, %v527
    %v532 = vcombine.high %v84, %v84
    %v534 = vunpack.c.l.s4 1966171168
    %v535 = vunpack.c.0.s8 %v534
    %v536 = vlaneseq
    %v537 = vshrl.u32 %v536, 7
    %v538 = vsub.s32 %v535, %v537
    %v539 = vrot.slane %v84, %v538
    %v541 = vunpack.c.l.s4 1966171168
    %v542 = vunpack.c.0.s8 %v541
    %v543 = vlaneseq
    %v544 = vshrl.u32 %v543, 7
    %v545 = vsub.s32 %v542, %v544
    %v546 = vrot.slane %v532, %v545
    %v547 = vcombine.high %v539, %v539
    %v548 = vcombine.high %v546, %v546
    %v550 = vunpack.c.l.s4 1966171168
    %v551 = vunpack.c.0.s8 %v550
    %v552 = vlaneseq
    %v553 = vshrl.u32 %v552, 7
    %v554 = vsub.s32 %v551, %v553
    %v555 = vrot.slane %v539, %v554
    %v557 = vunpack.c.l.s4 1966171168
    %v558 = vunpack.c.0.s8 %v557
    %v559 = vlaneseq
    %v560 = vshrl.u32 %v559, 7
    %v561 = vsub.s32 %v558, %v560
    %v562 = vrot.slane %v546, %v561
    %v564 = vunpack.c.l.s4 1966171168
    %v565 = vunpack.c.0.s8 %v564
    %v566 = vlaneseq
    %v567 = vshrl.u32 %v566, 7
    %v568 = vsub.s32 %v565, %v567
    %v569 = vrot.slane %v547, %v568
    %v571 = vunpack.c.l.s4 1966171168
    %v572 = vunpack.c.0.s8 %v571
    %v573 = vlaneseq
    %v574 = vshrl.u32 %v573, 7
    %v575 = vsub.s32 %v572, %v574
    %v576 = vrot.slane %v548, %v575
    %v577 = vcombine.high %v555, %v555
    %v578 = vcombine.high %v562, %v562
    %v579 = vcombine.high %v569, %v569
    %v580 = vcombine.high %v576, %v576
    %v581 = vcombine.high %v85, %v85
    %v583 = vunpack.c.l.s4 1966171168
    %v584 = vunpack.c.0.s8 %v583
    %v585 = vlaneseq
    %v586 = vshrl.u32 %v585, 7
    %v587 = vsub.s32 %v584, %v586
    %v588 = vrot.slane %v85, %v587
    %v590 = vunpack.c.l.s4 1966171168
    %v591 = vunpack.c.0.s8 %v590
    %v592 = vlaneseq
    %v593 = vshrl.u32 %v592, 7
    %v594 = vsub.s32 %v591, %v593
    %v595 = vrot.slane %v581, %v594
    %v596 = vcombine.high %v588, %v588
    %v597 = vcombine.high %v595, %v595
    %v599 = vunpack.c.l.s4 1966171168
    %v600 = vunpack.c.0.s8 %v599
    %v601 = vlaneseq
    %v602 = vshrl.u32 %v601, 7
    %v603 = vsub.s32 %v600, %v602
    %v604 = vrot.slane %v588, %v603
    %v606 = vunpack.c.l.s4 1966171168
    %v607 = vunpack.c.0.s8 %v606
    %v608 = vlaneseq
    %v609 = vshrl.u32 %v608, 7
    %v610 = vsub.s32 %v607, %v609
    %v611 = vrot.slane %v595, %v610
    %v613 = vunpack.c.l.s4 1966171168
    %v614 = vunpack.c.0.s8 %v613
    %v615 = vlaneseq
    %v616 = vshrl.u32 %v615, 7
    %v617 = vsub.s32 %v614, %v616
    %v618 = vrot.slane %v596, %v617
    %v620 = vunpack.c.l.s4 1966171168
    %v621 = vunpack.c.0.s8 %v620
    %v622 = vlaneseq
    %v623 = vshrl.u32 %v622, 7
    %v624 = vsub.s32 %v621, %v623
    %v625 = vrot.slane %v597, %v624
    %v626 = vcombine.high %v604, %v604
    %v627 = vcombine.high %v611, %v611
    %v628 = vcombine.high %v618, %v618
    %v629 = vcombine.high %v625, %v625
    %v630 = vcombine.high %v86, %v86
    %v632 = vunpack.c.l.s4 1966171168
    %v633 = vunpack.c.0.s8 %v632
    %v634 = vlaneseq
    %v635 = vshrl.u32 %v634, 7
    %v636 = vsub.s32 %v633, %v635
    %v637 = vrot.slane %v86, %v636
    %v639 = vunpack.c.l.s4 1966171168
    %v640 = vunpack.c.0.s8 %v639
    %v641 = vlaneseq
    %v642 = vshrl.u32 %v641, 7
    %v643 = vsub.s32 %v640, %v642
    %v644 = vrot.slane %v630, %v643
    %v645 = vcombine.high %v637, %v637
    %v646 = vcombine.high %v644, %v644
    %v648 = vunpack.c.l.s4 1966171168
    %v649 = vunpack.c.0.s8 %v648
    %v650 = vlaneseq
    %v651 = vshrl.u32 %v650, 7
    %v652 = vsub.s32 %v649, %v651
    %v653 = vrot.slane %v637, %v652
    %v655 = vunpack.c.l.s4 1966171168
    %v656 = vunpack.c.0.s8 %v655
    %v657 = vlaneseq
    %v658 = vshrl.u32 %v657, 7
    %v659 = vsub.s32 %v656, %v658
    %v660 = vrot.slane %v644, %v659
    %v662 = vunpack.c.l.s4 1966171168
    %v663 = vunpack.c.0.s8 %v662
    %v664 = vlaneseq
    %v665 = vshrl.u32 %v664, 7
    %v666 = vsub.s32 %v663, %v665
    %v667 = vrot.slane %v645, %v666
    %v669 = vunpack.c.l.s4 1966171168
    %v670 = vunpack.c.0.s8 %v669
    %v671 = vlaneseq
    %v672 = vshrl.u32 %v671, 7
    %v673 = vsub.s32 %v670, %v672
    %v674 = vrot.slane %v646, %v673
    %v675 = vcombine.high %v653, %v653
    %v676 = vcombine.high %v660, %v660
    %v677 = vcombine.high %v667, %v667
    %v678 = vcombine.high %v674, %v674
    %v679 = vcombine.high %v87, %v87
    %v681 = vunpack.c.l.s4 1966171168
    %v682 = vunpack.c.0.s8 %v681
    %v683 = vlaneseq
    %v684 = vshrl.u32 %v683, 7
    %v685 = vsub.s32 %v682, %v684
    %v686 = vrot.slane %v87, %v685
    %v688 = vunpack.c.l.s4 1966171168
    %v689 = vunpack.c.0.s8 %v688
    %v690 = vlaneseq
    %v691 = vshrl.u32 %v690, 7
    %v692 = vsub.s32 %v689, %v691
    %v693 = vrot.slane %v679, %v692
    %v694 = vcombine.high %v686, %v686
    %v695 = vcombine.high %v693, %v693
    %v697 = vunpack.c.l.s4 1966171168
    %v698 = vunpack.c.0.s8 %v697
    %v699 = vlaneseq
    %v700 = vshrl.u32 %v699, 7
    %v701 = vsub.s32 %v698, %v700
    %v702 = vrot.slane %v686, %v701
    %v704 = vunpack.c.l.s4 1966171168
    %v705 = vunpack.c.0.s8 %v704
    %v706 = vlaneseq
    %v707 = vshrl.u32 %v706, 7
    %v708 = vsub.s32 %v705, %v707
    %v709 = vrot.slane %v693, %v708
    %v711 = vunpack.c.l.s4 1966171168
    %v712 = vunpack.c.0.s8 %v711
    %v713 = vlaneseq
    %v714 = vshrl.u32 %v713, 7
    %v715 = vsub.s32 %v712, %v714
    %v716 = vrot.slane %v694, %v715
    %v718 = vunpack.c.l.s4 1966171168
    %v719 = vunpack.c.0.s8 %v718
    %v720 = vlaneseq
    %v721 = vshrl.u32 %v720, 7
    %v722 = vsub.s32 %v719, %v721
    %v723 = vrot.slane %v695, %v722
    %v724 = vcombine.high %v702, %v702
    %v725 = vcombine.high %v709, %v709
    %v726 = vcombine.high %v716, %v716
    %v727 = vcombine.high %v723, %v723
    %v728 = vcombine.high %v88, %v88
    %v730 = vunpack.c.l.s4 1966171168
    %v731 = vunpack.c.0.s8 %v730
    %v732 = vlaneseq
    %v733 = vshrl.u32 %v732, 7
    %v734 = vsub.s32 %v731, %v733
    %v735 = vrot.slane %v88, %v734
    %v737 = vunpack.c.l.s4 1966171168
    %v738 = vunpack.c.0.s8 %v737
    %v739 = vlaneseq
    %v740 = vshrl.u32 %v739, 7
    %v741 = vsub.s32 %v738, %v740
    %v742 = vrot.slane %v728, %v741
    %v743 = vcombine.high %v735, %v735
    %v744 = vcombine.high %v742, %v742
    %v746 = vunpack.c.l.s4 1966171168
    %v747 = vunpack.c.0.s8 %v746
    %v748 = vlaneseq
    %v749 = vshrl.u32 %v748, 7
    %v750 = vsub.s32 %v747, %v749
    %v751 = vrot.slane %v735, %v750
    %v753 = vunpack.c.l.s4 1966171168
    %v754 = vunpack.c.0.s8 %v753
    %v755 = vlaneseq
    %v756 = vshrl.u32 %v755, 7
    %v757 = vsub.s32 %v754, %v756
    %v758 = vrot.slane %v742, %v757
    %v760 = vunpack.c.l.s4 1966171168
    %v761 = vunpack.c.0.s8 %v760
    %v762 = vlaneseq
    %v763 = vshrl.u32 %v762, 7
    %v764 = vsub.s32 %v761, %v763
    %v765 = vrot.slane %v743, %v764
    %v767 = vunpack.c.l.s4 1966171168
    %v768 = vunpack.c.0.s8 %v767
    %v769 = vlaneseq
    %v770 = vshrl.u32 %v769, 7
    %v771 = vsub.s32 %v768, %v770
    %v772 = vrot.slane %v744, %v771
    %v773 = vcombine.high %v751, %v751
    %v774 = vcombine.high %v758, %v758
    %v775 = vcombine.high %v765, %v765
    %v776 = vcombine.high %v772, %v772
    %v777 = vcombine.high %v89, %v89
    %v779 = vunpack.c.l.s4 1966171168
    %v780 = vunpack.c.0.s8 %v779
    %v781 = vlaneseq
    %v782 = vshrl.u32 %v781, 7
    %v783 = vsub.s32 %v780, %v782
    %v784 = vrot.slane %v89, %v783
    %v786 = vunpack.c.l.s4 1966171168
    %v787 = vunpack.c.0.s8 %v786
    %v788 = vlaneseq
    %v789 = vshrl.u32 %v788, 7
    %v790 = vsub.s32 %v787, %v789
    %v791 = vrot.slane %v777, %v790
    %v792 = vcombine.high %v784, %v784
    %v793 = vcombine.high %v791, %v791
    %v795 = vunpack.c.l.s4 1966171168
    %v796 = vunpack.c.0.s8 %v795
    %v797 = vlaneseq
    %v798 = vshrl.u32 %v797, 7
    %v799 = vsub.s32 %v796, %v798
    %v800 = vrot.slane %v784, %v799
    %v802 = vunpack.c.l.s4 1966171168
    %v803 = vunpack.c.0.s8 %v802
    %v804 = vlaneseq
    %v805 = vshrl.u32 %v804, 7
    %v806 = vsub.s32 %v803, %v805
    %v807 = vrot.slane %v791, %v806
    %v809 = vunpack.c.l.s4 1966171168
    %v810 = vunpack.c.0.s8 %v809
    %v811 = vlaneseq
    %v812 = vshrl.u32 %v811, 7
    %v813 = vsub.s32 %v810, %v812
    %v814 = vrot.slane %v792, %v813
    %v816 = vunpack.c.l.s4 1966171168
    %v817 = vunpack.c.0.s8 %v816
    %v818 = vlaneseq
    %v819 = vshrl.u32 %v818, 7
    %v820 = vsub.s32 %v817, %v819
    %v821 = vrot.slane %v793, %v820
    %v822 = vcombine.high %v800, %v800
    %v823 = vcombine.high %v807, %v807
    %v824 = vcombine.high %v814, %v814
    %v825 = vcombine.high %v821, %v821
    %v826 = vcombine.high %v90, %v90
    %v828 = vunpack.c.l.s4 1966171168
    %v829 = vunpack.c.0.s8 %v828
    %v830 = vlaneseq
    %v831 = vshrl.u32 %v830, 7
    %v832 = vsub.s32 %v829, %v831
    %v833 = vrot.slane %v90, %v832
    %v835 = vunpack.c.l.s4 1966171168
    %v836 = vunpack.c.0.s8 %v835
    %v837 = vlaneseq
    %v838 = vshrl.u32 %v837, 7
    %v839 = vsub.s32 %v836, %v838
    %v840 = vrot.slane %v826, %v839
    %v841 = vcombine.high %v833, %v833
    %v842 = vcombine.high %v840, %v840
    %v844 = vunpack.c.l.s4 1966171168
    %v845 = vunpack.c.0.s8 %v844
    %v846 = vlaneseq
    %v847 = vshrl.u32 %v846, 7
    %v848 = vsub.s32 %v845, %v847
    %v849 = vrot.slane %v833, %v848
    %v851 = vunpack.c.l.s4 1966171168
    %v852 = vunpack.c.0.s8 %v851
    %v853 = vlaneseq
    %v854 = vshrl.u32 %v853, 7
    %v855 = vsub.s32 %v852, %v854
    %v856 = vrot.slane %v840, %v855
    %v858 = vunpack.c.l.s4 1966171168
    %v859 = vunpack.c.0.s8 %v858
    %v860 = vlaneseq
    %v861 = vshrl.u32 %v860, 7
    %v862 = vsub.s32 %v859, %v861
    %v863 = vrot.slane %v841, %v862
    %v865 = vunpack.c.l.s4 1966171168
    %v866 = vunpack.c.0.s8 %v865
    %v867 = vlaneseq
    %v868 = vshrl.u32 %v867, 7
    %v869 = vsub.s32 %v866, %v868
    %v870 = vrot.slane %v842, %v869
    %v871 = vcombine.high %v849, %v849
    %v872 = vcombine.high %v856, %v856
    %v873 = vcombine.high %v863, %v863
    %v874 = vcombine.high %v870, %v870
    %v875 = vcombine.high %v91, %v91
    %v877 = vunpack.c.l.s4 1966171168
    %v878 = vunpack.c.0.s8 %v877
    %v879 = vlaneseq
    %v880 = vshrl.u32 %v879, 7
    %v881 = vsub.s32 %v878, %v880
    %v882 = vrot.slane %v91, %v881
    %v884 = vunpack.c.l.s4 1966171168
    %v885 = vunpack.c.0.s8 %v884
    %v886 = vlaneseq
    %v887 = vshrl.u32 %v886, 7
    %v888 = vsub.s32 %v885, %v887
    %v889 = vrot.slane %v875, %v888
    %v890 = vcombine.high %v882, %v882
    %v891 = vcombine.high %v889, %v889
    %v893 = vunpack.c.l.s4 1966171168
    %v894 = vunpack.c.0.s8 %v893
    %v895 = vlaneseq
    %v896 = vshrl.u32 %v895, 7
    %v897 = vsub.s32 %v894, %v896
    %v898 = vrot.slane %v882, %v897
    %v900 = vunpack.c.l.s4 1966171168
    %v901 = vunpack.c.0.s8 %v900
    %v902 = vlaneseq
    %v903 = vshrl.u32 %v902, 7
    %v904 = vsub.s32 %v901, %v903
    %v905 = vrot.slane %v889, %v904
    %v907 = vunpack.c.l.s4 1966171168
    %v908 = vunpack.c.0.s8 %v907
    %v909 = vlaneseq
    %v910 = vshrl.u32 %v909, 7
    %v911 = vsub.s32 %v908, %v910
    %v912 = vrot.slane %v890, %v911
    %v914 = vunpack.c.l.s4 1966171168
    %v915 = vunpack.c.0.s8 %v914
    %v916 = vlaneseq
    %v917 = vshrl.u32 %v916, 7
    %v918 = vsub.s32 %v915, %v917
    %v919 = vrot.slane %v891, %v918
    %v920 = vcombine.high %v898, %v898
    %v921 = vcombine.high %v905, %v905
    %v922 = vcombine.high %v912, %v912
    %v923 = vcombine.high %v919, %v919
    %v924 = vcombine.high %v92, %v92
    %v926 = vunpack.c.l.s4 1966171168
    %v927 = vunpack.c.0.s8 %v926
    %v928 = vlaneseq
    %v929 = vshrl.u32 %v928, 7
    %v930 = vsub.s32 %v927, %v929
    %v931 = vrot.slane %v92, %v930
    %v933 = vunpack.c.l.s4 1966171168
    %v934 = vunpack.c.0.s8 %v933
    %v935 = vlaneseq
    %v936 = vshrl.u32 %v935, 7
    %v937 = vsub.s32 %v934, %v936
    %v938 = vrot.slane %v924, %v937
    %v939 = vcombine.high %v931, %v931
    %v940 = vcombine.high %v938, %v938
    %v942 = vunpack.c.l.s4 1966171168
    %v943 = vunpack.c.0.s8 %v942
    %v944 = vlaneseq
    %v945 = vshrl.u32 %v944, 7
    %v946 = vsub.s32 %v943, %v945
    %v947 = vrot.slane %v931, %v946
    %v949 = vunpack.c.l.s4 1966171168
    %v950 = vunpack.c.0.s8 %v949
    %v951 = vlaneseq
    %v952 = vshrl.u32 %v951, 7
    %v953 = vsub.s32 %v950, %v952
    %v954 = vrot.slane %v938, %v953
    %v956 = vunpack.c.l.s4 1966171168
    %v957 = vunpack.c.0.s8 %v956
    %v958 = vlaneseq
    %v959 = vshrl.u32 %v958, 7
    %v960 = vsub.s32 %v957, %v959
    %v961 = vrot.slane %v939, %v960
    %v963 = vunpack.c.l.s4 1966171168
    %v964 = vunpack.c.0.s8 %v963
    %v965 = vlaneseq
    %v966 = vshrl.u32 %v965, 7
    %v967 = vsub.s32 %v964, %v966
    %v968 = vrot.slane %v940, %v967
    %v969 = vcombine.high %v947, %v947
    %v970 = vcombine.high %v954, %v954
    %v971 = vcombine.high %v961, %v961
    %v972 = vcombine.high %v968, %v968
    %v973 = vcombine.high %v93, %v93
    %v975 = vunpack.c.l.s4 1966171168
    %v976 = vunpack.c.0.s8 %v975
    %v977 = vlaneseq
    %v978 = vshrl.u32 %v977, 7
    %v979 = vsub.s32 %v976, %v978
    %v980 = vrot.slane %v93, %v979
    %v982 = vunpack.c.l.s4 1966171168
    %v983 = vunpack.c.0.s8 %v982
    %v984 = vlaneseq
    %v985 = vshrl.u32 %v984, 7
    %v986 = vsub.s32 %v983, %v985
    %v987 = vrot.slane %v973, %v986
    %v988 = vcombine.high %v980, %v980
    %v989 = vcombine.high %v987, %v987
    %v991 = vunpack.c.l.s4 1966171168
    %v992 = vunpack.c.0.s8 %v991
    %v993 = vlaneseq
    %v994 = vshrl.u32 %v993, 7
    %v995 = vsub.s32 %v992, %v994
    %v996 = vrot.slane %v980, %v995
    %v998 = vunpack.c.l.s4 1966171168
    %v999 = vunpack.c.0.s8 %v998
    %v1000 = vlaneseq
    %v1001 = vshrl.u32 %v1000, 7
    %v1002 = vsub.s32 %v999, %v1001
    %v1003 = vrot.slane %v987, %v1002
    %v1005 = vunpack.c.l.s4 1966171168
    %v1006 = vunpack.c.0.s8 %v1005
    %v1007 = vlaneseq
    %v1008 = vshrl.u32 %v1007, 7
    %v1009 = vsub.s32 %v1006, %v1008
    %v1010 = vrot.slane %v988, %v1009
    %v1012 = vunpack.c.l.s4 1966171168
    %v1013 = vunpack.c.0.s8 %v1012
    %v1014 = vlaneseq
    %v1015 = vshrl.u32 %v1014, 7
    %v1016 = vsub.s32 %v1013, %v1015
    %v1017 = vrot.slane %v989, %v1016
    %v1018 = vcombine.high %v996, %v996
    %v1019 = vcombine.high %v1003, %v1003
    %v1020 = vcombine.high %v1010, %v1010
    %v1021 = vcombine.high %v1017, %v1017
    %v1022 = vcombine.high %v94, %v94
    %v1024 = vunpack.c.l.s4 1966171168
    %v1025 = vunpack.c.0.s8 %v1024
    %v1026 = vlaneseq
    %v1027 = vshrl.u32 %v1026, 7
    %v1028 = vsub.s32 %v1025, %v1027
    %v1029 = vrot.slane %v94, %v1028
    %v1031 = vunpack.c.l.s4 1966171168
    %v1032 = vunpack.c.0.s8 %v1031
    %v1033 = vlaneseq
    %v1034 = vshrl.u32 %v1033, 7
    %v1035 = vsub.s32 %v1032, %v1034
    %v1036 = vrot.slane %v1022, %v1035
    %v1037 = vcombine.high %v1029, %v1029
    %v1038 = vcombine.high %v1036, %v1036
    %v1040 = vunpack.c.l.s4 1966171168
    %v1041 = vunpack.c.0.s8 %v1040
    %v1042 = vlaneseq
    %v1043 = vshrl.u32 %v1042, 7
    %v1044 = vsub.s32 %v1041, %v1043
    %v1045 = vrot.slane %v1029, %v1044
    %v1047 = vunpack.c.l.s4 1966171168
    %v1048 = vunpack.c.0.s8 %v1047
    %v1049 = vlaneseq
    %v1050 = vshrl.u32 %v1049, 7
    %v1051 = vsub.s32 %v1048, %v1050
    %v1052 = vrot.slane %v1036, %v1051
    %v1054 = vunpack.c.l.s4 1966171168
    %v1055 = vunpack.c.0.s8 %v1054
    %v1056 = vlaneseq
    %v1057 = vshrl.u32 %v1056, 7
    %v1058 = vsub.s32 %v1055, %v1057
    %v1059 = vrot.slane %v1037, %v1058
    %v1061 = vunpack.c.l.s4 1966171168
    %v1062 = vunpack.c.0.s8 %v1061
    %v1063 = vlaneseq
    %v1064 = vshrl.u32 %v1063, 7
    %v1065 = vsub.s32 %v1062, %v1064
    %v1066 = vrot.slane %v1038, %v1065
    %v1067 = vcombine.high %v1045, %v1045
    %v1068 = vcombine.high %v1052, %v1052
    %v1069 = vcombine.high %v1059, %v1059
    %v1070 = vcombine.high %v1066, %v1066
    %v1071 = vcombine.high %v95, %v95
    %v1073 = vunpack.c.l.s4 1966171168
    %v1074 = vunpack.c.0.s8 %v1073
    %v1075 = vlaneseq
    %v1076 = vshrl.u32 %v1075, 7
    %v1077 = vsub.s32 %v1074, %v1076
    %v1078 = vrot.slane %v95, %v1077
    %v1080 = vunpack.c.l.s4 1966171168
    %v1081 = vunpack.c.0.s8 %v1080
    %v1082 = vlaneseq
    %v1083 = vshrl.u32 %v1082, 7
    %v1084 = vsub.s32 %v1081, %v1083
    %v1085 = vrot.slane %v1071, %v1084
    %v1086 = vcombine.high %v1078, %v1078
    %v1087 = vcombine.high %v1085, %v1085
    %v1089 = vunpack.c.l.s4 1966171168
    %v1090 = vunpack.c.0.s8 %v1089
    %v1091 = vlaneseq
    %v1092 = vshrl.u32 %v1091, 7
    %v1093 = vsub.s32 %v1090, %v1092
    %v1094 = vrot.slane %v1078, %v1093
    %v1096 = vunpack.c.l.s4 1966171168
    %v1097 = vunpack.c.0.s8 %v1096
    %v1098 = vlaneseq
    %v1099 = vshrl.u32 %v1098, 7
    %v1100 = vsub.s32 %v1097, %v1099
    %v1101 = vrot.slane %v1085, %v1100
    %v1103 = vunpack.c.l.s4 1966171168
    %v1104 = vunpack.c.0.s8 %v1103
    %v1105 = vlaneseq
    %v1106 = vshrl.u32 %v1105, 7
    %v1107 = vsub.s32 %v1104, %v1106
    %v1108 = vrot.slane %v1086, %v1107
    %v1110 = vunpack.c.l.s4 1966171168
    %v1111 = vunpack.c.0.s8 %v1110
    %v1112 = vlaneseq
    %v1113 = vshrl.u32 %v1112, 7
    %v1114 = vsub.s32 %v1111, %v1113
    %v1115 = vrot.slane %v1087, %v1114
    %v1116 = vcombine.high %v1094, %v1094
    %v1117 = vcombine.high %v1101, %v1101
    %v1118 = vcombine.high %v1108, %v1108
    %v1119 = vcombine.high %v1115, %v1115
    %v1120 = vcombine.high %v96, %v96
    %v1122 = vunpack.c.l.s4 1966171168
    %v1123 = vunpack.c.0.s8 %v1122
    %v1124 = vlaneseq
    %v1125 = vshrl.u32 %v1124, 7
    %v1126 = vsub.s32 %v1123, %v1125
    %v1127 = vrot.slane %v96, %v1126
    %v1129 = vunpack.c.l.s4 1966171168
    %v1130 = vunpack.c.0.s8 %v1129
    %v1131 = vlaneseq
    %v1132 = vshrl.u32 %v1131, 7
    %v1133 = vsub.s32 %v1130, %v1132
    %v1134 = vrot.slane %v1120, %v1133
    %v1135 = vcombine.high %v1127, %v1127
    %v1136 = vcombine.high %v1134, %v1134
    %v1138 = vunpack.c.l.s4 1966171168
    %v1139 = vunpack.c.0.s8 %v1138
    %v1140 = vlaneseq
    %v1141 = vshrl.u32 %v1140, 7
    %v1142 = vsub.s32 %v1139, %v1141
    %v1143 = vrot.slane %v1127, %v1142
    %v1145 = vunpack.c.l.s4 1966171168
    %v1146 = vunpack.c.0.s8 %v1145
    %v1147 = vlaneseq
    %v1148 = vshrl.u32 %v1147, 7
    %v1149 = vsub.s32 %v1146, %v1148
    %v1150 = vrot.slane %v1134, %v1149
    %v1152 = vunpack.c.l.s4 1966171168
    %v1153 = vunpack.c.0.s8 %v1152
    %v1154 = vlaneseq
    %v1155 = vshrl.u32 %v1154, 7
    %v1156 = vsub.s32 %v1153, %v1155
    %v1157 = vrot.slane %v1135, %v1156
    %v1159 = vunpack.c.l.s4 1966171168
    %v1160 = vunpack.c.0.s8 %v1159
    %v1161 = vlaneseq
    %v1162 = vshrl.u32 %v1161, 7
    %v1163 = vsub.s32 %v1160, %v1162
    %v1164 = vrot.slane %v1136, %v1163
    %v1165 = vcombine.high %v1143, %v1143
    %v1166 = vcombine.high %v1150, %v1150
    %v1167 = vcombine.high %v1157, %v1157
    %v1168 = vcombine.high %v1164, %v1164
    %v1169 = vcombine.high %v97, %v97
    %v1171 = vunpack.c.l.s4 1966171168
    %v1172 = vunpack.c.0.s8 %v1171
    %v1173 = vlaneseq
    %v1174 = vshrl.u32 %v1173, 7
    %v1175 = vsub.s32 %v1172, %v1174
    %v1176 = vrot.slane %v97, %v1175
    %v1178 = vunpack.c.l.s4 1966171168
    %v1179 = vunpack.c.0.s8 %v1178
    %v1180 = vlaneseq
    %v1181 = vshrl.u32 %v1180, 7
    %v1182 = vsub.s32 %v1179, %v1181
    %v1183 = vrot.slane %v1169, %v1182
    %v1184 = vcombine.high %v1176, %v1176
    %v1185 = vcombine.high %v1183, %v1183
    %v1187 = vunpack.c.l.s4 1966171168
    %v1188 = vunpack.c.0.s8 %v1187
    %v1189 = vlaneseq
    %v1190 = vshrl.u32 %v1189, 7
    %v1191 = vsub.s32 %v1188, %v1190
    %v1192 = vrot.slane %v1176, %v1191
    %v1194 = vunpack.c.l.s4 1966171168
    %v1195 = vunpack.c.0.s8 %v1194
    %v1196 = vlaneseq
    %v1197 = vshrl.u32 %v1196, 7
    %v1198 = vsub.s32 %v1195, %v1197
    %v1199 = vrot.slane %v1183, %v1198
    %v1201 = vunpack.c.l.s4 1966171168
    %v1202 = vunpack.c.0.s8 %v1201
    %v1203 = vlaneseq
    %v1204 = vshrl.u32 %v1203, 7
    %v1205 = vsub.s32 %v1202, %v1204
    %v1206 = vrot.slane %v1184, %v1205
    %v1208 = vunpack.c.l.s4 1966171168
    %v1209 = vunpack.c.0.s8 %v1208
    %v1210 = vlaneseq
    %v1211 = vshrl.u32 %v1210, 7
    %v1212 = vsub.s32 %v1209, %v1211
    %v1213 = vrot.slane %v1185, %v1212
    %v1214 = vcombine.high %v1192, %v1192
    %v1215 = vcombine.high %v1199, %v1199
    %v1216 = vcombine.high %v1206, %v1206
    %v1217 = vcombine.high %v1213, %v1213
    %v1218 = vcombine.high %v98, %v98
    %v1220 = vunpack.c.l.s4 1966171168
    %v1221 = vunpack.c.0.s8 %v1220
    %v1222 = vlaneseq
    %v1223 = vshrl.u32 %v1222, 7
    %v1224 = vsub.s32 %v1221, %v1223
    %v1225 = vrot.slane %v98, %v1224
    %v1227 = vunpack.c.l.s4 1966171168
    %v1228 = vunpack.c.0.s8 %v1227
    %v1229 = vlaneseq
    %v1230 = vshrl.u32 %v1229, 7
    %v1231 = vsub.s32 %v1228, %v1230
    %v1232 = vrot.slane %v1218, %v1231
    %v1233 = vcombine.high %v1225, %v1225
    %v1234 = vcombine.high %v1232, %v1232
    %v1236 = vunpack.c.l.s4 1966171168
    %v1237 = vunpack.c.0.s8 %v1236
    %v1238 = vlaneseq
    %v1239 = vshrl.u32 %v1238, 7
    %v1240 = vsub.s32 %v1237, %v1239
    %v1241 = vrot.slane %v1225, %v1240
    %v1243 = vunpack.c.l.s4 1966171168
    %v1244 = vunpack.c.0.s8 %v1243
    %v1245 = vlaneseq
    %v1246 = vshrl.u32 %v1245, 7
    %v1247 = vsub.s32 %v1244, %v1246
    %v1248 = vrot.slane %v1232, %v1247
    %v1250 = vunpack.c.l.s4 1966171168
    %v1251 = vunpack.c.0.s8 %v1250
    %v1252 = vlaneseq
    %v1253 = vshrl.u32 %v1252, 7
    %v1254 = vsub.s32 %v1251, %v1253
    %v1255 = vrot.slane %v1233, %v1254
    %v1257 = vunpack.c.l.s4 1966171168
    %v1258 = vunpack.c.0.s8 %v1257
    %v1259 = vlaneseq
    %v1260 = vshrl.u32 %v1259, 7
    %v1261 = vsub.s32 %v1258, %v1260
    %v1262 = vrot.slane %v1234, %v1261
    %v1263 = vcombine.high %v1241, %v1241
    %v1264 = vcombine.high %v1248, %v1248
    %v1265 = vcombine.high %v1255, %v1255
    %v1266 = vcombine.high %v1262, %v1262
    %v1267 = vcombine.high %v99, %v99
    %v1269 = vunpack.c.l.s4 1966171168
    %v1270 = vunpack.c.0.s8 %v1269
    %v1271 = vlaneseq
    %v1272 = vshrl.u32 %v1271, 7
    %v1273 = vsub.s32 %v1270, %v1272
    %v1274 = vrot.slane %v99, %v1273
    %v1276 = vunpack.c.l.s4 1966171168
    %v1277 = vunpack.c.0.s8 %v1276
    %v1278 = vlaneseq
    %v1279 = vshrl.u32 %v1278, 7
    %v1280 = vsub.s32 %v1277, %v1279
    %v1281 = vrot.slane %v1267, %v1280
    %v1282 = vcombine.high %v1274, %v1274
    %v1283 = vcombine.high %v1281, %v1281
    %v1285 = vunpack.c.l.s4 1966171168
    %v1286 = vunpack.c.0.s8 %v1285
    %v1287 = vlaneseq
    %v1288 = vshrl.u32 %v1287, 7
    %v1289 = vsub.s32 %v1286, %v1288
    %v1290 = vrot.slane %v1274, %v1289
    %v1292 = vunpack.c.l.s4 1966171168
    %v1293 = vunpack.c.0.s8 %v1292
    %v1294 = vlaneseq
    %v1295 = vshrl.u32 %v1294, 7
    %v1296 = vsub.s32 %v1293, %v1295
    %v1297 = vrot.slane %v1281, %v1296
    %v1299 = vunpack.c.l.s4 1966171168
    %v1300 = vunpack.c.0.s8 %v1299
    %v1301 = vlaneseq
    %v1302 = vshrl.u32 %v1301, 7
    %v1303 = vsub.s32 %v1300, %v1302
    %v1304 = vrot.slane %v1282, %v1303
    %v1306 = vunpack.c.l.s4 1966171168
    %v1307 = vunpack.c.0.s8 %v1306
    %v1308 = vlaneseq
    %v1309 = vshrl.u32 %v1308, 7
    %v1310 = vsub.s32 %v1307, %v1309
    %v1311 = vrot.slane %v1283, %v1310
    %v1312 = vcombine.high %v1290, %v1290
    %v1313 = vcombine.high %v1297, %v1297
    %v1314 = vcombine.high %v1304, %v1304
    %v1315 = vcombine.high %v1311, %v1311
    %v1316 = vcombine.high %v100, %v100
    %v1318 = vunpack.c.l.s4 1966171168
    %v1319 = vunpack.c.0.s8 %v1318
    %v1320 = vlaneseq
    %v1321 = vshrl.u32 %v1320, 7
    %v1322 = vsub.s32 %v1319, %v1321
    %v1323 = vrot.slane %v100, %v1322
    %v1325 = vunpack.c.l.s4 1966171168
    %v1326 = vunpack.c.0.s8 %v1325
    %v1327 = vlaneseq
    %v1328 = vshrl.u32 %v1327, 7
    %v1329 = vsub.s32 %v1326, %v1328
    %v1330 = vrot.slane %v1316, %v1329
    %v1331 = vcombine.high %v1323, %v1323
    %v1332 = vcombine.high %v1330, %v1330
    %v1334 = vunpack.c.l.s4 1966171168
    %v1335 = vunpack.c.0.s8 %v1334
    %v1336 = vlaneseq
    %v1337 = vshrl.u32 %v1336, 7
    %v1338 = vsub.s32 %v1335, %v1337
    %v1339 = vrot.slane %v1323, %v1338
    %v1341 = vunpack.c.l.s4 1966171168
    %v1342 = vunpack.c.0.s8 %v1341
    %v1343 = vlaneseq
    %v1344 = vshrl.u32 %v1343, 7
    %v1345 = vsub.s32 %v1342, %v1344
    %v1346 = vrot.slane %v1330, %v1345
    %v1348 = vunpack.c.l.s4 1966171168
    %v1349 = vunpack.c.0.s8 %v1348
    %v1350 = vlaneseq
    %v1351 = vshrl.u32 %v1350, 7
    %v1352 = vsub.s32 %v1349, %v1351
    %v1353 = vrot.slane %v1331, %v1352
    %v1355 = vunpack.c.l.s4 1966171168
    %v1356 = vunpack.c.0.s8 %v1355
    %v1357 = vlaneseq
    %v1358 = vshrl.u32 %v1357, 7
    %v1359 = vsub.s32 %v1356, %v1358
    %v1360 = vrot.slane %v1332, %v1359
    %v1361 = vcombine.high %v1339, %v1339
    %v1362 = vcombine.high %v1346, %v1346
    %v1363 = vcombine.high %v1353, %v1353
    %v1364 = vcombine.high %v1360, %v1360
    %v1365 = vcombine.high %v101, %v101
    %v1367 = vunpack.c.l.s4 1966171168
    %v1368 = vunpack.c.0.s8 %v1367
    %v1369 = vlaneseq
    %v1370 = vshrl.u32 %v1369, 7
    %v1371 = vsub.s32 %v1368, %v1370
    %v1372 = vrot.slane %v101, %v1371
    %v1374 = vunpack.c.l.s4 1966171168
    %v1375 = vunpack.c.0.s8 %v1374
    %v1376 = vlaneseq
    %v1377 = vshrl.u32 %v1376, 7
    %v1378 = vsub.s32 %v1375, %v1377
    %v1379 = vrot.slane %v1365, %v1378
    %v1380 = vcombine.high %v1372, %v1372
    %v1381 = vcombine.high %v1379, %v1379
    %v1383 = vunpack.c.l.s4 1966171168
    %v1384 = vunpack.c.0.s8 %v1383
    %v1385 = vlaneseq
    %v1386 = vshrl.u32 %v1385, 7
    %v1387 = vsub.s32 %v1384, %v1386
    %v1388 = vrot.slane %v1372, %v1387
    %v1390 = vunpack.c.l.s4 1966171168
    %v1391 = vunpack.c.0.s8 %v1390
    %v1392 = vlaneseq
    %v1393 = vshrl.u32 %v1392, 7
    %v1394 = vsub.s32 %v1391, %v1393
    %v1395 = vrot.slane %v1379, %v1394
    %v1397 = vunpack.c.l.s4 1966171168
    %v1398 = vunpack.c.0.s8 %v1397
    %v1399 = vlaneseq
    %v1400 = vshrl.u32 %v1399, 7
    %v1401 = vsub.s32 %v1398, %v1400
    %v1402 = vrot.slane %v1380, %v1401
    %v1404 = vunpack.c.l.s4 1966171168
    %v1405 = vunpack.c.0.s8 %v1404
    %v1406 = vlaneseq
    %v1407 = vshrl.u32 %v1406, 7
    %v1408 = vsub.s32 %v1405, %v1407
    %v1409 = vrot.slane %v1381, %v1408
    %v1410 = vcombine.high %v1388, %v1388
    %v1411 = vcombine.high %v1395, %v1395
    %v1412 = vcombine.high %v1402, %v1402
    %v1413 = vcombine.high %v1409, %v1409
    %v1414 = vcombine.high %v102, %v102
    %v1416 = vunpack.c.l.s4 1966171168
    %v1417 = vunpack.c.0.s8 %v1416
    %v1418 = vlaneseq
    %v1419 = vshrl.u32 %v1418, 7
    %v1420 = vsub.s32 %v1417, %v1419
    %v1421 = vrot.slane %v102, %v1420
    %v1423 = vunpack.c.l.s4 1966171168
    %v1424 = vunpack.c.0.s8 %v1423
    %v1425 = vlaneseq
    %v1426 = vshrl.u32 %v1425, 7
    %v1427 = vsub.s32 %v1424, %v1426
    %v1428 = vrot.slane %v1414, %v1427
    %v1429 = vcombine.high %v1421, %v1421
    %v1430 = vcombine.high %v1428, %v1428
    %v1432 = vunpack.c.l.s4 1966171168
    %v1433 = vunpack.c.0.s8 %v1432
    %v1434 = vlaneseq
    %v1435 = vshrl.u32 %v1434, 7
    %v1436 = vsub.s32 %v1433, %v1435
    %v1437 = vrot.slane %v1421, %v1436
    %v1439 = vunpack.c.l.s4 1966171168
    %v1440 = vunpack.c.0.s8 %v1439
    %v1441 = vlaneseq
    %v1442 = vshrl.u32 %v1441, 7
    %v1443 = vsub.s32 %v1440, %v1442
    %v1444 = vrot.slane %v1428, %v1443
    %v1446 = vunpack.c.l.s4 1966171168
    %v1447 = vunpack.c.0.s8 %v1446
    %v1448 = vlaneseq
    %v1449 = vshrl.u32 %v1448, 7
    %v1450 = vsub.s32 %v1447, %v1449
    %v1451 = vrot.slane %v1429, %v1450
    %v1453 = vunpack.c.l.s4 1966171168
    %v1454 = vunpack.c.0.s8 %v1453
    %v1455 = vlaneseq
    %v1456 = vshrl.u32 %v1455, 7
    %v1457 = vsub.s32 %v1454, %v1456
    %v1458 = vrot.slane %v1430, %v1457
    %v1459 = vcombine.high %v1437, %v1437
    %v1460 = vcombine.high %v1444, %v1444
    %v1461 = vcombine.high %v1451, %v1451
    %v1462 = vcombine.high %v1458, %v1458
    %v1463 = vcombine.high %v103, %v103
    %v1465 = vunpack.c.l.s4 1966171168
    %v1466 = vunpack.c.0.s8 %v1465
    %v1467 = vlaneseq
    %v1468 = vshrl.u32 %v1467, 7
    %v1469 = vsub.s32 %v1466, %v1468
    %v1470 = vrot.slane %v103, %v1469
    %v1472 = vunpack.c.l.s4 1966171168
    %v1473 = vunpack.c.0.s8 %v1472
    %v1474 = vlaneseq
    %v1475 = vshrl.u32 %v1474, 7
    %v1476 = vsub.s32 %v1473, %v1475
    %v1477 = vrot.slane %v1463, %v1476
    %v1478 = vcombine.high %v1470, %v1470
    %v1479 = vcombine.high %v1477, %v1477
    %v1481 = vunpack.c.l.s4 1966171168
    %v1482 = vunpack.c.0.s8 %v1481
    %v1483 = vlaneseq
    %v1484 = vshrl.u32 %v1483, 7
    %v1485 = vsub.s32 %v1482, %v1484
    %v1486 = vrot.slane %v1470, %v1485
    %v1488 = vunpack.c.l.s4 1966171168
    %v1489 = vunpack.c.0.s8 %v1488
    %v1490 = vlaneseq
    %v1491 = vshrl.u32 %v1490, 7
    %v1492 = vsub.s32 %v1489, %v1491
    %v1493 = vrot.slane %v1477, %v1492
    %v1495 = vunpack.c.l.s4 1966171168
    %v1496 = vunpack.c.0.s8 %v1495
    %v1497 = vlaneseq
    %v1498 = vshrl.u32 %v1497, 7
    %v1499 = vsub.s32 %v1496, %v1498
    %v1500 = vrot.slane %v1478, %v1499
    %v1502 = vunpack.c.l.s4 1966171168
    %v1503 = vunpack.c.0.s8 %v1502
    %v1504 = vlaneseq
    %v1505 = vshrl.u32 %v1504, 7
    %v1506 = vsub.s32 %v1503, %v1505
    %v1507 = vrot.slane %v1479, %v1506
    %v1508 = vcombine.high %v1486, %v1486
    %v1509 = vcombine.high %v1493, %v1493
    %v1510 = vcombine.high %v1500, %v1500
    %v1511 = vcombine.high %v1507, %v1507
    %v1512 = vcombine.high %v104, %v104
    %v1514 = vunpack.c.l.s4 1966171168
    %v1515 = vunpack.c.0.s8 %v1514
    %v1516 = vlaneseq
    %v1517 = vshrl.u32 %v1516, 7
    %v1518 = vsub.s32 %v1515, %v1517
    %v1519 = vrot.slane %v104, %v1518
    %v1521 = vunpack.c.l.s4 1966171168
    %v1522 = vunpack.c.0.s8 %v1521
    %v1523 = vlaneseq
    %v1524 = vshrl.u32 %v1523, 7
    %v1525 = vsub.s32 %v1522, %v1524
    %v1526 = vrot.slane %v1512, %v1525
    %v1527 = vcombine.high %v1519, %v1519
    %v1528 = vcombine.high %v1526, %v1526
    %v1530 = vunpack.c.l.s4 1966171168
    %v1531 = vunpack.c.0.s8 %v1530
    %v1532 = vlaneseq
    %v1533 = vshrl.u32 %v1532, 7
    %v1534 = vsub.s32 %v1531, %v1533
    %v1535 = vrot.slane %v1519, %v1534
    %v1537 = vunpack.c.l.s4 1966171168
    %v1538 = vunpack.c.0.s8 %v1537
    %v1539 = vlaneseq
    %v1540 = vshrl.u32 %v1539, 7
    %v1541 = vsub.s32 %v1538, %v1540
    %v1542 = vrot.slane %v1526, %v1541
    %v1544 = vunpack.c.l.s4 1966171168
    %v1545 = vunpack.c.0.s8 %v1544
    %v1546 = vlaneseq
    %v1547 = vshrl.u32 %v1546, 7
    %v1548 = vsub.s32 %v1545, %v1547
    %v1549 = vrot.slane %v1527, %v1548
    %v1551 = vunpack.c.l.s4 1966171168
    %v1552 = vunpack.c.0.s8 %v1551
    %v1553 = vlaneseq
    %v1554 = vshrl.u32 %v1553, 7
    %v1555 = vsub.s32 %v1552, %v1554
    %v1556 = vrot.slane %v1528, %v1555
    %v1557 = vcombine.high %v1535, %v1535
    %v1558 = vcombine.high %v1542, %v1542
    %v1559 = vcombine.high %v1549, %v1549
    %v1560 = vcombine.high %v1556, %v1556
    %v1561 = vcombine.high %v105, %v105
    %v1563 = vunpack.c.l.s4 1966171168
    %v1564 = vunpack.c.0.s8 %v1563
    %v1565 = vlaneseq
    %v1566 = vshrl.u32 %v1565, 7
    %v1567 = vsub.s32 %v1564, %v1566
    %v1568 = vrot.slane %v105, %v1567
    %v1570 = vunpack.c.l.s4 1966171168
    %v1571 = vunpack.c.0.s8 %v1570
    %v1572 = vlaneseq
    %v1573 = vshrl.u32 %v1572, 7
    %v1574 = vsub.s32 %v1571, %v1573
    %v1575 = vrot.slane %v1561, %v1574
    %v1576 = vcombine.high %v1568, %v1568
    %v1577 = vcombine.high %v1575, %v1575
    %v1579 = vunpack.c.l.s4 1966171168
    %v1580 = vunpack.c.0.s8 %v1579
    %v1581 = vlaneseq
    %v1582 = vshrl.u32 %v1581, 7
    %v1583 = vsub.s32 %v1580, %v1582
    %v1584 = vrot.slane %v1568, %v1583
    %v1586 = vunpack.c.l.s4 1966171168
    %v1587 = vunpack.c.0.s8 %v1586
    %v1588 = vlaneseq
    %v1589 = vshrl.u32 %v1588, 7
    %v1590 = vsub.s32 %v1587, %v1589
    %v1591 = vrot.slane %v1575, %v1590
    %v1593 = vunpack.c.l.s4 1966171168
    %v1594 = vunpack.c.0.s8 %v1593
    %v1595 = vlaneseq
    %v1596 = vshrl.u32 %v1595, 7
    %v1597 = vsub.s32 %v1594, %v1596
    %v1598 = vrot.slane %v1576, %v1597
    %v1600 = vunpack.c.l.s4 1966171168
    %v1601 = vunpack.c.0.s8 %v1600
    %v1602 = vlaneseq
    %v1603 = vshrl.u32 %v1602, 7
    %v1604 = vsub.s32 %v1601, %v1603
    %v1605 = vrot.slane %v1577, %v1604
    %v1606 = vcombine.high %v1584, %v1584
    %v1607 = vcombine.high %v1591, %v1591
    %v1608 = vcombine.high %v1598, %v1598
    %v1609 = vcombine.high %v1605, %v1605
    %v1610 = vcombine.high %v106, %v106
    %v1612 = vunpack.c.l.s4 1966171168
    %v1613 = vunpack.c.0.s8 %v1612
    %v1614 = vlaneseq
    %v1615 = vshrl.u32 %v1614, 7
    %v1616 = vsub.s32 %v1613, %v1615
    %v1617 = vrot.slane %v106, %v1616
    %v1619 = vunpack.c.l.s4 1966171168
    %v1620 = vunpack.c.0.s8 %v1619
    %v1621 = vlaneseq
    %v1622 = vshrl.u32 %v1621, 7
    %v1623 = vsub.s32 %v1620, %v1622
    %v1624 = vrot.slane %v1610, %v1623
    %v1625 = vcombine.high %v1617, %v1617
    %v1626 = vcombine.high %v1624, %v1624
    %v1628 = vunpack.c.l.s4 1966171168
    %v1629 = vunpack.c.0.s8 %v1628
    %v1630 = vlaneseq
    %v1631 = vshrl.u32 %v1630, 7
    %v1632 = vsub.s32 %v1629, %v1631
    %v1633 = vrot.slane %v1617, %v1632
    %v1635 = vunpack.c.l.s4 1966171168
    %v1636 = vunpack.c.0.s8 %v1635
    %v1637 = vlaneseq
    %v1638 = vshrl.u32 %v1637, 7
    %v1639 = vsub.s32 %v1636, %v1638
    %v1640 = vrot.slane %v1624, %v1639
    %v1642 = vunpack.c.l.s4 1966171168
    %v1643 = vunpack.c.0.s8 %v1642
    %v1644 = vlaneseq
    %v1645 = vshrl.u32 %v1644, 7
    %v1646 = vsub.s32 %v1643, %v1645
    %v1647 = vrot.slane %v1625, %v1646
    %v1649 = vunpack.c.l.s4 1966171168
    %v1650 = vunpack.c.0.s8 %v1649
    %v1651 = vlaneseq
    %v1652 = vshrl.u32 %v1651, 7
    %v1653 = vsub.s32 %v1650, %v1652
    %v1654 = vrot.slane %v1626, %v1653
    %v1655 = vcombine.high %v1633, %v1633
    %v1656 = vcombine.high %v1640, %v1640
    %v1657 = vcombine.high %v1647, %v1647
    %v1658 = vcombine.high %v1654, %v1654
    %v1659 = vcombine.high %v107, %v107
    %v1661 = vunpack.c.l.s4 1966171168
    %v1662 = vunpack.c.0.s8 %v1661
    %v1663 = vlaneseq
    %v1664 = vshrl.u32 %v1663, 7
    %v1665 = vsub.s32 %v1662, %v1664
    %v1666 = vrot.slane %v107, %v1665
    %v1668 = vunpack.c.l.s4 1966171168
    %v1669 = vunpack.c.0.s8 %v1668
    %v1670 = vlaneseq
    %v1671 = vshrl.u32 %v1670, 7
    %v1672 = vsub.s32 %v1669, %v1671
    %v1673 = vrot.slane %v1659, %v1672
    %v1674 = vcombine.high %v1666, %v1666
    %v1675 = vcombine.high %v1673, %v1673
    %v1677 = vunpack.c.l.s4 1966171168
    %v1678 = vunpack.c.0.s8 %v1677
    %v1679 = vlaneseq
    %v1680 = vshrl.u32 %v1679, 7
    %v1681 = vsub.s32 %v1678, %v1680
    %v1682 = vrot.slane %v1666, %v1681
    %v1684 = vunpack.c.l.s4 1966171168
    %v1685 = vunpack.c.0.s8 %v1684
    %v1686 = vlaneseq
    %v1687 = vshrl.u32 %v1686, 7
    %v1688 = vsub.s32 %v1685, %v1687
    %v1689 = vrot.slane %v1673, %v1688
    %v1691 = vunpack.c.l.s4 1966171168
    %v1692 = vunpack.c.0.s8 %v1691
    %v1693 = vlaneseq
    %v1694 = vshrl.u32 %v1693, 7
    %v1695 = vsub.s32 %v1692, %v1694
    %v1696 = vrot.slane %v1674, %v1695
    %v1698 = vunpack.c.l.s4 1966171168
    %v1699 = vunpack.c.0.s8 %v1698
    %v1700 = vlaneseq
    %v1701 = vshrl.u32 %v1700, 7
    %v1702 = vsub.s32 %v1699, %v1701
    %v1703 = vrot.slane %v1675, %v1702
    %v1704 = vcombine.high %v1682, %v1682
    %v1705 = vcombine.high %v1689, %v1689
    %v1706 = vcombine.high %v1696, %v1696
    %v1707 = vcombine.high %v1703, %v1703
    %v1708 = vld [vmem:[#allocation2] sm:$0xff]
    %v1709 = vld [vmem:[#allocation2 + $0x8] sm:$0xff]
    %v1710 = vld [vmem:[#allocation2 + $0x10] sm:$0xff]
    %v1711 = vld [vmem:[#allocation2 + $0x18] sm:$0xff]
    %v1712 = vld [vmem:[#allocation2 + $0x20] sm:$0xff]
    %v1713 = vld [vmem:[#allocation2 + $0x28] sm:$0xff]
    %v1714 = vld [vmem:[#allocation2 + $0x30] sm:$0xff]
    %v1715 = vld [vmem:[#allocation2 + $0x38] sm:$0xff]
    %v1716 = vld [vmem:[#allocation2 + $0x40] sm:$0xff]
    %v1717 = vld [vmem:[#allocation2 + $0x48] sm:$0xff]
    %v1718 = vld [vmem:[#allocation2 + $0x50] sm:$0xff]
    %v1719 = vld [vmem:[#allocation2 + $0x58] sm:$0xff]
    %v1720 = vld [vmem:[#allocation2 + $0x60] sm:$0xff]
    %v1721 = vld [vmem:[#allocation2 + $0x68] sm:$0xff]
    %v1722 = vld [vmem:[#allocation2 + $0x70] sm:$0xff]
    %v1723 = vld [vmem:[#allocation2 + $0x78] sm:$0xff]
    %v1724 = vld [vmem:[#allocation2 + $0x80] sm:$0xff]
    %v1725 = vld [vmem:[#allocation2 + $0x88] sm:$0xff]
    %v1726 = vld [vmem:[#allocation2 + $0x90] sm:$0xff]
    %v1727 = vld [vmem:[#allocation2 + $0x98] sm:$0xff]
    %v1728 = vld [vmem:[#allocation2 + $0xa0] sm:$0xff]
    %v1729 = vld [vmem:[#allocation2 + $0xa8] sm:$0xff]
    %v1730 = vld [vmem:[#allocation2 + $0xb0] sm:$0xff]
    %v1731 = vld [vmem:[#allocation2 + $0xb8] sm:$0xff]
    %v1732 = vld [vmem:[#allocation2 + $0xc0] sm:$0xff]
    %v1733 = vld [vmem:[#allocation2 + $0xc8] sm:$0xff]
    %v1734 = vld [vmem:[#allocation2 + $0xd0] sm:$0xff]
    %v1735 = vld [vmem:[#allocation2 + $0xd8] sm:$0xff]
    %v1736 = vld [vmem:[#allocation2 + $0xe0] sm:$0xff]
    %v1737 = vld [vmem:[#allocation2 + $0xe8] sm:$0xff]
    %v1738 = vld [vmem:[#allocation2 + $0xf0] sm:$0xff]
    %v1739 = vld [vmem:[#allocation2 + $0xf8] sm:$0xff]
    %v1772 = vcombine.high %v1708, %v1708
    %v1774 = vunpack.c.l.s4 1966171168
    %v1775 = vunpack.c.0.s8 %v1774
    %v1776 = vlaneseq
    %v1777 = vshrl.u32 %v1776, 7
    %v1778 = vsub.s32 %v1775, %v1777
    %v1779 = vrot.slane %v1708, %v1778
    %v1781 = vunpack.c.l.s4 1966171168
    %v1782 = vunpack.c.0.s8 %v1781
    %v1783 = vlaneseq
    %v1784 = vshrl.u32 %v1783, 7
    %v1785 = vsub.s32 %v1782, %v1784
    %v1786 = vrot.slane %v1772, %v1785
    %v1787 = vcombine.high %v1779, %v1779
    %v1788 = vcombine.high %v1786, %v1786
    %v1790 = vunpack.c.l.s4 1966171168
    %v1791 = vunpack.c.0.s8 %v1790
    %v1792 = vlaneseq
    %v1793 = vshrl.u32 %v1792, 7
    %v1794 = vsub.s32 %v1791, %v1793
    %v1795 = vrot.slane %v1779, %v1794
    %v1797 = vunpack.c.l.s4 1966171168
    %v1798 = vunpack.c.0.s8 %v1797
    %v1799 = vlaneseq
    %v1800 = vshrl.u32 %v1799, 7
    %v1801 = vsub.s32 %v1798, %v1800
    %v1802 = vrot.slane %v1786, %v1801
    %v1804 = vunpack.c.l.s4 1966171168
    %v1805 = vunpack.c.0.s8 %v1804
    %v1806 = vlaneseq
    %v1807 = vshrl.u32 %v1806, 7
    %v1808 = vsub.s32 %v1805, %v1807
    %v1809 = vrot.slane %v1787, %v1808
    %v1811 = vunpack.c.l.s4 1966171168
    %v1812 = vunpack.c.0.s8 %v1811
    %v1813 = vlaneseq
    %v1814 = vshrl.u32 %v1813, 7
    %v1815 = vsub.s32 %v1812, %v1814
    %v1816 = vrot.slane %v1788, %v1815
    %v1817 = vcombine.high %v1795, %v1795
    %v1818 = vcombine.high %v1802, %v1802
    %v1819 = vcombine.high %v1809, %v1809
    %v1820 = vcombine.high %v1816, %v1816
    %v1821 = vcombine.high %v1709, %v1709
    %v1823 = vunpack.c.l.s4 1966171168
    %v1824 = vunpack.c.0.s8 %v1823
    %v1825 = vlaneseq
    %v1826 = vshrl.u32 %v1825, 7
    %v1827 = vsub.s32 %v1824, %v1826
    %v1828 = vrot.slane %v1709, %v1827
    %v1830 = vunpack.c.l.s4 1966171168
    %v1831 = vunpack.c.0.s8 %v1830
    %v1832 = vlaneseq
    %v1833 = vshrl.u32 %v1832, 7
    %v1834 = vsub.s32 %v1831, %v1833
    %v1835 = vrot.slane %v1821, %v1834
    %v1836 = vcombine.high %v1828, %v1828
    %v1837 = vcombine.high %v1835, %v1835
    %v1839 = vunpack.c.l.s4 1966171168
    %v1840 = vunpack.c.0.s8 %v1839
    %v1841 = vlaneseq
    %v1842 = vshrl.u32 %v1841, 7
    %v1843 = vsub.s32 %v1840, %v1842
    %v1844 = vrot.slane %v1828, %v1843
    %v1846 = vunpack.c.l.s4 1966171168
    %v1847 = vunpack.c.0.s8 %v1846
    %v1848 = vlaneseq
    %v1849 = vshrl.u32 %v1848, 7
    %v1850 = vsub.s32 %v1847, %v1849
    %v1851 = vrot.slane %v1835, %v1850
    %v1853 = vunpack.c.l.s4 1966171168
    %v1854 = vunpack.c.0.s8 %v1853
    %v1855 = vlaneseq
    %v1856 = vshrl.u32 %v1855, 7
    %v1857 = vsub.s32 %v1854, %v1856
    %v1858 = vrot.slane %v1836, %v1857
    %v1860 = vunpack.c.l.s4 1966171168
    %v1861 = vunpack.c.0.s8 %v1860
    %v1862 = vlaneseq
    %v1863 = vshrl.u32 %v1862, 7
    %v1864 = vsub.s32 %v1861, %v1863
    %v1865 = vrot.slane %v1837, %v1864
    %v1866 = vcombine.high %v1844, %v1844
    %v1867 = vcombine.high %v1851, %v1851
    %v1868 = vcombine.high %v1858, %v1858
    %v1869 = vcombine.high %v1865, %v1865
    %v1870 = vcombine.high %v1710, %v1710
    %v1872 = vunpack.c.l.s4 1966171168
    %v1873 = vunpack.c.0.s8 %v1872
    %v1874 = vlaneseq
    %v1875 = vshrl.u32 %v1874, 7
    %v1876 = vsub.s32 %v1873, %v1875
    %v1877 = vrot.slane %v1710, %v1876
    %v1879 = vunpack.c.l.s4 1966171168
    %v1880 = vunpack.c.0.s8 %v1879
    %v1881 = vlaneseq
    %v1882 = vshrl.u32 %v1881, 7
    %v1883 = vsub.s32 %v1880, %v1882
    %v1884 = vrot.slane %v1870, %v1883
    %v1885 = vcombine.high %v1877, %v1877
    %v1886 = vcombine.high %v1884, %v1884
    %v1888 = vunpack.c.l.s4 1966171168
    %v1889 = vunpack.c.0.s8 %v1888
    %v1890 = vlaneseq
    %v1891 = vshrl.u32 %v1890, 7
    %v1892 = vsub.s32 %v1889, %v1891
    %v1893 = vrot.slane %v1877, %v1892
    %v1895 = vunpack.c.l.s4 1966171168
    %v1896 = vunpack.c.0.s8 %v1895
    %v1897 = vlaneseq
    %v1898 = vshrl.u32 %v1897, 7
    %v1899 = vsub.s32 %v1896, %v1898
    %v1900 = vrot.slane %v1884, %v1899
    %v1902 = vunpack.c.l.s4 1966171168
    %v1903 = vunpack.c.0.s8 %v1902
    %v1904 = vlaneseq
    %v1905 = vshrl.u32 %v1904, 7
    %v1906 = vsub.s32 %v1903, %v1905
    %v1907 = vrot.slane %v1885, %v1906
    %v1909 = vunpack.c.l.s4 1966171168
    %v1910 = vunpack.c.0.s8 %v1909
    %v1911 = vlaneseq
    %v1912 = vshrl.u32 %v1911, 7
    %v1913 = vsub.s32 %v1910, %v1912
    %v1914 = vrot.slane %v1886, %v1913
    %v1915 = vcombine.high %v1893, %v1893
    %v1916 = vcombine.high %v1900, %v1900
    %v1917 = vcombine.high %v1907, %v1907
    %v1918 = vcombine.high %v1914, %v1914
    %v1919 = vcombine.high %v1711, %v1711
    %v1921 = vunpack.c.l.s4 1966171168
    %v1922 = vunpack.c.0.s8 %v1921
    %v1923 = vlaneseq
    %v1924 = vshrl.u32 %v1923, 7
    %v1925 = vsub.s32 %v1922, %v1924
    %v1926 = vrot.slane %v1711, %v1925
    %v1928 = vunpack.c.l.s4 1966171168
    %v1929 = vunpack.c.0.s8 %v1928
    %v1930 = vlaneseq
    %v1931 = vshrl.u32 %v1930, 7
    %v1932 = vsub.s32 %v1929, %v1931
    %v1933 = vrot.slane %v1919, %v1932
    %v1934 = vcombine.high %v1926, %v1926
    %v1935 = vcombine.high %v1933, %v1933
    %v1937 = vunpack.c.l.s4 1966171168
    %v1938 = vunpack.c.0.s8 %v1937
    %v1939 = vlaneseq
    %v1940 = vshrl.u32 %v1939, 7
    %v1941 = vsub.s32 %v1938, %v1940
    %v1942 = vrot.slane %v1926, %v1941
    %v1944 = vunpack.c.l.s4 1966171168
    %v1945 = vunpack.c.0.s8 %v1944
    %v1946 = vlaneseq
    %v1947 = vshrl.u32 %v1946, 7
    %v1948 = vsub.s32 %v1945, %v1947
    %v1949 = vrot.slane %v1933, %v1948
    %v1951 = vunpack.c.l.s4 1966171168
    %v1952 = vunpack.c.0.s8 %v1951
    %v1953 = vlaneseq
    %v1954 = vshrl.u32 %v1953, 7
    %v1955 = vsub.s32 %v1952, %v1954
    %v1956 = vrot.slane %v1934, %v1955
    %v1958 = vunpack.c.l.s4 1966171168
    %v1959 = vunpack.c.0.s8 %v1958
    %v1960 = vlaneseq
    %v1961 = vshrl.u32 %v1960, 7
    %v1962 = vsub.s32 %v1959, %v1961
    %v1963 = vrot.slane %v1935, %v1962
    %v1964 = vcombine.high %v1942, %v1942
    %v1965 = vcombine.high %v1949, %v1949
    %v1966 = vcombine.high %v1956, %v1956
    %v1967 = vcombine.high %v1963, %v1963
    %v1968 = vcombine.high %v1712, %v1712
    %v1970 = vunpack.c.l.s4 1966171168
    %v1971 = vunpack.c.0.s8 %v1970
    %v1972 = vlaneseq
    %v1973 = vshrl.u32 %v1972, 7
    %v1974 = vsub.s32 %v1971, %v1973
    %v1975 = vrot.slane %v1712, %v1974
    %v1977 = vunpack.c.l.s4 1966171168
    %v1978 = vunpack.c.0.s8 %v1977
    %v1979 = vlaneseq
    %v1980 = vshrl.u32 %v1979, 7
    %v1981 = vsub.s32 %v1978, %v1980
    %v1982 = vrot.slane %v1968, %v1981
    %v1983 = vcombine.high %v1975, %v1975
    %v1984 = vcombine.high %v1982, %v1982
    %v1986 = vunpack.c.l.s4 1966171168
    %v1987 = vunpack.c.0.s8 %v1986
    %v1988 = vlaneseq
    %v1989 = vshrl.u32 %v1988, 7
    %v1990 = vsub.s32 %v1987, %v1989
    %v1991 = vrot.slane %v1975, %v1990
    %v1993 = vunpack.c.l.s4 1966171168
    %v1994 = vunpack.c.0.s8 %v1993
    %v1995 = vlaneseq
    %v1996 = vshrl.u32 %v1995, 7
    %v1997 = vsub.s32 %v1994, %v1996
    %v1998 = vrot.slane %v1982, %v1997
    %v2000 = vunpack.c.l.s4 1966171168
    %v2001 = vunpack.c.0.s8 %v2000
    %v2002 = vlaneseq
    %v2003 = vshrl.u32 %v2002, 7
    %v2004 = vsub.s32 %v2001, %v2003
    %v2005 = vrot.slane %v1983, %v2004
    %v2007 = vunpack.c.l.s4 1966171168
    %v2008 = vunpack.c.0.s8 %v2007
    %v2009 = vlaneseq
    %v2010 = vshrl.u32 %v2009, 7
    %v2011 = vsub.s32 %v2008, %v2010
    %v2012 = vrot.slane %v1984, %v2011
    %v2013 = vcombine.high %v1991, %v1991
    %v2014 = vcombine.high %v1998, %v1998
    %v2015 = vcombine.high %v2005, %v2005
    %v2016 = vcombine.high %v2012, %v2012
    %v2017 = vcombine.high %v1713, %v1713
    %v2019 = vunpack.c.l.s4 1966171168
    %v2020 = vunpack.c.0.s8 %v2019
    %v2021 = vlaneseq
    %v2022 = vshrl.u32 %v2021, 7
    %v2023 = vsub.s32 %v2020, %v2022
    %v2024 = vrot.slane %v1713, %v2023
    %v2026 = vunpack.c.l.s4 1966171168
    %v2027 = vunpack.c.0.s8 %v2026
    %v2028 = vlaneseq
    %v2029 = vshrl.u32 %v2028, 7
    %v2030 = vsub.s32 %v2027, %v2029
    %v2031 = vrot.slane %v2017, %v2030
    %v2032 = vcombine.high %v2024, %v2024
    %v2033 = vcombine.high %v2031, %v2031
    %v2035 = vunpack.c.l.s4 1966171168
    %v2036 = vunpack.c.0.s8 %v2035
    %v2037 = vlaneseq
    %v2038 = vshrl.u32 %v2037, 7
    %v2039 = vsub.s32 %v2036, %v2038
    %v2040 = vrot.slane %v2024, %v2039
    %v2042 = vunpack.c.l.s4 1966171168
    %v2043 = vunpack.c.0.s8 %v2042
    %v2044 = vlaneseq
    %v2045 = vshrl.u32 %v2044, 7
    %v2046 = vsub.s32 %v2043, %v2045
    %v2047 = vrot.slane %v2031, %v2046
    %v2049 = vunpack.c.l.s4 1966171168
    %v2050 = vunpack.c.0.s8 %v2049
    %v2051 = vlaneseq
    %v2052 = vshrl.u32 %v2051, 7
    %v2053 = vsub.s32 %v2050, %v2052
    %v2054 = vrot.slane %v2032, %v2053
    %v2056 = vunpack.c.l.s4 1966171168
    %v2057 = vunpack.c.0.s8 %v2056
    %v2058 = vlaneseq
    %v2059 = vshrl.u32 %v2058, 7
    %v2060 = vsub.s32 %v2057, %v2059
    %v2061 = vrot.slane %v2033, %v2060
    %v2062 = vcombine.high %v2040, %v2040
    %v2063 = vcombine.high %v2047, %v2047
    %v2064 = vcombine.high %v2054, %v2054
    %v2065 = vcombine.high %v2061, %v2061
    %v2066 = vcombine.high %v1714, %v1714
    %v2068 = vunpack.c.l.s4 1966171168
    %v2069 = vunpack.c.0.s8 %v2068
    %v2070 = vlaneseq
    %v2071 = vshrl.u32 %v2070, 7
    %v2072 = vsub.s32 %v2069, %v2071
    %v2073 = vrot.slane %v1714, %v2072
    %v2075 = vunpack.c.l.s4 1966171168
    %v2076 = vunpack.c.0.s8 %v2075
    %v2077 = vlaneseq
    %v2078 = vshrl.u32 %v2077, 7
    %v2079 = vsub.s32 %v2076, %v2078
    %v2080 = vrot.slane %v2066, %v2079
    %v2081 = vcombine.high %v2073, %v2073
    %v2082 = vcombine.high %v2080, %v2080
    %v2084 = vunpack.c.l.s4 1966171168
    %v2085 = vunpack.c.0.s8 %v2084
    %v2086 = vlaneseq
    %v2087 = vshrl.u32 %v2086, 7
    %v2088 = vsub.s32 %v2085, %v2087
    %v2089 = vrot.slane %v2073, %v2088
    %v2091 = vunpack.c.l.s4 1966171168
    %v2092 = vunpack.c.0.s8 %v2091
    %v2093 = vlaneseq
    %v2094 = vshrl.u32 %v2093, 7
    %v2095 = vsub.s32 %v2092, %v2094
    %v2096 = vrot.slane %v2080, %v2095
    %v2098 = vunpack.c.l.s4 1966171168
    %v2099 = vunpack.c.0.s8 %v2098
    %v2100 = vlaneseq
    %v2101 = vshrl.u32 %v2100, 7
    %v2102 = vsub.s32 %v2099, %v2101
    %v2103 = vrot.slane %v2081, %v2102
    %v2105 = vunpack.c.l.s4 1966171168
    %v2106 = vunpack.c.0.s8 %v2105
    %v2107 = vlaneseq
    %v2108 = vshrl.u32 %v2107, 7
    %v2109 = vsub.s32 %v2106, %v2108
    %v2110 = vrot.slane %v2082, %v2109
    %v2111 = vcombine.high %v2089, %v2089
    %v2112 = vcombine.high %v2096, %v2096
    %v2113 = vcombine.high %v2103, %v2103
    %v2114 = vcombine.high %v2110, %v2110
    %v2115 = vcombine.high %v1715, %v1715
    %v2117 = vunpack.c.l.s4 1966171168
    %v2118 = vunpack.c.0.s8 %v2117
    %v2119 = vlaneseq
    %v2120 = vshrl.u32 %v2119, 7
    %v2121 = vsub.s32 %v2118, %v2120
    %v2122 = vrot.slane %v1715, %v2121
    %v2124 = vunpack.c.l.s4 1966171168
    %v2125 = vunpack.c.0.s8 %v2124
    %v2126 = vlaneseq
    %v2127 = vshrl.u32 %v2126, 7
    %v2128 = vsub.s32 %v2125, %v2127
    %v2129 = vrot.slane %v2115, %v2128
    %v2130 = vcombine.high %v2122, %v2122
    %v2131 = vcombine.high %v2129, %v2129
    %v2133 = vunpack.c.l.s4 1966171168
    %v2134 = vunpack.c.0.s8 %v2133
    %v2135 = vlaneseq
    %v2136 = vshrl.u32 %v2135, 7
    %v2137 = vsub.s32 %v2134, %v2136
    %v2138 = vrot.slane %v2122, %v2137
    %v2140 = vunpack.c.l.s4 1966171168
    %v2141 = vunpack.c.0.s8 %v2140
    %v2142 = vlaneseq
    %v2143 = vshrl.u32 %v2142, 7
    %v2144 = vsub.s32 %v2141, %v2143
    %v2145 = vrot.slane %v2129, %v2144
    %v2147 = vunpack.c.l.s4 1966171168
    %v2148 = vunpack.c.0.s8 %v2147
    %v2149 = vlaneseq
    %v2150 = vshrl.u32 %v2149, 7
    %v2151 = vsub.s32 %v2148, %v2150
    %v2152 = vrot.slane %v2130, %v2151
    %v2154 = vunpack.c.l.s4 1966171168
    %v2155 = vunpack.c.0.s8 %v2154
    %v2156 = vlaneseq
    %v2157 = vshrl.u32 %v2156, 7
    %v2158 = vsub.s32 %v2155, %v2157
    %v2159 = vrot.slane %v2131, %v2158
    %v2160 = vcombine.high %v2138, %v2138
    %v2161 = vcombine.high %v2145, %v2145
    %v2162 = vcombine.high %v2152, %v2152
    %v2163 = vcombine.high %v2159, %v2159
    %v2164 = vcombine.high %v1716, %v1716
    %v2166 = vunpack.c.l.s4 1966171168
    %v2167 = vunpack.c.0.s8 %v2166
    %v2168 = vlaneseq
    %v2169 = vshrl.u32 %v2168, 7
    %v2170 = vsub.s32 %v2167, %v2169
    %v2171 = vrot.slane %v1716, %v2170
    %v2173 = vunpack.c.l.s4 1966171168
    %v2174 = vunpack.c.0.s8 %v2173
    %v2175 = vlaneseq
    %v2176 = vshrl.u32 %v2175, 7
    %v2177 = vsub.s32 %v2174, %v2176
    %v2178 = vrot.slane %v2164, %v2177
    %v2179 = vcombine.high %v2171, %v2171
    %v2180 = vcombine.high %v2178, %v2178
    %v2182 = vunpack.c.l.s4 1966171168
    %v2183 = vunpack.c.0.s8 %v2182
    %v2184 = vlaneseq
    %v2185 = vshrl.u32 %v2184, 7
    %v2186 = vsub.s32 %v2183, %v2185
    %v2187 = vrot.slane %v2171, %v2186
    %v2189 = vunpack.c.l.s4 1966171168
    %v2190 = vunpack.c.0.s8 %v2189
    %v2191 = vlaneseq
    %v2192 = vshrl.u32 %v2191, 7
    %v2193 = vsub.s32 %v2190, %v2192
    %v2194 = vrot.slane %v2178, %v2193
    %v2196 = vunpack.c.l.s4 1966171168
    %v2197 = vunpack.c.0.s8 %v2196
    %v2198 = vlaneseq
    %v2199 = vshrl.u32 %v2198, 7
    %v2200 = vsub.s32 %v2197, %v2199
    %v2201 = vrot.slane %v2179, %v2200
    %v2203 = vunpack.c.l.s4 1966171168
    %v2204 = vunpack.c.0.s8 %v2203
    %v2205 = vlaneseq
    %v2206 = vshrl.u32 %v2205, 7
    %v2207 = vsub.s32 %v2204, %v2206
    %v2208 = vrot.slane %v2180, %v2207
    %v2209 = vcombine.high %v2187, %v2187
    %v2210 = vcombine.high %v2194, %v2194
    %v2211 = vcombine.high %v2201, %v2201
    %v2212 = vcombine.high %v2208, %v2208
    %v2213 = vcombine.high %v1717, %v1717
    %v2215 = vunpack.c.l.s4 1966171168
    %v2216 = vunpack.c.0.s8 %v2215
    %v2217 = vlaneseq
    %v2218 = vshrl.u32 %v2217, 7
    %v2219 = vsub.s32 %v2216, %v2218
    %v2220 = vrot.slane %v1717, %v2219
    %v2222 = vunpack.c.l.s4 1966171168
    %v2223 = vunpack.c.0.s8 %v2222
    %v2224 = vlaneseq
    %v2225 = vshrl.u32 %v2224, 7
    %v2226 = vsub.s32 %v2223, %v2225
    %v2227 = vrot.slane %v2213, %v2226
    %v2228 = vcombine.high %v2220, %v2220
    %v2229 = vcombine.high %v2227, %v2227
    %v2231 = vunpack.c.l.s4 1966171168
    %v2232 = vunpack.c.0.s8 %v2231
    %v2233 = vlaneseq
    %v2234 = vshrl.u32 %v2233, 7
    %v2235 = vsub.s32 %v2232, %v2234
    %v2236 = vrot.slane %v2220, %v2235
    %v2238 = vunpack.c.l.s4 1966171168
    %v2239 = vunpack.c.0.s8 %v2238
    %v2240 = vlaneseq
    %v2241 = vshrl.u32 %v2240, 7
    %v2242 = vsub.s32 %v2239, %v2241
    %v2243 = vrot.slane %v2227, %v2242
    %v2245 = vunpack.c.l.s4 1966171168
    %v2246 = vunpack.c.0.s8 %v2245
    %v2247 = vlaneseq
    %v2248 = vshrl.u32 %v2247, 7
    %v2249 = vsub.s32 %v2246, %v2248
    %v2250 = vrot.slane %v2228, %v2249
    %v2252 = vunpack.c.l.s4 1966171168
    %v2253 = vunpack.c.0.s8 %v2252
    %v2254 = vlaneseq
    %v2255 = vshrl.u32 %v2254, 7
    %v2256 = vsub.s32 %v2253, %v2255
    %v2257 = vrot.slane %v2229, %v2256
    %v2258 = vcombine.high %v2236, %v2236
    %v2259 = vcombine.high %v2243, %v2243
    %v2260 = vcombine.high %v2250, %v2250
    %v2261 = vcombine.high %v2257, %v2257
    %v2262 = vcombine.high %v1718, %v1718
    %v2264 = vunpack.c.l.s4 1966171168
    %v2265 = vunpack.c.0.s8 %v2264
    %v2266 = vlaneseq
    %v2267 = vshrl.u32 %v2266, 7
    %v2268 = vsub.s32 %v2265, %v2267
    %v2269 = vrot.slane %v1718, %v2268
    %v2271 = vunpack.c.l.s4 1966171168
    %v2272 = vunpack.c.0.s8 %v2271
    %v2273 = vlaneseq
    %v2274 = vshrl.u32 %v2273, 7
    %v2275 = vsub.s32 %v2272, %v2274
    %v2276 = vrot.slane %v2262, %v2275
    %v2277 = vcombine.high %v2269, %v2269
    %v2278 = vcombine.high %v2276, %v2276
    %v2280 = vunpack.c.l.s4 1966171168
    %v2281 = vunpack.c.0.s8 %v2280
    %v2282 = vlaneseq
    %v2283 = vshrl.u32 %v2282, 7
    %v2284 = vsub.s32 %v2281, %v2283
    %v2285 = vrot.slane %v2269, %v2284
    %v2287 = vunpack.c.l.s4 1966171168
    %v2288 = vunpack.c.0.s8 %v2287
    %v2289 = vlaneseq
    %v2290 = vshrl.u32 %v2289, 7
    %v2291 = vsub.s32 %v2288, %v2290
    %v2292 = vrot.slane %v2276, %v2291
    %v2294 = vunpack.c.l.s4 1966171168
    %v2295 = vunpack.c.0.s8 %v2294
    %v2296 = vlaneseq
    %v2297 = vshrl.u32 %v2296, 7
    %v2298 = vsub.s32 %v2295, %v2297
    %v2299 = vrot.slane %v2277, %v2298
    %v2301 = vunpack.c.l.s4 1966171168
    %v2302 = vunpack.c.0.s8 %v2301
    %v2303 = vlaneseq
    %v2304 = vshrl.u32 %v2303, 7
    %v2305 = vsub.s32 %v2302, %v2304
    %v2306 = vrot.slane %v2278, %v2305
    %v2307 = vcombine.high %v2285, %v2285
    %v2308 = vcombine.high %v2292, %v2292
    %v2309 = vcombine.high %v2299, %v2299
    %v2310 = vcombine.high %v2306, %v2306
    %v2311 = vcombine.high %v1719, %v1719
    %v2313 = vunpack.c.l.s4 1966171168
    %v2314 = vunpack.c.0.s8 %v2313
    %v2315 = vlaneseq
    %v2316 = vshrl.u32 %v2315, 7
    %v2317 = vsub.s32 %v2314, %v2316
    %v2318 = vrot.slane %v1719, %v2317
    %v2320 = vunpack.c.l.s4 1966171168
    %v2321 = vunpack.c.0.s8 %v2320
    %v2322 = vlaneseq
    %v2323 = vshrl.u32 %v2322, 7
    %v2324 = vsub.s32 %v2321, %v2323
    %v2325 = vrot.slane %v2311, %v2324
    %v2326 = vcombine.high %v2318, %v2318
    %v2327 = vcombine.high %v2325, %v2325
    %v2329 = vunpack.c.l.s4 1966171168
    %v2330 = vunpack.c.0.s8 %v2329
    %v2331 = vlaneseq
    %v2332 = vshrl.u32 %v2331, 7
    %v2333 = vsub.s32 %v2330, %v2332
    %v2334 = vrot.slane %v2318, %v2333
    %v2336 = vunpack.c.l.s4 1966171168
    %v2337 = vunpack.c.0.s8 %v2336
    %v2338 = vlaneseq
    %v2339 = vshrl.u32 %v2338, 7
    %v2340 = vsub.s32 %v2337, %v2339
    %v2341 = vrot.slane %v2325, %v2340
    %v2343 = vunpack.c.l.s4 1966171168
    %v2344 = vunpack.c.0.s8 %v2343
    %v2345 = vlaneseq
    %v2346 = vshrl.u32 %v2345, 7
    %v2347 = vsub.s32 %v2344, %v2346
    %v2348 = vrot.slane %v2326, %v2347
    %v2350 = vunpack.c.l.s4 1966171168
    %v2351 = vunpack.c.0.s8 %v2350
    %v2352 = vlaneseq
    %v2353 = vshrl.u32 %v2352, 7
    %v2354 = vsub.s32 %v2351, %v2353
    %v2355 = vrot.slane %v2327, %v2354
    %v2356 = vcombine.high %v2334, %v2334
    %v2357 = vcombine.high %v2341, %v2341
    %v2358 = vcombine.high %v2348, %v2348
    %v2359 = vcombine.high %v2355, %v2355
    %v2360 = vcombine.high %v1720, %v1720
    %v2362 = vunpack.c.l.s4 1966171168
    %v2363 = vunpack.c.0.s8 %v2362
    %v2364 = vlaneseq
    %v2365 = vshrl.u32 %v2364, 7
    %v2366 = vsub.s32 %v2363, %v2365
    %v2367 = vrot.slane %v1720, %v2366
    %v2369 = vunpack.c.l.s4 1966171168
    %v2370 = vunpack.c.0.s8 %v2369
    %v2371 = vlaneseq
    %v2372 = vshrl.u32 %v2371, 7
    %v2373 = vsub.s32 %v2370, %v2372
    %v2374 = vrot.slane %v2360, %v2373
    %v2375 = vcombine.high %v2367, %v2367
    %v2376 = vcombine.high %v2374, %v2374
    %v2378 = vunpack.c.l.s4 1966171168
    %v2379 = vunpack.c.0.s8 %v2378
    %v2380 = vlaneseq
    %v2381 = vshrl.u32 %v2380, 7
    %v2382 = vsub.s32 %v2379, %v2381
    %v2383 = vrot.slane %v2367, %v2382
    %v2385 = vunpack.c.l.s4 1966171168
    %v2386 = vunpack.c.0.s8 %v2385
    %v2387 = vlaneseq
    %v2388 = vshrl.u32 %v2387, 7
    %v2389 = vsub.s32 %v2386, %v2388
    %v2390 = vrot.slane %v2374, %v2389
    %v2392 = vunpack.c.l.s4 1966171168
    %v2393 = vunpack.c.0.s8 %v2392
    %v2394 = vlaneseq
    %v2395 = vshrl.u32 %v2394, 7
    %v2396 = vsub.s32 %v2393, %v2395
    %v2397 = vrot.slane %v2375, %v2396
    %v2399 = vunpack.c.l.s4 1966171168
    %v2400 = vunpack.c.0.s8 %v2399
    %v2401 = vlaneseq
    %v2402 = vshrl.u32 %v2401, 7
    %v2403 = vsub.s32 %v2400, %v2402
    %v2404 = vrot.slane %v2376, %v2403
    %v2405 = vcombine.high %v2383, %v2383
    %v2406 = vcombine.high %v2390, %v2390
    %v2407 = vcombine.high %v2397, %v2397
    %v2408 = vcombine.high %v2404, %v2404
    %v2409 = vcombine.high %v1721, %v1721
    %v2411 = vunpack.c.l.s4 1966171168
    %v2412 = vunpack.c.0.s8 %v2411
    %v2413 = vlaneseq
    %v2414 = vshrl.u32 %v2413, 7
    %v2415 = vsub.s32 %v2412, %v2414
    %v2416 = vrot.slane %v1721, %v2415
    %v2418 = vunpack.c.l.s4 1966171168
    %v2419 = vunpack.c.0.s8 %v2418
    %v2420 = vlaneseq
    %v2421 = vshrl.u32 %v2420, 7
    %v2422 = vsub.s32 %v2419, %v2421
    %v2423 = vrot.slane %v2409, %v2422
    %v2424 = vcombine.high %v2416, %v2416
    %v2425 = vcombine.high %v2423, %v2423
    %v2427 = vunpack.c.l.s4 1966171168
    %v2428 = vunpack.c.0.s8 %v2427
    %v2429 = vlaneseq
    %v2430 = vshrl.u32 %v2429, 7
    %v2431 = vsub.s32 %v2428, %v2430
    %v2432 = vrot.slane %v2416, %v2431
    %v2434 = vunpack.c.l.s4 1966171168
    %v2435 = vunpack.c.0.s8 %v2434
    %v2436 = vlaneseq
    %v2437 = vshrl.u32 %v2436, 7
    %v2438 = vsub.s32 %v2435, %v2437
    %v2439 = vrot.slane %v2423, %v2438
    %v2441 = vunpack.c.l.s4 1966171168
    %v2442 = vunpack.c.0.s8 %v2441
    %v2443 = vlaneseq
    %v2444 = vshrl.u32 %v2443, 7
    %v2445 = vsub.s32 %v2442, %v2444
    %v2446 = vrot.slane %v2424, %v2445
    %v2448 = vunpack.c.l.s4 1966171168
    %v2449 = vunpack.c.0.s8 %v2448
    %v2450 = vlaneseq
    %v2451 = vshrl.u32 %v2450, 7
    %v2452 = vsub.s32 %v2449, %v2451
    %v2453 = vrot.slane %v2425, %v2452
    %v2454 = vcombine.high %v2432, %v2432
    %v2455 = vcombine.high %v2439, %v2439
    %v2456 = vcombine.high %v2446, %v2446
    %v2457 = vcombine.high %v2453, %v2453
    %v2458 = vcombine.high %v1722, %v1722
    %v2460 = vunpack.c.l.s4 1966171168
    %v2461 = vunpack.c.0.s8 %v2460
    %v2462 = vlaneseq
    %v2463 = vshrl.u32 %v2462, 7
    %v2464 = vsub.s32 %v2461, %v2463
    %v2465 = vrot.slane %v1722, %v2464
    %v2467 = vunpack.c.l.s4 1966171168
    %v2468 = vunpack.c.0.s8 %v2467
    %v2469 = vlaneseq
    %v2470 = vshrl.u32 %v2469, 7
    %v2471 = vsub.s32 %v2468, %v2470
    %v2472 = vrot.slane %v2458, %v2471
    %v2473 = vcombine.high %v2465, %v2465
    %v2474 = vcombine.high %v2472, %v2472
    %v2476 = vunpack.c.l.s4 1966171168
    %v2477 = vunpack.c.0.s8 %v2476
    %v2478 = vlaneseq
    %v2479 = vshrl.u32 %v2478, 7
    %v2480 = vsub.s32 %v2477, %v2479
    %v2481 = vrot.slane %v2465, %v2480
    %v2483 = vunpack.c.l.s4 1966171168
    %v2484 = vunpack.c.0.s8 %v2483
    %v2485 = vlaneseq
    %v2486 = vshrl.u32 %v2485, 7
    %v2487 = vsub.s32 %v2484, %v2486
    %v2488 = vrot.slane %v2472, %v2487
    %v2490 = vunpack.c.l.s4 1966171168
    %v2491 = vunpack.c.0.s8 %v2490
    %v2492 = vlaneseq
    %v2493 = vshrl.u32 %v2492, 7
    %v2494 = vsub.s32 %v2491, %v2493
    %v2495 = vrot.slane %v2473, %v2494
    %v2497 = vunpack.c.l.s4 1966171168
    %v2498 = vunpack.c.0.s8 %v2497
    %v2499 = vlaneseq
    %v2500 = vshrl.u32 %v2499, 7
    %v2501 = vsub.s32 %v2498, %v2500
    %v2502 = vrot.slane %v2474, %v2501
    %v2503 = vcombine.high %v2481, %v2481
    %v2504 = vcombine.high %v2488, %v2488
    %v2505 = vcombine.high %v2495, %v2495
    %v2506 = vcombine.high %v2502, %v2502
    %v2507 = vcombine.high %v1723, %v1723
    %v2509 = vunpack.c.l.s4 1966171168
    %v2510 = vunpack.c.0.s8 %v2509
    %v2511 = vlaneseq
    %v2512 = vshrl.u32 %v2511, 7
    %v2513 = vsub.s32 %v2510, %v2512
    %v2514 = vrot.slane %v1723, %v2513
    %v2516 = vunpack.c.l.s4 1966171168
    %v2517 = vunpack.c.0.s8 %v2516
    %v2518 = vlaneseq
    %v2519 = vshrl.u32 %v2518, 7
    %v2520 = vsub.s32 %v2517, %v2519
    %v2521 = vrot.slane %v2507, %v2520
    %v2522 = vcombine.high %v2514, %v2514
    %v2523 = vcombine.high %v2521, %v2521
    %v2525 = vunpack.c.l.s4 1966171168
    %v2526 = vunpack.c.0.s8 %v2525
    %v2527 = vlaneseq
    %v2528 = vshrl.u32 %v2527, 7
    %v2529 = vsub.s32 %v2526, %v2528
    %v2530 = vrot.slane %v2514, %v2529
    %v2532 = vunpack.c.l.s4 1966171168
    %v2533 = vunpack.c.0.s8 %v2532
    %v2534 = vlaneseq
    %v2535 = vshrl.u32 %v2534, 7
    %v2536 = vsub.s32 %v2533, %v2535
    %v2537 = vrot.slane %v2521, %v2536
    %v2539 = vunpack.c.l.s4 1966171168
    %v2540 = vunpack.c.0.s8 %v2539
    %v2541 = vlaneseq
    %v2542 = vshrl.u32 %v2541, 7
    %v2543 = vsub.s32 %v2540, %v2542
    %v2544 = vrot.slane %v2522, %v2543
    %v2546 = vunpack.c.l.s4 1966171168
    %v2547 = vunpack.c.0.s8 %v2546
    %v2548 = vlaneseq
    %v2549 = vshrl.u32 %v2548, 7
    %v2550 = vsub.s32 %v2547, %v2549
    %v2551 = vrot.slane %v2523, %v2550
    %v2552 = vcombine.high %v2530, %v2530
    %v2553 = vcombine.high %v2537, %v2537
    %v2554 = vcombine.high %v2544, %v2544
    %v2555 = vcombine.high %v2551, %v2551
    %v2556 = vcombine.high %v1724, %v1724
    %v2558 = vunpack.c.l.s4 1966171168
    %v2559 = vunpack.c.0.s8 %v2558
    %v2560 = vlaneseq
    %v2561 = vshrl.u32 %v2560, 7
    %v2562 = vsub.s32 %v2559, %v2561
    %v2563 = vrot.slane %v1724, %v2562
    %v2565 = vunpack.c.l.s4 1966171168
    %v2566 = vunpack.c.0.s8 %v2565
    %v2567 = vlaneseq
    %v2568 = vshrl.u32 %v2567, 7
    %v2569 = vsub.s32 %v2566, %v2568
    %v2570 = vrot.slane %v2556, %v2569
    %v2571 = vcombine.high %v2563, %v2563
    %v2572 = vcombine.high %v2570, %v2570
    %v2574 = vunpack.c.l.s4 1966171168
    %v2575 = vunpack.c.0.s8 %v2574
    %v2576 = vlaneseq
    %v2577 = vshrl.u32 %v2576, 7
    %v2578 = vsub.s32 %v2575, %v2577
    %v2579 = vrot.slane %v2563, %v2578
    %v2581 = vunpack.c.l.s4 1966171168
    %v2582 = vunpack.c.0.s8 %v2581
    %v2583 = vlaneseq
    %v2584 = vshrl.u32 %v2583, 7
    %v2585 = vsub.s32 %v2582, %v2584
    %v2586 = vrot.slane %v2570, %v2585
    %v2588 = vunpack.c.l.s4 1966171168
    %v2589 = vunpack.c.0.s8 %v2588
    %v2590 = vlaneseq
    %v2591 = vshrl.u32 %v2590, 7
    %v2592 = vsub.s32 %v2589, %v2591
    %v2593 = vrot.slane %v2571, %v2592
    %v2595 = vunpack.c.l.s4 1966171168
    %v2596 = vunpack.c.0.s8 %v2595
    %v2597 = vlaneseq
    %v2598 = vshrl.u32 %v2597, 7
    %v2599 = vsub.s32 %v2596, %v2598
    %v2600 = vrot.slane %v2572, %v2599
    %v2601 = vcombine.high %v2579, %v2579
    %v2602 = vcombine.high %v2586, %v2586
    %v2603 = vcombine.high %v2593, %v2593
    %v2604 = vcombine.high %v2600, %v2600
    %v2605 = vcombine.high %v1725, %v1725
    %v2607 = vunpack.c.l.s4 1966171168
    %v2608 = vunpack.c.0.s8 %v2607
    %v2609 = vlaneseq
    %v2610 = vshrl.u32 %v2609, 7
    %v2611 = vsub.s32 %v2608, %v2610
    %v2612 = vrot.slane %v1725, %v2611
    %v2614 = vunpack.c.l.s4 1966171168
    %v2615 = vunpack.c.0.s8 %v2614
    %v2616 = vlaneseq
    %v2617 = vshrl.u32 %v2616, 7
    %v2618 = vsub.s32 %v2615, %v2617
    %v2619 = vrot.slane %v2605, %v2618
    %v2620 = vcombine.high %v2612, %v2612
    %v2621 = vcombine.high %v2619, %v2619
    %v2623 = vunpack.c.l.s4 1966171168
    %v2624 = vunpack.c.0.s8 %v2623
    %v2625 = vlaneseq
    %v2626 = vshrl.u32 %v2625, 7
    %v2627 = vsub.s32 %v2624, %v2626
    %v2628 = vrot.slane %v2612, %v2627
    %v2630 = vunpack.c.l.s4 1966171168
    %v2631 = vunpack.c.0.s8 %v2630
    %v2632 = vlaneseq
    %v2633 = vshrl.u32 %v2632, 7
    %v2634 = vsub.s32 %v2631, %v2633
    %v2635 = vrot.slane %v2619, %v2634
    %v2637 = vunpack.c.l.s4 1966171168
    %v2638 = vunpack.c.0.s8 %v2637
    %v2639 = vlaneseq
    %v2640 = vshrl.u32 %v2639, 7
    %v2641 = vsub.s32 %v2638, %v2640
    %v2642 = vrot.slane %v2620, %v2641
    %v2644 = vunpack.c.l.s4 1966171168
    %v2645 = vunpack.c.0.s8 %v2644
    %v2646 = vlaneseq
    %v2647 = vshrl.u32 %v2646, 7
    %v2648 = vsub.s32 %v2645, %v2647
    %v2649 = vrot.slane %v2621, %v2648
    %v2650 = vcombine.high %v2628, %v2628
    %v2651 = vcombine.high %v2635, %v2635
    %v2652 = vcombine.high %v2642, %v2642
    %v2653 = vcombine.high %v2649, %v2649
    %v2654 = vcombine.high %v1726, %v1726
    %v2656 = vunpack.c.l.s4 1966171168
    %v2657 = vunpack.c.0.s8 %v2656
    %v2658 = vlaneseq
    %v2659 = vshrl.u32 %v2658, 7
    %v2660 = vsub.s32 %v2657, %v2659
    %v2661 = vrot.slane %v1726, %v2660
    %v2663 = vunpack.c.l.s4 1966171168
    %v2664 = vunpack.c.0.s8 %v2663
    %v2665 = vlaneseq
    %v2666 = vshrl.u32 %v2665, 7
    %v2667 = vsub.s32 %v2664, %v2666
    %v2668 = vrot.slane %v2654, %v2667
    %v2669 = vcombine.high %v2661, %v2661
    %v2670 = vcombine.high %v2668, %v2668
    %v2672 = vunpack.c.l.s4 1966171168
    %v2673 = vunpack.c.0.s8 %v2672
    %v2674 = vlaneseq
    %v2675 = vshrl.u32 %v2674, 7
    %v2676 = vsub.s32 %v2673, %v2675
    %v2677 = vrot.slane %v2661, %v2676
    %v2679 = vunpack.c.l.s4 1966171168
    %v2680 = vunpack.c.0.s8 %v2679
    %v2681 = vlaneseq
    %v2682 = vshrl.u32 %v2681, 7
    %v2683 = vsub.s32 %v2680, %v2682
    %v2684 = vrot.slane %v2668, %v2683
    %v2686 = vunpack.c.l.s4 1966171168
    %v2687 = vunpack.c.0.s8 %v2686
    %v2688 = vlaneseq
    %v2689 = vshrl.u32 %v2688, 7
    %v2690 = vsub.s32 %v2687, %v2689
    %v2691 = vrot.slane %v2669, %v2690
    %v2693 = vunpack.c.l.s4 1966171168
    %v2694 = vunpack.c.0.s8 %v2693
    %v2695 = vlaneseq
    %v2696 = vshrl.u32 %v2695, 7
    %v2697 = vsub.s32 %v2694, %v2696
    %v2698 = vrot.slane %v2670, %v2697
    %v2699 = vcombine.high %v2677, %v2677
    %v2700 = vcombine.high %v2684, %v2684
    %v2701 = vcombine.high %v2691, %v2691
    %v2702 = vcombine.high %v2698, %v2698
    %v2703 = vcombine.high %v1727, %v1727
    %v2705 = vunpack.c.l.s4 1966171168
    %v2706 = vunpack.c.0.s8 %v2705
    %v2707 = vlaneseq
    %v2708 = vshrl.u32 %v2707, 7
    %v2709 = vsub.s32 %v2706, %v2708
    %v2710 = vrot.slane %v1727, %v2709
    %v2712 = vunpack.c.l.s4 1966171168
    %v2713 = vunpack.c.0.s8 %v2712
    %v2714 = vlaneseq
    %v2715 = vshrl.u32 %v2714, 7
    %v2716 = vsub.s32 %v2713, %v2715
    %v2717 = vrot.slane %v2703, %v2716
    %v2718 = vcombine.high %v2710, %v2710
    %v2719 = vcombine.high %v2717, %v2717
    %v2721 = vunpack.c.l.s4 1966171168
    %v2722 = vunpack.c.0.s8 %v2721
    %v2723 = vlaneseq
    %v2724 = vshrl.u32 %v2723, 7
    %v2725 = vsub.s32 %v2722, %v2724
    %v2726 = vrot.slane %v2710, %v2725
    %v2728 = vunpack.c.l.s4 1966171168
    %v2729 = vunpack.c.0.s8 %v2728
    %v2730 = vlaneseq
    %v2731 = vshrl.u32 %v2730, 7
    %v2732 = vsub.s32 %v2729, %v2731
    %v2733 = vrot.slane %v2717, %v2732
    %v2735 = vunpack.c.l.s4 1966171168
    %v2736 = vunpack.c.0.s8 %v2735
    %v2737 = vlaneseq
    %v2738 = vshrl.u32 %v2737, 7
    %v2739 = vsub.s32 %v2736, %v2738
    %v2740 = vrot.slane %v2718, %v2739
    %v2742 = vunpack.c.l.s4 1966171168
    %v2743 = vunpack.c.0.s8 %v2742
    %v2744 = vlaneseq
    %v2745 = vshrl.u32 %v2744, 7
    %v2746 = vsub.s32 %v2743, %v2745
    %v2747 = vrot.slane %v2719, %v2746
    %v2748 = vcombine.high %v2726, %v2726
    %v2749 = vcombine.high %v2733, %v2733
    %v2750 = vcombine.high %v2740, %v2740
    %v2751 = vcombine.high %v2747, %v2747
    %v2752 = vcombine.high %v1728, %v1728
    %v2754 = vunpack.c.l.s4 1966171168
    %v2755 = vunpack.c.0.s8 %v2754
    %v2756 = vlaneseq
    %v2757 = vshrl.u32 %v2756, 7
    %v2758 = vsub.s32 %v2755, %v2757
    %v2759 = vrot.slane %v1728, %v2758
    %v2761 = vunpack.c.l.s4 1966171168
    %v2762 = vunpack.c.0.s8 %v2761
    %v2763 = vlaneseq
    %v2764 = vshrl.u32 %v2763, 7
    %v2765 = vsub.s32 %v2762, %v2764
    %v2766 = vrot.slane %v2752, %v2765
    %v2767 = vcombine.high %v2759, %v2759
    %v2768 = vcombine.high %v2766, %v2766
    %v2770 = vunpack.c.l.s4 1966171168
    %v2771 = vunpack.c.0.s8 %v2770
    %v2772 = vlaneseq
    %v2773 = vshrl.u32 %v2772, 7
    %v2774 = vsub.s32 %v2771, %v2773
    %v2775 = vrot.slane %v2759, %v2774
    %v2777 = vunpack.c.l.s4 1966171168
    %v2778 = vunpack.c.0.s8 %v2777
    %v2779 = vlaneseq
    %v2780 = vshrl.u32 %v2779, 7
    %v2781 = vsub.s32 %v2778, %v2780
    %v2782 = vrot.slane %v2766, %v2781
    %v2784 = vunpack.c.l.s4 1966171168
    %v2785 = vunpack.c.0.s8 %v2784
    %v2786 = vlaneseq
    %v2787 = vshrl.u32 %v2786, 7
    %v2788 = vsub.s32 %v2785, %v2787
    %v2789 = vrot.slane %v2767, %v2788
    %v2791 = vunpack.c.l.s4 1966171168
    %v2792 = vunpack.c.0.s8 %v2791
    %v2793 = vlaneseq
    %v2794 = vshrl.u32 %v2793, 7
    %v2795 = vsub.s32 %v2792, %v2794
    %v2796 = vrot.slane %v2768, %v2795
    %v2797 = vcombine.high %v2775, %v2775
    %v2798 = vcombine.high %v2782, %v2782
    %v2799 = vcombine.high %v2789, %v2789
    %v2800 = vcombine.high %v2796, %v2796
    %v2801 = vcombine.high %v1729, %v1729
    %v2803 = vunpack.c.l.s4 1966171168
    %v2804 = vunpack.c.0.s8 %v2803
    %v2805 = vlaneseq
    %v2806 = vshrl.u32 %v2805, 7
    %v2807 = vsub.s32 %v2804, %v2806
    %v2808 = vrot.slane %v1729, %v2807
    %v2810 = vunpack.c.l.s4 1966171168
    %v2811 = vunpack.c.0.s8 %v2810
    %v2812 = vlaneseq
    %v2813 = vshrl.u32 %v2812, 7
    %v2814 = vsub.s32 %v2811, %v2813
    %v2815 = vrot.slane %v2801, %v2814
    %v2816 = vcombine.high %v2808, %v2808
    %v2817 = vcombine.high %v2815, %v2815
    %v2819 = vunpack.c.l.s4 1966171168
    %v2820 = vunpack.c.0.s8 %v2819
    %v2821 = vlaneseq
    %v2822 = vshrl.u32 %v2821, 7
    %v2823 = vsub.s32 %v2820, %v2822
    %v2824 = vrot.slane %v2808, %v2823
    %v2826 = vunpack.c.l.s4 1966171168
    %v2827 = vunpack.c.0.s8 %v2826
    %v2828 = vlaneseq
    %v2829 = vshrl.u32 %v2828, 7
    %v2830 = vsub.s32 %v2827, %v2829
    %v2831 = vrot.slane %v2815, %v2830
    %v2833 = vunpack.c.l.s4 1966171168
    %v2834 = vunpack.c.0.s8 %v2833
    %v2835 = vlaneseq
    %v2836 = vshrl.u32 %v2835, 7
    %v2837 = vsub.s32 %v2834, %v2836
    %v2838 = vrot.slane %v2816, %v2837
    %v2840 = vunpack.c.l.s4 1966171168
    %v2841 = vunpack.c.0.s8 %v2840
    %v2842 = vlaneseq
    %v2843 = vshrl.u32 %v2842, 7
    %v2844 = vsub.s32 %v2841, %v2843
    %v2845 = vrot.slane %v2817, %v2844
    %v2846 = vcombine.high %v2824, %v2824
    %v2847 = vcombine.high %v2831, %v2831
    %v2848 = vcombine.high %v2838, %v2838
    %v2849 = vcombine.high %v2845, %v2845
    %v2850 = vcombine.high %v1730, %v1730
    %v2852 = vunpack.c.l.s4 1966171168
    %v2853 = vunpack.c.0.s8 %v2852
    %v2854 = vlaneseq
    %v2855 = vshrl.u32 %v2854, 7
    %v2856 = vsub.s32 %v2853, %v2855
    %v2857 = vrot.slane %v1730, %v2856
    %v2859 = vunpack.c.l.s4 1966171168
    %v2860 = vunpack.c.0.s8 %v2859
    %v2861 = vlaneseq
    %v2862 = vshrl.u32 %v2861, 7
    %v2863 = vsub.s32 %v2860, %v2862
    %v2864 = vrot.slane %v2850, %v2863
    %v2865 = vcombine.high %v2857, %v2857
    %v2866 = vcombine.high %v2864, %v2864
    %v2868 = vunpack.c.l.s4 1966171168
    %v2869 = vunpack.c.0.s8 %v2868
    %v2870 = vlaneseq
    %v2871 = vshrl.u32 %v2870, 7
    %v2872 = vsub.s32 %v2869, %v2871
    %v2873 = vrot.slane %v2857, %v2872
    %v2875 = vunpack.c.l.s4 1966171168
    %v2876 = vunpack.c.0.s8 %v2875
    %v2877 = vlaneseq
    %v2878 = vshrl.u32 %v2877, 7
    %v2879 = vsub.s32 %v2876, %v2878
    %v2880 = vrot.slane %v2864, %v2879
    %v2882 = vunpack.c.l.s4 1966171168
    %v2883 = vunpack.c.0.s8 %v2882
    %v2884 = vlaneseq
    %v2885 = vshrl.u32 %v2884, 7
    %v2886 = vsub.s32 %v2883, %v2885
    %v2887 = vrot.slane %v2865, %v2886
    %v2889 = vunpack.c.l.s4 1966171168
    %v2890 = vunpack.c.0.s8 %v2889
    %v2891 = vlaneseq
    %v2892 = vshrl.u32 %v2891, 7
    %v2893 = vsub.s32 %v2890, %v2892
    %v2894 = vrot.slane %v2866, %v2893
    %v2895 = vcombine.high %v2873, %v2873
    %v2896 = vcombine.high %v2880, %v2880
    %v2897 = vcombine.high %v2887, %v2887
    %v2898 = vcombine.high %v2894, %v2894
    %v2899 = vcombine.high %v1731, %v1731
    %v2901 = vunpack.c.l.s4 1966171168
    %v2902 = vunpack.c.0.s8 %v2901
    %v2903 = vlaneseq
    %v2904 = vshrl.u32 %v2903, 7
    %v2905 = vsub.s32 %v2902, %v2904
    %v2906 = vrot.slane %v1731, %v2905
    %v2908 = vunpack.c.l.s4 1966171168
    %v2909 = vunpack.c.0.s8 %v2908
    %v2910 = vlaneseq
    %v2911 = vshrl.u32 %v2910, 7
    %v2912 = vsub.s32 %v2909, %v2911
    %v2913 = vrot.slane %v2899, %v2912
    %v2914 = vcombine.high %v2906, %v2906
    %v2915 = vcombine.high %v2913, %v2913
    %v2917 = vunpack.c.l.s4 1966171168
    %v2918 = vunpack.c.0.s8 %v2917
    %v2919 = vlaneseq
    %v2920 = vshrl.u32 %v2919, 7
    %v2921 = vsub.s32 %v2918, %v2920
    %v2922 = vrot.slane %v2906, %v2921
    %v2924 = vunpack.c.l.s4 1966171168
    %v2925 = vunpack.c.0.s8 %v2924
    %v2926 = vlaneseq
    %v2927 = vshrl.u32 %v2926, 7
    %v2928 = vsub.s32 %v2925, %v2927
    %v2929 = vrot.slane %v2913, %v2928
    %v2931 = vunpack.c.l.s4 1966171168
    %v2932 = vunpack.c.0.s8 %v2931
    %v2933 = vlaneseq
    %v2934 = vshrl.u32 %v2933, 7
    %v2935 = vsub.s32 %v2932, %v2934
    %v2936 = vrot.slane %v2914, %v2935
    %v2938 = vunpack.c.l.s4 1966171168
    %v2939 = vunpack.c.0.s8 %v2938
    %v2940 = vlaneseq
    %v2941 = vshrl.u32 %v2940, 7
    %v2942 = vsub.s32 %v2939, %v2941
    %v2943 = vrot.slane %v2915, %v2942
    %v2944 = vcombine.high %v2922, %v2922
    %v2945 = vcombine.high %v2929, %v2929
    %v2946 = vcombine.high %v2936, %v2936
    %v2947 = vcombine.high %v2943, %v2943
    %v2948 = vcombine.high %v1732, %v1732
    %v2950 = vunpack.c.l.s4 1966171168
    %v2951 = vunpack.c.0.s8 %v2950
    %v2952 = vlaneseq
    %v2953 = vshrl.u32 %v2952, 7
    %v2954 = vsub.s32 %v2951, %v2953
    %v2955 = vrot.slane %v1732, %v2954
    %v2957 = vunpack.c.l.s4 1966171168
    %v2958 = vunpack.c.0.s8 %v2957
    %v2959 = vlaneseq
    %v2960 = vshrl.u32 %v2959, 7
    %v2961 = vsub.s32 %v2958, %v2960
    %v2962 = vrot.slane %v2948, %v2961
    %v2963 = vcombine.high %v2955, %v2955
    %v2964 = vcombine.high %v2962, %v2962
    %v2966 = vunpack.c.l.s4 1966171168
    %v2967 = vunpack.c.0.s8 %v2966
    %v2968 = vlaneseq
    %v2969 = vshrl.u32 %v2968, 7
    %v2970 = vsub.s32 %v2967, %v2969
    %v2971 = vrot.slane %v2955, %v2970
    %v2973 = vunpack.c.l.s4 1966171168
    %v2974 = vunpack.c.0.s8 %v2973
    %v2975 = vlaneseq
    %v2976 = vshrl.u32 %v2975, 7
    %v2977 = vsub.s32 %v2974, %v2976
    %v2978 = vrot.slane %v2962, %v2977
    %v2980 = vunpack.c.l.s4 1966171168
    %v2981 = vunpack.c.0.s8 %v2980
    %v2982 = vlaneseq
    %v2983 = vshrl.u32 %v2982, 7
    %v2984 = vsub.s32 %v2981, %v2983
    %v2985 = vrot.slane %v2963, %v2984
    %v2987 = vunpack.c.l.s4 1966171168
    %v2988 = vunpack.c.0.s8 %v2987
    %v2989 = vlaneseq
    %v2990 = vshrl.u32 %v2989, 7
    %v2991 = vsub.s32 %v2988, %v2990
    %v2992 = vrot.slane %v2964, %v2991
    %v2993 = vcombine.high %v2971, %v2971
    %v2994 = vcombine.high %v2978, %v2978
    %v2995 = vcombine.high %v2985, %v2985
    %v2996 = vcombine.high %v2992, %v2992
    %v2997 = vcombine.high %v1733, %v1733
    %v2999 = vunpack.c.l.s4 1966171168
    %v3000 = vunpack.c.0.s8 %v2999
    %v3001 = vlaneseq
    %v3002 = vshrl.u32 %v3001, 7
    %v3003 = vsub.s32 %v3000, %v3002
    %v3004 = vrot.slane %v1733, %v3003
    %v3006 = vunpack.c.l.s4 1966171168
    %v3007 = vunpack.c.0.s8 %v3006
    %v3008 = vlaneseq
    %v3009 = vshrl.u32 %v3008, 7
    %v3010 = vsub.s32 %v3007, %v3009
    %v3011 = vrot.slane %v2997, %v3010
    %v3012 = vcombine.high %v3004, %v3004
    %v3013 = vcombine.high %v3011, %v3011
    %v3015 = vunpack.c.l.s4 1966171168
    %v3016 = vunpack.c.0.s8 %v3015
    %v3017 = vlaneseq
    %v3018 = vshrl.u32 %v3017, 7
    %v3019 = vsub.s32 %v3016, %v3018
    %v3020 = vrot.slane %v3004, %v3019
    %v3022 = vunpack.c.l.s4 1966171168
    %v3023 = vunpack.c.0.s8 %v3022
    %v3024 = vlaneseq
    %v3025 = vshrl.u32 %v3024, 7
    %v3026 = vsub.s32 %v3023, %v3025
    %v3027 = vrot.slane %v3011, %v3026
    %v3029 = vunpack.c.l.s4 1966171168
    %v3030 = vunpack.c.0.s8 %v3029
    %v3031 = vlaneseq
    %v3032 = vshrl.u32 %v3031, 7
    %v3033 = vsub.s32 %v3030, %v3032
    %v3034 = vrot.slane %v3012, %v3033
    %v3036 = vunpack.c.l.s4 1966171168
    %v3037 = vunpack.c.0.s8 %v3036
    %v3038 = vlaneseq
    %v3039 = vshrl.u32 %v3038, 7
    %v3040 = vsub.s32 %v3037, %v3039
    %v3041 = vrot.slane %v3013, %v3040
    %v3042 = vcombine.high %v3020, %v3020
    %v3043 = vcombine.high %v3027, %v3027
    %v3044 = vcombine.high %v3034, %v3034
    %v3045 = vcombine.high %v3041, %v3041
    %v3046 = vcombine.high %v1734, %v1734
    %v3048 = vunpack.c.l.s4 1966171168
    %v3049 = vunpack.c.0.s8 %v3048
    %v3050 = vlaneseq
    %v3051 = vshrl.u32 %v3050, 7
    %v3052 = vsub.s32 %v3049, %v3051
    %v3053 = vrot.slane %v1734, %v3052
    %v3055 = vunpack.c.l.s4 1966171168
    %v3056 = vunpack.c.0.s8 %v3055
    %v3057 = vlaneseq
    %v3058 = vshrl.u32 %v3057, 7
    %v3059 = vsub.s32 %v3056, %v3058
    %v3060 = vrot.slane %v3046, %v3059
    %v3061 = vcombine.high %v3053, %v3053
    %v3062 = vcombine.high %v3060, %v3060
    %v3064 = vunpack.c.l.s4 1966171168
    %v3065 = vunpack.c.0.s8 %v3064
    %v3066 = vlaneseq
    %v3067 = vshrl.u32 %v3066, 7
    %v3068 = vsub.s32 %v3065, %v3067
    %v3069 = vrot.slane %v3053, %v3068
    %v3071 = vunpack.c.l.s4 1966171168
    %v3072 = vunpack.c.0.s8 %v3071
    %v3073 = vlaneseq
    %v3074 = vshrl.u32 %v3073, 7
    %v3075 = vsub.s32 %v3072, %v3074
    %v3076 = vrot.slane %v3060, %v3075
    %v3078 = vunpack.c.l.s4 1966171168
    %v3079 = vunpack.c.0.s8 %v3078
    %v3080 = vlaneseq
    %v3081 = vshrl.u32 %v3080, 7
    %v3082 = vsub.s32 %v3079, %v3081
    %v3083 = vrot.slane %v3061, %v3082
    %v3085 = vunpack.c.l.s4 1966171168
    %v3086 = vunpack.c.0.s8 %v3085
    %v3087 = vlaneseq
    %v3088 = vshrl.u32 %v3087, 7
    %v3089 = vsub.s32 %v3086, %v3088
    %v3090 = vrot.slane %v3062, %v3089
    %v3091 = vcombine.high %v3069, %v3069
    %v3092 = vcombine.high %v3076, %v3076
    %v3093 = vcombine.high %v3083, %v3083
    %v3094 = vcombine.high %v3090, %v3090
    %v3095 = vcombine.high %v1735, %v1735
    %v3097 = vunpack.c.l.s4 1966171168
    %v3098 = vunpack.c.0.s8 %v3097
    %v3099 = vlaneseq
    %v3100 = vshrl.u32 %v3099, 7
    %v3101 = vsub.s32 %v3098, %v3100
    %v3102 = vrot.slane %v1735, %v3101
    %v3104 = vunpack.c.l.s4 1966171168
    %v3105 = vunpack.c.0.s8 %v3104
    %v3106 = vlaneseq
    %v3107 = vshrl.u32 %v3106, 7
    %v3108 = vsub.s32 %v3105, %v3107
    %v3109 = vrot.slane %v3095, %v3108
    %v3110 = vcombine.high %v3102, %v3102
    %v3111 = vcombine.high %v3109, %v3109
    %v3113 = vunpack.c.l.s4 1966171168
    %v3114 = vunpack.c.0.s8 %v3113
    %v3115 = vlaneseq
    %v3116 = vshrl.u32 %v3115, 7
    %v3117 = vsub.s32 %v3114, %v3116
    %v3118 = vrot.slane %v3102, %v3117
    %v3120 = vunpack.c.l.s4 1966171168
    %v3121 = vunpack.c.0.s8 %v3120
    %v3122 = vlaneseq
    %v3123 = vshrl.u32 %v3122, 7
    %v3124 = vsub.s32 %v3121, %v3123
    %v3125 = vrot.slane %v3109, %v3124
    %v3127 = vunpack.c.l.s4 1966171168
    %v3128 = vunpack.c.0.s8 %v3127
    %v3129 = vlaneseq
    %v3130 = vshrl.u32 %v3129, 7
    %v3131 = vsub.s32 %v3128, %v3130
    %v3132 = vrot.slane %v3110, %v3131
    %v3134 = vunpack.c.l.s4 1966171168
    %v3135 = vunpack.c.0.s8 %v3134
    %v3136 = vlaneseq
    %v3137 = vshrl.u32 %v3136, 7
    %v3138 = vsub.s32 %v3135, %v3137
    %v3139 = vrot.slane %v3111, %v3138
    %v3140 = vcombine.high %v3118, %v3118
    %v3141 = vcombine.high %v3125, %v3125
    %v3142 = vcombine.high %v3132, %v3132
    %v3143 = vcombine.high %v3139, %v3139
    %v3144 = vcombine.high %v1736, %v1736
    %v3146 = vunpack.c.l.s4 1966171168
    %v3147 = vunpack.c.0.s8 %v3146
    %v3148 = vlaneseq
    %v3149 = vshrl.u32 %v3148, 7
    %v3150 = vsub.s32 %v3147, %v3149
    %v3151 = vrot.slane %v1736, %v3150
    %v3153 = vunpack.c.l.s4 1966171168
    %v3154 = vunpack.c.0.s8 %v3153
    %v3155 = vlaneseq
    %v3156 = vshrl.u32 %v3155, 7
    %v3157 = vsub.s32 %v3154, %v3156
    %v3158 = vrot.slane %v3144, %v3157
    %v3159 = vcombine.high %v3151, %v3151
    %v3160 = vcombine.high %v3158, %v3158
    %v3162 = vunpack.c.l.s4 1966171168
    %v3163 = vunpack.c.0.s8 %v3162
    %v3164 = vlaneseq
    %v3165 = vshrl.u32 %v3164, 7
    %v3166 = vsub.s32 %v3163, %v3165
    %v3167 = vrot.slane %v3151, %v3166
    %v3169 = vunpack.c.l.s4 1966171168
    %v3170 = vunpack.c.0.s8 %v3169
    %v3171 = vlaneseq
    %v3172 = vshrl.u32 %v3171, 7
    %v3173 = vsub.s32 %v3170, %v3172
    %v3174 = vrot.slane %v3158, %v3173
    %v3176 = vunpack.c.l.s4 1966171168
    %v3177 = vunpack.c.0.s8 %v3176
    %v3178 = vlaneseq
    %v3179 = vshrl.u32 %v3178, 7
    %v3180 = vsub.s32 %v3177, %v3179
    %v3181 = vrot.slane %v3159, %v3180
    %v3183 = vunpack.c.l.s4 1966171168
    %v3184 = vunpack.c.0.s8 %v3183
    %v3185 = vlaneseq
    %v3186 = vshrl.u32 %v3185, 7
    %v3187 = vsub.s32 %v3184, %v3186
    %v3188 = vrot.slane %v3160, %v3187
    %v3189 = vcombine.high %v3167, %v3167
    %v3190 = vcombine.high %v3174, %v3174
    %v3191 = vcombine.high %v3181, %v3181
    %v3192 = vcombine.high %v3188, %v3188
    %v3193 = vcombine.high %v1737, %v1737
    %v3195 = vunpack.c.l.s4 1966171168
    %v3196 = vunpack.c.0.s8 %v3195
    %v3197 = vlaneseq
    %v3198 = vshrl.u32 %v3197, 7
    %v3199 = vsub.s32 %v3196, %v3198
    %v3200 = vrot.slane %v1737, %v3199
    %v3202 = vunpack.c.l.s4 1966171168
    %v3203 = vunpack.c.0.s8 %v3202
    %v3204 = vlaneseq
    %v3205 = vshrl.u32 %v3204, 7
    %v3206 = vsub.s32 %v3203, %v3205
    %v3207 = vrot.slane %v3193, %v3206
    %v3208 = vcombine.high %v3200, %v3200
    %v3209 = vcombine.high %v3207, %v3207
    %v3211 = vunpack.c.l.s4 1966171168
    %v3212 = vunpack.c.0.s8 %v3211
    %v3213 = vlaneseq
    %v3214 = vshrl.u32 %v3213, 7
    %v3215 = vsub.s32 %v3212, %v3214
    %v3216 = vrot.slane %v3200, %v3215
    %v3218 = vunpack.c.l.s4 1966171168
    %v3219 = vunpack.c.0.s8 %v3218
    %v3220 = vlaneseq
    %v3221 = vshrl.u32 %v3220, 7
    %v3222 = vsub.s32 %v3219, %v3221
    %v3223 = vrot.slane %v3207, %v3222
    %v3225 = vunpack.c.l.s4 1966171168
    %v3226 = vunpack.c.0.s8 %v3225
    %v3227 = vlaneseq
    %v3228 = vshrl.u32 %v3227, 7
    %v3229 = vsub.s32 %v3226, %v3228
    %v3230 = vrot.slane %v3208, %v3229
    %v3232 = vunpack.c.l.s4 1966171168
    %v3233 = vunpack.c.0.s8 %v3232
    %v3234 = vlaneseq
    %v3235 = vshrl.u32 %v3234, 7
    %v3236 = vsub.s32 %v3233, %v3235
    %v3237 = vrot.slane %v3209, %v3236
    %v3238 = vcombine.high %v3216, %v3216
    %v3239 = vcombine.high %v3223, %v3223
    %v3240 = vcombine.high %v3230, %v3230
    %v3241 = vcombine.high %v3237, %v3237
    %v3242 = vcombine.high %v1738, %v1738
    %v3244 = vunpack.c.l.s4 1966171168
    %v3245 = vunpack.c.0.s8 %v3244
    %v3246 = vlaneseq
    %v3247 = vshrl.u32 %v3246, 7
    %v3248 = vsub.s32 %v3245, %v3247
    %v3249 = vrot.slane %v1738, %v3248
    %v3251 = vunpack.c.l.s4 1966171168
    %v3252 = vunpack.c.0.s8 %v3251
    %v3253 = vlaneseq
    %v3254 = vshrl.u32 %v3253, 7
    %v3255 = vsub.s32 %v3252, %v3254
    %v3256 = vrot.slane %v3242, %v3255
    %v3257 = vcombine.high %v3249, %v3249
    %v3258 = vcombine.high %v3256, %v3256
    %v3260 = vunpack.c.l.s4 1966171168
    %v3261 = vunpack.c.0.s8 %v3260
    %v3262 = vlaneseq
    %v3263 = vshrl.u32 %v3262, 7
    %v3264 = vsub.s32 %v3261, %v3263
    %v3265 = vrot.slane %v3249, %v3264
    %v3267 = vunpack.c.l.s4 1966171168
    %v3268 = vunpack.c.0.s8 %v3267
    %v3269 = vlaneseq
    %v3270 = vshrl.u32 %v3269, 7
    %v3271 = vsub.s32 %v3268, %v3270
    %v3272 = vrot.slane %v3256, %v3271
    %v3274 = vunpack.c.l.s4 1966171168
    %v3275 = vunpack.c.0.s8 %v3274
    %v3276 = vlaneseq
    %v3277 = vshrl.u32 %v3276, 7
    %v3278 = vsub.s32 %v3275, %v3277
    %v3279 = vrot.slane %v3257, %v3278
    %v3281 = vunpack.c.l.s4 1966171168
    %v3282 = vunpack.c.0.s8 %v3281
    %v3283 = vlaneseq
    %v3284 = vshrl.u32 %v3283, 7
    %v3285 = vsub.s32 %v3282, %v3284
    %v3286 = vrot.slane %v3258, %v3285
    %v3287 = vcombine.high %v3265, %v3265
    %v3288 = vcombine.high %v3272, %v3272
    %v3289 = vcombine.high %v3279, %v3279
    %v3290 = vcombine.high %v3286, %v3286
    %v3291 = vcombine.high %v1739, %v1739
    %v3293 = vunpack.c.l.s4 1966171168
    %v3294 = vunpack.c.0.s8 %v3293
    %v3295 = vlaneseq
    %v3296 = vshrl.u32 %v3295, 7
    %v3297 = vsub.s32 %v3294, %v3296
    %v3298 = vrot.slane %v1739, %v3297
    %v3300 = vunpack.c.l.s4 1966171168
    %v3301 = vunpack.c.0.s8 %v3300
    %v3302 = vlaneseq
    %v3303 = vshrl.u32 %v3302, 7
    %v3304 = vsub.s32 %v3301, %v3303
    %v3305 = vrot.slane %v3291, %v3304
    %v3306 = vcombine.high %v3298, %v3298
    %v3307 = vcombine.high %v3305, %v3305
    %v3309 = vunpack.c.l.s4 1966171168
    %v3310 = vunpack.c.0.s8 %v3309
    %v3311 = vlaneseq
    %v3312 = vshrl.u32 %v3311, 7
    %v3313 = vsub.s32 %v3310, %v3312
    %v3314 = vrot.slane %v3298, %v3313
    %v3316 = vunpack.c.l.s4 1966171168
    %v3317 = vunpack.c.0.s8 %v3316
    %v3318 = vlaneseq
    %v3319 = vshrl.u32 %v3318, 7
    %v3320 = vsub.s32 %v3317, %v3319
    %v3321 = vrot.slane %v3305, %v3320
    %v3323 = vunpack.c.l.s4 1966171168
    %v3324 = vunpack.c.0.s8 %v3323
    %v3325 = vlaneseq
    %v3326 = vshrl.u32 %v3325, 7
    %v3327 = vsub.s32 %v3324, %v3326
    %v3328 = vrot.slane %v3306, %v3327
    %v3330 = vunpack.c.l.s4 1966171168
    %v3331 = vunpack.c.0.s8 %v3330
    %v3332 = vlaneseq
    %v3333 = vshrl.u32 %v3332, 7
    %v3334 = vsub.s32 %v3331, %v3333
    %v3335 = vrot.slane %v3307, %v3334
    %v3336 = vcombine.high %v3314, %v3314
    %v3337 = vcombine.high %v3321, %v3321
    %v3338 = vcombine.high %v3328, %v3328
    %v3339 = vcombine.high %v3335, %v3335
    %v3340 = vld [vmem:[#allocation7] sm:$0xff]
    %v3341 = vld [vmem:[#allocation7 + $0x8] sm:$0xff]
    %v3342 = vld [vmem:[#allocation7 + $0x10] sm:$0xff]
    %v3343 = vld [vmem:[#allocation7 + $0x18] sm:$0xff]
    %v3344 = vld [vmem:[#allocation7 + $0x20] sm:$0xff]
    %v3345 = vld [vmem:[#allocation7 + $0x28] sm:$0xff]
    %v3346 = vld [vmem:[#allocation7 + $0x30] sm:$0xff]
    %v3347 = vld [vmem:[#allocation7 + $0x38] sm:$0xff]
    %v3348 = vld [vmem:[#allocation7 + $0x40] sm:$0xff]
    %v3349 = vld [vmem:[#allocation7 + $0x48] sm:$0xff]
    %v3350 = vld [vmem:[#allocation7 + $0x50] sm:$0xff]
    %v3351 = vld [vmem:[#allocation7 + $0x58] sm:$0xff]
    %v3352 = vld [vmem:[#allocation7 + $0x60] sm:$0xff]
    %v3353 = vld [vmem:[#allocation7 + $0x68] sm:$0xff]
    %v3354 = vld [vmem:[#allocation7 + $0x70] sm:$0xff]
    %v3355 = vld [vmem:[#allocation7 + $0x78] sm:$0xff]
    %v3356 = vld [vmem:[#allocation7 + $0x80] sm:$0xff]
    %v3357 = vld [vmem:[#allocation7 + $0x88] sm:$0xff]
    %v3358 = vld [vmem:[#allocation7 + $0x90] sm:$0xff]
    %v3359 = vld [vmem:[#allocation7 + $0x98] sm:$0xff]
    %v3360 = vld [vmem:[#allocation7 + $0xa0] sm:$0xff]
    %v3361 = vld [vmem:[#allocation7 + $0xa8] sm:$0xff]
    %v3362 = vld [vmem:[#allocation7 + $0xb0] sm:$0xff]
    %v3363 = vld [vmem:[#allocation7 + $0xb8] sm:$0xff]
    %v3364 = vld [vmem:[#allocation7 + $0xc0] sm:$0xff]
    %v3365 = vld [vmem:[#allocation7 + $0xc8] sm:$0xff]
    %v3366 = vld [vmem:[#allocation7 + $0xd0] sm:$0xff]
    %v3367 = vld [vmem:[#allocation7 + $0xd8] sm:$0xff]
    %v3368 = vld [vmem:[#allocation7 + $0xe0] sm:$0xff]
    %v3369 = vld [vmem:[#allocation7 + $0xe8] sm:$0xff]
    %v3370 = vld [vmem:[#allocation7 + $0xf0] sm:$0xff]
    %v3371 = vld [vmem:[#allocation7 + $0xf8] sm:$0xff]
    %v3372 = vld [vmem:[#allocation7 + $0x100] sm:$0xff]
    %v3373 = vld [vmem:[#allocation7 + $0x108] sm:$0xff]
    %v3374 = vld [vmem:[#allocation7 + $0x110] sm:$0xff]
    %v3375 = vld [vmem:[#allocation7 + $0x118] sm:$0xff]
    %v3376 = vld [vmem:[#allocation7 + $0x120] sm:$0xff]
    %v3377 = vld [vmem:[#allocation7 + $0x128] sm:$0xff]
    %v3378 = vld [vmem:[#allocation7 + $0x130] sm:$0xff]
    %v3379 = vld [vmem:[#allocation7 + $0x138] sm:$0xff]
    %v3380 = vld [vmem:[#allocation7 + $0x140] sm:$0xff]
    %v3381 = vld [vmem:[#allocation7 + $0x148] sm:$0xff]
    %v3382 = vld [vmem:[#allocation7 + $0x150] sm:$0xff]
    %v3383 = vld [vmem:[#allocation7 + $0x158] sm:$0xff]
    %v3384 = vld [vmem:[#allocation7 + $0x160] sm:$0xff]
    %v3385 = vld [vmem:[#allocation7 + $0x168] sm:$0xff]
    %v3386 = vld [vmem:[#allocation7 + $0x170] sm:$0xff]
    %v3387 = vld [vmem:[#allocation7 + $0x178] sm:$0xff]
    %v3388 = vld [vmem:[#allocation7 + $0x180] sm:$0xff]
    %v3389 = vld [vmem:[#allocation7 + $0x188] sm:$0xff]
    %v3390 = vld [vmem:[#allocation7 + $0x190] sm:$0xff]
    %v3391 = vld [vmem:[#allocation7 + $0x198] sm:$0xff]
    %v3392 = vld [vmem:[#allocation7 + $0x1a0] sm:$0xff]
    %v3393 = vld [vmem:[#allocation7 + $0x1a8] sm:$0xff]
    %v3394 = vld [vmem:[#allocation7 + $0x1b0] sm:$0xff]
    %v3395 = vld [vmem:[#allocation7 + $0x1b8] sm:$0xff]
    %v3396 = vld [vmem:[#allocation7 + $0x1c0] sm:$0xff]
    %v3397 = vld [vmem:[#allocation7 + $0x1c8] sm:$0xff]
    %v3398 = vld [vmem:[#allocation7 + $0x1d0] sm:$0xff]
    %v3399 = vld [vmem:[#allocation7 + $0x1d8] sm:$0xff]
    %v3400 = vld [vmem:[#allocation7 + $0x1e0] sm:$0xff]
    %v3401 = vld [vmem:[#allocation7 + $0x1e8] sm:$0xff]
    %v3402 = vld [vmem:[#allocation7 + $0x1f0] sm:$0xff]
    %v3403 = vld [vmem:[#allocation7 + $0x1f8] sm:$0xff]
    %v3404 = vld [vmem:[#allocation7 + $0x200] sm:$0xff]
    %v3405 = vld [vmem:[#allocation7 + $0x208] sm:$0xff]
    %v3406 = vld [vmem:[#allocation7 + $0x210] sm:$0xff]
    %v3407 = vld [vmem:[#allocation7 + $0x218] sm:$0xff]
    %v3408 = vld [vmem:[#allocation7 + $0x220] sm:$0xff]
    %v3409 = vld [vmem:[#allocation7 + $0x228] sm:$0xff]
    %v3410 = vld [vmem:[#allocation7 + $0x230] sm:$0xff]
    %v3411 = vld [vmem:[#allocation7 + $0x238] sm:$0xff]
    %v3412 = vld [vmem:[#allocation7 + $0x240] sm:$0xff]
    %v3413 = vld [vmem:[#allocation7 + $0x248] sm:$0xff]
    %v3414 = vld [vmem:[#allocation7 + $0x250] sm:$0xff]
    %v3415 = vld [vmem:[#allocation7 + $0x258] sm:$0xff]
    %v3416 = vld [vmem:[#allocation7 + $0x260] sm:$0xff]
    %v3417 = vld [vmem:[#allocation7 + $0x268] sm:$0xff]
    %v3418 = vld [vmem:[#allocation7 + $0x270] sm:$0xff]
    %v3419 = vld [vmem:[#allocation7 + $0x278] sm:$0xff]
    %v3420 = vld [vmem:[#allocation7 + $0x280] sm:$0xff]
    %v3421 = vld [vmem:[#allocation7 + $0x288] sm:$0xff]
    %v3422 = vld [vmem:[#allocation7 + $0x290] sm:$0xff]
    %v3423 = vld [vmem:[#allocation7 + $0x298] sm:$0xff]
    %v3424 = vld [vmem:[#allocation7 + $0x2a0] sm:$0xff]
    %v3425 = vld [vmem:[#allocation7 + $0x2a8] sm:$0xff]
    %v3426 = vld [vmem:[#allocation7 + $0x2b0] sm:$0xff]
    %v3427 = vld [vmem:[#allocation7 + $0x2b8] sm:$0xff]
    %v3428 = vld [vmem:[#allocation7 + $0x2c0] sm:$0xff]
    %v3429 = vld [vmem:[#allocation7 + $0x2c8] sm:$0xff]
    %v3430 = vld [vmem:[#allocation7 + $0x2d0] sm:$0xff]
    %v3431 = vld [vmem:[#allocation7 + $0x2d8] sm:$0xff]
    %v3432 = vld [vmem:[#allocation7 + $0x2e0] sm:$0xff]
    %v3433 = vld [vmem:[#allocation7 + $0x2e8] sm:$0xff]
    %v3434 = vld [vmem:[#allocation7 + $0x2f0] sm:$0xff]
    %v3435 = vld [vmem:[#allocation7 + $0x2f8] sm:$0xff]
    %v3436 = vld [vmem:[#allocation7 + $0x300] sm:$0xff]
    %v3437 = vld [vmem:[#allocation7 + $0x308] sm:$0xff]
    %v3438 = vld [vmem:[#allocation7 + $0x310] sm:$0xff]
    %v3439 = vld [vmem:[#allocation7 + $0x318] sm:$0xff]
    %v3440 = vld [vmem:[#allocation7 + $0x320] sm:$0xff]
    %v3441 = vld [vmem:[#allocation7 + $0x328] sm:$0xff]
    %v3442 = vld [vmem:[#allocation7 + $0x330] sm:$0xff]
    %v3443 = vld [vmem:[#allocation7 + $0x338] sm:$0xff]
    %v3444 = vld [vmem:[#allocation7 + $0x340] sm:$0xff]
    %v3445 = vld [vmem:[#allocation7 + $0x348] sm:$0xff]
    %v3446 = vld [vmem:[#allocation7 + $0x350] sm:$0xff]
    %v3447 = vld [vmem:[#allocation7 + $0x358] sm:$0xff]
    %v3448 = vld [vmem:[#allocation7 + $0x360] sm:$0xff]
    %v3449 = vld [vmem:[#allocation7 + $0x368] sm:$0xff]
    %v3450 = vld [vmem:[#allocation7 + $0x370] sm:$0xff]
    %v3451 = vld [vmem:[#allocation7 + $0x378] sm:$0xff]
    %v3452 = vld [vmem:[#allocation7 + $0x380] sm:$0xff]
    %v3453 = vld [vmem:[#allocation7 + $0x388] sm:$0xff]
    %v3454 = vld [vmem:[#allocation7 + $0x390] sm:$0xff]
    %v3455 = vld [vmem:[#allocation7 + $0x398] sm:$0xff]
    %v3456 = vld [vmem:[#allocation7 + $0x3a0] sm:$0xff]
    %v3457 = vld [vmem:[#allocation7 + $0x3a8] sm:$0xff]
    %v3458 = vld [vmem:[#allocation7 + $0x3b0] sm:$0xff]
    %v3459 = vld [vmem:[#allocation7 + $0x3b8] sm:$0xff]
    %v3460 = vld [vmem:[#allocation7 + $0x3c0] sm:$0xff]
    %v3461 = vld [vmem:[#allocation7 + $0x3c8] sm:$0xff]
    %v3462 = vld [vmem:[#allocation7 + $0x3d0] sm:$0xff]
    %v3463 = vld [vmem:[#allocation7 + $0x3d8] sm:$0xff]
    %v3464 = vld [vmem:[#allocation7 + $0x3e0] sm:$0xff]
    %v3465 = vld [vmem:[#allocation7 + $0x3e8] sm:$0xff]
    %v3466 = vld [vmem:[#allocation7 + $0x3f0] sm:$0xff]
    %v3467 = vld [vmem:[#allocation7 + $0x3f8] sm:$0xff]
    %v3468 = vld [vmem:[#allocation7 + $0x400] sm:$0xff]
    %v3469 = vld [vmem:[#allocation7 + $0x408] sm:$0xff]
    %v3470 = vld [vmem:[#allocation7 + $0x410] sm:$0xff]
    %v3471 = vld [vmem:[#allocation7 + $0x418] sm:$0xff]
    %v3472 = vld [vmem:[#allocation7 + $0x420] sm:$0xff]
    %v3473 = vld [vmem:[#allocation7 + $0x428] sm:$0xff]
    %v3474 = vld [vmem:[#allocation7 + $0x430] sm:$0xff]
    %v3475 = vld [vmem:[#allocation7 + $0x438] sm:$0xff]
    %v3476 = vld [vmem:[#allocation7 + $0x440] sm:$0xff]
    %v3477 = vld [vmem:[#allocation7 + $0x448] sm:$0xff]
    %v3478 = vld [vmem:[#allocation7 + $0x450] sm:$0xff]
    %v3479 = vld [vmem:[#allocation7 + $0x458] sm:$0xff]
    %v3480 = vld [vmem:[#allocation7 + $0x460] sm:$0xff]
    %v3481 = vld [vmem:[#allocation7 + $0x468] sm:$0xff]
    %v3482 = vld [vmem:[#allocation7 + $0x470] sm:$0xff]
    %v3483 = vld [vmem:[#allocation7 + $0x478] sm:$0xff]
    %v3484 = vld [vmem:[#allocation7 + $0x480] sm:$0xff]
    %v3485 = vld [vmem:[#allocation7 + $0x488] sm:$0xff]
    %v3486 = vld [vmem:[#allocation7 + $0x490] sm:$0xff]
    %v3487 = vld [vmem:[#allocation7 + $0x498] sm:$0xff]
    %v3488 = vld [vmem:[#allocation7 + $0x4a0] sm:$0xff]
    %v3489 = vld [vmem:[#allocation7 + $0x4a8] sm:$0xff]
    %v3490 = vld [vmem:[#allocation7 + $0x4b0] sm:$0xff]
    %v3491 = vld [vmem:[#allocation7 + $0x4b8] sm:$0xff]
    %v3492 = vld [vmem:[#allocation7 + $0x4c0] sm:$0xff]
    %v3493 = vld [vmem:[#allocation7 + $0x4c8] sm:$0xff]
    %v3494 = vld [vmem:[#allocation7 + $0x4d0] sm:$0xff]
    %v3495 = vld [vmem:[#allocation7 + $0x4d8] sm:$0xff]
    %v3496 = vld [vmem:[#allocation7 + $0x4e0] sm:$0xff]
    %v3497 = vld [vmem:[#allocation7 + $0x4e8] sm:$0xff]
    %v3498 = vld [vmem:[#allocation7 + $0x4f0] sm:$0xff]
    %v3499 = vld [vmem:[#allocation7 + $0x4f8] sm:$0xff]
    %v3500 = vld [vmem:[#allocation7 + $0x500] sm:$0xff]
    %v3501 = vld [vmem:[#allocation7 + $0x508] sm:$0xff]
    %v3502 = vld [vmem:[#allocation7 + $0x510] sm:$0xff]
    %v3503 = vld [vmem:[#allocation7 + $0x518] sm:$0xff]
    %v3504 = vld [vmem:[#allocation7 + $0x520] sm:$0xff]
    %v3505 = vld [vmem:[#allocation7 + $0x528] sm:$0xff]
    %v3506 = vld [vmem:[#allocation7 + $0x530] sm:$0xff]
    %v3507 = vld [vmem:[#allocation7 + $0x538] sm:$0xff]
    %v3508 = vld [vmem:[#allocation7 + $0x540] sm:$0xff]
    %v3509 = vld [vmem:[#allocation7 + $0x548] sm:$0xff]
    %v3510 = vld [vmem:[#allocation7 + $0x550] sm:$0xff]
    %v3511 = vld [vmem:[#allocation7 + $0x558] sm:$0xff]
    %v3512 = vld [vmem:[#allocation7 + $0x560] sm:$0xff]
    %v3513 = vld [vmem:[#allocation7 + $0x568] sm:$0xff]
    %v3514 = vld [vmem:[#allocation7 + $0x570] sm:$0xff]
    %v3515 = vld [vmem:[#allocation7 + $0x578] sm:$0xff]
    %v3516 = vld [vmem:[#allocation7 + $0x580] sm:$0xff]
    %v3517 = vld [vmem:[#allocation7 + $0x588] sm:$0xff]
    %v3518 = vld [vmem:[#allocation7 + $0x590] sm:$0xff]
    %v3519 = vld [vmem:[#allocation7 + $0x598] sm:$0xff]
    %v3520 = vld [vmem:[#allocation7 + $0x5a0] sm:$0xff]
    %v3521 = vld [vmem:[#allocation7 + $0x5a8] sm:$0xff]
    %v3522 = vld [vmem:[#allocation7 + $0x5b0] sm:$0xff]
    %v3523 = vld [vmem:[#allocation7 + $0x5b8] sm:$0xff]
    %v3524 = vld [vmem:[#allocation7 + $0x5c0] sm:$0xff]
    %v3525 = vld [vmem:[#allocation7 + $0x5c8] sm:$0xff]
    %v3526 = vld [vmem:[#allocation7 + $0x5d0] sm:$0xff]
    %v3527 = vld [vmem:[#allocation7 + $0x5d8] sm:$0xff]
    %v3528 = vld [vmem:[#allocation7 + $0x5e0] sm:$0xff]
    %v3529 = vld [vmem:[#allocation7 + $0x5e8] sm:$0xff]
    %v3530 = vld [vmem:[#allocation7 + $0x5f0] sm:$0xff]
    %v3531 = vld [vmem:[#allocation7 + $0x5f8] sm:$0xff]
    %v3532 = vld [vmem:[#allocation7 + $0x600] sm:$0xff]
    %v3533 = vld [vmem:[#allocation7 + $0x608] sm:$0xff]
    %v3534 = vld [vmem:[#allocation7 + $0x610] sm:$0xff]
    %v3535 = vld [vmem:[#allocation7 + $0x618] sm:$0xff]
    %v3536 = vld [vmem:[#allocation7 + $0x620] sm:$0xff]
    %v3537 = vld [vmem:[#allocation7 + $0x628] sm:$0xff]
    %v3538 = vld [vmem:[#allocation7 + $0x630] sm:$0xff]
    %v3539 = vld [vmem:[#allocation7 + $0x638] sm:$0xff]
    %v3540 = vld [vmem:[#allocation7 + $0x640] sm:$0xff]
    %v3541 = vld [vmem:[#allocation7 + $0x648] sm:$0xff]
    %v3542 = vld [vmem:[#allocation7 + $0x650] sm:$0xff]
    %v3543 = vld [vmem:[#allocation7 + $0x658] sm:$0xff]
    %v3544 = vld [vmem:[#allocation7 + $0x660] sm:$0xff]
    %v3545 = vld [vmem:[#allocation7 + $0x668] sm:$0xff]
    %v3546 = vld [vmem:[#allocation7 + $0x670] sm:$0xff]
    %v3547 = vld [vmem:[#allocation7 + $0x678] sm:$0xff]
    %v3548 = vld [vmem:[#allocation7 + $0x680] sm:$0xff]
    %v3549 = vld [vmem:[#allocation7 + $0x688] sm:$0xff]
    %v3550 = vld [vmem:[#allocation7 + $0x690] sm:$0xff]
    %v3551 = vld [vmem:[#allocation7 + $0x698] sm:$0xff]
    %v3552 = vld [vmem:[#allocation7 + $0x6a0] sm:$0xff]
    %v3553 = vld [vmem:[#allocation7 + $0x6a8] sm:$0xff]
    %v3554 = vld [vmem:[#allocation7 + $0x6b0] sm:$0xff]
    %v3555 = vld [vmem:[#allocation7 + $0x6b8] sm:$0xff]
    %v3556 = vld [vmem:[#allocation7 + $0x6c0] sm:$0xff]
    %v3557 = vld [vmem:[#allocation7 + $0x6c8] sm:$0xff]
    %v3558 = vld [vmem:[#allocation7 + $0x6d0] sm:$0xff]
    %v3559 = vld [vmem:[#allocation7 + $0x6d8] sm:$0xff]
    %v3560 = vld [vmem:[#allocation7 + $0x6e0] sm:$0xff]
    %v3561 = vld [vmem:[#allocation7 + $0x6e8] sm:$0xff]
    %v3562 = vld [vmem:[#allocation7 + $0x6f0] sm:$0xff]
    %v3563 = vld [vmem:[#allocation7 + $0x6f8] sm:$0xff]
    %v3564 = vld [vmem:[#allocation7 + $0x700] sm:$0xff]
    %v3565 = vld [vmem:[#allocation7 + $0x708] sm:$0xff]
    %v3566 = vld [vmem:[#allocation7 + $0x710] sm:$0xff]
    %v3567 = vld [vmem:[#allocation7 + $0x718] sm:$0xff]
    %v3568 = vld [vmem:[#allocation7 + $0x720] sm:$0xff]
    %v3569 = vld [vmem:[#allocation7 + $0x728] sm:$0xff]
    %v3570 = vld [vmem:[#allocation7 + $0x730] sm:$0xff]
    %v3571 = vld [vmem:[#allocation7 + $0x738] sm:$0xff]
    %v3572 = vld [vmem:[#allocation7 + $0x740] sm:$0xff]
    %v3573 = vld [vmem:[#allocation7 + $0x748] sm:$0xff]
    %v3574 = vld [vmem:[#allocation7 + $0x750] sm:$0xff]
    %v3575 = vld [vmem:[#allocation7 + $0x758] sm:$0xff]
    %v3576 = vld [vmem:[#allocation7 + $0x760] sm:$0xff]
    %v3577 = vld [vmem:[#allocation7 + $0x768] sm:$0xff]
    %v3578 = vld [vmem:[#allocation7 + $0x770] sm:$0xff]
    %v3579 = vld [vmem:[#allocation7 + $0x778] sm:$0xff]
    %v3580 = vld [vmem:[#allocation7 + $0x780] sm:$0xff]
    %v3581 = vld [vmem:[#allocation7 + $0x788] sm:$0xff]
    %v3582 = vld [vmem:[#allocation7 + $0x790] sm:$0xff]
    %v3583 = vld [vmem:[#allocation7 + $0x798] sm:$0xff]
    %v3584 = vld [vmem:[#allocation7 + $0x7a0] sm:$0xff]
    %v3585 = vld [vmem:[#allocation7 + $0x7a8] sm:$0xff]
    %v3586 = vld [vmem:[#allocation7 + $0x7b0] sm:$0xff]
    %v3587 = vld [vmem:[#allocation7 + $0x7b8] sm:$0xff]
    %v3588 = vld [vmem:[#allocation7 + $0x7c0] sm:$0xff]
    %v3589 = vld [vmem:[#allocation7 + $0x7c8] sm:$0xff]
    %v3590 = vld [vmem:[#allocation7 + $0x7d0] sm:$0xff]
    %v3591 = vld [vmem:[#allocation7 + $0x7d8] sm:$0xff]
    %v3592 = vld [vmem:[#allocation7 + $0x7e0] sm:$0xff]
    %v3593 = vld [vmem:[#allocation7 + $0x7e8] sm:$0xff]
    %v3594 = vld [vmem:[#allocation7 + $0x7f0] sm:$0xff]
    %v3595 = vld [vmem:[#allocation7 + $0x7f8] sm:$0xff]
    %3852 = vrot.lane.b32.xlu0 %v3340, 64
    %v3853 = vpop.permute.xlu0 %3852
    %3854 = vrot.lane.b32.xlu0 %v3341, 64
    %v3855 = vpop.permute.xlu0 %3854
    %3856 = vrot.lane.b32.xlu0 %v3342, 64
    %v3857 = vpop.permute.xlu0 %3856
    %3858 = vrot.lane.b32.xlu0 %v3343, 64
    %v3859 = vpop.permute.xlu0 %3858
    %3860 = vrot.lane.b32.xlu0 %v3344, 64
    %v3861 = vpop.permute.xlu0 %3860
    %3862 = vrot.lane.b32.xlu0 %v3345, 64
    %v3863 = vpop.permute.xlu0 %3862
    %3864 = vrot.lane.b32.xlu0 %v3346, 64
    %v3865 = vpop.permute.xlu0 %3864
    %3866 = vrot.lane.b32.xlu0 %v3347, 64
    %v3867 = vpop.permute.xlu0 %3866
    %3868 = vrot.lane.b32.xlu0 %v3348, 64
    %v3869 = vpop.permute.xlu0 %3868
    %3870 = vrot.lane.b32.xlu0 %v3349, 64
    %v3871 = vpop.permute.xlu0 %3870
    %3872 = vrot.lane.b32.xlu0 %v3350, 64
    %v3873 = vpop.permute.xlu0 %3872
    %3874 = vrot.lane.b32.xlu0 %v3351, 64
    %v3875 = vpop.permute.xlu0 %3874
    %3876 = vrot.lane.b32.xlu0 %v3352, 64
    %v3877 = vpop.permute.xlu0 %3876
    %3878 = vrot.lane.b32.xlu0 %v3353, 64
    %v3879 = vpop.permute.xlu0 %3878
    %3880 = vrot.lane.b32.xlu0 %v3354, 64
    %v3881 = vpop.permute.xlu0 %3880
    %3882 = vrot.lane.b32.xlu0 %v3355, 64
    %v3883 = vpop.permute.xlu0 %3882
    %3884 = vrot.lane.b32.xlu0 %v3356, 64
    %v3885 = vpop.permute.xlu0 %3884
    %3886 = vrot.lane.b32.xlu0 %v3357, 64
    %v3887 = vpop.permute.xlu0 %3886
    %3888 = vrot.lane.b32.xlu0 %v3358, 64
    %v3889 = vpop.permute.xlu0 %3888
    %3890 = vrot.lane.b32.xlu0 %v3359, 64
    %v3891 = vpop.permute.xlu0 %3890
    %3892 = vrot.lane.b32.xlu0 %v3360, 64
    %v3893 = vpop.permute.xlu0 %3892
    %3894 = vrot.lane.b32.xlu0 %v3361, 64
    %v3895 = vpop.permute.xlu0 %3894
    %3896 = vrot.lane.b32.xlu0 %v3362, 64
    %v3897 = vpop.permute.xlu0 %3896
    %3898 = vrot.lane.b32.xlu0 %v3363, 64
    %v3899 = vpop.permute.xlu0 %3898
    %3900 = vrot.lane.b32.xlu0 %v3364, 64
    %v3901 = vpop.permute.xlu0 %3900
    %3902 = vrot.lane.b32.xlu0 %v3365, 64
    %v3903 = vpop.permute.xlu0 %3902
    %3904 = vrot.lane.b32.xlu0 %v3366, 64
    %v3905 = vpop.permute.xlu0 %3904
    %3906 = vrot.lane.b32.xlu0 %v3367, 64
    %v3907 = vpop.permute.xlu0 %3906
    %3908 = vrot.lane.b32.xlu0 %v3368, 64
    %v3909 = vpop.permute.xlu0 %3908
    %3910 = vrot.lane.b32.xlu0 %v3369, 64
    %v3911 = vpop.permute.xlu0 %3910
    %3912 = vrot.lane.b32.xlu0 %v3370, 64
    %v3913 = vpop.permute.xlu0 %3912
    %3914 = vrot.lane.b32.xlu0 %v3371, 64
    %v3915 = vpop.permute.xlu0 %3914
    %3916 = vrot.lane.b32.xlu0 %v3372, 64
    %v3917 = vpop.permute.xlu0 %3916
    %3918 = vrot.lane.b32.xlu0 %v3373, 64
    %v3919 = vpop.permute.xlu0 %3918
    %3920 = vrot.lane.b32.xlu0 %v3374, 64
    %v3921 = vpop.permute.xlu0 %3920
    %3922 = vrot.lane.b32.xlu0 %v3375, 64
    %v3923 = vpop.permute.xlu0 %3922
    %3924 = vrot.lane.b32.xlu0 %v3376, 64
    %v3925 = vpop.permute.xlu0 %3924
    %3926 = vrot.lane.b32.xlu0 %v3377, 64
    %v3927 = vpop.permute.xlu0 %3926
    %3928 = vrot.lane.b32.xlu0 %v3378, 64
    %v3929 = vpop.permute.xlu0 %3928
    %3930 = vrot.lane.b32.xlu0 %v3379, 64
    %v3931 = vpop.permute.xlu0 %3930
    %3932 = vrot.lane.b32.xlu0 %v3380, 64
    %v3933 = vpop.permute.xlu0 %3932
    %3934 = vrot.lane.b32.xlu0 %v3381, 64
    %v3935 = vpop.permute.xlu0 %3934
    %3936 = vrot.lane.b32.xlu0 %v3382, 64
    %v3937 = vpop.permute.xlu0 %3936
    %3938 = vrot.lane.b32.xlu0 %v3383, 64
    %v3939 = vpop.permute.xlu0 %3938
    %3940 = vrot.lane.b32.xlu0 %v3384, 64
    %v3941 = vpop.permute.xlu0 %3940
    %3942 = vrot.lane.b32.xlu0 %v3385, 64
    %v3943 = vpop.permute.xlu0 %3942
    %3944 = vrot.lane.b32.xlu0 %v3386, 64
    %v3945 = vpop.permute.xlu0 %3944
    %3946 = vrot.lane.b32.xlu0 %v3387, 64
    %v3947 = vpop.permute.xlu0 %3946
    %3948 = vrot.lane.b32.xlu0 %v3388, 64
    %v3949 = vpop.permute.xlu0 %3948
    %3950 = vrot.lane.b32.xlu0 %v3389, 64
    %v3951 = vpop.permute.xlu0 %3950
    %3952 = vrot.lane.b32.xlu0 %v3390, 64
    %v3953 = vpop.permute.xlu0 %3952
    %3954 = vrot.lane.b32.xlu0 %v3391, 64
    %v3955 = vpop.permute.xlu0 %3954
    %3956 = vrot.lane.b32.xlu0 %v3392, 64
    %v3957 = vpop.permute.xlu0 %3956
    %3958 = vrot.lane.b32.xlu0 %v3393, 64
    %v3959 = vpop.permute.xlu0 %3958
    %3960 = vrot.lane.b32.xlu0 %v3394, 64
    %v3961 = vpop.permute.xlu0 %3960
    %3962 = vrot.lane.b32.xlu0 %v3395, 64
    %v3963 = vpop.permute.xlu0 %3962
    %3964 = vrot.lane.b32.xlu0 %v3396, 64
    %v3965 = vpop.permute.xlu0 %3964
    %3966 = vrot.lane.b32.xlu0 %v3397, 64
    %v3967 = vpop.permute.xlu0 %3966
    %3968 = vrot.lane.b32.xlu0 %v3398, 64
    %v3969 = vpop.permute.xlu0 %3968
    %3970 = vrot.lane.b32.xlu0 %v3399, 64
    %v3971 = vpop.permute.xlu0 %3970
    %3972 = vrot.lane.b32.xlu0 %v3400, 64
    %v3973 = vpop.permute.xlu0 %3972
    %3974 = vrot.lane.b32.xlu0 %v3401, 64
    %v3975 = vpop.permute.xlu0 %3974
    %3976 = vrot.lane.b32.xlu0 %v3402, 64
    %v3977 = vpop.permute.xlu0 %3976
    %3978 = vrot.lane.b32.xlu0 %v3403, 64
    %v3979 = vpop.permute.xlu0 %3978
    %3980 = vrot.lane.b32.xlu0 %v3404, 64
    %v3981 = vpop.permute.xlu0 %3980
    %3982 = vrot.lane.b32.xlu0 %v3405, 64
    %v3983 = vpop.permute.xlu0 %3982
    %3984 = vrot.lane.b32.xlu0 %v3406, 64
    %v3985 = vpop.permute.xlu0 %3984
    %3986 = vrot.lane.b32.xlu0 %v3407, 64
    %v3987 = vpop.permute.xlu0 %3986
    %3988 = vrot.lane.b32.xlu0 %v3408, 64
    %v3989 = vpop.permute.xlu0 %3988
    %3990 = vrot.lane.b32.xlu0 %v3409, 64
    %v3991 = vpop.permute.xlu0 %3990
    %3992 = vrot.lane.b32.xlu0 %v3410, 64
    %v3993 = vpop.permute.xlu0 %3992
    %3994 = vrot.lane.b32.xlu0 %v3411, 64
    %v3995 = vpop.permute.xlu0 %3994
    %3996 = vrot.lane.b32.xlu0 %v3412, 64
    %v3997 = vpop.permute.xlu0 %3996
    %3998 = vrot.lane.b32.xlu0 %v3413, 64
    %v3999 = vpop.permute.xlu0 %3998
    %4000 = vrot.lane.b32.xlu0 %v3414, 64
    %v4001 = vpop.permute.xlu0 %4000
    %4002 = vrot.lane.b32.xlu0 %v3415, 64
    %v4003 = vpop.permute.xlu0 %4002
    %4004 = vrot.lane.b32.xlu0 %v3416, 64
    %v4005 = vpop.permute.xlu0 %4004
    %4006 = vrot.lane.b32.xlu0 %v3417, 64
    %v4007 = vpop.permute.xlu0 %4006
    %4008 = vrot.lane.b32.xlu0 %v3418, 64
    %v4009 = vpop.permute.xlu0 %4008
    %4010 = vrot.lane.b32.xlu0 %v3419, 64
    %v4011 = vpop.permute.xlu0 %4010
    %4012 = vrot.lane.b32.xlu0 %v3420, 64
    %v4013 = vpop.permute.xlu0 %4012
    %4014 = vrot.lane.b32.xlu0 %v3421, 64
    %v4015 = vpop.permute.xlu0 %4014
    %4016 = vrot.lane.b32.xlu0 %v3422, 64
    %v4017 = vpop.permute.xlu0 %4016
    %4018 = vrot.lane.b32.xlu0 %v3423, 64
    %v4019 = vpop.permute.xlu0 %4018
    %4020 = vrot.lane.b32.xlu0 %v3424, 64
    %v4021 = vpop.permute.xlu0 %4020
    %4022 = vrot.lane.b32.xlu0 %v3425, 64
    %v4023 = vpop.permute.xlu0 %4022
    %4024 = vrot.lane.b32.xlu0 %v3426, 64
    %v4025 = vpop.permute.xlu0 %4024
    %4026 = vrot.lane.b32.xlu0 %v3427, 64
    %v4027 = vpop.permute.xlu0 %4026
    %4028 = vrot.lane.b32.xlu0 %v3428, 64
    %v4029 = vpop.permute.xlu0 %4028
    %4030 = vrot.lane.b32.xlu0 %v3429, 64
    %v4031 = vpop.permute.xlu0 %4030
    %4032 = vrot.lane.b32.xlu0 %v3430, 64
    %v4033 = vpop.permute.xlu0 %4032
    %4034 = vrot.lane.b32.xlu0 %v3431, 64
    %v4035 = vpop.permute.xlu0 %4034
    %4036 = vrot.lane.b32.xlu0 %v3432, 64
    %v4037 = vpop.permute.xlu0 %4036
    %4038 = vrot.lane.b32.xlu0 %v3433, 64
    %v4039 = vpop.permute.xlu0 %4038
    %4040 = vrot.lane.b32.xlu0 %v3434, 64
    %v4041 = vpop.permute.xlu0 %4040
    %4042 = vrot.lane.b32.xlu0 %v3435, 64
    %v4043 = vpop.permute.xlu0 %4042
    %4044 = vrot.lane.b32.xlu0 %v3436, 64
    %v4045 = vpop.permute.xlu0 %4044
    %4046 = vrot.lane.b32.xlu0 %v3437, 64
    %v4047 = vpop.permute.xlu0 %4046
    %4048 = vrot.lane.b32.xlu0 %v3438, 64
    %v4049 = vpop.permute.xlu0 %4048
    %4050 = vrot.lane.b32.xlu0 %v3439, 64
    %v4051 = vpop.permute.xlu0 %4050
    %4052 = vrot.lane.b32.xlu0 %v3440, 64
    %v4053 = vpop.permute.xlu0 %4052
    %4054 = vrot.lane.b32.xlu0 %v3441, 64
    %v4055 = vpop.permute.xlu0 %4054
    %4056 = vrot.lane.b32.xlu0 %v3442, 64
    %v4057 = vpop.permute.xlu0 %4056
    %4058 = vrot.lane.b32.xlu0 %v3443, 64
    %v4059 = vpop.permute.xlu0 %4058
    %4060 = vrot.lane.b32.xlu0 %v3444, 64
    %v4061 = vpop.permute.xlu0 %4060
    %4062 = vrot.lane.b32.xlu0 %v3445, 64
    %v4063 = vpop.permute.xlu0 %4062
    %4064 = vrot.lane.b32.xlu0 %v3446, 64
    %v4065 = vpop.permute.xlu0 %4064
    %4066 = vrot.lane.b32.xlu0 %v3447, 64
    %v4067 = vpop.permute.xlu0 %4066
    %4068 = vrot.lane.b32.xlu0 %v3448, 64
    %v4069 = vpop.permute.xlu0 %4068
    %4070 = vrot.lane.b32.xlu0 %v3449, 64
    %v4071 = vpop.permute.xlu0 %4070
    %4072 = vrot.lane.b32.xlu0 %v3450, 64
    %v4073 = vpop.permute.xlu0 %4072
    %4074 = vrot.lane.b32.xlu0 %v3451, 64
    %v4075 = vpop.permute.xlu0 %4074
    %4076 = vrot.lane.b32.xlu0 %v3452, 64
    %v4077 = vpop.permute.xlu0 %4076
    %4078 = vrot.lane.b32.xlu0 %v3453, 64
    %v4079 = vpop.permute.xlu0 %4078
    %4080 = vrot.lane.b32.xlu0 %v3454, 64
    %v4081 = vpop.permute.xlu0 %4080
    %4082 = vrot.lane.b32.xlu0 %v3455, 64
    %v4083 = vpop.permute.xlu0 %4082
    %4084 = vrot.lane.b32.xlu0 %v3456, 64
    %v4085 = vpop.permute.xlu0 %4084
    %4086 = vrot.lane.b32.xlu0 %v3457, 64
    %v4087 = vpop.permute.xlu0 %4086
    %4088 = vrot.lane.b32.xlu0 %v3458, 64
    %v4089 = vpop.permute.xlu0 %4088
    %4090 = vrot.lane.b32.xlu0 %v3459, 64
    %v4091 = vpop.permute.xlu0 %4090
    %4092 = vrot.lane.b32.xlu0 %v3460, 64
    %v4093 = vpop.permute.xlu0 %4092
    %4094 = vrot.lane.b32.xlu0 %v3461, 64
    %v4095 = vpop.permute.xlu0 %4094
    %4096 = vrot.lane.b32.xlu0 %v3462, 64
    %v4097 = vpop.permute.xlu0 %4096
    %4098 = vrot.lane.b32.xlu0 %v3463, 64
    %v4099 = vpop.permute.xlu0 %4098
    %4100 = vrot.lane.b32.xlu0 %v3464, 64
    %v4101 = vpop.permute.xlu0 %4100
    %4102 = vrot.lane.b32.xlu0 %v3465, 64
    %v4103 = vpop.permute.xlu0 %4102
    %4104 = vrot.lane.b32.xlu0 %v3466, 64
    %v4105 = vpop.permute.xlu0 %4104
    %4106 = vrot.lane.b32.xlu0 %v3467, 64
    %v4107 = vpop.permute.xlu0 %4106
    %4108 = vrot.lane.b32.xlu0 %v3468, 64
    %v4109 = vpop.permute.xlu0 %4108
    %4110 = vrot.lane.b32.xlu0 %v3469, 64
    %v4111 = vpop.permute.xlu0 %4110
    %4112 = vrot.lane.b32.xlu0 %v3470, 64
    %v4113 = vpop.permute.xlu0 %4112
    %4114 = vrot.lane.b32.xlu0 %v3471, 64
    %v4115 = vpop.permute.xlu0 %4114
    %4116 = vrot.lane.b32.xlu0 %v3472, 64
    %v4117 = vpop.permute.xlu0 %4116
    %4118 = vrot.lane.b32.xlu0 %v3473, 64
    %v4119 = vpop.permute.xlu0 %4118
    %4120 = vrot.lane.b32.xlu0 %v3474, 64
    %v4121 = vpop.permute.xlu0 %4120
    %4122 = vrot.lane.b32.xlu0 %v3475, 64
    %v4123 = vpop.permute.xlu0 %4122
    %4124 = vrot.lane.b32.xlu0 %v3476, 64
    %v4125 = vpop.permute.xlu0 %4124
    %4126 = vrot.lane.b32.xlu0 %v3477, 64
    %v4127 = vpop.permute.xlu0 %4126
    %4128 = vrot.lane.b32.xlu0 %v3478, 64
    %v4129 = vpop.permute.xlu0 %4128
    %4130 = vrot.lane.b32.xlu0 %v3479, 64
    %v4131 = vpop.permute.xlu0 %4130
    %4132 = vrot.lane.b32.xlu0 %v3480, 64
    %v4133 = vpop.permute.xlu0 %4132
    %4134 = vrot.lane.b32.xlu0 %v3481, 64
    %v4135 = vpop.permute.xlu0 %4134
    %4136 = vrot.lane.b32.xlu0 %v3482, 64
    %v4137 = vpop.permute.xlu0 %4136
    %4138 = vrot.lane.b32.xlu0 %v3483, 64
    %v4139 = vpop.permute.xlu0 %4138
    %4140 = vrot.lane.b32.xlu0 %v3484, 64
    %v4141 = vpop.permute.xlu0 %4140
    %4142 = vrot.lane.b32.xlu0 %v3485, 64
    %v4143 = vpop.permute.xlu0 %4142
    %4144 = vrot.lane.b32.xlu0 %v3486, 64
    %v4145 = vpop.permute.xlu0 %4144
    %4146 = vrot.lane.b32.xlu0 %v3487, 64
    %v4147 = vpop.permute.xlu0 %4146
    %4148 = vrot.lane.b32.xlu0 %v3488, 64
    %v4149 = vpop.permute.xlu0 %4148
    %4150 = vrot.lane.b32.xlu0 %v3489, 64
    %v4151 = vpop.permute.xlu0 %4150
    %4152 = vrot.lane.b32.xlu0 %v3490, 64
    %v4153 = vpop.permute.xlu0 %4152
    %4154 = vrot.lane.b32.xlu0 %v3491, 64
    %v4155 = vpop.permute.xlu0 %4154
    %4156 = vrot.lane.b32.xlu0 %v3492, 64
    %v4157 = vpop.permute.xlu0 %4156
    %4158 = vrot.lane.b32.xlu0 %v3493, 64
    %v4159 = vpop.permute.xlu0 %4158
    %4160 = vrot.lane.b32.xlu0 %v3494, 64
    %v4161 = vpop.permute.xlu0 %4160
    %4162 = vrot.lane.b32.xlu0 %v3495, 64
    %v4163 = vpop.permute.xlu0 %4162
    %4164 = vrot.lane.b32.xlu0 %v3496, 64
    %v4165 = vpop.permute.xlu0 %4164
    %4166 = vrot.lane.b32.xlu0 %v3497, 64
    %v4167 = vpop.permute.xlu0 %4166
    %4168 = vrot.lane.b32.xlu0 %v3498, 64
    %v4169 = vpop.permute.xlu0 %4168
    %4170 = vrot.lane.b32.xlu0 %v3499, 64
    %v4171 = vpop.permute.xlu0 %4170
    %4172 = vrot.lane.b32.xlu0 %v3500, 64
    %v4173 = vpop.permute.xlu0 %4172
    %4174 = vrot.lane.b32.xlu0 %v3501, 64
    %v4175 = vpop.permute.xlu0 %4174
    %4176 = vrot.lane.b32.xlu0 %v3502, 64
    %v4177 = vpop.permute.xlu0 %4176
    %4178 = vrot.lane.b32.xlu0 %v3503, 64
    %v4179 = vpop.permute.xlu0 %4178
    %4180 = vrot.lane.b32.xlu0 %v3504, 64
    %v4181 = vpop.permute.xlu0 %4180
    %4182 = vrot.lane.b32.xlu0 %v3505, 64
    %v4183 = vpop.permute.xlu0 %4182
    %4184 = vrot.lane.b32.xlu0 %v3506, 64
    %v4185 = vpop.permute.xlu0 %4184
    %4186 = vrot.lane.b32.xlu0 %v3507, 64
    %v4187 = vpop.permute.xlu0 %4186
    %4188 = vrot.lane.b32.xlu0 %v3508, 64
    %v4189 = vpop.permute.xlu0 %4188
    %4190 = vrot.lane.b32.xlu0 %v3509, 64
    %v4191 = vpop.permute.xlu0 %4190
    %4192 = vrot.lane.b32.xlu0 %v3510, 64
    %v4193 = vpop.permute.xlu0 %4192
    %4194 = vrot.lane.b32.xlu0 %v3511, 64
    %v4195 = vpop.permute.xlu0 %4194
    %4196 = vrot.lane.b32.xlu0 %v3512, 64
    %v4197 = vpop.permute.xlu0 %4196
    %4198 = vrot.lane.b32.xlu0 %v3513, 64
    %v4199 = vpop.permute.xlu0 %4198
    %4200 = vrot.lane.b32.xlu0 %v3514, 64
    %v4201 = vpop.permute.xlu0 %4200
    %4202 = vrot.lane.b32.xlu0 %v3515, 64
    %v4203 = vpop.permute.xlu0 %4202
    %4204 = vrot.lane.b32.xlu0 %v3516, 64
    %v4205 = vpop.permute.xlu0 %4204
    %4206 = vrot.lane.b32.xlu0 %v3517, 64
    %v4207 = vpop.permute.xlu0 %4206
    %4208 = vrot.lane.b32.xlu0 %v3518, 64
    %v4209 = vpop.permute.xlu0 %4208
    %4210 = vrot.lane.b32.xlu0 %v3519, 64
    %v4211 = vpop.permute.xlu0 %4210
    %4212 = vrot.lane.b32.xlu0 %v3520, 64
    %v4213 = vpop.permute.xlu0 %4212
    %4214 = vrot.lane.b32.xlu0 %v3521, 64
    %v4215 = vpop.permute.xlu0 %4214
    %4216 = vrot.lane.b32.xlu0 %v3522, 64
    %v4217 = vpop.permute.xlu0 %4216
    %4218 = vrot.lane.b32.xlu0 %v3523, 64
    %v4219 = vpop.permute.xlu0 %4218
    %4220 = vrot.lane.b32.xlu0 %v3524, 64
    %v4221 = vpop.permute.xlu0 %4220
    %4222 = vrot.lane.b32.xlu0 %v3525, 64
    %v4223 = vpop.permute.xlu0 %4222
    %4224 = vrot.lane.b32.xlu0 %v3526, 64
    %v4225 = vpop.permute.xlu0 %4224
    %4226 = vrot.lane.b32.xlu0 %v3527, 64
    %v4227 = vpop.permute.xlu0 %4226
    %4228 = vrot.lane.b32.xlu0 %v3528, 64
    %v4229 = vpop.permute.xlu0 %4228
    %4230 = vrot.lane.b32.xlu0 %v3529, 64
    %v4231 = vpop.permute.xlu0 %4230
    %4232 = vrot.lane.b32.xlu0 %v3530, 64
    %v4233 = vpop.permute.xlu0 %4232
    %4234 = vrot.lane.b32.xlu0 %v3531, 64
    %v4235 = vpop.permute.xlu0 %4234
    %4236 = vrot.lane.b32.xlu0 %v3532, 64
    %v4237 = vpop.permute.xlu0 %4236
    %4238 = vrot.lane.b32.xlu0 %v3533, 64
    %v4239 = vpop.permute.xlu0 %4238
    %4240 = vrot.lane.b32.xlu0 %v3534, 64
    %v4241 = vpop.permute.xlu0 %4240
    %4242 = vrot.lane.b32.xlu0 %v3535, 64
    %v4243 = vpop.permute.xlu0 %4242
    %4244 = vrot.lane.b32.xlu0 %v3536, 64
    %v4245 = vpop.permute.xlu0 %4244
    %4246 = vrot.lane.b32.xlu0 %v3537, 64
    %v4247 = vpop.permute.xlu0 %4246
    %4248 = vrot.lane.b32.xlu0 %v3538, 64
    %v4249 = vpop.permute.xlu0 %4248
    %4250 = vrot.lane.b32.xlu0 %v3539, 64
    %v4251 = vpop.permute.xlu0 %4250
    %4252 = vrot.lane.b32.xlu0 %v3540, 64
    %v4253 = vpop.permute.xlu0 %4252
    %4254 = vrot.lane.b32.xlu0 %v3541, 64
    %v4255 = vpop.permute.xlu0 %4254
    %4256 = vrot.lane.b32.xlu0 %v3542, 64
    %v4257 = vpop.permute.xlu0 %4256
    %4258 = vrot.lane.b32.xlu0 %v3543, 64
    %v4259 = vpop.permute.xlu0 %4258
    %4260 = vrot.lane.b32.xlu0 %v3544, 64
    %v4261 = vpop.permute.xlu0 %4260
    %4262 = vrot.lane.b32.xlu0 %v3545, 64
    %v4263 = vpop.permute.xlu0 %4262
    %4264 = vrot.lane.b32.xlu0 %v3546, 64
    %v4265 = vpop.permute.xlu0 %4264
    %4266 = vrot.lane.b32.xlu0 %v3547, 64
    %v4267 = vpop.permute.xlu0 %4266
    %4268 = vrot.lane.b32.xlu0 %v3548, 64
    %v4269 = vpop.permute.xlu0 %4268
    %4270 = vrot.lane.b32.xlu0 %v3549, 64
    %v4271 = vpop.permute.xlu0 %4270
    %4272 = vrot.lane.b32.xlu0 %v3550, 64
    %v4273 = vpop.permute.xlu0 %4272
    %4274 = vrot.lane.b32.xlu0 %v3551, 64
    %v4275 = vpop.permute.xlu0 %4274
    %4276 = vrot.lane.b32.xlu0 %v3552, 64
    %v4277 = vpop.permute.xlu0 %4276
    %4278 = vrot.lane.b32.xlu0 %v3553, 64
    %v4279 = vpop.permute.xlu0 %4278
    %4280 = vrot.lane.b32.xlu0 %v3554, 64
    %v4281 = vpop.permute.xlu0 %4280
    %4282 = vrot.lane.b32.xlu0 %v3555, 64
    %v4283 = vpop.permute.xlu0 %4282
    %4284 = vrot.lane.b32.xlu0 %v3556, 64
    %v4285 = vpop.permute.xlu0 %4284
    %4286 = vrot.lane.b32.xlu0 %v3557, 64
    %v4287 = vpop.permute.xlu0 %4286
    %4288 = vrot.lane.b32.xlu0 %v3558, 64
    %v4289 = vpop.permute.xlu0 %4288
    %4290 = vrot.lane.b32.xlu0 %v3559, 64
    %v4291 = vpop.permute.xlu0 %4290
    %4292 = vrot.lane.b32.xlu0 %v3560, 64
    %v4293 = vpop.permute.xlu0 %4292
    %4294 = vrot.lane.b32.xlu0 %v3561, 64
    %v4295 = vpop.permute.xlu0 %4294
    %4296 = vrot.lane.b32.xlu0 %v3562, 64
    %v4297 = vpop.permute.xlu0 %4296
    %4298 = vrot.lane.b32.xlu0 %v3563, 64
    %v4299 = vpop.permute.xlu0 %4298
    %4300 = vrot.lane.b32.xlu0 %v3564, 64
    %v4301 = vpop.permute.xlu0 %4300
    %4302 = vrot.lane.b32.xlu0 %v3565, 64
    %v4303 = vpop.permute.xlu0 %4302
    %4304 = vrot.lane.b32.xlu0 %v3566, 64
    %v4305 = vpop.permute.xlu0 %4304
    %4306 = vrot.lane.b32.xlu0 %v3567, 64
    %v4307 = vpop.permute.xlu0 %4306
    %4308 = vrot.lane.b32.xlu0 %v3568, 64
    %v4309 = vpop.permute.xlu0 %4308
    %4310 = vrot.lane.b32.xlu0 %v3569, 64
    %v4311 = vpop.permute.xlu0 %4310
    %4312 = vrot.lane.b32.xlu0 %v3570, 64
    %v4313 = vpop.permute.xlu0 %4312
    %4314 = vrot.lane.b32.xlu0 %v3571, 64
    %v4315 = vpop.permute.xlu0 %4314
    %4316 = vrot.lane.b32.xlu0 %v3572, 64
    %v4317 = vpop.permute.xlu0 %4316
    %4318 = vrot.lane.b32.xlu0 %v3573, 64
    %v4319 = vpop.permute.xlu0 %4318
    %4320 = vrot.lane.b32.xlu0 %v3574, 64
    %v4321 = vpop.permute.xlu0 %4320
    %4322 = vrot.lane.b32.xlu0 %v3575, 64
    %v4323 = vpop.permute.xlu0 %4322
    %4324 = vrot.lane.b32.xlu0 %v3576, 64
    %v4325 = vpop.permute.xlu0 %4324
    %4326 = vrot.lane.b32.xlu0 %v3577, 64
    %v4327 = vpop.permute.xlu0 %4326
    %4328 = vrot.lane.b32.xlu0 %v3578, 64
    %v4329 = vpop.permute.xlu0 %4328
    %4330 = vrot.lane.b32.xlu0 %v3579, 64
    %v4331 = vpop.permute.xlu0 %4330
    %4332 = vrot.lane.b32.xlu0 %v3580, 64
    %v4333 = vpop.permute.xlu0 %4332
    %4334 = vrot.lane.b32.xlu0 %v3581, 64
    %v4335 = vpop.permute.xlu0 %4334
    %4336 = vrot.lane.b32.xlu0 %v3582, 64
    %v4337 = vpop.permute.xlu0 %4336
    %4338 = vrot.lane.b32.xlu0 %v3583, 64
    %v4339 = vpop.permute.xlu0 %4338
    %4340 = vrot.lane.b32.xlu0 %v3584, 64
    %v4341 = vpop.permute.xlu0 %4340
    %4342 = vrot.lane.b32.xlu0 %v3585, 64
    %v4343 = vpop.permute.xlu0 %4342
    %4344 = vrot.lane.b32.xlu0 %v3586, 64
    %v4345 = vpop.permute.xlu0 %4344
    %4346 = vrot.lane.b32.xlu0 %v3587, 64
    %v4347 = vpop.permute.xlu0 %4346
    %4348 = vrot.lane.b32.xlu0 %v3588, 64
    %v4349 = vpop.permute.xlu0 %4348
    %4350 = vrot.lane.b32.xlu0 %v3589, 64
    %v4351 = vpop.permute.xlu0 %4350
    %4352 = vrot.lane.b32.xlu0 %v3590, 64
    %v4353 = vpop.permute.xlu0 %4352
    %4354 = vrot.lane.b32.xlu0 %v3591, 64
    %v4355 = vpop.permute.xlu0 %4354
    %4356 = vrot.lane.b32.xlu0 %v3592, 64
    %v4357 = vpop.permute.xlu0 %4356
    %4358 = vrot.lane.b32.xlu0 %v3593, 64
    %v4359 = vpop.permute.xlu0 %4358
    %4360 = vrot.lane.b32.xlu0 %v3594, 64
    %v4361 = vpop.permute.xlu0 %4360
    %4362 = vrot.lane.b32.xlu0 %v3595, 64
    %v4363 = vpop.permute.xlu0 %4362
    %v4620 = vlaneseq
    %v4621 = vshrl.u32 %v4620, 7
    %v4622 = vsub.s32 0, %v4621
    %v4623 = vrot.slane %v163, %v4622
    %v4624 = vlaneseq
    %v4625 = vshrl.u32 %v4624, 7
    %v4626 = vsub.s32 0, %v4625
    %v4627 = vrot.slane %v177, %v4626
    %v4628 = vlaneseq
    %v4629 = vshrl.u32 %v4628, 7
    %v4630 = vsub.s32 0, %v4629
    %v4631 = vrot.slane %v185, %v4630
    %v4632 = vlaneseq
    %v4633 = vshrl.u32 %v4632, 7
    %v4634 = vsub.s32 0, %v4633
    %v4635 = vrot.slane %v187, %v4634
    %v4636 = vlaneseq
    %v4637 = vshrl.u32 %v4636, 7
    %v4638 = vsub.s32 0, %v4637
    %v4639 = vrot.slane %v170, %v4638
    %v4640 = vlaneseq
    %v4641 = vshrl.u32 %v4640, 7
    %v4642 = vsub.s32 0, %v4641
    %v4643 = vrot.slane %v184, %v4642
    %v4644 = vlaneseq
    %v4645 = vshrl.u32 %v4644, 7
    %v4646 = vsub.s32 0, %v4645
    %v4647 = vrot.slane %v186, %v4646
    %v4648 = vlaneseq
    %v4649 = vshrl.u32 %v4648, 7
    %v4650 = vsub.s32 0, %v4649
    %v4651 = vrot.slane %v188, %v4650
    %v4652 = vlaneseq
    %v4653 = vshrl.u32 %v4652, 7
    %v4654 = vsub.s32 0, %v4653
    %v4655 = vrot.slane %v212, %v4654
    %v4656 = vlaneseq
    %v4657 = vshrl.u32 %v4656, 7
    %v4658 = vsub.s32 0, %v4657
    %v4659 = vrot.slane %v226, %v4658
    %v4660 = vlaneseq
    %v4661 = vshrl.u32 %v4660, 7
    %v4662 = vsub.s32 0, %v4661
    %v4663 = vrot.slane %v234, %v4662
    %v4664 = vlaneseq
    %v4665 = vshrl.u32 %v4664, 7
    %v4666 = vsub.s32 0, %v4665
    %v4667 = vrot.slane %v236, %v4666
    %v4668 = vlaneseq
    %v4669 = vshrl.u32 %v4668, 7
    %v4670 = vsub.s32 0, %v4669
    %v4671 = vrot.slane %v219, %v4670
    %v4672 = vlaneseq
    %v4673 = vshrl.u32 %v4672, 7
    %v4674 = vsub.s32 0, %v4673
    %v4675 = vrot.slane %v233, %v4674
    %v4676 = vlaneseq
    %v4677 = vshrl.u32 %v4676, 7
    %v4678 = vsub.s32 0, %v4677
    %v4679 = vrot.slane %v235, %v4678
    %v4680 = vlaneseq
    %v4681 = vshrl.u32 %v4680, 7
    %v4682 = vsub.s32 0, %v4681
    %v4683 = vrot.slane %v237, %v4682
    %v4684 = vlaneseq
    %v4685 = vshrl.u32 %v4684, 7
    %v4686 = vsub.s32 0, %v4685
    %v4687 = vrot.slane %v261, %v4686
    %v4688 = vlaneseq
    %v4689 = vshrl.u32 %v4688, 7
    %v4690 = vsub.s32 0, %v4689
    %v4691 = vrot.slane %v275, %v4690
    %v4692 = vlaneseq
    %v4693 = vshrl.u32 %v4692, 7
    %v4694 = vsub.s32 0, %v4693
    %v4695 = vrot.slane %v283, %v4694
    %v4696 = vlaneseq
    %v4697 = vshrl.u32 %v4696, 7
    %v4698 = vsub.s32 0, %v4697
    %v4699 = vrot.slane %v285, %v4698
    %v4700 = vlaneseq
    %v4701 = vshrl.u32 %v4700, 7
    %v4702 = vsub.s32 0, %v4701
    %v4703 = vrot.slane %v268, %v4702
    %v4704 = vlaneseq
    %v4705 = vshrl.u32 %v4704, 7
    %v4706 = vsub.s32 0, %v4705
    %v4707 = vrot.slane %v282, %v4706
    %v4708 = vlaneseq
    %v4709 = vshrl.u32 %v4708, 7
    %v4710 = vsub.s32 0, %v4709
    %v4711 = vrot.slane %v284, %v4710
    %v4712 = vlaneseq
    %v4713 = vshrl.u32 %v4712, 7
    %v4714 = vsub.s32 0, %v4713
    %v4715 = vrot.slane %v286, %v4714
    %v4716 = vlaneseq
    %v4717 = vshrl.u32 %v4716, 7
    %v4718 = vsub.s32 0, %v4717
    %v4719 = vrot.slane %v310, %v4718
    %v4720 = vlaneseq
    %v4721 = vshrl.u32 %v4720, 7
    %v4722 = vsub.s32 0, %v4721
    %v4723 = vrot.slane %v324, %v4722
    %v4724 = vlaneseq
    %v4725 = vshrl.u32 %v4724, 7
    %v4726 = vsub.s32 0, %v4725
    %v4727 = vrot.slane %v332, %v4726
    %v4728 = vlaneseq
    %v4729 = vshrl.u32 %v4728, 7
    %v4730 = vsub.s32 0, %v4729
    %v4731 = vrot.slane %v334, %v4730
    %v4732 = vlaneseq
    %v4733 = vshrl.u32 %v4732, 7
    %v4734 = vsub.s32 0, %v4733
    %v4735 = vrot.slane %v317, %v4734
    %v4736 = vlaneseq
    %v4737 = vshrl.u32 %v4736, 7
    %v4738 = vsub.s32 0, %v4737
    %v4739 = vrot.slane %v331, %v4738
    %v4740 = vlaneseq
    %v4741 = vshrl.u32 %v4740, 7
    %v4742 = vsub.s32 0, %v4741
    %v4743 = vrot.slane %v333, %v4742
    %v4744 = vlaneseq
    %v4745 = vshrl.u32 %v4744, 7
    %v4746 = vsub.s32 0, %v4745
    %v4747 = vrot.slane %v335, %v4746
    %v4748 = vlaneseq
    %v4749 = vshrl.u32 %v4748, 7
    %v4750 = vsub.s32 0, %v4749
    %v4751 = vrot.slane %v359, %v4750
    %v4752 = vlaneseq
    %v4753 = vshrl.u32 %v4752, 7
    %v4754 = vsub.s32 0, %v4753
    %v4755 = vrot.slane %v373, %v4754
    %v4756 = vlaneseq
    %v4757 = vshrl.u32 %v4756, 7
    %v4758 = vsub.s32 0, %v4757
    %v4759 = vrot.slane %v381, %v4758
    %v4760 = vlaneseq
    %v4761 = vshrl.u32 %v4760, 7
    %v4762 = vsub.s32 0, %v4761
    %v4763 = vrot.slane %v383, %v4762
    %v4764 = vlaneseq
    %v4765 = vshrl.u32 %v4764, 7
    %v4766 = vsub.s32 0, %v4765
    %v4767 = vrot.slane %v366, %v4766
    %v4768 = vlaneseq
    %v4769 = vshrl.u32 %v4768, 7
    %v4770 = vsub.s32 0, %v4769
    %v4771 = vrot.slane %v380, %v4770
    %v4772 = vlaneseq
    %v4773 = vshrl.u32 %v4772, 7
    %v4774 = vsub.s32 0, %v4773
    %v4775 = vrot.slane %v382, %v4774
    %v4776 = vlaneseq
    %v4777 = vshrl.u32 %v4776, 7
    %v4778 = vsub.s32 0, %v4777
    %v4779 = vrot.slane %v384, %v4778
    %v4780 = vlaneseq
    %v4781 = vshrl.u32 %v4780, 7
    %v4782 = vsub.s32 0, %v4781
    %v4783 = vrot.slane %v408, %v4782
    %v4784 = vlaneseq
    %v4785 = vshrl.u32 %v4784, 7
    %v4786 = vsub.s32 0, %v4785
    %v4787 = vrot.slane %v422, %v4786
    %v4788 = vlaneseq
    %v4789 = vshrl.u32 %v4788, 7
    %v4790 = vsub.s32 0, %v4789
    %v4791 = vrot.slane %v430, %v4790
    %v4792 = vlaneseq
    %v4793 = vshrl.u32 %v4792, 7
    %v4794 = vsub.s32 0, %v4793
    %v4795 = vrot.slane %v432, %v4794
    %v4796 = vlaneseq
    %v4797 = vshrl.u32 %v4796, 7
    %v4798 = vsub.s32 0, %v4797
    %v4799 = vrot.slane %v415, %v4798
    %v4800 = vlaneseq
    %v4801 = vshrl.u32 %v4800, 7
    %v4802 = vsub.s32 0, %v4801
    %v4803 = vrot.slane %v429, %v4802
    %v4804 = vlaneseq
    %v4805 = vshrl.u32 %v4804, 7
    %v4806 = vsub.s32 0, %v4805
    %v4807 = vrot.slane %v431, %v4806
    %v4808 = vlaneseq
    %v4809 = vshrl.u32 %v4808, 7
    %v4810 = vsub.s32 0, %v4809
    %v4811 = vrot.slane %v433, %v4810
    %v4812 = vlaneseq
    %v4813 = vshrl.u32 %v4812, 7
    %v4814 = vsub.s32 0, %v4813
    %v4815 = vrot.slane %v457, %v4814
    %v4816 = vlaneseq
    %v4817 = vshrl.u32 %v4816, 7
    %v4818 = vsub.s32 0, %v4817
    %v4819 = vrot.slane %v471, %v4818
    %v4820 = vlaneseq
    %v4821 = vshrl.u32 %v4820, 7
    %v4822 = vsub.s32 0, %v4821
    %v4823 = vrot.slane %v479, %v4822
    %v4824 = vlaneseq
    %v4825 = vshrl.u32 %v4824, 7
    %v4826 = vsub.s32 0, %v4825
    %v4827 = vrot.slane %v481, %v4826
    %v4828 = vlaneseq
    %v4829 = vshrl.u32 %v4828, 7
    %v4830 = vsub.s32 0, %v4829
    %v4831 = vrot.slane %v464, %v4830
    %v4832 = vlaneseq
    %v4833 = vshrl.u32 %v4832, 7
    %v4834 = vsub.s32 0, %v4833
    %v4835 = vrot.slane %v478, %v4834
    %v4836 = vlaneseq
    %v4837 = vshrl.u32 %v4836, 7
    %v4838 = vsub.s32 0, %v4837
    %v4839 = vrot.slane %v480, %v4838
    %v4840 = vlaneseq
    %v4841 = vshrl.u32 %v4840, 7
    %v4842 = vsub.s32 0, %v4841
    %v4843 = vrot.slane %v482, %v4842
    %v4844 = vlaneseq
    %v4845 = vshrl.u32 %v4844, 7
    %v4846 = vsub.s32 0, %v4845
    %v4847 = vrot.slane %v506, %v4846
    %v4848 = vlaneseq
    %v4849 = vshrl.u32 %v4848, 7
    %v4850 = vsub.s32 0, %v4849
    %v4851 = vrot.slane %v520, %v4850
    %v4852 = vlaneseq
    %v4853 = vshrl.u32 %v4852, 7
    %v4854 = vsub.s32 0, %v4853
    %v4855 = vrot.slane %v528, %v4854
    %v4856 = vlaneseq
    %v4857 = vshrl.u32 %v4856, 7
    %v4858 = vsub.s32 0, %v4857
    %v4859 = vrot.slane %v530, %v4858
    %v4860 = vlaneseq
    %v4861 = vshrl.u32 %v4860, 7
    %v4862 = vsub.s32 0, %v4861
    %v4863 = vrot.slane %v513, %v4862
    %v4864 = vlaneseq
    %v4865 = vshrl.u32 %v4864, 7
    %v4866 = vsub.s32 0, %v4865
    %v4867 = vrot.slane %v527, %v4866
    %v4868 = vlaneseq
    %v4869 = vshrl.u32 %v4868, 7
    %v4870 = vsub.s32 0, %v4869
    %v4871 = vrot.slane %v529, %v4870
    %v4872 = vlaneseq
    %v4873 = vshrl.u32 %v4872, 7
    %v4874 = vsub.s32 0, %v4873
    %v4875 = vrot.slane %v531, %v4874
    %v4876 = vlaneseq
    %v4877 = vshrl.u32 %v4876, 7
    %v4878 = vsub.s32 0, %v4877
    %v4879 = vrot.slane %v555, %v4878
    %v4880 = vlaneseq
    %v4881 = vshrl.u32 %v4880, 7
    %v4882 = vsub.s32 0, %v4881
    %v4883 = vrot.slane %v569, %v4882
    %v4884 = vlaneseq
    %v4885 = vshrl.u32 %v4884, 7
    %v4886 = vsub.s32 0, %v4885
    %v4887 = vrot.slane %v577, %v4886
    %v4888 = vlaneseq
    %v4889 = vshrl.u32 %v4888, 7
    %v4890 = vsub.s32 0, %v4889
    %v4891 = vrot.slane %v579, %v4890
    %v4892 = vlaneseq
    %v4893 = vshrl.u32 %v4892, 7
    %v4894 = vsub.s32 0, %v4893
    %v4895 = vrot.slane %v562, %v4894
    %v4896 = vlaneseq
    %v4897 = vshrl.u32 %v4896, 7
    %v4898 = vsub.s32 0, %v4897
    %v4899 = vrot.slane %v576, %v4898
    %v4900 = vlaneseq
    %v4901 = vshrl.u32 %v4900, 7
    %v4902 = vsub.s32 0, %v4901
    %v4903 = vrot.slane %v578, %v4902
    %v4904 = vlaneseq
    %v4905 = vshrl.u32 %v4904, 7
    %v4906 = vsub.s32 0, %v4905
    %v4907 = vrot.slane %v580, %v4906
    %v4908 = vlaneseq
    %v4909 = vshrl.u32 %v4908, 7
    %v4910 = vsub.s32 0, %v4909
    %v4911 = vrot.slane %v604, %v4910
    %v4912 = vlaneseq
    %v4913 = vshrl.u32 %v4912, 7
    %v4914 = vsub.s32 0, %v4913
    %v4915 = vrot.slane %v618, %v4914
    %v4916 = vlaneseq
    %v4917 = vshrl.u32 %v4916, 7
    %v4918 = vsub.s32 0, %v4917
    %v4919 = vrot.slane %v626, %v4918
    %v4920 = vlaneseq
    %v4921 = vshrl.u32 %v4920, 7
    %v4922 = vsub.s32 0, %v4921
    %v4923 = vrot.slane %v628, %v4922
    %v4924 = vlaneseq
    %v4925 = vshrl.u32 %v4924, 7
    %v4926 = vsub.s32 0, %v4925
    %v4927 = vrot.slane %v611, %v4926
    %v4928 = vlaneseq
    %v4929 = vshrl.u32 %v4928, 7
    %v4930 = vsub.s32 0, %v4929
    %v4931 = vrot.slane %v625, %v4930
    %v4932 = vlaneseq
    %v4933 = vshrl.u32 %v4932, 7
    %v4934 = vsub.s32 0, %v4933
    %v4935 = vrot.slane %v627, %v4934
    %v4936 = vlaneseq
    %v4937 = vshrl.u32 %v4936, 7
    %v4938 = vsub.s32 0, %v4937
    %v4939 = vrot.slane %v629, %v4938
    %v4940 = vlaneseq
    %v4941 = vshrl.u32 %v4940, 7
    %v4942 = vsub.s32 0, %v4941
    %v4943 = vrot.slane %v653, %v4942
    %v4944 = vlaneseq
    %v4945 = vshrl.u32 %v4944, 7
    %v4946 = vsub.s32 0, %v4945
    %v4947 = vrot.slane %v667, %v4946
    %v4948 = vlaneseq
    %v4949 = vshrl.u32 %v4948, 7
    %v4950 = vsub.s32 0, %v4949
    %v4951 = vrot.slane %v675, %v4950
    %v4952 = vlaneseq
    %v4953 = vshrl.u32 %v4952, 7
    %v4954 = vsub.s32 0, %v4953
    %v4955 = vrot.slane %v677, %v4954
    %v4956 = vlaneseq
    %v4957 = vshrl.u32 %v4956, 7
    %v4958 = vsub.s32 0, %v4957
    %v4959 = vrot.slane %v660, %v4958
    %v4960 = vlaneseq
    %v4961 = vshrl.u32 %v4960, 7
    %v4962 = vsub.s32 0, %v4961
    %v4963 = vrot.slane %v674, %v4962
    %v4964 = vlaneseq
    %v4965 = vshrl.u32 %v4964, 7
    %v4966 = vsub.s32 0, %v4965
    %v4967 = vrot.slane %v676, %v4966
    %v4968 = vlaneseq
    %v4969 = vshrl.u32 %v4968, 7
    %v4970 = vsub.s32 0, %v4969
    %v4971 = vrot.slane %v678, %v4970
    %v4972 = vlaneseq
    %v4973 = vshrl.u32 %v4972, 7
    %v4974 = vsub.s32 0, %v4973
    %v4975 = vrot.slane %v702, %v4974
    %v4976 = vlaneseq
    %v4977 = vshrl.u32 %v4976, 7
    %v4978 = vsub.s32 0, %v4977
    %v4979 = vrot.slane %v716, %v4978
    %v4980 = vlaneseq
    %v4981 = vshrl.u32 %v4980, 7
    %v4982 = vsub.s32 0, %v4981
    %v4983 = vrot.slane %v724, %v4982
    %v4984 = vlaneseq
    %v4985 = vshrl.u32 %v4984, 7
    %v4986 = vsub.s32 0, %v4985
    %v4987 = vrot.slane %v726, %v4986
    %v4988 = vlaneseq
    %v4989 = vshrl.u32 %v4988, 7
    %v4990 = vsub.s32 0, %v4989
    %v4991 = vrot.slane %v709, %v4990
    %v4992 = vlaneseq
    %v4993 = vshrl.u32 %v4992, 7
    %v4994 = vsub.s32 0, %v4993
    %v4995 = vrot.slane %v723, %v4994
    %v4996 = vlaneseq
    %v4997 = vshrl.u32 %v4996, 7
    %v4998 = vsub.s32 0, %v4997
    %v4999 = vrot.slane %v725, %v4998
    %v5000 = vlaneseq
    %v5001 = vshrl.u32 %v5000, 7
    %v5002 = vsub.s32 0, %v5001
    %v5003 = vrot.slane %v727, %v5002
    %v5004 = vlaneseq
    %v5005 = vshrl.u32 %v5004, 7
    %v5006 = vsub.s32 0, %v5005
    %v5007 = vrot.slane %v751, %v5006
    %v5008 = vlaneseq
    %v5009 = vshrl.u32 %v5008, 7
    %v5010 = vsub.s32 0, %v5009
    %v5011 = vrot.slane %v765, %v5010
    %v5012 = vlaneseq
    %v5013 = vshrl.u32 %v5012, 7
    %v5014 = vsub.s32 0, %v5013
    %v5015 = vrot.slane %v773, %v5014
    %v5016 = vlaneseq
    %v5017 = vshrl.u32 %v5016, 7
    %v5018 = vsub.s32 0, %v5017
    %v5019 = vrot.slane %v775, %v5018
    %v5020 = vlaneseq
    %v5021 = vshrl.u32 %v5020, 7
    %v5022 = vsub.s32 0, %v5021
    %v5023 = vrot.slane %v758, %v5022
    %v5024 = vlaneseq
    %v5025 = vshrl.u32 %v5024, 7
    %v5026 = vsub.s32 0, %v5025
    %v5027 = vrot.slane %v772, %v5026
    %v5028 = vlaneseq
    %v5029 = vshrl.u32 %v5028, 7
    %v5030 = vsub.s32 0, %v5029
    %v5031 = vrot.slane %v774, %v5030
    %v5032 = vlaneseq
    %v5033 = vshrl.u32 %v5032, 7
    %v5034 = vsub.s32 0, %v5033
    %v5035 = vrot.slane %v776, %v5034
    %v5036 = vlaneseq
    %v5037 = vshrl.u32 %v5036, 7
    %v5038 = vsub.s32 0, %v5037
    %v5039 = vrot.slane %v800, %v5038
    %v5040 = vlaneseq
    %v5041 = vshrl.u32 %v5040, 7
    %v5042 = vsub.s32 0, %v5041
    %v5043 = vrot.slane %v814, %v5042
    %v5044 = vlaneseq
    %v5045 = vshrl.u32 %v5044, 7
    %v5046 = vsub.s32 0, %v5045
    %v5047 = vrot.slane %v822, %v5046
    %v5048 = vlaneseq
    %v5049 = vshrl.u32 %v5048, 7
    %v5050 = vsub.s32 0, %v5049
    %v5051 = vrot.slane %v824, %v5050
    %v5052 = vlaneseq
    %v5053 = vshrl.u32 %v5052, 7
    %v5054 = vsub.s32 0, %v5053
    %v5055 = vrot.slane %v807, %v5054
    %v5056 = vlaneseq
    %v5057 = vshrl.u32 %v5056, 7
    %v5058 = vsub.s32 0, %v5057
    %v5059 = vrot.slane %v821, %v5058
    %v5060 = vlaneseq
    %v5061 = vshrl.u32 %v5060, 7
    %v5062 = vsub.s32 0, %v5061
    %v5063 = vrot.slane %v823, %v5062
    %v5064 = vlaneseq
    %v5065 = vshrl.u32 %v5064, 7
    %v5066 = vsub.s32 0, %v5065
    %v5067 = vrot.slane %v825, %v5066
    %v5068 = vlaneseq
    %v5069 = vshrl.u32 %v5068, 7
    %v5070 = vsub.s32 0, %v5069
    %v5071 = vrot.slane %v849, %v5070
    %v5072 = vlaneseq
    %v5073 = vshrl.u32 %v5072, 7
    %v5074 = vsub.s32 0, %v5073
    %v5075 = vrot.slane %v863, %v5074
    %v5076 = vlaneseq
    %v5077 = vshrl.u32 %v5076, 7
    %v5078 = vsub.s32 0, %v5077
    %v5079 = vrot.slane %v871, %v5078
    %v5080 = vlaneseq
    %v5081 = vshrl.u32 %v5080, 7
    %v5082 = vsub.s32 0, %v5081
    %v5083 = vrot.slane %v873, %v5082
    %v5084 = vlaneseq
    %v5085 = vshrl.u32 %v5084, 7
    %v5086 = vsub.s32 0, %v5085
    %v5087 = vrot.slane %v856, %v5086
    %v5088 = vlaneseq
    %v5089 = vshrl.u32 %v5088, 7
    %v5090 = vsub.s32 0, %v5089
    %v5091 = vrot.slane %v870, %v5090
    %v5092 = vlaneseq
    %v5093 = vshrl.u32 %v5092, 7
    %v5094 = vsub.s32 0, %v5093
    %v5095 = vrot.slane %v872, %v5094
    %v5096 = vlaneseq
    %v5097 = vshrl.u32 %v5096, 7
    %v5098 = vsub.s32 0, %v5097
    %v5099 = vrot.slane %v874, %v5098
    %v5100 = vlaneseq
    %v5101 = vshrl.u32 %v5100, 7
    %v5102 = vsub.s32 0, %v5101
    %v5103 = vrot.slane %v898, %v5102
    %v5104 = vlaneseq
    %v5105 = vshrl.u32 %v5104, 7
    %v5106 = vsub.s32 0, %v5105
    %v5107 = vrot.slane %v912, %v5106
    %v5108 = vlaneseq
    %v5109 = vshrl.u32 %v5108, 7
    %v5110 = vsub.s32 0, %v5109
    %v5111 = vrot.slane %v920, %v5110
    %v5112 = vlaneseq
    %v5113 = vshrl.u32 %v5112, 7
    %v5114 = vsub.s32 0, %v5113
    %v5115 = vrot.slane %v922, %v5114
    %v5116 = vlaneseq
    %v5117 = vshrl.u32 %v5116, 7
    %v5118 = vsub.s32 0, %v5117
    %v5119 = vrot.slane %v905, %v5118
    %v5120 = vlaneseq
    %v5121 = vshrl.u32 %v5120, 7
    %v5122 = vsub.s32 0, %v5121
    %v5123 = vrot.slane %v919, %v5122
    %v5124 = vlaneseq
    %v5125 = vshrl.u32 %v5124, 7
    %v5126 = vsub.s32 0, %v5125
    %v5127 = vrot.slane %v921, %v5126
    %v5128 = vlaneseq
    %v5129 = vshrl.u32 %v5128, 7
    %v5130 = vsub.s32 0, %v5129
    %v5131 = vrot.slane %v923, %v5130
    %v5132 = vlaneseq
    %v5133 = vshrl.u32 %v5132, 7
    %v5134 = vsub.s32 0, %v5133
    %v5135 = vrot.slane %v947, %v5134
    %v5136 = vlaneseq
    %v5137 = vshrl.u32 %v5136, 7
    %v5138 = vsub.s32 0, %v5137
    %v5139 = vrot.slane %v961, %v5138
    %v5140 = vlaneseq
    %v5141 = vshrl.u32 %v5140, 7
    %v5142 = vsub.s32 0, %v5141
    %v5143 = vrot.slane %v969, %v5142
    %v5144 = vlaneseq
    %v5145 = vshrl.u32 %v5144, 7
    %v5146 = vsub.s32 0, %v5145
    %v5147 = vrot.slane %v971, %v5146
    %v5148 = vlaneseq
    %v5149 = vshrl.u32 %v5148, 7
    %v5150 = vsub.s32 0, %v5149
    %v5151 = vrot.slane %v954, %v5150
    %v5152 = vlaneseq
    %v5153 = vshrl.u32 %v5152, 7
    %v5154 = vsub.s32 0, %v5153
    %v5155 = vrot.slane %v968, %v5154
    %v5156 = vlaneseq
    %v5157 = vshrl.u32 %v5156, 7
    %v5158 = vsub.s32 0, %v5157
    %v5159 = vrot.slane %v970, %v5158
    %v5160 = vlaneseq
    %v5161 = vshrl.u32 %v5160, 7
    %v5162 = vsub.s32 0, %v5161
    %v5163 = vrot.slane %v972, %v5162
    %v5164 = vlaneseq
    %v5165 = vshrl.u32 %v5164, 7
    %v5166 = vsub.s32 0, %v5165
    %v5167 = vrot.slane %v996, %v5166
    %v5168 = vlaneseq
    %v5169 = vshrl.u32 %v5168, 7
    %v5170 = vsub.s32 0, %v5169
    %v5171 = vrot.slane %v1010, %v5170
    %v5172 = vlaneseq
    %v5173 = vshrl.u32 %v5172, 7
    %v5174 = vsub.s32 0, %v5173
    %v5175 = vrot.slane %v1018, %v5174
    %v5176 = vlaneseq
    %v5177 = vshrl.u32 %v5176, 7
    %v5178 = vsub.s32 0, %v5177
    %v5179 = vrot.slane %v1020, %v5178
    %v5180 = vlaneseq
    %v5181 = vshrl.u32 %v5180, 7
    %v5182 = vsub.s32 0, %v5181
    %v5183 = vrot.slane %v1003, %v5182
    %v5184 = vlaneseq
    %v5185 = vshrl.u32 %v5184, 7
    %v5186 = vsub.s32 0, %v5185
    %v5187 = vrot.slane %v1017, %v5186
    %v5188 = vlaneseq
    %v5189 = vshrl.u32 %v5188, 7
    %v5190 = vsub.s32 0, %v5189
    %v5191 = vrot.slane %v1019, %v5190
    %v5192 = vlaneseq
    %v5193 = vshrl.u32 %v5192, 7
    %v5194 = vsub.s32 0, %v5193
    %v5195 = vrot.slane %v1021, %v5194
    %v5196 = vlaneseq
    %v5197 = vshrl.u32 %v5196, 7
    %v5198 = vsub.s32 0, %v5197
    %v5199 = vrot.slane %v1045, %v5198
    %v5200 = vlaneseq
    %v5201 = vshrl.u32 %v5200, 7
    %v5202 = vsub.s32 0, %v5201
    %v5203 = vrot.slane %v1059, %v5202
    %v5204 = vlaneseq
    %v5205 = vshrl.u32 %v5204, 7
    %v5206 = vsub.s32 0, %v5205
    %v5207 = vrot.slane %v1067, %v5206
    %v5208 = vlaneseq
    %v5209 = vshrl.u32 %v5208, 7
    %v5210 = vsub.s32 0, %v5209
    %v5211 = vrot.slane %v1069, %v5210
    %v5212 = vlaneseq
    %v5213 = vshrl.u32 %v5212, 7
    %v5214 = vsub.s32 0, %v5213
    %v5215 = vrot.slane %v1052, %v5214
    %v5216 = vlaneseq
    %v5217 = vshrl.u32 %v5216, 7
    %v5218 = vsub.s32 0, %v5217
    %v5219 = vrot.slane %v1066, %v5218
    %v5220 = vlaneseq
    %v5221 = vshrl.u32 %v5220, 7
    %v5222 = vsub.s32 0, %v5221
    %v5223 = vrot.slane %v1068, %v5222
    %v5224 = vlaneseq
    %v5225 = vshrl.u32 %v5224, 7
    %v5226 = vsub.s32 0, %v5225
    %v5227 = vrot.slane %v1070, %v5226
    %v5228 = vlaneseq
    %v5229 = vshrl.u32 %v5228, 7
    %v5230 = vsub.s32 0, %v5229
    %v5231 = vrot.slane %v1094, %v5230
    %v5232 = vlaneseq
    %v5233 = vshrl.u32 %v5232, 7
    %v5234 = vsub.s32 0, %v5233
    %v5235 = vrot.slane %v1108, %v5234
    %v5236 = vlaneseq
    %v5237 = vshrl.u32 %v5236, 7
    %v5238 = vsub.s32 0, %v5237
    %v5239 = vrot.slane %v1116, %v5238
    %v5240 = vlaneseq
    %v5241 = vshrl.u32 %v5240, 7
    %v5242 = vsub.s32 0, %v5241
    %v5243 = vrot.slane %v1118, %v5242
    %v5244 = vlaneseq
    %v5245 = vshrl.u32 %v5244, 7
    %v5246 = vsub.s32 0, %v5245
    %v5247 = vrot.slane %v1101, %v5246
    %v5248 = vlaneseq
    %v5249 = vshrl.u32 %v5248, 7
    %v5250 = vsub.s32 0, %v5249
    %v5251 = vrot.slane %v1115, %v5250
    %v5252 = vlaneseq
    %v5253 = vshrl.u32 %v5252, 7
    %v5254 = vsub.s32 0, %v5253
    %v5255 = vrot.slane %v1117, %v5254
    %v5256 = vlaneseq
    %v5257 = vshrl.u32 %v5256, 7
    %v5258 = vsub.s32 0, %v5257
    %v5259 = vrot.slane %v1119, %v5258
    %v5260 = vlaneseq
    %v5261 = vshrl.u32 %v5260, 7
    %v5262 = vsub.s32 0, %v5261
    %v5263 = vrot.slane %v1143, %v5262
    %v5264 = vlaneseq
    %v5265 = vshrl.u32 %v5264, 7
    %v5266 = vsub.s32 0, %v5265
    %v5267 = vrot.slane %v1157, %v5266
    %v5268 = vlaneseq
    %v5269 = vshrl.u32 %v5268, 7
    %v5270 = vsub.s32 0, %v5269
    %v5271 = vrot.slane %v1165, %v5270
    %v5272 = vlaneseq
    %v5273 = vshrl.u32 %v5272, 7
    %v5274 = vsub.s32 0, %v5273
    %v5275 = vrot.slane %v1167, %v5274
    %v5276 = vlaneseq
    %v5277 = vshrl.u32 %v5276, 7
    %v5278 = vsub.s32 0, %v5277
    %v5279 = vrot.slane %v1150, %v5278
    %v5280 = vlaneseq
    %v5281 = vshrl.u32 %v5280, 7
    %v5282 = vsub.s32 0, %v5281
    %v5283 = vrot.slane %v1164, %v5282
    %v5284 = vlaneseq
    %v5285 = vshrl.u32 %v5284, 7
    %v5286 = vsub.s32 0, %v5285
    %v5287 = vrot.slane %v1166, %v5286
    %v5288 = vlaneseq
    %v5289 = vshrl.u32 %v5288, 7
    %v5290 = vsub.s32 0, %v5289
    %v5291 = vrot.slane %v1168, %v5290
    %v5292 = vlaneseq
    %v5293 = vshrl.u32 %v5292, 7
    %v5294 = vsub.s32 0, %v5293
    %v5295 = vrot.slane %v1192, %v5294
    %v5296 = vlaneseq
    %v5297 = vshrl.u32 %v5296, 7
    %v5298 = vsub.s32 0, %v5297
    %v5299 = vrot.slane %v1206, %v5298
    %v5300 = vlaneseq
    %v5301 = vshrl.u32 %v5300, 7
    %v5302 = vsub.s32 0, %v5301
    %v5303 = vrot.slane %v1214, %v5302
    %v5304 = vlaneseq
    %v5305 = vshrl.u32 %v5304, 7
    %v5306 = vsub.s32 0, %v5305
    %v5307 = vrot.slane %v1216, %v5306
    %v5308 = vlaneseq
    %v5309 = vshrl.u32 %v5308, 7
    %v5310 = vsub.s32 0, %v5309
    %v5311 = vrot.slane %v1199, %v5310
    %v5312 = vlaneseq
    %v5313 = vshrl.u32 %v5312, 7
    %v5314 = vsub.s32 0, %v5313
    %v5315 = vrot.slane %v1213, %v5314
    %v5316 = vlaneseq
    %v5317 = vshrl.u32 %v5316, 7
    %v5318 = vsub.s32 0, %v5317
    %v5319 = vrot.slane %v1215, %v5318
    %v5320 = vlaneseq
    %v5321 = vshrl.u32 %v5320, 7
    %v5322 = vsub.s32 0, %v5321
    %v5323 = vrot.slane %v1217, %v5322
    %v5324 = vlaneseq
    %v5325 = vshrl.u32 %v5324, 7
    %v5326 = vsub.s32 0, %v5325
    %v5327 = vrot.slane %v1241, %v5326
    %v5328 = vlaneseq
    %v5329 = vshrl.u32 %v5328, 7
    %v5330 = vsub.s32 0, %v5329
    %v5331 = vrot.slane %v1255, %v5330
    %v5332 = vlaneseq
    %v5333 = vshrl.u32 %v5332, 7
    %v5334 = vsub.s32 0, %v5333
    %v5335 = vrot.slane %v1263, %v5334
    %v5336 = vlaneseq
    %v5337 = vshrl.u32 %v5336, 7
    %v5338 = vsub.s32 0, %v5337
    %v5339 = vrot.slane %v1265, %v5338
    %v5340 = vlaneseq
    %v5341 = vshrl.u32 %v5340, 7
    %v5342 = vsub.s32 0, %v5341
    %v5343 = vrot.slane %v1248, %v5342
    %v5344 = vlaneseq
    %v5345 = vshrl.u32 %v5344, 7
    %v5346 = vsub.s32 0, %v5345
    %v5347 = vrot.slane %v1262, %v5346
    %v5348 = vlaneseq
    %v5349 = vshrl.u32 %v5348, 7
    %v5350 = vsub.s32 0, %v5349
    %v5351 = vrot.slane %v1264, %v5350
    %v5352 = vlaneseq
    %v5353 = vshrl.u32 %v5352, 7
    %v5354 = vsub.s32 0, %v5353
    %v5355 = vrot.slane %v1266, %v5354
    %v5356 = vlaneseq
    %v5357 = vshrl.u32 %v5356, 7
    %v5358 = vsub.s32 0, %v5357
    %v5359 = vrot.slane %v1290, %v5358
    %v5360 = vlaneseq
    %v5361 = vshrl.u32 %v5360, 7
    %v5362 = vsub.s32 0, %v5361
    %v5363 = vrot.slane %v1304, %v5362
    %v5364 = vlaneseq
    %v5365 = vshrl.u32 %v5364, 7
    %v5366 = vsub.s32 0, %v5365
    %v5367 = vrot.slane %v1312, %v5366
    %v5368 = vlaneseq
    %v5369 = vshrl.u32 %v5368, 7
    %v5370 = vsub.s32 0, %v5369
    %v5371 = vrot.slane %v1314, %v5370
    %v5372 = vlaneseq
    %v5373 = vshrl.u32 %v5372, 7
    %v5374 = vsub.s32 0, %v5373
    %v5375 = vrot.slane %v1297, %v5374
    %v5376 = vlaneseq
    %v5377 = vshrl.u32 %v5376, 7
    %v5378 = vsub.s32 0, %v5377
    %v5379 = vrot.slane %v1311, %v5378
    %v5380 = vlaneseq
    %v5381 = vshrl.u32 %v5380, 7
    %v5382 = vsub.s32 0, %v5381
    %v5383 = vrot.slane %v1313, %v5382
    %v5384 = vlaneseq
    %v5385 = vshrl.u32 %v5384, 7
    %v5386 = vsub.s32 0, %v5385
    %v5387 = vrot.slane %v1315, %v5386
    %v5388 = vlaneseq
    %v5389 = vshrl.u32 %v5388, 7
    %v5390 = vsub.s32 0, %v5389
    %v5391 = vrot.slane %v1339, %v5390
    %v5392 = vlaneseq
    %v5393 = vshrl.u32 %v5392, 7
    %v5394 = vsub.s32 0, %v5393
    %v5395 = vrot.slane %v1353, %v5394
    %v5396 = vlaneseq
    %v5397 = vshrl.u32 %v5396, 7
    %v5398 = vsub.s32 0, %v5397
    %v5399 = vrot.slane %v1361, %v5398
    %v5400 = vlaneseq
    %v5401 = vshrl.u32 %v5400, 7
    %v5402 = vsub.s32 0, %v5401
    %v5403 = vrot.slane %v1363, %v5402
    %v5404 = vlaneseq
    %v5405 = vshrl.u32 %v5404, 7
    %v5406 = vsub.s32 0, %v5405
    %v5407 = vrot.slane %v1346, %v5406
    %v5408 = vlaneseq
    %v5409 = vshrl.u32 %v5408, 7
    %v5410 = vsub.s32 0, %v5409
    %v5411 = vrot.slane %v1360, %v5410
    %v5412 = vlaneseq
    %v5413 = vshrl.u32 %v5412, 7
    %v5414 = vsub.s32 0, %v5413
    %v5415 = vrot.slane %v1362, %v5414
    %v5416 = vlaneseq
    %v5417 = vshrl.u32 %v5416, 7
    %v5418 = vsub.s32 0, %v5417
    %v5419 = vrot.slane %v1364, %v5418
    %v5420 = vlaneseq
    %v5421 = vshrl.u32 %v5420, 7
    %v5422 = vsub.s32 0, %v5421
    %v5423 = vrot.slane %v1388, %v5422
    %v5424 = vlaneseq
    %v5425 = vshrl.u32 %v5424, 7
    %v5426 = vsub.s32 0, %v5425
    %v5427 = vrot.slane %v1402, %v5426
    %v5428 = vlaneseq
    %v5429 = vshrl.u32 %v5428, 7
    %v5430 = vsub.s32 0, %v5429
    %v5431 = vrot.slane %v1410, %v5430
    %v5432 = vlaneseq
    %v5433 = vshrl.u32 %v5432, 7
    %v5434 = vsub.s32 0, %v5433
    %v5435 = vrot.slane %v1412, %v5434
    %v5436 = vlaneseq
    %v5437 = vshrl.u32 %v5436, 7
    %v5438 = vsub.s32 0, %v5437
    %v5439 = vrot.slane %v1395, %v5438
    %v5440 = vlaneseq
    %v5441 = vshrl.u32 %v5440, 7
    %v5442 = vsub.s32 0, %v5441
    %v5443 = vrot.slane %v1409, %v5442
    %v5444 = vlaneseq
    %v5445 = vshrl.u32 %v5444, 7
    %v5446 = vsub.s32 0, %v5445
    %v5447 = vrot.slane %v1411, %v5446
    %v5448 = vlaneseq
    %v5449 = vshrl.u32 %v5448, 7
    %v5450 = vsub.s32 0, %v5449
    %v5451 = vrot.slane %v1413, %v5450
    %v5452 = vlaneseq
    %v5453 = vshrl.u32 %v5452, 7
    %v5454 = vsub.s32 0, %v5453
    %v5455 = vrot.slane %v1437, %v5454
    %v5456 = vlaneseq
    %v5457 = vshrl.u32 %v5456, 7
    %v5458 = vsub.s32 0, %v5457
    %v5459 = vrot.slane %v1451, %v5458
    %v5460 = vlaneseq
    %v5461 = vshrl.u32 %v5460, 7
    %v5462 = vsub.s32 0, %v5461
    %v5463 = vrot.slane %v1459, %v5462
    %v5464 = vlaneseq
    %v5465 = vshrl.u32 %v5464, 7
    %v5466 = vsub.s32 0, %v5465
    %v5467 = vrot.slane %v1461, %v5466
    %v5468 = vlaneseq
    %v5469 = vshrl.u32 %v5468, 7
    %v5470 = vsub.s32 0, %v5469
    %v5471 = vrot.slane %v1444, %v5470
    %v5472 = vlaneseq
    %v5473 = vshrl.u32 %v5472, 7
    %v5474 = vsub.s32 0, %v5473
    %v5475 = vrot.slane %v1458, %v5474
    %v5476 = vlaneseq
    %v5477 = vshrl.u32 %v5476, 7
    %v5478 = vsub.s32 0, %v5477
    %v5479 = vrot.slane %v1460, %v5478
    %v5480 = vlaneseq
    %v5481 = vshrl.u32 %v5480, 7
    %v5482 = vsub.s32 0, %v5481
    %v5483 = vrot.slane %v1462, %v5482
    %v5484 = vlaneseq
    %v5485 = vshrl.u32 %v5484, 7
    %v5486 = vsub.s32 0, %v5485
    %v5487 = vrot.slane %v1486, %v5486
    %v5488 = vlaneseq
    %v5489 = vshrl.u32 %v5488, 7
    %v5490 = vsub.s32 0, %v5489
    %v5491 = vrot.slane %v1500, %v5490
    %v5492 = vlaneseq
    %v5493 = vshrl.u32 %v5492, 7
    %v5494 = vsub.s32 0, %v5493
    %v5495 = vrot.slane %v1508, %v5494
    %v5496 = vlaneseq
    %v5497 = vshrl.u32 %v5496, 7
    %v5498 = vsub.s32 0, %v5497
    %v5499 = vrot.slane %v1510, %v5498
    %v5500 = vlaneseq
    %v5501 = vshrl.u32 %v5500, 7
    %v5502 = vsub.s32 0, %v5501
    %v5503 = vrot.slane %v1493, %v5502
    %v5504 = vlaneseq
    %v5505 = vshrl.u32 %v5504, 7
    %v5506 = vsub.s32 0, %v5505
    %v5507 = vrot.slane %v1507, %v5506
    %v5508 = vlaneseq
    %v5509 = vshrl.u32 %v5508, 7
    %v5510 = vsub.s32 0, %v5509
    %v5511 = vrot.slane %v1509, %v5510
    %v5512 = vlaneseq
    %v5513 = vshrl.u32 %v5512, 7
    %v5514 = vsub.s32 0, %v5513
    %v5515 = vrot.slane %v1511, %v5514
    %v5516 = vlaneseq
    %v5517 = vshrl.u32 %v5516, 7
    %v5518 = vsub.s32 0, %v5517
    %v5519 = vrot.slane %v1535, %v5518
    %v5520 = vlaneseq
    %v5521 = vshrl.u32 %v5520, 7
    %v5522 = vsub.s32 0, %v5521
    %v5523 = vrot.slane %v1549, %v5522
    %v5524 = vlaneseq
    %v5525 = vshrl.u32 %v5524, 7
    %v5526 = vsub.s32 0, %v5525
    %v5527 = vrot.slane %v1557, %v5526
    %v5528 = vlaneseq
    %v5529 = vshrl.u32 %v5528, 7
    %v5530 = vsub.s32 0, %v5529
    %v5531 = vrot.slane %v1559, %v5530
    %v5532 = vlaneseq
    %v5533 = vshrl.u32 %v5532, 7
    %v5534 = vsub.s32 0, %v5533
    %v5535 = vrot.slane %v1542, %v5534
    %v5536 = vlaneseq
    %v5537 = vshrl.u32 %v5536, 7
    %v5538 = vsub.s32 0, %v5537
    %v5539 = vrot.slane %v1556, %v5538
    %v5540 = vlaneseq
    %v5541 = vshrl.u32 %v5540, 7
    %v5542 = vsub.s32 0, %v5541
    %v5543 = vrot.slane %v1558, %v5542
    %v5544 = vlaneseq
    %v5545 = vshrl.u32 %v5544, 7
    %v5546 = vsub.s32 0, %v5545
    %v5547 = vrot.slane %v1560, %v5546
    %v5548 = vlaneseq
    %v5549 = vshrl.u32 %v5548, 7
    %v5550 = vsub.s32 0, %v5549
    %v5551 = vrot.slane %v1584, %v5550
    %v5552 = vlaneseq
    %v5553 = vshrl.u32 %v5552, 7
    %v5554 = vsub.s32 0, %v5553
    %v5555 = vrot.slane %v1598, %v5554
    %v5556 = vlaneseq
    %v5557 = vshrl.u32 %v5556, 7
    %v5558 = vsub.s32 0, %v5557
    %v5559 = vrot.slane %v1606, %v5558
    %v5560 = vlaneseq
    %v5561 = vshrl.u32 %v5560, 7
    %v5562 = vsub.s32 0, %v5561
    %v5563 = vrot.slane %v1608, %v5562
    %v5564 = vlaneseq
    %v5565 = vshrl.u32 %v5564, 7
    %v5566 = vsub.s32 0, %v5565
    %v5567 = vrot.slane %v1591, %v5566
    %v5568 = vlaneseq
    %v5569 = vshrl.u32 %v5568, 7
    %v5570 = vsub.s32 0, %v5569
    %v5571 = vrot.slane %v1605, %v5570
    %v5572 = vlaneseq
    %v5573 = vshrl.u32 %v5572, 7
    %v5574 = vsub.s32 0, %v5573
    %v5575 = vrot.slane %v1607, %v5574
    %v5576 = vlaneseq
    %v5577 = vshrl.u32 %v5576, 7
    %v5578 = vsub.s32 0, %v5577
    %v5579 = vrot.slane %v1609, %v5578
    %v5580 = vlaneseq
    %v5581 = vshrl.u32 %v5580, 7
    %v5582 = vsub.s32 0, %v5581
    %v5583 = vrot.slane %v1633, %v5582
    %v5584 = vlaneseq
    %v5585 = vshrl.u32 %v5584, 7
    %v5586 = vsub.s32 0, %v5585
    %v5587 = vrot.slane %v1647, %v5586
    %v5588 = vlaneseq
    %v5589 = vshrl.u32 %v5588, 7
    %v5590 = vsub.s32 0, %v5589
    %v5591 = vrot.slane %v1655, %v5590
    %v5592 = vlaneseq
    %v5593 = vshrl.u32 %v5592, 7
    %v5594 = vsub.s32 0, %v5593
    %v5595 = vrot.slane %v1657, %v5594
    %v5596 = vlaneseq
    %v5597 = vshrl.u32 %v5596, 7
    %v5598 = vsub.s32 0, %v5597
    %v5599 = vrot.slane %v1640, %v5598
    %v5600 = vlaneseq
    %v5601 = vshrl.u32 %v5600, 7
    %v5602 = vsub.s32 0, %v5601
    %v5603 = vrot.slane %v1654, %v5602
    %v5604 = vlaneseq
    %v5605 = vshrl.u32 %v5604, 7
    %v5606 = vsub.s32 0, %v5605
    %v5607 = vrot.slane %v1656, %v5606
    %v5608 = vlaneseq
    %v5609 = vshrl.u32 %v5608, 7
    %v5610 = vsub.s32 0, %v5609
    %v5611 = vrot.slane %v1658, %v5610
    %v5612 = vlaneseq
    %v5613 = vshrl.u32 %v5612, 7
    %v5614 = vsub.s32 0, %v5613
    %v5615 = vrot.slane %v1682, %v5614
    %v5616 = vlaneseq
    %v5617 = vshrl.u32 %v5616, 7
    %v5618 = vsub.s32 0, %v5617
    %v5619 = vrot.slane %v1696, %v5618
    %v5620 = vlaneseq
    %v5621 = vshrl.u32 %v5620, 7
    %v5622 = vsub.s32 0, %v5621
    %v5623 = vrot.slane %v1704, %v5622
    %v5624 = vlaneseq
    %v5625 = vshrl.u32 %v5624, 7
    %v5626 = vsub.s32 0, %v5625
    %v5627 = vrot.slane %v1706, %v5626
    %v5628 = vlaneseq
    %v5629 = vshrl.u32 %v5628, 7
    %v5630 = vsub.s32 0, %v5629
    %v5631 = vrot.slane %v1689, %v5630
    %v5632 = vlaneseq
    %v5633 = vshrl.u32 %v5632, 7
    %v5634 = vsub.s32 0, %v5633
    %v5635 = vrot.slane %v1703, %v5634
    %v5636 = vlaneseq
    %v5637 = vshrl.u32 %v5636, 7
    %v5638 = vsub.s32 0, %v5637
    %v5639 = vrot.slane %v1705, %v5638
    %v5640 = vlaneseq
    %v5641 = vshrl.u32 %v5640, 7
    %v5642 = vsub.s32 0, %v5641
    %v5643 = vrot.slane %v1707, %v5642
    %v5900 = vmul.f32 %v3340, %v4623
    %v5901 = vmul.f32 %v3341, %v4627
    %v5902 = vmul.f32 %v3342, %v4631
    %v5903 = vmul.f32 %v3343, %v4635
    %v5904 = vmul.f32 %v3344, %v4639
    %v5905 = vmul.f32 %v3345, %v4643
    %v5906 = vmul.f32 %v3346, %v4647
    %v5907 = vmul.f32 %v3347, %v4651
    %v5908 = vmul.f32 %v3348, %v4655
    %v5909 = vmul.f32 %v3349, %v4659
    %v5910 = vmul.f32 %v3350, %v4663
    %v5911 = vmul.f32 %v3351, %v4667
    %v5912 = vmul.f32 %v3352, %v4671
    %v5913 = vmul.f32 %v3353, %v4675
    %v5914 = vmul.f32 %v3354, %v4679
    %v5915 = vmul.f32 %v3355, %v4683
    %v5916 = vmul.f32 %v3356, %v4687
    %v5917 = vmul.f32 %v3357, %v4691
    %v5918 = vmul.f32 %v3358, %v4695
    %v5919 = vmul.f32 %v3359, %v4699
    %v5920 = vmul.f32 %v3360, %v4703
    %v5921 = vmul.f32 %v3361, %v4707
    %v5922 = vmul.f32 %v3362, %v4711
    %v5923 = vmul.f32 %v3363, %v4715
    %v5924 = vmul.f32 %v3364, %v4719
    %v5925 = vmul.f32 %v3365, %v4723
    %v5926 = vmul.f32 %v3366, %v4727
    %v5927 = vmul.f32 %v3367, %v4731
    %v5928 = vmul.f32 %v3368, %v4735
    %v5929 = vmul.f32 %v3369, %v4739
    %v5930 = vmul.f32 %v3370, %v4743
    %v5931 = vmul.f32 %v3371, %v4747
    %v5932 = vmul.f32 %v3372, %v4751
    %v5933 = vmul.f32 %v3373, %v4755
    %v5934 = vmul.f32 %v3374, %v4759
    %v5935 = vmul.f32 %v3375, %v4763
    %v5936 = vmul.f32 %v3376, %v4767
    %v5937 = vmul.f32 %v3377, %v4771
    %v5938 = vmul.f32 %v3378, %v4775
    %v5939 = vmul.f32 %v3379, %v4779
    %v5940 = vmul.f32 %v3380, %v4783
    %v5941 = vmul.f32 %v3381, %v4787
    %v5942 = vmul.f32 %v3382, %v4791
    %v5943 = vmul.f32 %v3383, %v4795
    %v5944 = vmul.f32 %v3384, %v4799
    %v5945 = vmul.f32 %v3385, %v4803
    %v5946 = vmul.f32 %v3386, %v4807
    %v5947 = vmul.f32 %v3387, %v4811
    %v5948 = vmul.f32 %v3388, %v4815
    %v5949 = vmul.f32 %v3389, %v4819
    %v5950 = vmul.f32 %v3390, %v4823
    %v5951 = vmul.f32 %v3391, %v4827
    %v5952 = vmul.f32 %v3392, %v4831
    %v5953 = vmul.f32 %v3393, %v4835
    %v5954 = vmul.f32 %v3394, %v4839
    %v5955 = vmul.f32 %v3395, %v4843
    %v5956 = vmul.f32 %v3396, %v4847
    %v5957 = vmul.f32 %v3397, %v4851
    %v5958 = vmul.f32 %v3398, %v4855
    %v5959 = vmul.f32 %v3399, %v4859
    %v5960 = vmul.f32 %v3400, %v4863
    %v5961 = vmul.f32 %v3401, %v4867
    %v5962 = vmul.f32 %v3402, %v4871
    %v5963 = vmul.f32 %v3403, %v4875
    %v5964 = vmul.f32 %v3404, %v4879
    %v5965 = vmul.f32 %v3405, %v4883
    %v5966 = vmul.f32 %v3406, %v4887
    %v5967 = vmul.f32 %v3407, %v4891
    %v5968 = vmul.f32 %v3408, %v4895
    %v5969 = vmul.f32 %v3409, %v4899
    %v5970 = vmul.f32 %v3410, %v4903
    %v5971 = vmul.f32 %v3411, %v4907
    %v5972 = vmul.f32 %v3412, %v4911
    %v5973 = vmul.f32 %v3413, %v4915
    %v5974 = vmul.f32 %v3414, %v4919
    %v5975 = vmul.f32 %v3415, %v4923
    %v5976 = vmul.f32 %v3416, %v4927
    %v5977 = vmul.f32 %v3417, %v4931
    %v5978 = vmul.f32 %v3418, %v4935
    %v5979 = vmul.f32 %v3419, %v4939
    %v5980 = vmul.f32 %v3420, %v4943
    %v5981 = vmul.f32 %v3421, %v4947
    %v5982 = vmul.f32 %v3422, %v4951
    %v5983 = vmul.f32 %v3423, %v4955
    %v5984 = vmul.f32 %v3424, %v4959
    %v5985 = vmul.f32 %v3425, %v4963
    %v5986 = vmul.f32 %v3426, %v4967
    %v5987 = vmul.f32 %v3427, %v4971
    %v5988 = vmul.f32 %v3428, %v4975
    %v5989 = vmul.f32 %v3429, %v4979
    %v5990 = vmul.f32 %v3430, %v4983
    %v5991 = vmul.f32 %v3431, %v4987
    %v5992 = vmul.f32 %v3432, %v4991
    %v5993 = vmul.f32 %v3433, %v4995
    %v5994 = vmul.f32 %v3434, %v4999
    %v5995 = vmul.f32 %v3435, %v5003
    %v5996 = vmul.f32 %v3436, %v5007
    %v5997 = vmul.f32 %v3437, %v5011
    %v5998 = vmul.f32 %v3438, %v5015
    %v5999 = vmul.f32 %v3439, %v5019
    %v6000 = vmul.f32 %v3440, %v5023
    %v6001 = vmul.f32 %v3441, %v5027
    %v6002 = vmul.f32 %v3442, %v5031
    %v6003 = vmul.f32 %v3443, %v5035
    %v6004 = vmul.f32 %v3444, %v5039
    %v6005 = vmul.f32 %v3445, %v5043
    %v6006 = vmul.f32 %v3446, %v5047
    %v6007 = vmul.f32 %v3447, %v5051
    %v6008 = vmul.f32 %v3448, %v5055
    %v6009 = vmul.f32 %v3449, %v5059
    %v6010 = vmul.f32 %v3450, %v5063
    %v6011 = vmul.f32 %v3451, %v5067
    %v6012 = vmul.f32 %v3452, %v5071
    %v6013 = vmul.f32 %v3453, %v5075
    %v6014 = vmul.f32 %v3454, %v5079
    %v6015 = vmul.f32 %v3455, %v5083
    %v6016 = vmul.f32 %v3456, %v5087
    %v6017 = vmul.f32 %v3457, %v5091
    %v6018 = vmul.f32 %v3458, %v5095
    %v6019 = vmul.f32 %v3459, %v5099
    %v6020 = vmul.f32 %v3460, %v5103
    %v6021 = vmul.f32 %v3461, %v5107
    %v6022 = vmul.f32 %v3462, %v5111
    %v6023 = vmul.f32 %v3463, %v5115
    %v6024 = vmul.f32 %v3464, %v5119
    %v6025 = vmul.f32 %v3465, %v5123
    %v6026 = vmul.f32 %v3466, %v5127
    %v6027 = vmul.f32 %v3467, %v5131
    %v6028 = vmul.f32 %v3468, %v5135
    %v6029 = vmul.f32 %v3469, %v5139
    %v6030 = vmul.f32 %v3470, %v5143
    %v6031 = vmul.f32 %v3471, %v5147
    %v6032 = vmul.f32 %v3472, %v5151
    %v6033 = vmul.f32 %v3473, %v5155
    %v6034 = vmul.f32 %v3474, %v5159
    %v6035 = vmul.f32 %v3475, %v5163
    %v6036 = vmul.f32 %v3476, %v5167
    %v6037 = vmul.f32 %v3477, %v5171
    %v6038 = vmul.f32 %v3478, %v5175
    %v6039 = vmul.f32 %v3479, %v5179
    %v6040 = vmul.f32 %v3480, %v5183
    %v6041 = vmul.f32 %v3481, %v5187
    %v6042 = vmul.f32 %v3482, %v5191
    %v6043 = vmul.f32 %v3483, %v5195
    %v6044 = vmul.f32 %v3484, %v5199
    %v6045 = vmul.f32 %v3485, %v5203
    %v6046 = vmul.f32 %v3486, %v5207
    %v6047 = vmul.f32 %v3487, %v5211
    %v6048 = vmul.f32 %v3488, %v5215
    %v6049 = vmul.f32 %v3489, %v5219
    %v6050 = vmul.f32 %v3490, %v5223
    %v6051 = vmul.f32 %v3491, %v5227
    %v6052 = vmul.f32 %v3492, %v5231
    %v6053 = vmul.f32 %v3493, %v5235
    %v6054 = vmul.f32 %v3494, %v5239
    %v6055 = vmul.f32 %v3495, %v5243
    %v6056 = vmul.f32 %v3496, %v5247
    %v6057 = vmul.f32 %v3497, %v5251
    %v6058 = vmul.f32 %v3498, %v5255
    %v6059 = vmul.f32 %v3499, %v5259
    %v6060 = vmul.f32 %v3500, %v5263
    %v6061 = vmul.f32 %v3501, %v5267
    %v6062 = vmul.f32 %v3502, %v5271
    %v6063 = vmul.f32 %v3503, %v5275
    %v6064 = vmul.f32 %v3504, %v5279
    %v6065 = vmul.f32 %v3505, %v5283
    %v6066 = vmul.f32 %v3506, %v5287
    %v6067 = vmul.f32 %v3507, %v5291
    %v6068 = vmul.f32 %v3508, %v5295
    %v6069 = vmul.f32 %v3509, %v5299
    %v6070 = vmul.f32 %v3510, %v5303
    %v6071 = vmul.f32 %v3511, %v5307
    %v6072 = vmul.f32 %v3512, %v5311
    %v6073 = vmul.f32 %v3513, %v5315
    %v6074 = vmul.f32 %v3514, %v5319
    %v6075 = vmul.f32 %v3515, %v5323
    %v6076 = vmul.f32 %v3516, %v5327
    %v6077 = vmul.f32 %v3517, %v5331
    %v6078 = vmul.f32 %v3518, %v5335
    %v6079 = vmul.f32 %v3519, %v5339
    %v6080 = vmul.f32 %v3520, %v5343
    %v6081 = vmul.f32 %v3521, %v5347
    %v6082 = vmul.f32 %v3522, %v5351
    %v6083 = vmul.f32 %v3523, %v5355
    %v6084 = vmul.f32 %v3524, %v5359
    %v6085 = vmul.f32 %v3525, %v5363
    %v6086 = vmul.f32 %v3526, %v5367
    %v6087 = vmul.f32 %v3527, %v5371
    %v6088 = vmul.f32 %v3528, %v5375
    %v6089 = vmul.f32 %v3529, %v5379
    %v6090 = vmul.f32 %v3530, %v5383
    %v6091 = vmul.f32 %v3531, %v5387
    %v6092 = vmul.f32 %v3532, %v5391
    %v6093 = vmul.f32 %v3533, %v5395
    %v6094 = vmul.f32 %v3534, %v5399
    %v6095 = vmul.f32 %v3535, %v5403
    %v6096 = vmul.f32 %v3536, %v5407
    %v6097 = vmul.f32 %v3537, %v5411
    %v6098 = vmul.f32 %v3538, %v5415
    %v6099 = vmul.f32 %v3539, %v5419
    %v6100 = vmul.f32 %v3540, %v5423
    %v6101 = vmul.f32 %v3541, %v5427
    %v6102 = vmul.f32 %v3542, %v5431
    %v6103 = vmul.f32 %v3543, %v5435
    %v6104 = vmul.f32 %v3544, %v5439
    %v6105 = vmul.f32 %v3545, %v5443
    %v6106 = vmul.f32 %v3546, %v5447
    %v6107 = vmul.f32 %v3547, %v5451
    %v6108 = vmul.f32 %v3548, %v5455
    %v6109 = vmul.f32 %v3549, %v5459
    %v6110 = vmul.f32 %v3550, %v5463
    %v6111 = vmul.f32 %v3551, %v5467
    %v6112 = vmul.f32 %v3552, %v5471
    %v6113 = vmul.f32 %v3553, %v5475
    %v6114 = vmul.f32 %v3554, %v5479
    %v6115 = vmul.f32 %v3555, %v5483
    %v6116 = vmul.f32 %v3556, %v5487
    %v6117 = vmul.f32 %v3557, %v5491
    %v6118 = vmul.f32 %v3558, %v5495
    %v6119 = vmul.f32 %v3559, %v5499
    %v6120 = vmul.f32 %v3560, %v5503
    %v6121 = vmul.f32 %v3561, %v5507
    %v6122 = vmul.f32 %v3562, %v5511
    %v6123 = vmul.f32 %v3563, %v5515
    %v6124 = vmul.f32 %v3564, %v5519
    %v6125 = vmul.f32 %v3565, %v5523
    %v6126 = vmul.f32 %v3566, %v5527
    %v6127 = vmul.f32 %v3567, %v5531
    %v6128 = vmul.f32 %v3568, %v5535
    %v6129 = vmul.f32 %v3569, %v5539
    %v6130 = vmul.f32 %v3570, %v5543
    %v6131 = vmul.f32 %v3571, %v5547
    %v6132 = vmul.f32 %v3572, %v5551
    %v6133 = vmul.f32 %v3573, %v5555
    %v6134 = vmul.f32 %v3574, %v5559
    %v6135 = vmul.f32 %v3575, %v5563
    %v6136 = vmul.f32 %v3576, %v5567
    %v6137 = vmul.f32 %v3577, %v5571
    %v6138 = vmul.f32 %v3578, %v5575
    %v6139 = vmul.f32 %v3579, %v5579
    %v6140 = vmul.f32 %v3580, %v5583
    %v6141 = vmul.f32 %v3581, %v5587
    %v6142 = vmul.f32 %v3582, %v5591
    %v6143 = vmul.f32 %v3583, %v5595
    %v6144 = vmul.f32 %v3584, %v5599
    %v6145 = vmul.f32 %v3585, %v5603
    %v6146 = vmul.f32 %v3586, %v5607
    %v6147 = vmul.f32 %v3587, %v5611
    %v6148 = vmul.f32 %v3588, %v5615
    %v6149 = vmul.f32 %v3589, %v5619
    %v6150 = vmul.f32 %v3590, %v5623
    %v6151 = vmul.f32 %v3591, %v5627
    %v6152 = vmul.f32 %v3592, %v5631
    %v6153 = vmul.f32 %v3593, %v5635
    %v6154 = vmul.f32 %v3594, %v5639
    %v6155 = vmul.f32 %v3595, %v5643
    %v6156 = vlaneseq
    %v6157 = vshrl.u32 %v6156, 7
    %v6158 = vsub.s32 0, %v6157
    %v6159 = vrot.slane %v1795, %v6158
    %v6160 = vlaneseq
    %v6161 = vshrl.u32 %v6160, 7
    %v6162 = vsub.s32 0, %v6161
    %v6163 = vrot.slane %v1809, %v6162
    %v6164 = vlaneseq
    %v6165 = vshrl.u32 %v6164, 7
    %v6166 = vsub.s32 0, %v6165
    %v6167 = vrot.slane %v1817, %v6166
    %v6168 = vlaneseq
    %v6169 = vshrl.u32 %v6168, 7
    %v6170 = vsub.s32 0, %v6169
    %v6171 = vrot.slane %v1819, %v6170
    %v6172 = vlaneseq
    %v6173 = vshrl.u32 %v6172, 7
    %v6174 = vsub.s32 0, %v6173
    %v6175 = vrot.slane %v1802, %v6174
    %v6176 = vlaneseq
    %v6177 = vshrl.u32 %v6176, 7
    %v6178 = vsub.s32 0, %v6177
    %v6179 = vrot.slane %v1816, %v6178
    %v6180 = vlaneseq
    %v6181 = vshrl.u32 %v6180, 7
    %v6182 = vsub.s32 0, %v6181
    %v6183 = vrot.slane %v1818, %v6182
    %v6184 = vlaneseq
    %v6185 = vshrl.u32 %v6184, 7
    %v6186 = vsub.s32 0, %v6185
    %v6187 = vrot.slane %v1820, %v6186
    %v6188 = vlaneseq
    %v6189 = vshrl.u32 %v6188, 7
    %v6190 = vsub.s32 0, %v6189
    %v6191 = vrot.slane %v1844, %v6190
    %v6192 = vlaneseq
    %v6193 = vshrl.u32 %v6192, 7
    %v6194 = vsub.s32 0, %v6193
    %v6195 = vrot.slane %v1858, %v6194
    %v6196 = vlaneseq
    %v6197 = vshrl.u32 %v6196, 7
    %v6198 = vsub.s32 0, %v6197
    %v6199 = vrot.slane %v1866, %v6198
    %v6200 = vlaneseq
    %v6201 = vshrl.u32 %v6200, 7
    %v6202 = vsub.s32 0, %v6201
    %v6203 = vrot.slane %v1868, %v6202
    %v6204 = vlaneseq
    %v6205 = vshrl.u32 %v6204, 7
    %v6206 = vsub.s32 0, %v6205
    %v6207 = vrot.slane %v1851, %v6206
    %v6208 = vlaneseq
    %v6209 = vshrl.u32 %v6208, 7
    %v6210 = vsub.s32 0, %v6209
    %v6211 = vrot.slane %v1865, %v6210
    %v6212 = vlaneseq
    %v6213 = vshrl.u32 %v6212, 7
    %v6214 = vsub.s32 0, %v6213
    %v6215 = vrot.slane %v1867, %v6214
    %v6216 = vlaneseq
    %v6217 = vshrl.u32 %v6216, 7
    %v6218 = vsub.s32 0, %v6217
    %v6219 = vrot.slane %v1869, %v6218
    %v6220 = vlaneseq
    %v6221 = vshrl.u32 %v6220, 7
    %v6222 = vsub.s32 0, %v6221
    %v6223 = vrot.slane %v1893, %v6222
    %v6224 = vlaneseq
    %v6225 = vshrl.u32 %v6224, 7
    %v6226 = vsub.s32 0, %v6225
    %v6227 = vrot.slane %v1907, %v6226
    %v6228 = vlaneseq
    %v6229 = vshrl.u32 %v6228, 7
    %v6230 = vsub.s32 0, %v6229
    %v6231 = vrot.slane %v1915, %v6230
    %v6232 = vlaneseq
    %v6233 = vshrl.u32 %v6232, 7
    %v6234 = vsub.s32 0, %v6233
    %v6235 = vrot.slane %v1917, %v6234
    %v6236 = vlaneseq
    %v6237 = vshrl.u32 %v6236, 7
    %v6238 = vsub.s32 0, %v6237
    %v6239 = vrot.slane %v1900, %v6238
    %v6240 = vlaneseq
    %v6241 = vshrl.u32 %v6240, 7
    %v6242 = vsub.s32 0, %v6241
    %v6243 = vrot.slane %v1914, %v6242
    %v6244 = vlaneseq
    %v6245 = vshrl.u32 %v6244, 7
    %v6246 = vsub.s32 0, %v6245
    %v6247 = vrot.slane %v1916, %v6246
    %v6248 = vlaneseq
    %v6249 = vshrl.u32 %v6248, 7
    %v6250 = vsub.s32 0, %v6249
    %v6251 = vrot.slane %v1918, %v6250
    %v6252 = vlaneseq
    %v6253 = vshrl.u32 %v6252, 7
    %v6254 = vsub.s32 0, %v6253
    %v6255 = vrot.slane %v1942, %v6254
    %v6256 = vlaneseq
    %v6257 = vshrl.u32 %v6256, 7
    %v6258 = vsub.s32 0, %v6257
    %v6259 = vrot.slane %v1956, %v6258
    %v6260 = vlaneseq
    %v6261 = vshrl.u32 %v6260, 7
    %v6262 = vsub.s32 0, %v6261
    %v6263 = vrot.slane %v1964, %v6262
    %v6264 = vlaneseq
    %v6265 = vshrl.u32 %v6264, 7
    %v6266 = vsub.s32 0, %v6265
    %v6267 = vrot.slane %v1966, %v6266
    %v6268 = vlaneseq
    %v6269 = vshrl.u32 %v6268, 7
    %v6270 = vsub.s32 0, %v6269
    %v6271 = vrot.slane %v1949, %v6270
    %v6272 = vlaneseq
    %v6273 = vshrl.u32 %v6272, 7
    %v6274 = vsub.s32 0, %v6273
    %v6275 = vrot.slane %v1963, %v6274
    %v6276 = vlaneseq
    %v6277 = vshrl.u32 %v6276, 7
    %v6278 = vsub.s32 0, %v6277
    %v6279 = vrot.slane %v1965, %v6278
    %v6280 = vlaneseq
    %v6281 = vshrl.u32 %v6280, 7
    %v6282 = vsub.s32 0, %v6281
    %v6283 = vrot.slane %v1967, %v6282
    %v6284 = vlaneseq
    %v6285 = vshrl.u32 %v6284, 7
    %v6286 = vsub.s32 0, %v6285
    %v6287 = vrot.slane %v1991, %v6286
    %v6288 = vlaneseq
    %v6289 = vshrl.u32 %v6288, 7
    %v6290 = vsub.s32 0, %v6289
    %v6291 = vrot.slane %v2005, %v6290
    %v6292 = vlaneseq
    %v6293 = vshrl.u32 %v6292, 7
    %v6294 = vsub.s32 0, %v6293
    %v6295 = vrot.slane %v2013, %v6294
    %v6296 = vlaneseq
    %v6297 = vshrl.u32 %v6296, 7
    %v6298 = vsub.s32 0, %v6297
    %v6299 = vrot.slane %v2015, %v6298
    %v6300 = vlaneseq
    %v6301 = vshrl.u32 %v6300, 7
    %v6302 = vsub.s32 0, %v6301
    %v6303 = vrot.slane %v1998, %v6302
    %v6304 = vlaneseq
    %v6305 = vshrl.u32 %v6304, 7
    %v6306 = vsub.s32 0, %v6305
    %v6307 = vrot.slane %v2012, %v6306
    %v6308 = vlaneseq
    %v6309 = vshrl.u32 %v6308, 7
    %v6310 = vsub.s32 0, %v6309
    %v6311 = vrot.slane %v2014, %v6310
    %v6312 = vlaneseq
    %v6313 = vshrl.u32 %v6312, 7
    %v6314 = vsub.s32 0, %v6313
    %v6315 = vrot.slane %v2016, %v6314
    %v6316 = vlaneseq
    %v6317 = vshrl.u32 %v6316, 7
    %v6318 = vsub.s32 0, %v6317
    %v6319 = vrot.slane %v2040, %v6318
    %v6320 = vlaneseq
    %v6321 = vshrl.u32 %v6320, 7
    %v6322 = vsub.s32 0, %v6321
    %v6323 = vrot.slane %v2054, %v6322
    %v6324 = vlaneseq
    %v6325 = vshrl.u32 %v6324, 7
    %v6326 = vsub.s32 0, %v6325
    %v6327 = vrot.slane %v2062, %v6326
    %v6328 = vlaneseq
    %v6329 = vshrl.u32 %v6328, 7
    %v6330 = vsub.s32 0, %v6329
    %v6331 = vrot.slane %v2064, %v6330
    %v6332 = vlaneseq
    %v6333 = vshrl.u32 %v6332, 7
    %v6334 = vsub.s32 0, %v6333
    %v6335 = vrot.slane %v2047, %v6334
    %v6336 = vlaneseq
    %v6337 = vshrl.u32 %v6336, 7
    %v6338 = vsub.s32 0, %v6337
    %v6339 = vrot.slane %v2061, %v6338
    %v6340 = vlaneseq
    %v6341 = vshrl.u32 %v6340, 7
    %v6342 = vsub.s32 0, %v6341
    %v6343 = vrot.slane %v2063, %v6342
    %v6344 = vlaneseq
    %v6345 = vshrl.u32 %v6344, 7
    %v6346 = vsub.s32 0, %v6345
    %v6347 = vrot.slane %v2065, %v6346
    %v6348 = vlaneseq
    %v6349 = vshrl.u32 %v6348, 7
    %v6350 = vsub.s32 0, %v6349
    %v6351 = vrot.slane %v2089, %v6350
    %v6352 = vlaneseq
    %v6353 = vshrl.u32 %v6352, 7
    %v6354 = vsub.s32 0, %v6353
    %v6355 = vrot.slane %v2103, %v6354
    %v6356 = vlaneseq
    %v6357 = vshrl.u32 %v6356, 7
    %v6358 = vsub.s32 0, %v6357
    %v6359 = vrot.slane %v2111, %v6358
    %v6360 = vlaneseq
    %v6361 = vshrl.u32 %v6360, 7
    %v6362 = vsub.s32 0, %v6361
    %v6363 = vrot.slane %v2113, %v6362
    %v6364 = vlaneseq
    %v6365 = vshrl.u32 %v6364, 7
    %v6366 = vsub.s32 0, %v6365
    %v6367 = vrot.slane %v2096, %v6366
    %v6368 = vlaneseq
    %v6369 = vshrl.u32 %v6368, 7
    %v6370 = vsub.s32 0, %v6369
    %v6371 = vrot.slane %v2110, %v6370
    %v6372 = vlaneseq
    %v6373 = vshrl.u32 %v6372, 7
    %v6374 = vsub.s32 0, %v6373
    %v6375 = vrot.slane %v2112, %v6374
    %v6376 = vlaneseq
    %v6377 = vshrl.u32 %v6376, 7
    %v6378 = vsub.s32 0, %v6377
    %v6379 = vrot.slane %v2114, %v6378
    %v6380 = vlaneseq
    %v6381 = vshrl.u32 %v6380, 7
    %v6382 = vsub.s32 0, %v6381
    %v6383 = vrot.slane %v2138, %v6382
    %v6384 = vlaneseq
    %v6385 = vshrl.u32 %v6384, 7
    %v6386 = vsub.s32 0, %v6385
    %v6387 = vrot.slane %v2152, %v6386
    %v6388 = vlaneseq
    %v6389 = vshrl.u32 %v6388, 7
    %v6390 = vsub.s32 0, %v6389
    %v6391 = vrot.slane %v2160, %v6390
    %v6392 = vlaneseq
    %v6393 = vshrl.u32 %v6392, 7
    %v6394 = vsub.s32 0, %v6393
    %v6395 = vrot.slane %v2162, %v6394
    %v6396 = vlaneseq
    %v6397 = vshrl.u32 %v6396, 7
    %v6398 = vsub.s32 0, %v6397
    %v6399 = vrot.slane %v2145, %v6398
    %v6400 = vlaneseq
    %v6401 = vshrl.u32 %v6400, 7
    %v6402 = vsub.s32 0, %v6401
    %v6403 = vrot.slane %v2159, %v6402
    %v6404 = vlaneseq
    %v6405 = vshrl.u32 %v6404, 7
    %v6406 = vsub.s32 0, %v6405
    %v6407 = vrot.slane %v2161, %v6406
    %v6408 = vlaneseq
    %v6409 = vshrl.u32 %v6408, 7
    %v6410 = vsub.s32 0, %v6409
    %v6411 = vrot.slane %v2163, %v6410
    %v6412 = vlaneseq
    %v6413 = vshrl.u32 %v6412, 7
    %v6414 = vsub.s32 0, %v6413
    %v6415 = vrot.slane %v2187, %v6414
    %v6416 = vlaneseq
    %v6417 = vshrl.u32 %v6416, 7
    %v6418 = vsub.s32 0, %v6417
    %v6419 = vrot.slane %v2201, %v6418
    %v6420 = vlaneseq
    %v6421 = vshrl.u32 %v6420, 7
    %v6422 = vsub.s32 0, %v6421
    %v6423 = vrot.slane %v2209, %v6422
    %v6424 = vlaneseq
    %v6425 = vshrl.u32 %v6424, 7
    %v6426 = vsub.s32 0, %v6425
    %v6427 = vrot.slane %v2211, %v6426
    %v6428 = vlaneseq
    %v6429 = vshrl.u32 %v6428, 7
    %v6430 = vsub.s32 0, %v6429
    %v6431 = vrot.slane %v2194, %v6430
    %v6432 = vlaneseq
    %v6433 = vshrl.u32 %v6432, 7
    %v6434 = vsub.s32 0, %v6433
    %v6435 = vrot.slane %v2208, %v6434
    %v6436 = vlaneseq
    %v6437 = vshrl.u32 %v6436, 7
    %v6438 = vsub.s32 0, %v6437
    %v6439 = vrot.slane %v2210, %v6438
    %v6440 = vlaneseq
    %v6441 = vshrl.u32 %v6440, 7
    %v6442 = vsub.s32 0, %v6441
    %v6443 = vrot.slane %v2212, %v6442
    %v6444 = vlaneseq
    %v6445 = vshrl.u32 %v6444, 7
    %v6446 = vsub.s32 0, %v6445
    %v6447 = vrot.slane %v2236, %v6446
    %v6448 = vlaneseq
    %v6449 = vshrl.u32 %v6448, 7
    %v6450 = vsub.s32 0, %v6449
    %v6451 = vrot.slane %v2250, %v6450
    %v6452 = vlaneseq
    %v6453 = vshrl.u32 %v6452, 7
    %v6454 = vsub.s32 0, %v6453
    %v6455 = vrot.slane %v2258, %v6454
    %v6456 = vlaneseq
    %v6457 = vshrl.u32 %v6456, 7
    %v6458 = vsub.s32 0, %v6457
    %v6459 = vrot.slane %v2260, %v6458
    %v6460 = vlaneseq
    %v6461 = vshrl.u32 %v6460, 7
    %v6462 = vsub.s32 0, %v6461
    %v6463 = vrot.slane %v2243, %v6462
    %v6464 = vlaneseq
    %v6465 = vshrl.u32 %v6464, 7
    %v6466 = vsub.s32 0, %v6465
    %v6467 = vrot.slane %v2257, %v6466
    %v6468 = vlaneseq
    %v6469 = vshrl.u32 %v6468, 7
    %v6470 = vsub.s32 0, %v6469
    %v6471 = vrot.slane %v2259, %v6470
    %v6472 = vlaneseq
    %v6473 = vshrl.u32 %v6472, 7
    %v6474 = vsub.s32 0, %v6473
    %v6475 = vrot.slane %v2261, %v6474
    %v6476 = vlaneseq
    %v6477 = vshrl.u32 %v6476, 7
    %v6478 = vsub.s32 0, %v6477
    %v6479 = vrot.slane %v2285, %v6478
    %v6480 = vlaneseq
    %v6481 = vshrl.u32 %v6480, 7
    %v6482 = vsub.s32 0, %v6481
    %v6483 = vrot.slane %v2299, %v6482
    %v6484 = vlaneseq
    %v6485 = vshrl.u32 %v6484, 7
    %v6486 = vsub.s32 0, %v6485
    %v6487 = vrot.slane %v2307, %v6486
    %v6488 = vlaneseq
    %v6489 = vshrl.u32 %v6488, 7
    %v6490 = vsub.s32 0, %v6489
    %v6491 = vrot.slane %v2309, %v6490
    %v6492 = vlaneseq
    %v6493 = vshrl.u32 %v6492, 7
    %v6494 = vsub.s32 0, %v6493
    %v6495 = vrot.slane %v2292, %v6494
    %v6496 = vlaneseq
    %v6497 = vshrl.u32 %v6496, 7
    %v6498 = vsub.s32 0, %v6497
    %v6499 = vrot.slane %v2306, %v6498
    %v6500 = vlaneseq
    %v6501 = vshrl.u32 %v6500, 7
    %v6502 = vsub.s32 0, %v6501
    %v6503 = vrot.slane %v2308, %v6502
    %v6504 = vlaneseq
    %v6505 = vshrl.u32 %v6504, 7
    %v6506 = vsub.s32 0, %v6505
    %v6507 = vrot.slane %v2310, %v6506
    %v6508 = vlaneseq
    %v6509 = vshrl.u32 %v6508, 7
    %v6510 = vsub.s32 0, %v6509
    %v6511 = vrot.slane %v2334, %v6510
    %v6512 = vlaneseq
    %v6513 = vshrl.u32 %v6512, 7
    %v6514 = vsub.s32 0, %v6513
    %v6515 = vrot.slane %v2348, %v6514
    %v6516 = vlaneseq
    %v6517 = vshrl.u32 %v6516, 7
    %v6518 = vsub.s32 0, %v6517
    %v6519 = vrot.slane %v2356, %v6518
    %v6520 = vlaneseq
    %v6521 = vshrl.u32 %v6520, 7
    %v6522 = vsub.s32 0, %v6521
    %v6523 = vrot.slane %v2358, %v6522
    %v6524 = vlaneseq
    %v6525 = vshrl.u32 %v6524, 7
    %v6526 = vsub.s32 0, %v6525
    %v6527 = vrot.slane %v2341, %v6526
    %v6528 = vlaneseq
    %v6529 = vshrl.u32 %v6528, 7
    %v6530 = vsub.s32 0, %v6529
    %v6531 = vrot.slane %v2355, %v6530
    %v6532 = vlaneseq
    %v6533 = vshrl.u32 %v6532, 7
    %v6534 = vsub.s32 0, %v6533
    %v6535 = vrot.slane %v2357, %v6534
    %v6536 = vlaneseq
    %v6537 = vshrl.u32 %v6536, 7
    %v6538 = vsub.s32 0, %v6537
    %v6539 = vrot.slane %v2359, %v6538
    %v6540 = vlaneseq
    %v6541 = vshrl.u32 %v6540, 7
    %v6542 = vsub.s32 0, %v6541
    %v6543 = vrot.slane %v2383, %v6542
    %v6544 = vlaneseq
    %v6545 = vshrl.u32 %v6544, 7
    %v6546 = vsub.s32 0, %v6545
    %v6547 = vrot.slane %v2397, %v6546
    %v6548 = vlaneseq
    %v6549 = vshrl.u32 %v6548, 7
    %v6550 = vsub.s32 0, %v6549
    %v6551 = vrot.slane %v2405, %v6550
    %v6552 = vlaneseq
    %v6553 = vshrl.u32 %v6552, 7
    %v6554 = vsub.s32 0, %v6553
    %v6555 = vrot.slane %v2407, %v6554
    %v6556 = vlaneseq
    %v6557 = vshrl.u32 %v6556, 7
    %v6558 = vsub.s32 0, %v6557
    %v6559 = vrot.slane %v2390, %v6558
    %v6560 = vlaneseq
    %v6561 = vshrl.u32 %v6560, 7
    %v6562 = vsub.s32 0, %v6561
    %v6563 = vrot.slane %v2404, %v6562
    %v6564 = vlaneseq
    %v6565 = vshrl.u32 %v6564, 7
    %v6566 = vsub.s32 0, %v6565
    %v6567 = vrot.slane %v2406, %v6566
    %v6568 = vlaneseq
    %v6569 = vshrl.u32 %v6568, 7
    %v6570 = vsub.s32 0, %v6569
    %v6571 = vrot.slane %v2408, %v6570
    %v6572 = vlaneseq
    %v6573 = vshrl.u32 %v6572, 7
    %v6574 = vsub.s32 0, %v6573
    %v6575 = vrot.slane %v2432, %v6574
    %v6576 = vlaneseq
    %v6577 = vshrl.u32 %v6576, 7
    %v6578 = vsub.s32 0, %v6577
    %v6579 = vrot.slane %v2446, %v6578
    %v6580 = vlaneseq
    %v6581 = vshrl.u32 %v6580, 7
    %v6582 = vsub.s32 0, %v6581
    %v6583 = vrot.slane %v2454, %v6582
    %v6584 = vlaneseq
    %v6585 = vshrl.u32 %v6584, 7
    %v6586 = vsub.s32 0, %v6585
    %v6587 = vrot.slane %v2456, %v6586
    %v6588 = vlaneseq
    %v6589 = vshrl.u32 %v6588, 7
    %v6590 = vsub.s32 0, %v6589
    %v6591 = vrot.slane %v2439, %v6590
    %v6592 = vlaneseq
    %v6593 = vshrl.u32 %v6592, 7
    %v6594 = vsub.s32 0, %v6593
    %v6595 = vrot.slane %v2453, %v6594
    %v6596 = vlaneseq
    %v6597 = vshrl.u32 %v6596, 7
    %v6598 = vsub.s32 0, %v6597
    %v6599 = vrot.slane %v2455, %v6598
    %v6600 = vlaneseq
    %v6601 = vshrl.u32 %v6600, 7
    %v6602 = vsub.s32 0, %v6601
    %v6603 = vrot.slane %v2457, %v6602
    %v6604 = vlaneseq
    %v6605 = vshrl.u32 %v6604, 7
    %v6606 = vsub.s32 0, %v6605
    %v6607 = vrot.slane %v2481, %v6606
    %v6608 = vlaneseq
    %v6609 = vshrl.u32 %v6608, 7
    %v6610 = vsub.s32 0, %v6609
    %v6611 = vrot.slane %v2495, %v6610
    %v6612 = vlaneseq
    %v6613 = vshrl.u32 %v6612, 7
    %v6614 = vsub.s32 0, %v6613
    %v6615 = vrot.slane %v2503, %v6614
    %v6616 = vlaneseq
    %v6617 = vshrl.u32 %v6616, 7
    %v6618 = vsub.s32 0, %v6617
    %v6619 = vrot.slane %v2505, %v6618
    %v6620 = vlaneseq
    %v6621 = vshrl.u32 %v6620, 7
    %v6622 = vsub.s32 0, %v6621
    %v6623 = vrot.slane %v2488, %v6622
    %v6624 = vlaneseq
    %v6625 = vshrl.u32 %v6624, 7
    %v6626 = vsub.s32 0, %v6625
    %v6627 = vrot.slane %v2502, %v6626
    %v6628 = vlaneseq
    %v6629 = vshrl.u32 %v6628, 7
    %v6630 = vsub.s32 0, %v6629
    %v6631 = vrot.slane %v2504, %v6630
    %v6632 = vlaneseq
    %v6633 = vshrl.u32 %v6632, 7
    %v6634 = vsub.s32 0, %v6633
    %v6635 = vrot.slane %v2506, %v6634
    %v6636 = vlaneseq
    %v6637 = vshrl.u32 %v6636, 7
    %v6638 = vsub.s32 0, %v6637
    %v6639 = vrot.slane %v2530, %v6638
    %v6640 = vlaneseq
    %v6641 = vshrl.u32 %v6640, 7
    %v6642 = vsub.s32 0, %v6641
    %v6643 = vrot.slane %v2544, %v6642
    %v6644 = vlaneseq
    %v6645 = vshrl.u32 %v6644, 7
    %v6646 = vsub.s32 0, %v6645
    %v6647 = vrot.slane %v2552, %v6646
    %v6648 = vlaneseq
    %v6649 = vshrl.u32 %v6648, 7
    %v6650 = vsub.s32 0, %v6649
    %v6651 = vrot.slane %v2554, %v6650
    %v6652 = vlaneseq
    %v6653 = vshrl.u32 %v6652, 7
    %v6654 = vsub.s32 0, %v6653
    %v6655 = vrot.slane %v2537, %v6654
    %v6656 = vlaneseq
    %v6657 = vshrl.u32 %v6656, 7
    %v6658 = vsub.s32 0, %v6657
    %v6659 = vrot.slane %v2551, %v6658
    %v6660 = vlaneseq
    %v6661 = vshrl.u32 %v6660, 7
    %v6662 = vsub.s32 0, %v6661
    %v6663 = vrot.slane %v2553, %v6662
    %v6664 = vlaneseq
    %v6665 = vshrl.u32 %v6664, 7
    %v6666 = vsub.s32 0, %v6665
    %v6667 = vrot.slane %v2555, %v6666
    %v6668 = vlaneseq
    %v6669 = vshrl.u32 %v6668, 7
    %v6670 = vsub.s32 0, %v6669
    %v6671 = vrot.slane %v2579, %v6670
    %v6672 = vlaneseq
    %v6673 = vshrl.u32 %v6672, 7
    %v6674 = vsub.s32 0, %v6673
    %v6675 = vrot.slane %v2593, %v6674
    %v6676 = vlaneseq
    %v6677 = vshrl.u32 %v6676, 7
    %v6678 = vsub.s32 0, %v6677
    %v6679 = vrot.slane %v2601, %v6678
    %v6680 = vlaneseq
    %v6681 = vshrl.u32 %v6680, 7
    %v6682 = vsub.s32 0, %v6681
    %v6683 = vrot.slane %v2603, %v6682
    %v6684 = vlaneseq
    %v6685 = vshrl.u32 %v6684, 7
    %v6686 = vsub.s32 0, %v6685
    %v6687 = vrot.slane %v2586, %v6686
    %v6688 = vlaneseq
    %v6689 = vshrl.u32 %v6688, 7
    %v6690 = vsub.s32 0, %v6689
    %v6691 = vrot.slane %v2600, %v6690
    %v6692 = vlaneseq
    %v6693 = vshrl.u32 %v6692, 7
    %v6694 = vsub.s32 0, %v6693
    %v6695 = vrot.slane %v2602, %v6694
    %v6696 = vlaneseq
    %v6697 = vshrl.u32 %v6696, 7
    %v6698 = vsub.s32 0, %v6697
    %v6699 = vrot.slane %v2604, %v6698
    %v6700 = vlaneseq
    %v6701 = vshrl.u32 %v6700, 7
    %v6702 = vsub.s32 0, %v6701
    %v6703 = vrot.slane %v2628, %v6702
    %v6704 = vlaneseq
    %v6705 = vshrl.u32 %v6704, 7
    %v6706 = vsub.s32 0, %v6705
    %v6707 = vrot.slane %v2642, %v6706
    %v6708 = vlaneseq
    %v6709 = vshrl.u32 %v6708, 7
    %v6710 = vsub.s32 0, %v6709
    %v6711 = vrot.slane %v2650, %v6710
    %v6712 = vlaneseq
    %v6713 = vshrl.u32 %v6712, 7
    %v6714 = vsub.s32 0, %v6713
    %v6715 = vrot.slane %v2652, %v6714
    %v6716 = vlaneseq
    %v6717 = vshrl.u32 %v6716, 7
    %v6718 = vsub.s32 0, %v6717
    %v6719 = vrot.slane %v2635, %v6718
    %v6720 = vlaneseq
    %v6721 = vshrl.u32 %v6720, 7
    %v6722 = vsub.s32 0, %v6721
    %v6723 = vrot.slane %v2649, %v6722
    %v6724 = vlaneseq
    %v6725 = vshrl.u32 %v6724, 7
    %v6726 = vsub.s32 0, %v6725
    %v6727 = vrot.slane %v2651, %v6726
    %v6728 = vlaneseq
    %v6729 = vshrl.u32 %v6728, 7
    %v6730 = vsub.s32 0, %v6729
    %v6731 = vrot.slane %v2653, %v6730
    %v6732 = vlaneseq
    %v6733 = vshrl.u32 %v6732, 7
    %v6734 = vsub.s32 0, %v6733
    %v6735 = vrot.slane %v2677, %v6734
    %v6736 = vlaneseq
    %v6737 = vshrl.u32 %v6736, 7
    %v6738 = vsub.s32 0, %v6737
    %v6739 = vrot.slane %v2691, %v6738
    %v6740 = vlaneseq
    %v6741 = vshrl.u32 %v6740, 7
    %v6742 = vsub.s32 0, %v6741
    %v6743 = vrot.slane %v2699, %v6742
    %v6744 = vlaneseq
    %v6745 = vshrl.u32 %v6744, 7
    %v6746 = vsub.s32 0, %v6745
    %v6747 = vrot.slane %v2701, %v6746
    %v6748 = vlaneseq
    %v6749 = vshrl.u32 %v6748, 7
    %v6750 = vsub.s32 0, %v6749
    %v6751 = vrot.slane %v2684, %v6750
    %v6752 = vlaneseq
    %v6753 = vshrl.u32 %v6752, 7
    %v6754 = vsub.s32 0, %v6753
    %v6755 = vrot.slane %v2698, %v6754
    %v6756 = vlaneseq
    %v6757 = vshrl.u32 %v6756, 7
    %v6758 = vsub.s32 0, %v6757
    %v6759 = vrot.slane %v2700, %v6758
    %v6760 = vlaneseq
    %v6761 = vshrl.u32 %v6760, 7
    %v6762 = vsub.s32 0, %v6761
    %v6763 = vrot.slane %v2702, %v6762
    %v6764 = vlaneseq
    %v6765 = vshrl.u32 %v6764, 7
    %v6766 = vsub.s32 0, %v6765
    %v6767 = vrot.slane %v2726, %v6766
    %v6768 = vlaneseq
    %v6769 = vshrl.u32 %v6768, 7
    %v6770 = vsub.s32 0, %v6769
    %v6771 = vrot.slane %v2740, %v6770
    %v6772 = vlaneseq
    %v6773 = vshrl.u32 %v6772, 7
    %v6774 = vsub.s32 0, %v6773
    %v6775 = vrot.slane %v2748, %v6774
    %v6776 = vlaneseq
    %v6777 = vshrl.u32 %v6776, 7
    %v6778 = vsub.s32 0, %v6777
    %v6779 = vrot.slane %v2750, %v6778
    %v6780 = vlaneseq
    %v6781 = vshrl.u32 %v6780, 7
    %v6782 = vsub.s32 0, %v6781
    %v6783 = vrot.slane %v2733, %v6782
    %v6784 = vlaneseq
    %v6785 = vshrl.u32 %v6784, 7
    %v6786 = vsub.s32 0, %v6785
    %v6787 = vrot.slane %v2747, %v6786
    %v6788 = vlaneseq
    %v6789 = vshrl.u32 %v6788, 7
    %v6790 = vsub.s32 0, %v6789
    %v6791 = vrot.slane %v2749, %v6790
    %v6792 = vlaneseq
    %v6793 = vshrl.u32 %v6792, 7
    %v6794 = vsub.s32 0, %v6793
    %v6795 = vrot.slane %v2751, %v6794
    %v6796 = vlaneseq
    %v6797 = vshrl.u32 %v6796, 7
    %v6798 = vsub.s32 0, %v6797
    %v6799 = vrot.slane %v2775, %v6798
    %v6800 = vlaneseq
    %v6801 = vshrl.u32 %v6800, 7
    %v6802 = vsub.s32 0, %v6801
    %v6803 = vrot.slane %v2789, %v6802
    %v6804 = vlaneseq
    %v6805 = vshrl.u32 %v6804, 7
    %v6806 = vsub.s32 0, %v6805
    %v6807 = vrot.slane %v2797, %v6806
    %v6808 = vlaneseq
    %v6809 = vshrl.u32 %v6808, 7
    %v6810 = vsub.s32 0, %v6809
    %v6811 = vrot.slane %v2799, %v6810
    %v6812 = vlaneseq
    %v6813 = vshrl.u32 %v6812, 7
    %v6814 = vsub.s32 0, %v6813
    %v6815 = vrot.slane %v2782, %v6814
    %v6816 = vlaneseq
    %v6817 = vshrl.u32 %v6816, 7
    %v6818 = vsub.s32 0, %v6817
    %v6819 = vrot.slane %v2796, %v6818
    %v6820 = vlaneseq
    %v6821 = vshrl.u32 %v6820, 7
    %v6822 = vsub.s32 0, %v6821
    %v6823 = vrot.slane %v2798, %v6822
    %v6824 = vlaneseq
    %v6825 = vshrl.u32 %v6824, 7
    %v6826 = vsub.s32 0, %v6825
    %v6827 = vrot.slane %v2800, %v6826
    %v6828 = vlaneseq
    %v6829 = vshrl.u32 %v6828, 7
    %v6830 = vsub.s32 0, %v6829
    %v6831 = vrot.slane %v2824, %v6830
    %v6832 = vlaneseq
    %v6833 = vshrl.u32 %v6832, 7
    %v6834 = vsub.s32 0, %v6833
    %v6835 = vrot.slane %v2838, %v6834
    %v6836 = vlaneseq
    %v6837 = vshrl.u32 %v6836, 7
    %v6838 = vsub.s32 0, %v6837
    %v6839 = vrot.slane %v2846, %v6838
    %v6840 = vlaneseq
    %v6841 = vshrl.u32 %v6840, 7
    %v6842 = vsub.s32 0, %v6841
    %v6843 = vrot.slane %v2848, %v6842
    %v6844 = vlaneseq
    %v6845 = vshrl.u32 %v6844, 7
    %v6846 = vsub.s32 0, %v6845
    %v6847 = vrot.slane %v2831, %v6846
    %v6848 = vlaneseq
    %v6849 = vshrl.u32 %v6848, 7
    %v6850 = vsub.s32 0, %v6849
    %v6851 = vrot.slane %v2845, %v6850
    %v6852 = vlaneseq
    %v6853 = vshrl.u32 %v6852, 7
    %v6854 = vsub.s32 0, %v6853
    %v6855 = vrot.slane %v2847, %v6854
    %v6856 = vlaneseq
    %v6857 = vshrl.u32 %v6856, 7
    %v6858 = vsub.s32 0, %v6857
    %v6859 = vrot.slane %v2849, %v6858
    %v6860 = vlaneseq
    %v6861 = vshrl.u32 %v6860, 7
    %v6862 = vsub.s32 0, %v6861
    %v6863 = vrot.slane %v2873, %v6862
    %v6864 = vlaneseq
    %v6865 = vshrl.u32 %v6864, 7
    %v6866 = vsub.s32 0, %v6865
    %v6867 = vrot.slane %v2887, %v6866
    %v6868 = vlaneseq
    %v6869 = vshrl.u32 %v6868, 7
    %v6870 = vsub.s32 0, %v6869
    %v6871 = vrot.slane %v2895, %v6870
    %v6872 = vlaneseq
    %v6873 = vshrl.u32 %v6872, 7
    %v6874 = vsub.s32 0, %v6873
    %v6875 = vrot.slane %v2897, %v6874
    %v6876 = vlaneseq
    %v6877 = vshrl.u32 %v6876, 7
    %v6878 = vsub.s32 0, %v6877
    %v6879 = vrot.slane %v2880, %v6878
    %v6880 = vlaneseq
    %v6881 = vshrl.u32 %v6880, 7
    %v6882 = vsub.s32 0, %v6881
    %v6883 = vrot.slane %v2894, %v6882
    %v6884 = vlaneseq
    %v6885 = vshrl.u32 %v6884, 7
    %v6886 = vsub.s32 0, %v6885
    %v6887 = vrot.slane %v2896, %v6886
    %v6888 = vlaneseq
    %v6889 = vshrl.u32 %v6888, 7
    %v6890 = vsub.s32 0, %v6889
    %v6891 = vrot.slane %v2898, %v6890
    %v6892 = vlaneseq
    %v6893 = vshrl.u32 %v6892, 7
    %v6894 = vsub.s32 0, %v6893
    %v6895 = vrot.slane %v2922, %v6894
    %v6896 = vlaneseq
    %v6897 = vshrl.u32 %v6896, 7
    %v6898 = vsub.s32 0, %v6897
    %v6899 = vrot.slane %v2936, %v6898
    %v6900 = vlaneseq
    %v6901 = vshrl.u32 %v6900, 7
    %v6902 = vsub.s32 0, %v6901
    %v6903 = vrot.slane %v2944, %v6902
    %v6904 = vlaneseq
    %v6905 = vshrl.u32 %v6904, 7
    %v6906 = vsub.s32 0, %v6905
    %v6907 = vrot.slane %v2946, %v6906
    %v6908 = vlaneseq
    %v6909 = vshrl.u32 %v6908, 7
    %v6910 = vsub.s32 0, %v6909
    %v6911 = vrot.slane %v2929, %v6910
    %v6912 = vlaneseq
    %v6913 = vshrl.u32 %v6912, 7
    %v6914 = vsub.s32 0, %v6913
    %v6915 = vrot.slane %v2943, %v6914
    %v6916 = vlaneseq
    %v6917 = vshrl.u32 %v6916, 7
    %v6918 = vsub.s32 0, %v6917
    %v6919 = vrot.slane %v2945, %v6918
    %v6920 = vlaneseq
    %v6921 = vshrl.u32 %v6920, 7
    %v6922 = vsub.s32 0, %v6921
    %v6923 = vrot.slane %v2947, %v6922
    %v6924 = vlaneseq
    %v6925 = vshrl.u32 %v6924, 7
    %v6926 = vsub.s32 0, %v6925
    %v6927 = vrot.slane %v2971, %v6926
    %v6928 = vlaneseq
    %v6929 = vshrl.u32 %v6928, 7
    %v6930 = vsub.s32 0, %v6929
    %v6931 = vrot.slane %v2985, %v6930
    %v6932 = vlaneseq
    %v6933 = vshrl.u32 %v6932, 7
    %v6934 = vsub.s32 0, %v6933
    %v6935 = vrot.slane %v2993, %v6934
    %v6936 = vlaneseq
    %v6937 = vshrl.u32 %v6936, 7
    %v6938 = vsub.s32 0, %v6937
    %v6939 = vrot.slane %v2995, %v6938
    %v6940 = vlaneseq
    %v6941 = vshrl.u32 %v6940, 7
    %v6942 = vsub.s32 0, %v6941
    %v6943 = vrot.slane %v2978, %v6942
    %v6944 = vlaneseq
    %v6945 = vshrl.u32 %v6944, 7
    %v6946 = vsub.s32 0, %v6945
    %v6947 = vrot.slane %v2992, %v6946
    %v6948 = vlaneseq
    %v6949 = vshrl.u32 %v6948, 7
    %v6950 = vsub.s32 0, %v6949
    %v6951 = vrot.slane %v2994, %v6950
    %v6952 = vlaneseq
    %v6953 = vshrl.u32 %v6952, 7
    %v6954 = vsub.s32 0, %v6953
    %v6955 = vrot.slane %v2996, %v6954
    %v6956 = vlaneseq
    %v6957 = vshrl.u32 %v6956, 7
    %v6958 = vsub.s32 0, %v6957
    %v6959 = vrot.slane %v3020, %v6958
    %v6960 = vlaneseq
    %v6961 = vshrl.u32 %v6960, 7
    %v6962 = vsub.s32 0, %v6961
    %v6963 = vrot.slane %v3034, %v6962
    %v6964 = vlaneseq
    %v6965 = vshrl.u32 %v6964, 7
    %v6966 = vsub.s32 0, %v6965
    %v6967 = vrot.slane %v3042, %v6966
    %v6968 = vlaneseq
    %v6969 = vshrl.u32 %v6968, 7
    %v6970 = vsub.s32 0, %v6969
    %v6971 = vrot.slane %v3044, %v6970
    %v6972 = vlaneseq
    %v6973 = vshrl.u32 %v6972, 7
    %v6974 = vsub.s32 0, %v6973
    %v6975 = vrot.slane %v3027, %v6974
    %v6976 = vlaneseq
    %v6977 = vshrl.u32 %v6976, 7
    %v6978 = vsub.s32 0, %v6977
    %v6979 = vrot.slane %v3041, %v6978
    %v6980 = vlaneseq
    %v6981 = vshrl.u32 %v6980, 7
    %v6982 = vsub.s32 0, %v6981
    %v6983 = vrot.slane %v3043, %v6982
    %v6984 = vlaneseq
    %v6985 = vshrl.u32 %v6984, 7
    %v6986 = vsub.s32 0, %v6985
    %v6987 = vrot.slane %v3045, %v6986
    %v6988 = vlaneseq
    %v6989 = vshrl.u32 %v6988, 7
    %v6990 = vsub.s32 0, %v6989
    %v6991 = vrot.slane %v3069, %v6990
    %v6992 = vlaneseq
    %v6993 = vshrl.u32 %v6992, 7
    %v6994 = vsub.s32 0, %v6993
    %v6995 = vrot.slane %v3083, %v6994
    %v6996 = vlaneseq
    %v6997 = vshrl.u32 %v6996, 7
    %v6998 = vsub.s32 0, %v6997
    %v6999 = vrot.slane %v3091, %v6998
    %v7000 = vlaneseq
    %v7001 = vshrl.u32 %v7000, 7
    %v7002 = vsub.s32 0, %v7001
    %v7003 = vrot.slane %v3093, %v7002
    %v7004 = vlaneseq
    %v7005 = vshrl.u32 %v7004, 7
    %v7006 = vsub.s32 0, %v7005
    %v7007 = vrot.slane %v3076, %v7006
    %v7008 = vlaneseq
    %v7009 = vshrl.u32 %v7008, 7
    %v7010 = vsub.s32 0, %v7009
    %v7011 = vrot.slane %v3090, %v7010
    %v7012 = vlaneseq
    %v7013 = vshrl.u32 %v7012, 7
    %v7014 = vsub.s32 0, %v7013
    %v7015 = vrot.slane %v3092, %v7014
    %v7016 = vlaneseq
    %v7017 = vshrl.u32 %v7016, 7
    %v7018 = vsub.s32 0, %v7017
    %v7019 = vrot.slane %v3094, %v7018
    %v7020 = vlaneseq
    %v7021 = vshrl.u32 %v7020, 7
    %v7022 = vsub.s32 0, %v7021
    %v7023 = vrot.slane %v3118, %v7022
    %v7024 = vlaneseq
    %v7025 = vshrl.u32 %v7024, 7
    %v7026 = vsub.s32 0, %v7025
    %v7027 = vrot.slane %v3132, %v7026
    %v7028 = vlaneseq
    %v7029 = vshrl.u32 %v7028, 7
    %v7030 = vsub.s32 0, %v7029
    %v7031 = vrot.slane %v3140, %v7030
    %v7032 = vlaneseq
    %v7033 = vshrl.u32 %v7032, 7
    %v7034 = vsub.s32 0, %v7033
    %v7035 = vrot.slane %v3142, %v7034
    %v7036 = vlaneseq
    %v7037 = vshrl.u32 %v7036, 7
    %v7038 = vsub.s32 0, %v7037
    %v7039 = vrot.slane %v3125, %v7038
    %v7040 = vlaneseq
    %v7041 = vshrl.u32 %v7040, 7
    %v7042 = vsub.s32 0, %v7041
    %v7043 = vrot.slane %v3139, %v7042
    %v7044 = vlaneseq
    %v7045 = vshrl.u32 %v7044, 7
    %v7046 = vsub.s32 0, %v7045
    %v7047 = vrot.slane %v3141, %v7046
    %v7048 = vlaneseq
    %v7049 = vshrl.u32 %v7048, 7
    %v7050 = vsub.s32 0, %v7049
    %v7051 = vrot.slane %v3143, %v7050
    %v7052 = vlaneseq
    %v7053 = vshrl.u32 %v7052, 7
    %v7054 = vsub.s32 0, %v7053
    %v7055 = vrot.slane %v3167, %v7054
    %v7056 = vlaneseq
    %v7057 = vshrl.u32 %v7056, 7
    %v7058 = vsub.s32 0, %v7057
    %v7059 = vrot.slane %v3181, %v7058
    %v7060 = vlaneseq
    %v7061 = vshrl.u32 %v7060, 7
    %v7062 = vsub.s32 0, %v7061
    %v7063 = vrot.slane %v3189, %v7062
    %v7064 = vlaneseq
    %v7065 = vshrl.u32 %v7064, 7
    %v7066 = vsub.s32 0, %v7065
    %v7067 = vrot.slane %v3191, %v7066
    %v7068 = vlaneseq
    %v7069 = vshrl.u32 %v7068, 7
    %v7070 = vsub.s32 0, %v7069
    %v7071 = vrot.slane %v3174, %v7070
    %v7072 = vlaneseq
    %v7073 = vshrl.u32 %v7072, 7
    %v7074 = vsub.s32 0, %v7073
    %v7075 = vrot.slane %v3188, %v7074
    %v7076 = vlaneseq
    %v7077 = vshrl.u32 %v7076, 7
    %v7078 = vsub.s32 0, %v7077
    %v7079 = vrot.slane %v3190, %v7078
    %v7080 = vlaneseq
    %v7081 = vshrl.u32 %v7080, 7
    %v7082 = vsub.s32 0, %v7081
    %v7083 = vrot.slane %v3192, %v7082
    %v7084 = vlaneseq
    %v7085 = vshrl.u32 %v7084, 7
    %v7086 = vsub.s32 0, %v7085
    %v7087 = vrot.slane %v3216, %v7086
    %v7088 = vlaneseq
    %v7089 = vshrl.u32 %v7088, 7
    %v7090 = vsub.s32 0, %v7089
    %v7091 = vrot.slane %v3230, %v7090
    %v7092 = vlaneseq
    %v7093 = vshrl.u32 %v7092, 7
    %v7094 = vsub.s32 0, %v7093
    %v7095 = vrot.slane %v3238, %v7094
    %v7096 = vlaneseq
    %v7097 = vshrl.u32 %v7096, 7
    %v7098 = vsub.s32 0, %v7097
    %v7099 = vrot.slane %v3240, %v7098
    %v7100 = vlaneseq
    %v7101 = vshrl.u32 %v7100, 7
    %v7102 = vsub.s32 0, %v7101
    %v7103 = vrot.slane %v3223, %v7102
    %v7104 = vlaneseq
    %v7105 = vshrl.u32 %v7104, 7
    %v7106 = vsub.s32 0, %v7105
    %v7107 = vrot.slane %v3237, %v7106
    %v7108 = vlaneseq
    %v7109 = vshrl.u32 %v7108, 7
    %v7110 = vsub.s32 0, %v7109
    %v7111 = vrot.slane %v3239, %v7110
    %v7112 = vlaneseq
    %v7113 = vshrl.u32 %v7112, 7
    %v7114 = vsub.s32 0, %v7113
    %v7115 = vrot.slane %v3241, %v7114
    %v7116 = vlaneseq
    %v7117 = vshrl.u32 %v7116, 7
    %v7118 = vsub.s32 0, %v7117
    %v7119 = vrot.slane %v3265, %v7118
    %v7120 = vlaneseq
    %v7121 = vshrl.u32 %v7120, 7
    %v7122 = vsub.s32 0, %v7121
    %v7123 = vrot.slane %v3279, %v7122
    %v7124 = vlaneseq
    %v7125 = vshrl.u32 %v7124, 7
    %v7126 = vsub.s32 0, %v7125
    %v7127 = vrot.slane %v3287, %v7126
    %v7128 = vlaneseq
    %v7129 = vshrl.u32 %v7128, 7
    %v7130 = vsub.s32 0, %v7129
    %v7131 = vrot.slane %v3289, %v7130
    %v7132 = vlaneseq
    %v7133 = vshrl.u32 %v7132, 7
    %v7134 = vsub.s32 0, %v7133
    %v7135 = vrot.slane %v3272, %v7134
    %v7136 = vlaneseq
    %v7137 = vshrl.u32 %v7136, 7
    %v7138 = vsub.s32 0, %v7137
    %v7139 = vrot.slane %v3286, %v7138
    %v7140 = vlaneseq
    %v7141 = vshrl.u32 %v7140, 7
    %v7142 = vsub.s32 0, %v7141
    %v7143 = vrot.slane %v3288, %v7142
    %v7144 = vlaneseq
    %v7145 = vshrl.u32 %v7144, 7
    %v7146 = vsub.s32 0, %v7145
    %v7147 = vrot.slane %v3290, %v7146
    %v7148 = vlaneseq
    %v7149 = vshrl.u32 %v7148, 7
    %v7150 = vsub.s32 0, %v7149
    %v7151 = vrot.slane %v3314, %v7150
    %v7152 = vlaneseq
    %v7153 = vshrl.u32 %v7152, 7
    %v7154 = vsub.s32 0, %v7153
    %v7155 = vrot.slane %v3328, %v7154
    %v7156 = vlaneseq
    %v7157 = vshrl.u32 %v7156, 7
    %v7158 = vsub.s32 0, %v7157
    %v7159 = vrot.slane %v3336, %v7158
    %v7160 = vlaneseq
    %v7161 = vshrl.u32 %v7160, 7
    %v7162 = vsub.s32 0, %v7161
    %v7163 = vrot.slane %v3338, %v7162
    %v7164 = vlaneseq
    %v7165 = vshrl.u32 %v7164, 7
    %v7166 = vsub.s32 0, %v7165
    %v7167 = vrot.slane %v3321, %v7166
    %v7168 = vlaneseq
    %v7169 = vshrl.u32 %v7168, 7
    %v7170 = vsub.s32 0, %v7169
    %v7171 = vrot.slane %v3335, %v7170
    %v7172 = vlaneseq
    %v7173 = vshrl.u32 %v7172, 7
    %v7174 = vsub.s32 0, %v7173
    %v7175 = vrot.slane %v3337, %v7174
    %v7176 = vlaneseq
    %v7177 = vshrl.u32 %v7176, 7
    %v7178 = vsub.s32 0, %v7177
    %v7179 = vrot.slane %v3339, %v7178
    %v7436 = vmul.f32 %v3853, %v6159
    %v7437 = vmul.f32 %v3855, %v6163
    %v7438 = vmul.f32 %v3857, %v6167
    %v7439 = vmul.f32 %v3859, %v6171
    %v7440 = vmul.f32 %v3861, %v6175
    %v7441 = vmul.f32 %v3863, %v6179
    %v7442 = vmul.f32 %v3865, %v6183
    %v7443 = vmul.f32 %v3867, %v6187
    %v7444 = vmul.f32 %v3869, %v6191
    %v7445 = vmul.f32 %v3871, %v6195
    %v7446 = vmul.f32 %v3873, %v6199
    %v7447 = vmul.f32 %v3875, %v6203
    %v7448 = vmul.f32 %v3877, %v6207
    %v7449 = vmul.f32 %v3879, %v6211
    %v7450 = vmul.f32 %v3881, %v6215
    %v7451 = vmul.f32 %v3883, %v6219
    %v7452 = vmul.f32 %v3885, %v6223
    %v7453 = vmul.f32 %v3887, %v6227
    %v7454 = vmul.f32 %v3889, %v6231
    %v7455 = vmul.f32 %v3891, %v6235
    %v7456 = vmul.f32 %v3893, %v6239
    %v7457 = vmul.f32 %v3895, %v6243
    %v7458 = vmul.f32 %v3897, %v6247
    %v7459 = vmul.f32 %v3899, %v6251
    %v7460 = vmul.f32 %v3901, %v6255
    %v7461 = vmul.f32 %v3903, %v6259
    %v7462 = vmul.f32 %v3905, %v6263
    %v7463 = vmul.f32 %v3907, %v6267
    %v7464 = vmul.f32 %v3909, %v6271
    %v7465 = vmul.f32 %v3911, %v6275
    %v7466 = vmul.f32 %v3913, %v6279
    %v7467 = vmul.f32 %v3915, %v6283
    %v7468 = vmul.f32 %v3917, %v6287
    %v7469 = vmul.f32 %v3919, %v6291
    %v7470 = vmul.f32 %v3921, %v6295
    %v7471 = vmul.f32 %v3923, %v6299
    %v7472 = vmul.f32 %v3925, %v6303
    %v7473 = vmul.f32 %v3927, %v6307
    %v7474 = vmul.f32 %v3929, %v6311
    %v7475 = vmul.f32 %v3931, %v6315
    %v7476 = vmul.f32 %v3933, %v6319
    %v7477 = vmul.f32 %v3935, %v6323
    %v7478 = vmul.f32 %v3937, %v6327
    %v7479 = vmul.f32 %v3939, %v6331
    %v7480 = vmul.f32 %v3941, %v6335
    %v7481 = vmul.f32 %v3943, %v6339
    %v7482 = vmul.f32 %v3945, %v6343
    %v7483 = vmul.f32 %v3947, %v6347
    %v7484 = vmul.f32 %v3949, %v6351
    %v7485 = vmul.f32 %v3951, %v6355
    %v7486 = vmul.f32 %v3953, %v6359
    %v7487 = vmul.f32 %v3955, %v6363
    %v7488 = vmul.f32 %v3957, %v6367
    %v7489 = vmul.f32 %v3959, %v6371
    %v7490 = vmul.f32 %v3961, %v6375
    %v7491 = vmul.f32 %v3963, %v6379
    %v7492 = vmul.f32 %v3965, %v6383
    %v7493 = vmul.f32 %v3967, %v6387
    %v7494 = vmul.f32 %v3969, %v6391
    %v7495 = vmul.f32 %v3971, %v6395
    %v7496 = vmul.f32 %v3973, %v6399
    %v7497 = vmul.f32 %v3975, %v6403
    %v7498 = vmul.f32 %v3977, %v6407
    %v7499 = vmul.f32 %v3979, %v6411
    %v7500 = vmul.f32 %v3981, %v6415
    %v7501 = vmul.f32 %v3983, %v6419
    %v7502 = vmul.f32 %v3985, %v6423
    %v7503 = vmul.f32 %v3987, %v6427
    %v7504 = vmul.f32 %v3989, %v6431
    %v7505 = vmul.f32 %v3991, %v6435
    %v7506 = vmul.f32 %v3993, %v6439
    %v7507 = vmul.f32 %v3995, %v6443
    %v7508 = vmul.f32 %v3997, %v6447
    %v7509 = vmul.f32 %v3999, %v6451
    %v7510 = vmul.f32 %v4001, %v6455
    %v7511 = vmul.f32 %v4003, %v6459
    %v7512 = vmul.f32 %v4005, %v6463
    %v7513 = vmul.f32 %v4007, %v6467
    %v7514 = vmul.f32 %v4009, %v6471
    %v7515 = vmul.f32 %v4011, %v6475
    %v7516 = vmul.f32 %v4013, %v6479
    %v7517 = vmul.f32 %v4015, %v6483
    %v7518 = vmul.f32 %v4017, %v6487
    %v7519 = vmul.f32 %v4019, %v6491
    %v7520 = vmul.f32 %v4021, %v6495
    %v7521 = vmul.f32 %v4023, %v6499
    %v7522 = vmul.f32 %v4025, %v6503
    %v7523 = vmul.f32 %v4027, %v6507
    %v7524 = vmul.f32 %v4029, %v6511
    %v7525 = vmul.f32 %v4031, %v6515
    %v7526 = vmul.f32 %v4033, %v6519
    %v7527 = vmul.f32 %v4035, %v6523
    %v7528 = vmul.f32 %v4037, %v6527
    %v7529 = vmul.f32 %v4039, %v6531
    %v7530 = vmul.f32 %v4041, %v6535
    %v7531 = vmul.f32 %v4043, %v6539
    %v7532 = vmul.f32 %v4045, %v6543
    %v7533 = vmul.f32 %v4047, %v6547
    %v7534 = vmul.f32 %v4049, %v6551
    %v7535 = vmul.f32 %v4051, %v6555
    %v7536 = vmul.f32 %v4053, %v6559
    %v7537 = vmul.f32 %v4055, %v6563
    %v7538 = vmul.f32 %v4057, %v6567
    %v7539 = vmul.f32 %v4059, %v6571
    %v7540 = vmul.f32 %v4061, %v6575
    %v7541 = vmul.f32 %v4063, %v6579
    %v7542 = vmul.f32 %v4065, %v6583
    %v7543 = vmul.f32 %v4067, %v6587
    %v7544 = vmul.f32 %v4069, %v6591
    %v7545 = vmul.f32 %v4071, %v6595
    %v7546 = vmul.f32 %v4073, %v6599
    %v7547 = vmul.f32 %v4075, %v6603
    %v7548 = vmul.f32 %v4077, %v6607
    %v7549 = vmul.f32 %v4079, %v6611
    %v7550 = vmul.f32 %v4081, %v6615
    %v7551 = vmul.f32 %v4083, %v6619
    %v7552 = vmul.f32 %v4085, %v6623
    %v7553 = vmul.f32 %v4087, %v6627
    %v7554 = vmul.f32 %v4089, %v6631
    %v7555 = vmul.f32 %v4091, %v6635
    %v7556 = vmul.f32 %v4093, %v6639
    %v7557 = vmul.f32 %v4095, %v6643
    %v7558 = vmul.f32 %v4097, %v6647
    %v7559 = vmul.f32 %v4099, %v6651
    %v7560 = vmul.f32 %v4101, %v6655
    %v7561 = vmul.f32 %v4103, %v6659
    %v7562 = vmul.f32 %v4105, %v6663
    %v7563 = vmul.f32 %v4107, %v6667
    %v7564 = vmul.f32 %v4109, %v6671
    %v7565 = vmul.f32 %v4111, %v6675
    %v7566 = vmul.f32 %v4113, %v6679
    %v7567 = vmul.f32 %v4115, %v6683
    %v7568 = vmul.f32 %v4117, %v6687
    %v7569 = vmul.f32 %v4119, %v6691
    %v7570 = vmul.f32 %v4121, %v6695
    %v7571 = vmul.f32 %v4123, %v6699
    %v7572 = vmul.f32 %v4125, %v6703
    %v7573 = vmul.f32 %v4127, %v6707
    %v7574 = vmul.f32 %v4129, %v6711
    %v7575 = vmul.f32 %v4131, %v6715
    %v7576 = vmul.f32 %v4133, %v6719
    %v7577 = vmul.f32 %v4135, %v6723
    %v7578 = vmul.f32 %v4137, %v6727
    %v7579 = vmul.f32 %v4139, %v6731
    %v7580 = vmul.f32 %v4141, %v6735
    %v7581 = vmul.f32 %v4143, %v6739
    %v7582 = vmul.f32 %v4145, %v6743
    %v7583 = vmul.f32 %v4147, %v6747
    %v7584 = vmul.f32 %v4149, %v6751
    %v7585 = vmul.f32 %v4151, %v6755
    %v7586 = vmul.f32 %v4153, %v6759
    %v7587 = vmul.f32 %v4155, %v6763
    %v7588 = vmul.f32 %v4157, %v6767
    %v7589 = vmul.f32 %v4159, %v6771
    %v7590 = vmul.f32 %v4161, %v6775
    %v7591 = vmul.f32 %v4163, %v6779
    %v7592 = vmul.f32 %v4165, %v6783
    %v7593 = vmul.f32 %v4167, %v6787
    %v7594 = vmul.f32 %v4169, %v6791
    %v7595 = vmul.f32 %v4171, %v6795
    %v7596 = vmul.f32 %v4173, %v6799
    %v7597 = vmul.f32 %v4175, %v6803
    %v7598 = vmul.f32 %v4177, %v6807
    %v7599 = vmul.f32 %v4179, %v6811
    %v7600 = vmul.f32 %v4181, %v6815
    %v7601 = vmul.f32 %v4183, %v6819
    %v7602 = vmul.f32 %v4185, %v6823
    %v7603 = vmul.f32 %v4187, %v6827
    %v7604 = vmul.f32 %v4189, %v6831
    %v7605 = vmul.f32 %v4191, %v6835
    %v7606 = vmul.f32 %v4193, %v6839
    %v7607 = vmul.f32 %v4195, %v6843
    %v7608 = vmul.f32 %v4197, %v6847
    %v7609 = vmul.f32 %v4199, %v6851
    %v7610 = vmul.f32 %v4201, %v6855
    %v7611 = vmul.f32 %v4203, %v6859
    %v7612 = vmul.f32 %v4205, %v6863
    %v7613 = vmul.f32 %v4207, %v6867
    %v7614 = vmul.f32 %v4209, %v6871
    %v7615 = vmul.f32 %v4211, %v6875
    %v7616 = vmul.f32 %v4213, %v6879
    %v7617 = vmul.f32 %v4215, %v6883
    %v7618 = vmul.f32 %v4217, %v6887
    %v7619 = vmul.f32 %v4219, %v6891
    %v7620 = vmul.f32 %v4221, %v6895
    %v7621 = vmul.f32 %v4223, %v6899
    %v7622 = vmul.f32 %v4225, %v6903
    %v7623 = vmul.f32 %v4227, %v6907
    %v7624 = vmul.f32 %v4229, %v6911
    %v7625 = vmul.f32 %v4231, %v6915
    %v7626 = vmul.f32 %v4233, %v6919
    %v7627 = vmul.f32 %v4235, %v6923
    %v7628 = vmul.f32 %v4237, %v6927
    %v7629 = vmul.f32 %v4239, %v6931
    %v7630 = vmul.f32 %v4241, %v6935
    %v7631 = vmul.f32 %v4243, %v6939
    %v7632 = vmul.f32 %v4245, %v6943
    %v7633 = vmul.f32 %v4247, %v6947
    %v7634 = vmul.f32 %v4249, %v6951
    %v7635 = vmul.f32 %v4251, %v6955
    %v7636 = vmul.f32 %v4253, %v6959
    %v7637 = vmul.f32 %v4255, %v6963
    %v7638 = vmul.f32 %v4257, %v6967
    %v7639 = vmul.f32 %v4259, %v6971
    %v7640 = vmul.f32 %v4261, %v6975
    %v7641 = vmul.f32 %v4263, %v6979
    %v7642 = vmul.f32 %v4265, %v6983
    %v7643 = vmul.f32 %v4267, %v6987
    %v7644 = vmul.f32 %v4269, %v6991
    %v7645 = vmul.f32 %v4271, %v6995
    %v7646 = vmul.f32 %v4273, %v6999
    %v7647 = vmul.f32 %v4275, %v7003
    %v7648 = vmul.f32 %v4277, %v7007
    %v7649 = vmul.f32 %v4279, %v7011
    %v7650 = vmul.f32 %v4281, %v7015
    %v7651 = vmul.f32 %v4283, %v7019
    %v7652 = vmul.f32 %v4285, %v7023
    %v7653 = vmul.f32 %v4287, %v7027
    %v7654 = vmul.f32 %v4289, %v7031
    %v7655 = vmul.f32 %v4291, %v7035
    %v7656 = vmul.f32 %v4293, %v7039
    %v7657 = vmul.f32 %v4295, %v7043
    %v7658 = vmul.f32 %v4297, %v7047
    %v7659 = vmul.f32 %v4299, %v7051
    %v7660 = vmul.f32 %v4301, %v7055
    %v7661 = vmul.f32 %v4303, %v7059
    %v7662 = vmul.f32 %v4305, %v7063
    %v7663 = vmul.f32 %v4307, %v7067
    %v7664 = vmul.f32 %v4309, %v7071
    %v7665 = vmul.f32 %v4311, %v7075
    %v7666 = vmul.f32 %v4313, %v7079
    %v7667 = vmul.f32 %v4315, %v7083
    %v7668 = vmul.f32 %v4317, %v7087
    %v7669 = vmul.f32 %v4319, %v7091
    %v7670 = vmul.f32 %v4321, %v7095
    %v7671 = vmul.f32 %v4323, %v7099
    %v7672 = vmul.f32 %v4325, %v7103
    %v7673 = vmul.f32 %v4327, %v7107
    %v7674 = vmul.f32 %v4329, %v7111
    %v7675 = vmul.f32 %v4331, %v7115
    %v7676 = vmul.f32 %v4333, %v7119
    %v7677 = vmul.f32 %v4335, %v7123
    %v7678 = vmul.f32 %v4337, %v7127
    %v7679 = vmul.f32 %v4339, %v7131
    %v7680 = vmul.f32 %v4341, %v7135
    %v7681 = vmul.f32 %v4343, %v7139
    %v7682 = vmul.f32 %v4345, %v7143
    %v7683 = vmul.f32 %v4347, %v7147
    %v7684 = vmul.f32 %v4349, %v7151
    %v7685 = vmul.f32 %v4351, %v7155
    %v7686 = vmul.f32 %v4353, %v7159
    %v7687 = vmul.f32 %v4355, %v7163
    %v7688 = vmul.f32 %v4357, %v7167
    %v7689 = vmul.f32 %v4359, %v7171
    %v7690 = vmul.f32 %v4361, %v7175
    %v7691 = vmul.f32 %v4363, %v7179
    %v7692 = vadd.f32 %v5900, %v7436
    %v7693 = vadd.f32 %v5901, %v7437
    %v7694 = vadd.f32 %v5902, %v7438
    %v7695 = vadd.f32 %v5903, %v7439
    %v7696 = vadd.f32 %v5904, %v7440
    %v7697 = vadd.f32 %v5905, %v7441
    %v7698 = vadd.f32 %v5906, %v7442
    %v7699 = vadd.f32 %v5907, %v7443
    %v7700 = vadd.f32 %v5908, %v7444
    %v7701 = vadd.f32 %v5909, %v7445
    %v7702 = vadd.f32 %v5910, %v7446
    %v7703 = vadd.f32 %v5911, %v7447
    %v7704 = vadd.f32 %v5912, %v7448
    %v7705 = vadd.f32 %v5913, %v7449
    %v7706 = vadd.f32 %v5914, %v7450
    %v7707 = vadd.f32 %v5915, %v7451
    %v7708 = vadd.f32 %v5916, %v7452
    %v7709 = vadd.f32 %v5917, %v7453
    %v7710 = vadd.f32 %v5918, %v7454
    %v7711 = vadd.f32 %v5919, %v7455
    %v7712 = vadd.f32 %v5920, %v7456
    %v7713 = vadd.f32 %v5921, %v7457
    %v7714 = vadd.f32 %v5922, %v7458
    %v7715 = vadd.f32 %v5923, %v7459
    %v7716 = vadd.f32 %v5924, %v7460
    %v7717 = vadd.f32 %v5925, %v7461
    %v7718 = vadd.f32 %v5926, %v7462
    %v7719 = vadd.f32 %v5927, %v7463
    %v7720 = vadd.f32 %v5928, %v7464
    %v7721 = vadd.f32 %v5929, %v7465
    %v7722 = vadd.f32 %v5930, %v7466
    %v7723 = vadd.f32 %v5931, %v7467
    %v7724 = vadd.f32 %v5932, %v7468
    %v7725 = vadd.f32 %v5933, %v7469
    %v7726 = vadd.f32 %v5934, %v7470
    %v7727 = vadd.f32 %v5935, %v7471
    %v7728 = vadd.f32 %v5936, %v7472
    %v7729 = vadd.f32 %v5937, %v7473
    %v7730 = vadd.f32 %v5938, %v7474
    %v7731 = vadd.f32 %v5939, %v7475
    %v7732 = vadd.f32 %v5940, %v7476
    %v7733 = vadd.f32 %v5941, %v7477
    %v7734 = vadd.f32 %v5942, %v7478
    %v7735 = vadd.f32 %v5943, %v7479
    %v7736 = vadd.f32 %v5944, %v7480
    %v7737 = vadd.f32 %v5945, %v7481
    %v7738 = vadd.f32 %v5946, %v7482
    %v7739 = vadd.f32 %v5947, %v7483
    %v7740 = vadd.f32 %v5948, %v7484
    %v7741 = vadd.f32 %v5949, %v7485
    %v7742 = vadd.f32 %v5950, %v7486
    %v7743 = vadd.f32 %v5951, %v7487
    %v7744 = vadd.f32 %v5952, %v7488
    %v7745 = vadd.f32 %v5953, %v7489
    %v7746 = vadd.f32 %v5954, %v7490
    %v7747 = vadd.f32 %v5955, %v7491
    %v7748 = vadd.f32 %v5956, %v7492
    %v7749 = vadd.f32 %v5957, %v7493
    %v7750 = vadd.f32 %v5958, %v7494
    %v7751 = vadd.f32 %v5959, %v7495
    %v7752 = vadd.f32 %v5960, %v7496
    %v7753 = vadd.f32 %v5961, %v7497
    %v7754 = vadd.f32 %v5962, %v7498
    %v7755 = vadd.f32 %v5963, %v7499
    %v7756 = vadd.f32 %v5964, %v7500
    %v7757 = vadd.f32 %v5965, %v7501
    %v7758 = vadd.f32 %v5966, %v7502
    %v7759 = vadd.f32 %v5967, %v7503
    %v7760 = vadd.f32 %v5968, %v7504
    %v7761 = vadd.f32 %v5969, %v7505
    %v7762 = vadd.f32 %v5970, %v7506
    %v7763 = vadd.f32 %v5971, %v7507
    %v7764 = vadd.f32 %v5972, %v7508
    %v7765 = vadd.f32 %v5973, %v7509
    %v7766 = vadd.f32 %v5974, %v7510
    %v7767 = vadd.f32 %v5975, %v7511
    %v7768 = vadd.f32 %v5976, %v7512
    %v7769 = vadd.f32 %v5977, %v7513
    %v7770 = vadd.f32 %v5978, %v7514
    %v7771 = vadd.f32 %v5979, %v7515
    %v7772 = vadd.f32 %v5980, %v7516
    %v7773 = vadd.f32 %v5981, %v7517
    %v7774 = vadd.f32 %v5982, %v7518
    %v7775 = vadd.f32 %v5983, %v7519
    %v7776 = vadd.f32 %v5984, %v7520
    %v7777 = vadd.f32 %v5985, %v7521
    %v7778 = vadd.f32 %v5986, %v7522
    %v7779 = vadd.f32 %v5987, %v7523
    %v7780 = vadd.f32 %v5988, %v7524
    %v7781 = vadd.f32 %v5989, %v7525
    %v7782 = vadd.f32 %v5990, %v7526
    %v7783 = vadd.f32 %v5991, %v7527
    %v7784 = vadd.f32 %v5992, %v7528
    %v7785 = vadd.f32 %v5993, %v7529
    %v7786 = vadd.f32 %v5994, %v7530
    %v7787 = vadd.f32 %v5995, %v7531
    %v7788 = vadd.f32 %v5996, %v7532
    %v7789 = vadd.f32 %v5997, %v7533
    %v7790 = vadd.f32 %v5998, %v7534
    %v7791 = vadd.f32 %v5999, %v7535
    %v7792 = vadd.f32 %v6000, %v7536
    %v7793 = vadd.f32 %v6001, %v7537
    %v7794 = vadd.f32 %v6002, %v7538
    %v7795 = vadd.f32 %v6003, %v7539
    %v7796 = vadd.f32 %v6004, %v7540
    %v7797 = vadd.f32 %v6005, %v7541
    %v7798 = vadd.f32 %v6006, %v7542
    %v7799 = vadd.f32 %v6007, %v7543
    %v7800 = vadd.f32 %v6008, %v7544
    %v7801 = vadd.f32 %v6009, %v7545
    %v7802 = vadd.f32 %v6010, %v7546
    %v7803 = vadd.f32 %v6011, %v7547
    %v7804 = vadd.f32 %v6012, %v7548
    %v7805 = vadd.f32 %v6013, %v7549
    %v7806 = vadd.f32 %v6014, %v7550
    %v7807 = vadd.f32 %v6015, %v7551
    %v7808 = vadd.f32 %v6016, %v7552
    %v7809 = vadd.f32 %v6017, %v7553
    %v7810 = vadd.f32 %v6018, %v7554
    %v7811 = vadd.f32 %v6019, %v7555
    %v7812 = vadd.f32 %v6020, %v7556
    %v7813 = vadd.f32 %v6021, %v7557
    %v7814 = vadd.f32 %v6022, %v7558
    %v7815 = vadd.f32 %v6023, %v7559
    %v7816 = vadd.f32 %v6024, %v7560
    %v7817 = vadd.f32 %v6025, %v7561
    %v7818 = vadd.f32 %v6026, %v7562
    %v7819 = vadd.f32 %v6027, %v7563
    %v7820 = vadd.f32 %v6028, %v7564
    %v7821 = vadd.f32 %v6029, %v7565
    %v7822 = vadd.f32 %v6030, %v7566
    %v7823 = vadd.f32 %v6031, %v7567
    %v7824 = vadd.f32 %v6032, %v7568
    %v7825 = vadd.f32 %v6033, %v7569
    %v7826 = vadd.f32 %v6034, %v7570
    %v7827 = vadd.f32 %v6035, %v7571
    %v7828 = vadd.f32 %v6036, %v7572
    %v7829 = vadd.f32 %v6037, %v7573
    %v7830 = vadd.f32 %v6038, %v7574
    %v7831 = vadd.f32 %v6039, %v7575
    %v7832 = vadd.f32 %v6040, %v7576
    %v7833 = vadd.f32 %v6041, %v7577
    %v7834 = vadd.f32 %v6042, %v7578
    %v7835 = vadd.f32 %v6043, %v7579
    %v7836 = vadd.f32 %v6044, %v7580
    %v7837 = vadd.f32 %v6045, %v7581
    %v7838 = vadd.f32 %v6046, %v7582
    %v7839 = vadd.f32 %v6047, %v7583
    %v7840 = vadd.f32 %v6048, %v7584
    %v7841 = vadd.f32 %v6049, %v7585
    %v7842 = vadd.f32 %v6050, %v7586
    %v7843 = vadd.f32 %v6051, %v7587
    %v7844 = vadd.f32 %v6052, %v7588
    %v7845 = vadd.f32 %v6053, %v7589
    %v7846 = vadd.f32 %v6054, %v7590
    %v7847 = vadd.f32 %v6055, %v7591
    %v7848 = vadd.f32 %v6056, %v7592
    %v7849 = vadd.f32 %v6057, %v7593
    %v7850 = vadd.f32 %v6058, %v7594
    %v7851 = vadd.f32 %v6059, %v7595
    %v7852 = vadd.f32 %v6060, %v7596
    %v7853 = vadd.f32 %v6061, %v7597
    %v7854 = vadd.f32 %v6062, %v7598
    %v7855 = vadd.f32 %v6063, %v7599
    %v7856 = vadd.f32 %v6064, %v7600
    %v7857 = vadd.f32 %v6065, %v7601
    %v7858 = vadd.f32 %v6066, %v7602
    %v7859 = vadd.f32 %v6067, %v7603
    %v7860 = vadd.f32 %v6068, %v7604
    %v7861 = vadd.f32 %v6069, %v7605
    %v7862 = vadd.f32 %v6070, %v7606
    %v7863 = vadd.f32 %v6071, %v7607
    %v7864 = vadd.f32 %v6072, %v7608
    %v7865 = vadd.f32 %v6073, %v7609
    %v7866 = vadd.f32 %v6074, %v7610
    %v7867 = vadd.f32 %v6075, %v7611
    %v7868 = vadd.f32 %v6076, %v7612
    %v7869 = vadd.f32 %v6077, %v7613
    %v7870 = vadd.f32 %v6078, %v7614
    %v7871 = vadd.f32 %v6079, %v7615
    %v7872 = vadd.f32 %v6080, %v7616
    %v7873 = vadd.f32 %v6081, %v7617
    %v7874 = vadd.f32 %v6082, %v7618
    %v7875 = vadd.f32 %v6083, %v7619
    %v7876 = vadd.f32 %v6084, %v7620
    %v7877 = vadd.f32 %v6085, %v7621
    %v7878 = vadd.f32 %v6086, %v7622
    %v7879 = vadd.f32 %v6087, %v7623
    %v7880 = vadd.f32 %v6088, %v7624
    %v7881 = vadd.f32 %v6089, %v7625
    %v7882 = vadd.f32 %v6090, %v7626
    %v7883 = vadd.f32 %v6091, %v7627
    %v7884 = vadd.f32 %v6092, %v7628
    %v7885 = vadd.f32 %v6093, %v7629
    %v7886 = vadd.f32 %v6094, %v7630
    %v7887 = vadd.f32 %v6095, %v7631
    %v7888 = vadd.f32 %v6096, %v7632
    %v7889 = vadd.f32 %v6097, %v7633
    %v7890 = vadd.f32 %v6098, %v7634
    %v7891 = vadd.f32 %v6099, %v7635
    %v7892 = vadd.f32 %v6100, %v7636
    %v7893 = vadd.f32 %v6101, %v7637
    %v7894 = vadd.f32 %v6102, %v7638
    %v7895 = vadd.f32 %v6103, %v7639
    %v7896 = vadd.f32 %v6104, %v7640
    %v7897 = vadd.f32 %v6105, %v7641
    %v7898 = vadd.f32 %v6106, %v7642
    %v7899 = vadd.f32 %v6107, %v7643
    %v7900 = vadd.f32 %v6108, %v7644
    %v7901 = vadd.f32 %v6109, %v7645
    %v7902 = vadd.f32 %v6110, %v7646
    %v7903 = vadd.f32 %v6111, %v7647
    %v7904 = vadd.f32 %v6112, %v7648
    %v7905 = vadd.f32 %v6113, %v7649
    %v7906 = vadd.f32 %v6114, %v7650
    %v7907 = vadd.f32 %v6115, %v7651
    %v7908 = vadd.f32 %v6116, %v7652
    %v7909 = vadd.f32 %v6117, %v7653
    %v7910 = vadd.f32 %v6118, %v7654
    %v7911 = vadd.f32 %v6119, %v7655
    %v7912 = vadd.f32 %v6120, %v7656
    %v7913 = vadd.f32 %v6121, %v7657
    %v7914 = vadd.f32 %v6122, %v7658
    %v7915 = vadd.f32 %v6123, %v7659
    %v7916 = vadd.f32 %v6124, %v7660
    %v7917 = vadd.f32 %v6125, %v7661
    %v7918 = vadd.f32 %v6126, %v7662
    %v7919 = vadd.f32 %v6127, %v7663
    %v7920 = vadd.f32 %v6128, %v7664
    %v7921 = vadd.f32 %v6129, %v7665
    %v7922 = vadd.f32 %v6130, %v7666
    %v7923 = vadd.f32 %v6131, %v7667
    %v7924 = vadd.f32 %v6132, %v7668
    %v7925 = vadd.f32 %v6133, %v7669
    %v7926 = vadd.f32 %v6134, %v7670
    %v7927 = vadd.f32 %v6135, %v7671
    %v7928 = vadd.f32 %v6136, %v7672
    %v7929 = vadd.f32 %v6137, %v7673
    %v7930 = vadd.f32 %v6138, %v7674
    %v7931 = vadd.f32 %v6139, %v7675
    %v7932 = vadd.f32 %v6140, %v7676
    %v7933 = vadd.f32 %v6141, %v7677
    %v7934 = vadd.f32 %v6142, %v7678
    %v7935 = vadd.f32 %v6143, %v7679
    %v7936 = vadd.f32 %v6144, %v7680
    %v7937 = vadd.f32 %v6145, %v7681
    %v7938 = vadd.f32 %v6146, %v7682
    %v7939 = vadd.f32 %v6147, %v7683
    %v7940 = vadd.f32 %v6148, %v7684
    %v7941 = vadd.f32 %v6149, %v7685
    %v7942 = vadd.f32 %v6150, %v7686
    %v7943 = vadd.f32 %v6151, %v7687
    %v7944 = vadd.f32 %v6152, %v7688
    %v7945 = vadd.f32 %v6153, %v7689
    %v7946 = vadd.f32 %v6154, %v7690
    %v7947 = vadd.f32 %v6155, %v7691
    %7948 = vst [vmem:[#allocation10] sm:$0xff] %v7692
    %7949 = vst [vmem:[#allocation10 + $0x8] sm:$0xff] %v7693
    %7950 = vst [vmem:[#allocation10 + $0x10] sm:$0xff] %v7694
    %7951 = vst [vmem:[#allocation10 + $0x18] sm:$0xff] %v7695
    %7952 = vst [vmem:[#allocation10 + $0x20] sm:$0xff] %v7696
    %7953 = vst [vmem:[#allocation10 + $0x28] sm:$0xff] %v7697
    %7954 = vst [vmem:[#allocation10 + $0x30] sm:$0xff] %v7698
    %7955 = vst [vmem:[#allocation10 + $0x38] sm:$0xff] %v7699
    %7956 = vst [vmem:[#allocation10 + $0x40] sm:$0xff] %v7700
    %7957 = vst [vmem:[#allocation10 + $0x48] sm:$0xff] %v7701
    %7958 = vst [vmem:[#allocation10 + $0x50] sm:$0xff] %v7702
    %7959 = vst [vmem:[#allocation10 + $0x58] sm:$0xff] %v7703
    %7960 = vst [vmem:[#allocation10 + $0x60] sm:$0xff] %v7704
    %7961 = vst [vmem:[#allocation10 + $0x68] sm:$0xff] %v7705
    %7962 = vst [vmem:[#allocation10 + $0x70] sm:$0xff] %v7706
    %7963 = vst [vmem:[#allocation10 + $0x78] sm:$0xff] %v7707
    %7964 = vst [vmem:[#allocation10 + $0x80] sm:$0xff] %v7708
    %7965 = vst [vmem:[#allocation10 + $0x88] sm:$0xff] %v7709
    %7966 = vst [vmem:[#allocation10 + $0x90] sm:$0xff] %v7710
    %7967 = vst [vmem:[#allocation10 + $0x98] sm:$0xff] %v7711
    %7968 = vst [vmem:[#allocation10 + $0xa0] sm:$0xff] %v7712
    %7969 = vst [vmem:[#allocation10 + $0xa8] sm:$0xff] %v7713
    %7970 = vst [vmem:[#allocation10 + $0xb0] sm:$0xff] %v7714
    %7971 = vst [vmem:[#allocation10 + $0xb8] sm:$0xff] %v7715
    %7972 = vst [vmem:[#allocation10 + $0xc0] sm:$0xff] %v7716
    %7973 = vst [vmem:[#allocation10 + $0xc8] sm:$0xff] %v7717
    %7974 = vst [vmem:[#allocation10 + $0xd0] sm:$0xff] %v7718
    %7975 = vst [vmem:[#allocation10 + $0xd8] sm:$0xff] %v7719
    %7976 = vst [vmem:[#allocation10 + $0xe0] sm:$0xff] %v7720
    %7977 = vst [vmem:[#allocation10 + $0xe8] sm:$0xff] %v7721
    %7978 = vst [vmem:[#allocation10 + $0xf0] sm:$0xff] %v7722
    %7979 = vst [vmem:[#allocation10 + $0xf8] sm:$0xff] %v7723
    %7980 = vst [vmem:[#allocation10 + $0x100] sm:$0xff] %v7724
    %7981 = vst [vmem:[#allocation10 + $0x108] sm:$0xff] %v7725
    %7982 = vst [vmem:[#allocation10 + $0x110] sm:$0xff] %v7726
    %7983 = vst [vmem:[#allocation10 + $0x118] sm:$0xff] %v7727
    %7984 = vst [vmem:[#allocation10 + $0x120] sm:$0xff] %v7728
    %7985 = vst [vmem:[#allocation10 + $0x128] sm:$0xff] %v7729
    %7986 = vst [vmem:[#allocation10 + $0x130] sm:$0xff] %v7730
    %7987 = vst [vmem:[#allocation10 + $0x138] sm:$0xff] %v7731
    %7988 = vst [vmem:[#allocation10 + $0x140] sm:$0xff] %v7732
    %7989 = vst [vmem:[#allocation10 + $0x148] sm:$0xff] %v7733
    %7990 = vst [vmem:[#allocation10 + $0x150] sm:$0xff] %v7734
    %7991 = vst [vmem:[#allocation10 + $0x158] sm:$0xff] %v7735
    %7992 = vst [vmem:[#allocation10 + $0x160] sm:$0xff] %v7736
    %7993 = vst [vmem:[#allocation10 + $0x168] sm:$0xff] %v7737
    %7994 = vst [vmem:[#allocation10 + $0x170] sm:$0xff] %v7738
    %7995 = vst [vmem:[#allocation10 + $0x178] sm:$0xff] %v7739
    %7996 = vst [vmem:[#allocation10 + $0x180] sm:$0xff] %v7740
    %7997 = vst [vmem:[#allocation10 + $0x188] sm:$0xff] %v7741
    %7998 = vst [vmem:[#allocation10 + $0x190] sm:$0xff] %v7742
    %7999 = vst [vmem:[#allocation10 + $0x198] sm:$0xff] %v7743
    %8000 = vst [vmem:[#allocation10 + $0x1a0] sm:$0xff] %v7744
    %8001 = vst [vmem:[#allocation10 + $0x1a8] sm:$0xff] %v7745
    %8002 = vst [vmem:[#allocation10 + $0x1b0] sm:$0xff] %v7746
    %8003 = vst [vmem:[#allocation10 + $0x1b8] sm:$0xff] %v7747
    %8004 = vst [vmem:[#allocation10 + $0x1c0] sm:$0xff] %v7748
    %8005 = vst [vmem:[#allocation10 + $0x1c8] sm:$0xff] %v7749
    %8006 = vst [vmem:[#allocation10 + $0x1d0] sm:$0xff] %v7750
    %8007 = vst [vmem:[#allocation10 + $0x1d8] sm:$0xff] %v7751
    %8008 = vst [vmem:[#allocation10 + $0x1e0] sm:$0xff] %v7752
    %8009 = vst [vmem:[#allocation10 + $0x1e8] sm:$0xff] %v7753
    %8010 = vst [vmem:[#allocation10 + $0x1f0] sm:$0xff] %v7754
    %8011 = vst [vmem:[#allocation10 + $0x1f8] sm:$0xff] %v7755
    %8012 = vst [vmem:[#allocation10 + $0x200] sm:$0xff] %v7756
    %8013 = vst [vmem:[#allocation10 + $0x208] sm:$0xff] %v7757
    %8014 = vst [vmem:[#allocation10 + $0x210] sm:$0xff] %v7758
    %8015 = vst [vmem:[#allocation10 + $0x218] sm:$0xff] %v7759
    %8016 = vst [vmem:[#allocation10 + $0x220] sm:$0xff] %v7760
    %8017 = vst [vmem:[#allocation10 + $0x228] sm:$0xff] %v7761
    %8018 = vst [vmem:[#allocation10 + $0x230] sm:$0xff] %v7762
    %8019 = vst [vmem:[#allocation10 + $0x238] sm:$0xff] %v7763
    %8020 = vst [vmem:[#allocation10 + $0x240] sm:$0xff] %v7764
    %8021 = vst [vmem:[#allocation10 + $0x248] sm:$0xff] %v7765
    %8022 = vst [vmem:[#allocation10 + $0x250] sm:$0xff] %v7766
    %8023 = vst [vmem:[#allocation10 + $0x258] sm:$0xff] %v7767
    %8024 = vst [vmem:[#allocation10 + $0x260] sm:$0xff] %v7768
    %8025 = vst [vmem:[#allocation10 + $0x268] sm:$0xff] %v7769
    %8026 = vst [vmem:[#allocation10 + $0x270] sm:$0xff] %v7770
    %8027 = vst [vmem:[#allocation10 + $0x278] sm:$0xff] %v7771
    %8028 = vst [vmem:[#allocation10 + $0x280] sm:$0xff] %v7772
    %8029 = vst [vmem:[#allocation10 + $0x288] sm:$0xff] %v7773
    %8030 = vst [vmem:[#allocation10 + $0x290] sm:$0xff] %v7774
    %8031 = vst [vmem:[#allocation10 + $0x298] sm:$0xff] %v7775
    %8032 = vst [vmem:[#allocation10 + $0x2a0] sm:$0xff] %v7776
    %8033 = vst [vmem:[#allocation10 + $0x2a8] sm:$0xff] %v7777
    %8034 = vst [vmem:[#allocation10 + $0x2b0] sm:$0xff] %v7778
    %8035 = vst [vmem:[#allocation10 + $0x2b8] sm:$0xff] %v7779
    %8036 = vst [vmem:[#allocation10 + $0x2c0] sm:$0xff] %v7780
    %8037 = vst [vmem:[#allocation10 + $0x2c8] sm:$0xff] %v7781
    %8038 = vst [vmem:[#allocation10 + $0x2d0] sm:$0xff] %v7782
    %8039 = vst [vmem:[#allocation10 + $0x2d8] sm:$0xff] %v7783
    %8040 = vst [vmem:[#allocation10 + $0x2e0] sm:$0xff] %v7784
    %8041 = vst [vmem:[#allocation10 + $0x2e8] sm:$0xff] %v7785
    %8042 = vst [vmem:[#allocation10 + $0x2f0] sm:$0xff] %v7786
    %8043 = vst [vmem:[#allocation10 + $0x2f8] sm:$0xff] %v7787
    %8044 = vst [vmem:[#allocation10 + $0x300] sm:$0xff] %v7788
    %8045 = vst [vmem:[#allocation10 + $0x308] sm:$0xff] %v7789
    %8046 = vst [vmem:[#allocation10 + $0x310] sm:$0xff] %v7790
    %8047 = vst [vmem:[#allocation10 + $0x318] sm:$0xff] %v7791
    %8048 = vst [vmem:[#allocation10 + $0x320] sm:$0xff] %v7792
    %8049 = vst [vmem:[#allocation10 + $0x328] sm:$0xff] %v7793
    %8050 = vst [vmem:[#allocation10 + $0x330] sm:$0xff] %v7794
    %8051 = vst [vmem:[#allocation10 + $0x338] sm:$0xff] %v7795
    %8052 = vst [vmem:[#allocation10 + $0x340] sm:$0xff] %v7796
    %8053 = vst [vmem:[#allocation10 + $0x348] sm:$0xff] %v7797
    %8054 = vst [vmem:[#allocation10 + $0x350] sm:$0xff] %v7798
    %8055 = vst [vmem:[#allocation10 + $0x358] sm:$0xff] %v7799
    %8056 = vst [vmem:[#allocation10 + $0x360] sm:$0xff] %v7800
    %8057 = vst [vmem:[#allocation10 + $0x368] sm:$0xff] %v7801
    %8058 = vst [vmem:[#allocation10 + $0x370] sm:$0xff] %v7802
    %8059 = vst [vmem:[#allocation10 + $0x378] sm:$0xff] %v7803
    %8060 = vst [vmem:[#allocation10 + $0x380] sm:$0xff] %v7804
    %8061 = vst [vmem:[#allocation10 + $0x388] sm:$0xff] %v7805
    %8062 = vst [vmem:[#allocation10 + $0x390] sm:$0xff] %v7806
    %8063 = vst [vmem:[#allocation10 + $0x398] sm:$0xff] %v7807
    %8064 = vst [vmem:[#allocation10 + $0x3a0] sm:$0xff] %v7808
    %8065 = vst [vmem:[#allocation10 + $0x3a8] sm:$0xff] %v7809
    %8066 = vst [vmem:[#allocation10 + $0x3b0] sm:$0xff] %v7810
    %8067 = vst [vmem:[#allocation10 + $0x3b8] sm:$0xff] %v7811
    %8068 = vst [vmem:[#allocation10 + $0x3c0] sm:$0xff] %v7812
    %8069 = vst [vmem:[#allocation10 + $0x3c8] sm:$0xff] %v7813
    %8070 = vst [vmem:[#allocation10 + $0x3d0] sm:$0xff] %v7814
    %8071 = vst [vmem:[#allocation10 + $0x3d8] sm:$0xff] %v7815
    %8072 = vst [vmem:[#allocation10 + $0x3e0] sm:$0xff] %v7816
    %8073 = vst [vmem:[#allocation10 + $0x3e8] sm:$0xff] %v7817
    %8074 = vst [vmem:[#allocation10 + $0x3f0] sm:$0xff] %v7818
    %8075 = vst [vmem:[#allocation10 + $0x3f8] sm:$0xff] %v7819
    %8076 = vst [vmem:[#allocation10 + $0x400] sm:$0xff] %v7820
    %8077 = vst [vmem:[#allocation10 + $0x408] sm:$0xff] %v7821
    %8078 = vst [vmem:[#allocation10 + $0x410] sm:$0xff] %v7822
    %8079 = vst [vmem:[#allocation10 + $0x418] sm:$0xff] %v7823
    %8080 = vst [vmem:[#allocation10 + $0x420] sm:$0xff] %v7824
    %8081 = vst [vmem:[#allocation10 + $0x428] sm:$0xff] %v7825
    %8082 = vst [vmem:[#allocation10 + $0x430] sm:$0xff] %v7826
    %8083 = vst [vmem:[#allocation10 + $0x438] sm:$0xff] %v7827
    %8084 = vst [vmem:[#allocation10 + $0x440] sm:$0xff] %v7828
    %8085 = vst [vmem:[#allocation10 + $0x448] sm:$0xff] %v7829
    %8086 = vst [vmem:[#allocation10 + $0x450] sm:$0xff] %v7830
    %8087 = vst [vmem:[#allocation10 + $0x458] sm:$0xff] %v7831
    %8088 = vst [vmem:[#allocation10 + $0x460] sm:$0xff] %v7832
    %8089 = vst [vmem:[#allocation10 + $0x468] sm:$0xff] %v7833
    %8090 = vst [vmem:[#allocation10 + $0x470] sm:$0xff] %v7834
    %8091 = vst [vmem:[#allocation10 + $0x478] sm:$0xff] %v7835
    %8092 = vst [vmem:[#allocation10 + $0x480] sm:$0xff] %v7836
    %8093 = vst [vmem:[#allocation10 + $0x488] sm:$0xff] %v7837
    %8094 = vst [vmem:[#allocation10 + $0x490] sm:$0xff] %v7838
    %8095 = vst [vmem:[#allocation10 + $0x498] sm:$0xff] %v7839
    %8096 = vst [vmem:[#allocation10 + $0x4a0] sm:$0xff] %v7840
    %8097 = vst [vmem:[#allocation10 + $0x4a8] sm:$0xff] %v7841
    %8098 = vst [vmem:[#allocation10 + $0x4b0] sm:$0xff] %v7842
    %8099 = vst [vmem:[#allocation10 + $0x4b8] sm:$0xff] %v7843
    %8100 = vst [vmem:[#allocation10 + $0x4c0] sm:$0xff] %v7844
    %8101 = vst [vmem:[#allocation10 + $0x4c8] sm:$0xff] %v7845
    %8102 = vst [vmem:[#allocation10 + $0x4d0] sm:$0xff] %v7846
    %8103 = vst [vmem:[#allocation10 + $0x4d8] sm:$0xff] %v7847
    %8104 = vst [vmem:[#allocation10 + $0x4e0] sm:$0xff] %v7848
    %8105 = vst [vmem:[#allocation10 + $0x4e8] sm:$0xff] %v7849
    %8106 = vst [vmem:[#allocation10 + $0x4f0] sm:$0xff] %v7850
    %8107 = vst [vmem:[#allocation10 + $0x4f8] sm:$0xff] %v7851
    %8108 = vst [vmem:[#allocation10 + $0x500] sm:$0xff] %v7852
    %8109 = vst [vmem:[#allocation10 + $0x508] sm:$0xff] %v7853
    %8110 = vst [vmem:[#allocation10 + $0x510] sm:$0xff] %v7854
    %8111 = vst [vmem:[#allocation10 + $0x518] sm:$0xff] %v7855
    %8112 = vst [vmem:[#allocation10 + $0x520] sm:$0xff] %v7856
    %8113 = vst [vmem:[#allocation10 + $0x528] sm:$0xff] %v7857
    %8114 = vst [vmem:[#allocation10 + $0x530] sm:$0xff] %v7858
    %8115 = vst [vmem:[#allocation10 + $0x538] sm:$0xff] %v7859
    %8116 = vst [vmem:[#allocation10 + $0x540] sm:$0xff] %v7860
    %8117 = vst [vmem:[#allocation10 + $0x548] sm:$0xff] %v7861
    %8118 = vst [vmem:[#allocation10 + $0x550] sm:$0xff] %v7862
    %8119 = vst [vmem:[#allocation10 + $0x558] sm:$0xff] %v7863
    %8120 = vst [vmem:[#allocation10 + $0x560] sm:$0xff] %v7864
    %8121 = vst [vmem:[#allocation10 + $0x568] sm:$0xff] %v7865
    %8122 = vst [vmem:[#allocation10 + $0x570] sm:$0xff] %v7866
    %8123 = vst [vmem:[#allocation10 + $0x578] sm:$0xff] %v7867
    %8124 = vst [vmem:[#allocation10 + $0x580] sm:$0xff] %v7868
    %8125 = vst [vmem:[#allocation10 + $0x588] sm:$0xff] %v7869
    %8126 = vst [vmem:[#allocation10 + $0x590] sm:$0xff] %v7870
    %8127 = vst [vmem:[#allocation10 + $0x598] sm:$0xff] %v7871
    %8128 = vst [vmem:[#allocation10 + $0x5a0] sm:$0xff] %v7872
    %8129 = vst [vmem:[#allocation10 + $0x5a8] sm:$0xff] %v7873
    %8130 = vst [vmem:[#allocation10 + $0x5b0] sm:$0xff] %v7874
    %8131 = vst [vmem:[#allocation10 + $0x5b8] sm:$0xff] %v7875
    %8132 = vst [vmem:[#allocation10 + $0x5c0] sm:$0xff] %v7876
    %8133 = vst [vmem:[#allocation10 + $0x5c8] sm:$0xff] %v7877
    %8134 = vst [vmem:[#allocation10 + $0x5d0] sm:$0xff] %v7878
    %8135 = vst [vmem:[#allocation10 + $0x5d8] sm:$0xff] %v7879
    %8136 = vst [vmem:[#allocation10 + $0x5e0] sm:$0xff] %v7880
    %8137 = vst [vmem:[#allocation10 + $0x5e8] sm:$0xff] %v7881
    %8138 = vst [vmem:[#allocation10 + $0x5f0] sm:$0xff] %v7882
    %8139 = vst [vmem:[#allocation10 + $0x5f8] sm:$0xff] %v7883
    %8140 = vst [vmem:[#allocation10 + $0x600] sm:$0xff] %v7884
    %8141 = vst [vmem:[#allocation10 + $0x608] sm:$0xff] %v7885
    %8142 = vst [vmem:[#allocation10 + $0x610] sm:$0xff] %v7886
    %8143 = vst [vmem:[#allocation10 + $0x618] sm:$0xff] %v7887
    %8144 = vst [vmem:[#allocation10 + $0x620] sm:$0xff] %v7888
    %8145 = vst [vmem:[#allocation10 + $0x628] sm:$0xff] %v7889
    %8146 = vst [vmem:[#allocation10 + $0x630] sm:$0xff] %v7890
    %8147 = vst [vmem:[#allocation10 + $0x638] sm:$0xff] %v7891
    %8148 = vst [vmem:[#allocation10 + $0x640] sm:$0xff] %v7892
    %8149 = vst [vmem:[#allocation10 + $0x648] sm:$0xff] %v7893
    %8150 = vst [vmem:[#allocation10 + $0x650] sm:$0xff] %v7894
    %8151 = vst [vmem:[#allocation10 + $0x658] sm:$0xff] %v7895
    %8152 = vst [vmem:[#allocation10 + $0x660] sm:$0xff] %v7896
    %8153 = vst [vmem:[#allocation10 + $0x668] sm:$0xff] %v7897
    %8154 = vst [vmem:[#allocation10 + $0x670] sm:$0xff] %v7898
    %8155 = vst [vmem:[#allocation10 + $0x678] sm:$0xff] %v7899
    %8156 = vst [vmem:[#allocation10 + $0x680] sm:$0xff] %v7900
    %8157 = vst [vmem:[#allocation10 + $0x688] sm:$0xff] %v7901
    %8158 = vst [vmem:[#allocation10 + $0x690] sm:$0xff] %v7902
    %8159 = vst [vmem:[#allocation10 + $0x698] sm:$0xff] %v7903
    %8160 = vst [vmem:[#allocation10 + $0x6a0] sm:$0xff] %v7904
    %8161 = vst [vmem:[#allocation10 + $0x6a8] sm:$0xff] %v7905
    %8162 = vst [vmem:[#allocation10 + $0x6b0] sm:$0xff] %v7906
    %8163 = vst [vmem:[#allocation10 + $0x6b8] sm:$0xff] %v7907
    %8164 = vst [vmem:[#allocation10 + $0x6c0] sm:$0xff] %v7908
    %8165 = vst [vmem:[#allocation10 + $0x6c8] sm:$0xff] %v7909
    %8166 = vst [vmem:[#allocation10 + $0x6d0] sm:$0xff] %v7910
    %8167 = vst [vmem:[#allocation10 + $0x6d8] sm:$0xff] %v7911
    %8168 = vst [vmem:[#allocation10 + $0x6e0] sm:$0xff] %v7912
    %8169 = vst [vmem:[#allocation10 + $0x6e8] sm:$0xff] %v7913
    %8170 = vst [vmem:[#allocation10 + $0x6f0] sm:$0xff] %v7914
    %8171 = vst [vmem:[#allocation10 + $0x6f8] sm:$0xff] %v7915
    %8172 = vst [vmem:[#allocation10 + $0x700] sm:$0xff] %v7916
    %8173 = vst [vmem:[#allocation10 + $0x708] sm:$0xff] %v7917
    %8174 = vst [vmem:[#allocation10 + $0x710] sm:$0xff] %v7918
    %8175 = vst [vmem:[#allocation10 + $0x718] sm:$0xff] %v7919
    %8176 = vst [vmem:[#allocation10 + $0x720] sm:$0xff] %v7920
    %8177 = vst [vmem:[#allocation10 + $0x728] sm:$0xff] %v7921
    %8178 = vst [vmem:[#allocation10 + $0x730] sm:$0xff] %v7922
    %8179 = vst [vmem:[#allocation10 + $0x738] sm:$0xff] %v7923
    %8180 = vst [vmem:[#allocation10 + $0x740] sm:$0xff] %v7924
    %8181 = vst [vmem:[#allocation10 + $0x748] sm:$0xff] %v7925
    %8182 = vst [vmem:[#allocation10 + $0x750] sm:$0xff] %v7926
    %8183 = vst [vmem:[#allocation10 + $0x758] sm:$0xff] %v7927
    %8184 = vst [vmem:[#allocation10 + $0x760] sm:$0xff] %v7928
    %8185 = vst [vmem:[#allocation10 + $0x768] sm:$0xff] %v7929
    %8186 = vst [vmem:[#allocation10 + $0x770] sm:$0xff] %v7930
    %8187 = vst [vmem:[#allocation10 + $0x778] sm:$0xff] %v7931
    %8188 = vst [vmem:[#allocation10 + $0x780] sm:$0xff] %v7932
    %8189 = vst [vmem:[#allocation10 + $0x788] sm:$0xff] %v7933
    %8190 = vst [vmem:[#allocation10 + $0x790] sm:$0xff] %v7934
    %8191 = vst [vmem:[#allocation10 + $0x798] sm:$0xff] %v7935
    %8192 = vst [vmem:[#allocation10 + $0x7a0] sm:$0xff] %v7936
    %8193 = vst [vmem:[#allocation10 + $0x7a8] sm:$0xff] %v7937
    %8194 = vst [vmem:[#allocation10 + $0x7b0] sm:$0xff] %v7938
    %8195 = vst [vmem:[#allocation10 + $0x7b8] sm:$0xff] %v7939
    %8196 = vst [vmem:[#allocation10 + $0x7c0] sm:$0xff] %v7940
    %8197 = vst [vmem:[#allocation10 + $0x7c8] sm:$0xff] %v7941
    %8198 = vst [vmem:[#allocation10 + $0x7d0] sm:$0xff] %v7942
    %8199 = vst [vmem:[#allocation10 + $0x7d8] sm:$0xff] %v7943
    %8200 = vst [vmem:[#allocation10 + $0x7e0] sm:$0xff] %v7944
    %8201 = vst [vmem:[#allocation10 + $0x7e8] sm:$0xff] %v7945
    %8202 = vst [vmem:[#allocation10 + $0x7f0] sm:$0xff] %v7946
    %8203 = vst [vmem:[#allocation10 + $0x7f8] sm:$0xff] %v7947
    %v8204 = vld [vmem:[#allocation8] sm:$0xff]
    %v8205 = vld [vmem:[#allocation8 + $0x8] sm:$0xff]
    %v8206 = vld [vmem:[#allocation8 + $0x10] sm:$0xff]
    %v8207 = vld [vmem:[#allocation8 + $0x18] sm:$0xff]
    %v8208 = vld [vmem:[#allocation8 + $0x20] sm:$0xff]
    %v8209 = vld [vmem:[#allocation8 + $0x28] sm:$0xff]
    %v8210 = vld [vmem:[#allocation8 + $0x30] sm:$0xff]
    %v8211 = vld [vmem:[#allocation8 + $0x38] sm:$0xff]
    %v8212 = vld [vmem:[#allocation8 + $0x40] sm:$0xff]
    %v8213 = vld [vmem:[#allocation8 + $0x48] sm:$0xff]
    %v8214 = vld [vmem:[#allocation8 + $0x50] sm:$0xff]
    %v8215 = vld [vmem:[#allocation8 + $0x58] sm:$0xff]
    %v8216 = vld [vmem:[#allocation8 + $0x60] sm:$0xff]
    %v8217 = vld [vmem:[#allocation8 + $0x68] sm:$0xff]
    %v8218 = vld [vmem:[#allocation8 + $0x70] sm:$0xff]
    %v8219 = vld [vmem:[#allocation8 + $0x78] sm:$0xff]
    %v8220 = vld [vmem:[#allocation8 + $0x80] sm:$0xff]
    %v8221 = vld [vmem:[#allocation8 + $0x88] sm:$0xff]
    %v8222 = vld [vmem:[#allocation8 + $0x90] sm:$0xff]
    %v8223 = vld [vmem:[#allocation8 + $0x98] sm:$0xff]
    %v8224 = vld [vmem:[#allocation8 + $0xa0] sm:$0xff]
    %v8225 = vld [vmem:[#allocation8 + $0xa8] sm:$0xff]
    %v8226 = vld [vmem:[#allocation8 + $0xb0] sm:$0xff]
    %v8227 = vld [vmem:[#allocation8 + $0xb8] sm:$0xff]
    %v8228 = vld [vmem:[#allocation8 + $0xc0] sm:$0xff]
    %v8229 = vld [vmem:[#allocation8 + $0xc8] sm:$0xff]
    %v8230 = vld [vmem:[#allocation8 + $0xd0] sm:$0xff]
    %v8231 = vld [vmem:[#allocation8 + $0xd8] sm:$0xff]
    %v8232 = vld [vmem:[#allocation8 + $0xe0] sm:$0xff]
    %v8233 = vld [vmem:[#allocation8 + $0xe8] sm:$0xff]
    %v8234 = vld [vmem:[#allocation8 + $0xf0] sm:$0xff]
    %v8235 = vld [vmem:[#allocation8 + $0xf8] sm:$0xff]
    %v8236 = vld [vmem:[#allocation8 + $0x100] sm:$0xff]
    %v8237 = vld [vmem:[#allocation8 + $0x108] sm:$0xff]
    %v8238 = vld [vmem:[#allocation8 + $0x110] sm:$0xff]
    %v8239 = vld [vmem:[#allocation8 + $0x118] sm:$0xff]
    %v8240 = vld [vmem:[#allocation8 + $0x120] sm:$0xff]
    %v8241 = vld [vmem:[#allocation8 + $0x128] sm:$0xff]
    %v8242 = vld [vmem:[#allocation8 + $0x130] sm:$0xff]
    %v8243 = vld [vmem:[#allocation8 + $0x138] sm:$0xff]
    %v8244 = vld [vmem:[#allocation8 + $0x140] sm:$0xff]
    %v8245 = vld [vmem:[#allocation8 + $0x148] sm:$0xff]
    %v8246 = vld [vmem:[#allocation8 + $0x150] sm:$0xff]
    %v8247 = vld [vmem:[#allocation8 + $0x158] sm:$0xff]
    %v8248 = vld [vmem:[#allocation8 + $0x160] sm:$0xff]
    %v8249 = vld [vmem:[#allocation8 + $0x168] sm:$0xff]
    %v8250 = vld [vmem:[#allocation8 + $0x170] sm:$0xff]
    %v8251 = vld [vmem:[#allocation8 + $0x178] sm:$0xff]
    %v8252 = vld [vmem:[#allocation8 + $0x180] sm:$0xff]
    %v8253 = vld [vmem:[#allocation8 + $0x188] sm:$0xff]
    %v8254 = vld [vmem:[#allocation8 + $0x190] sm:$0xff]
    %v8255 = vld [vmem:[#allocation8 + $0x198] sm:$0xff]
    %v8256 = vld [vmem:[#allocation8 + $0x1a0] sm:$0xff]
    %v8257 = vld [vmem:[#allocation8 + $0x1a8] sm:$0xff]
    %v8258 = vld [vmem:[#allocation8 + $0x1b0] sm:$0xff]
    %v8259 = vld [vmem:[#allocation8 + $0x1b8] sm:$0xff]
    %v8260 = vld [vmem:[#allocation8 + $0x1c0] sm:$0xff]
    %v8261 = vld [vmem:[#allocation8 + $0x1c8] sm:$0xff]
    %v8262 = vld [vmem:[#allocation8 + $0x1d0] sm:$0xff]
    %v8263 = vld [vmem:[#allocation8 + $0x1d8] sm:$0xff]
    %v8264 = vld [vmem:[#allocation8 + $0x1e0] sm:$0xff]
    %v8265 = vld [vmem:[#allocation8 + $0x1e8] sm:$0xff]
    %v8266 = vld [vmem:[#allocation8 + $0x1f0] sm:$0xff]
    %v8267 = vld [vmem:[#allocation8 + $0x1f8] sm:$0xff]
    %v8268 = vld [vmem:[#allocation8 + $0x200] sm:$0xff]
    %v8269 = vld [vmem:[#allocation8 + $0x208] sm:$0xff]
    %v8270 = vld [vmem:[#allocation8 + $0x210] sm:$0xff]
    %v8271 = vld [vmem:[#allocation8 + $0x218] sm:$0xff]
    %v8272 = vld [vmem:[#allocation8 + $0x220] sm:$0xff]
    %v8273 = vld [vmem:[#allocation8 + $0x228] sm:$0xff]
    %v8274 = vld [vmem:[#allocation8 + $0x230] sm:$0xff]
    %v8275 = vld [vmem:[#allocation8 + $0x238] sm:$0xff]
    %v8276 = vld [vmem:[#allocation8 + $0x240] sm:$0xff]
    %v8277 = vld [vmem:[#allocation8 + $0x248] sm:$0xff]
    %v8278 = vld [vmem:[#allocation8 + $0x250] sm:$0xff]
    %v8279 = vld [vmem:[#allocation8 + $0x258] sm:$0xff]
    %v8280 = vld [vmem:[#allocation8 + $0x260] sm:$0xff]
    %v8281 = vld [vmem:[#allocation8 + $0x268] sm:$0xff]
    %v8282 = vld [vmem:[#allocation8 + $0x270] sm:$0xff]
    %v8283 = vld [vmem:[#allocation8 + $0x278] sm:$0xff]
    %v8284 = vld [vmem:[#allocation8 + $0x280] sm:$0xff]
    %v8285 = vld [vmem:[#allocation8 + $0x288] sm:$0xff]
    %v8286 = vld [vmem:[#allocation8 + $0x290] sm:$0xff]
    %v8287 = vld [vmem:[#allocation8 + $0x298] sm:$0xff]
    %v8288 = vld [vmem:[#allocation8 + $0x2a0] sm:$0xff]
    %v8289 = vld [vmem:[#allocation8 + $0x2a8] sm:$0xff]
    %v8290 = vld [vmem:[#allocation8 + $0x2b0] sm:$0xff]
    %v8291 = vld [vmem:[#allocation8 + $0x2b8] sm:$0xff]
    %v8292 = vld [vmem:[#allocation8 + $0x2c0] sm:$0xff]
    %v8293 = vld [vmem:[#allocation8 + $0x2c8] sm:$0xff]
    %v8294 = vld [vmem:[#allocation8 + $0x2d0] sm:$0xff]
    %v8295 = vld [vmem:[#allocation8 + $0x2d8] sm:$0xff]
    %v8296 = vld [vmem:[#allocation8 + $0x2e0] sm:$0xff]
    %v8297 = vld [vmem:[#allocation8 + $0x2e8] sm:$0xff]
    %v8298 = vld [vmem:[#allocation8 + $0x2f0] sm:$0xff]
    %v8299 = vld [vmem:[#allocation8 + $0x2f8] sm:$0xff]
    %v8300 = vld [vmem:[#allocation8 + $0x300] sm:$0xff]
    %v8301 = vld [vmem:[#allocation8 + $0x308] sm:$0xff]
    %v8302 = vld [vmem:[#allocation8 + $0x310] sm:$0xff]
    %v8303 = vld [vmem:[#allocation8 + $0x318] sm:$0xff]
    %v8304 = vld [vmem:[#allocation8 + $0x320] sm:$0xff]
    %v8305 = vld [vmem:[#allocation8 + $0x328] sm:$0xff]
    %v8306 = vld [vmem:[#allocation8 + $0x330] sm:$0xff]
    %v8307 = vld [vmem:[#allocation8 + $0x338] sm:$0xff]
    %v8308 = vld [vmem:[#allocation8 + $0x340] sm:$0xff]
    %v8309 = vld [vmem:[#allocation8 + $0x348] sm:$0xff]
    %v8310 = vld [vmem:[#allocation8 + $0x350] sm:$0xff]
    %v8311 = vld [vmem:[#allocation8 + $0x358] sm:$0xff]
    %v8312 = vld [vmem:[#allocation8 + $0x360] sm:$0xff]
    %v8313 = vld [vmem:[#allocation8 + $0x368] sm:$0xff]
    %v8314 = vld [vmem:[#allocation8 + $0x370] sm:$0xff]
    %v8315 = vld [vmem:[#allocation8 + $0x378] sm:$0xff]
    %v8316 = vld [vmem:[#allocation8 + $0x380] sm:$0xff]
    %v8317 = vld [vmem:[#allocation8 + $0x388] sm:$0xff]
    %v8318 = vld [vmem:[#allocation8 + $0x390] sm:$0xff]
    %v8319 = vld [vmem:[#allocation8 + $0x398] sm:$0xff]
    %v8320 = vld [vmem:[#allocation8 + $0x3a0] sm:$0xff]
    %v8321 = vld [vmem:[#allocation8 + $0x3a8] sm:$0xff]
    %v8322 = vld [vmem:[#allocation8 + $0x3b0] sm:$0xff]
    %v8323 = vld [vmem:[#allocation8 + $0x3b8] sm:$0xff]
    %v8324 = vld [vmem:[#allocation8 + $0x3c0] sm:$0xff]
    %v8325 = vld [vmem:[#allocation8 + $0x3c8] sm:$0xff]
    %v8326 = vld [vmem:[#allocation8 + $0x3d0] sm:$0xff]
    %v8327 = vld [vmem:[#allocation8 + $0x3d8] sm:$0xff]
    %v8328 = vld [vmem:[#allocation8 + $0x3e0] sm:$0xff]
    %v8329 = vld [vmem:[#allocation8 + $0x3e8] sm:$0xff]
    %v8330 = vld [vmem:[#allocation8 + $0x3f0] sm:$0xff]
    %v8331 = vld [vmem:[#allocation8 + $0x3f8] sm:$0xff]
    %v8332 = vld [vmem:[#allocation8 + $0x400] sm:$0xff]
    %v8333 = vld [vmem:[#allocation8 + $0x408] sm:$0xff]
    %v8334 = vld [vmem:[#allocation8 + $0x410] sm:$0xff]
    %v8335 = vld [vmem:[#allocation8 + $0x418] sm:$0xff]
    %v8336 = vld [vmem:[#allocation8 + $0x420] sm:$0xff]
    %v8337 = vld [vmem:[#allocation8 + $0x428] sm:$0xff]
    %v8338 = vld [vmem:[#allocation8 + $0x430] sm:$0xff]
    %v8339 = vld [vmem:[#allocation8 + $0x438] sm:$0xff]
    %v8340 = vld [vmem:[#allocation8 + $0x440] sm:$0xff]
    %v8341 = vld [vmem:[#allocation8 + $0x448] sm:$0xff]
    %v8342 = vld [vmem:[#allocation8 + $0x450] sm:$0xff]
    %v8343 = vld [vmem:[#allocation8 + $0x458] sm:$0xff]
    %v8344 = vld [vmem:[#allocation8 + $0x460] sm:$0xff]
    %v8345 = vld [vmem:[#allocation8 + $0x468] sm:$0xff]
    %v8346 = vld [vmem:[#allocation8 + $0x470] sm:$0xff]
    %v8347 = vld [vmem:[#allocation8 + $0x478] sm:$0xff]
    %v8348 = vld [vmem:[#allocation8 + $0x480] sm:$0xff]
    %v8349 = vld [vmem:[#allocation8 + $0x488] sm:$0xff]
    %v8350 = vld [vmem:[#allocation8 + $0x490] sm:$0xff]
    %v8351 = vld [vmem:[#allocation8 + $0x498] sm:$0xff]
    %v8352 = vld [vmem:[#allocation8 + $0x4a0] sm:$0xff]
    %v8353 = vld [vmem:[#allocation8 + $0x4a8] sm:$0xff]
    %v8354 = vld [vmem:[#allocation8 + $0x4b0] sm:$0xff]
    %v8355 = vld [vmem:[#allocation8 + $0x4b8] sm:$0xff]
    %v8356 = vld [vmem:[#allocation8 + $0x4c0] sm:$0xff]
    %v8357 = vld [vmem:[#allocation8 + $0x4c8] sm:$0xff]
    %v8358 = vld [vmem:[#allocation8 + $0x4d0] sm:$0xff]
    %v8359 = vld [vmem:[#allocation8 + $0x4d8] sm:$0xff]
    %v8360 = vld [vmem:[#allocation8 + $0x4e0] sm:$0xff]
    %v8361 = vld [vmem:[#allocation8 + $0x4e8] sm:$0xff]
    %v8362 = vld [vmem:[#allocation8 + $0x4f0] sm:$0xff]
    %v8363 = vld [vmem:[#allocation8 + $0x4f8] sm:$0xff]
    %v8364 = vld [vmem:[#allocation8 + $0x500] sm:$0xff]
    %v8365 = vld [vmem:[#allocation8 + $0x508] sm:$0xff]
    %v8366 = vld [vmem:[#allocation8 + $0x510] sm:$0xff]
    %v8367 = vld [vmem:[#allocation8 + $0x518] sm:$0xff]
    %v8368 = vld [vmem:[#allocation8 + $0x520] sm:$0xff]
    %v8369 = vld [vmem:[#allocation8 + $0x528] sm:$0xff]
    %v8370 = vld [vmem:[#allocation8 + $0x530] sm:$0xff]
    %v8371 = vld [vmem:[#allocation8 + $0x538] sm:$0xff]
    %v8372 = vld [vmem:[#allocation8 + $0x540] sm:$0xff]
    %v8373 = vld [vmem:[#allocation8 + $0x548] sm:$0xff]
    %v8374 = vld [vmem:[#allocation8 + $0x550] sm:$0xff]
    %v8375 = vld [vmem:[#allocation8 + $0x558] sm:$0xff]
    %v8376 = vld [vmem:[#allocation8 + $0x560] sm:$0xff]
    %v8377 = vld [vmem:[#allocation8 + $0x568] sm:$0xff]
    %v8378 = vld [vmem:[#allocation8 + $0x570] sm:$0xff]
    %v8379 = vld [vmem:[#allocation8 + $0x578] sm:$0xff]
    %v8380 = vld [vmem:[#allocation8 + $0x580] sm:$0xff]
    %v8381 = vld [vmem:[#allocation8 + $0x588] sm:$0xff]
    %v8382 = vld [vmem:[#allocation8 + $0x590] sm:$0xff]
    %v8383 = vld [vmem:[#allocation8 + $0x598] sm:$0xff]
    %v8384 = vld [vmem:[#allocation8 + $0x5a0] sm:$0xff]
    %v8385 = vld [vmem:[#allocation8 + $0x5a8] sm:$0xff]
    %v8386 = vld [vmem:[#allocation8 + $0x5b0] sm:$0xff]
    %v8387 = vld [vmem:[#allocation8 + $0x5b8] sm:$0xff]
    %v8388 = vld [vmem:[#allocation8 + $0x5c0] sm:$0xff]
    %v8389 = vld [vmem:[#allocation8 + $0x5c8] sm:$0xff]
    %v8390 = vld [vmem:[#allocation8 + $0x5d0] sm:$0xff]
    %v8391 = vld [vmem:[#allocation8 + $0x5d8] sm:$0xff]
    %v8392 = vld [vmem:[#allocation8 + $0x5e0] sm:$0xff]
    %v8393 = vld [vmem:[#allocation8 + $0x5e8] sm:$0xff]
    %v8394 = vld [vmem:[#allocation8 + $0x5f0] sm:$0xff]
    %v8395 = vld [vmem:[#allocation8 + $0x5f8] sm:$0xff]
    %v8396 = vld [vmem:[#allocation8 + $0x600] sm:$0xff]
    %v8397 = vld [vmem:[#allocation8 + $0x608] sm:$0xff]
    %v8398 = vld [vmem:[#allocation8 + $0x610] sm:$0xff]
    %v8399 = vld [vmem:[#allocation8 + $0x618] sm:$0xff]
    %v8400 = vld [vmem:[#allocation8 + $0x620] sm:$0xff]
    %v8401 = vld [vmem:[#allocation8 + $0x628] sm:$0xff]
    %v8402 = vld [vmem:[#allocation8 + $0x630] sm:$0xff]
    %v8403 = vld [vmem:[#allocation8 + $0x638] sm:$0xff]
    %v8404 = vld [vmem:[#allocation8 + $0x640] sm:$0xff]
    %v8405 = vld [vmem:[#allocation8 + $0x648] sm:$0xff]
    %v8406 = vld [vmem:[#allocation8 + $0x650] sm:$0xff]
    %v8407 = vld [vmem:[#allocation8 + $0x658] sm:$0xff]
    %v8408 = vld [vmem:[#allocation8 + $0x660] sm:$0xff]
    %v8409 = vld [vmem:[#allocation8 + $0x668] sm:$0xff]
    %v8410 = vld [vmem:[#allocation8 + $0x670] sm:$0xff]
    %v8411 = vld [vmem:[#allocation8 + $0x678] sm:$0xff]
    %v8412 = vld [vmem:[#allocation8 + $0x680] sm:$0xff]
    %v8413 = vld [vmem:[#allocation8 + $0x688] sm:$0xff]
    %v8414 = vld [vmem:[#allocation8 + $0x690] sm:$0xff]
    %v8415 = vld [vmem:[#allocation8 + $0x698] sm:$0xff]
    %v8416 = vld [vmem:[#allocation8 + $0x6a0] sm:$0xff]
    %v8417 = vld [vmem:[#allocation8 + $0x6a8] sm:$0xff]
    %v8418 = vld [vmem:[#allocation8 + $0x6b0] sm:$0xff]
    %v8419 = vld [vmem:[#allocation8 + $0x6b8] sm:$0xff]
    %v8420 = vld [vmem:[#allocation8 + $0x6c0] sm:$0xff]
    %v8421 = vld [vmem:[#allocation8 + $0x6c8] sm:$0xff]
    %v8422 = vld [vmem:[#allocation8 + $0x6d0] sm:$0xff]
    %v8423 = vld [vmem:[#allocation8 + $0x6d8] sm:$0xff]
    %v8424 = vld [vmem:[#allocation8 + $0x6e0] sm:$0xff]
    %v8425 = vld [vmem:[#allocation8 + $0x6e8] sm:$0xff]
    %v8426 = vld [vmem:[#allocation8 + $0x6f0] sm:$0xff]
    %v8427 = vld [vmem:[#allocation8 + $0x6f8] sm:$0xff]
    %v8428 = vld [vmem:[#allocation8 + $0x700] sm:$0xff]
    %v8429 = vld [vmem:[#allocation8 + $0x708] sm:$0xff]
    %v8430 = vld [vmem:[#allocation8 + $0x710] sm:$0xff]
    %v8431 = vld [vmem:[#allocation8 + $0x718] sm:$0xff]
    %v8432 = vld [vmem:[#allocation8 + $0x720] sm:$0xff]
    %v8433 = vld [vmem:[#allocation8 + $0x728] sm:$0xff]
    %v8434 = vld [vmem:[#allocation8 + $0x730] sm:$0xff]
    %v8435 = vld [vmem:[#allocation8 + $0x738] sm:$0xff]
    %v8436 = vld [vmem:[#allocation8 + $0x740] sm:$0xff]
    %v8437 = vld [vmem:[#allocation8 + $0x748] sm:$0xff]
    %v8438 = vld [vmem:[#allocation8 + $0x750] sm:$0xff]
    %v8439 = vld [vmem:[#allocation8 + $0x758] sm:$0xff]
    %v8440 = vld [vmem:[#allocation8 + $0x760] sm:$0xff]
    %v8441 = vld [vmem:[#allocation8 + $0x768] sm:$0xff]
    %v8442 = vld [vmem:[#allocation8 + $0x770] sm:$0xff]
    %v8443 = vld [vmem:[#allocation8 + $0x778] sm:$0xff]
    %v8444 = vld [vmem:[#allocation8 + $0x780] sm:$0xff]
    %v8445 = vld [vmem:[#allocation8 + $0x788] sm:$0xff]
    %v8446 = vld [vmem:[#allocation8 + $0x790] sm:$0xff]
    %v8447 = vld [vmem:[#allocation8 + $0x798] sm:$0xff]
    %v8448 = vld [vmem:[#allocation8 + $0x7a0] sm:$0xff]
    %v8449 = vld [vmem:[#allocation8 + $0x7a8] sm:$0xff]
    %v8450 = vld [vmem:[#allocation8 + $0x7b0] sm:$0xff]
    %v8451 = vld [vmem:[#allocation8 + $0x7b8] sm:$0xff]
    %v8452 = vld [vmem:[#allocation8 + $0x7c0] sm:$0xff]
    %v8453 = vld [vmem:[#allocation8 + $0x7c8] sm:$0xff]
    %v8454 = vld [vmem:[#allocation8 + $0x7d0] sm:$0xff]
    %v8455 = vld [vmem:[#allocation8 + $0x7d8] sm:$0xff]
    %v8456 = vld [vmem:[#allocation8 + $0x7e0] sm:$0xff]
    %v8457 = vld [vmem:[#allocation8 + $0x7e8] sm:$0xff]
    %v8458 = vld [vmem:[#allocation8 + $0x7f0] sm:$0xff]
    %v8459 = vld [vmem:[#allocation8 + $0x7f8] sm:$0xff]
    %8716 = vrot.lane.b32.xlu0 %v8204, 64
    %v8717 = vpop.permute.xlu0 %8716
    %8718 = vrot.lane.b32.xlu0 %v8205, 64
    %v8719 = vpop.permute.xlu0 %8718
    %8720 = vrot.lane.b32.xlu0 %v8206, 64
    %v8721 = vpop.permute.xlu0 %8720
    %8722 = vrot.lane.b32.xlu0 %v8207, 64
    %v8723 = vpop.permute.xlu0 %8722
    %8724 = vrot.lane.b32.xlu0 %v8208, 64
    %v8725 = vpop.permute.xlu0 %8724
    %8726 = vrot.lane.b32.xlu0 %v8209, 64
    %v8727 = vpop.permute.xlu0 %8726
    %8728 = vrot.lane.b32.xlu0 %v8210, 64
    %v8729 = vpop.permute.xlu0 %8728
    %8730 = vrot.lane.b32.xlu0 %v8211, 64
    %v8731 = vpop.permute.xlu0 %8730
    %8732 = vrot.lane.b32.xlu0 %v8212, 64
    %v8733 = vpop.permute.xlu0 %8732
    %8734 = vrot.lane.b32.xlu0 %v8213, 64
    %v8735 = vpop.permute.xlu0 %8734
    %8736 = vrot.lane.b32.xlu0 %v8214, 64
    %v8737 = vpop.permute.xlu0 %8736
    %8738 = vrot.lane.b32.xlu0 %v8215, 64
    %v8739 = vpop.permute.xlu0 %8738
    %8740 = vrot.lane.b32.xlu0 %v8216, 64
    %v8741 = vpop.permute.xlu0 %8740
    %8742 = vrot.lane.b32.xlu0 %v8217, 64
    %v8743 = vpop.permute.xlu0 %8742
    %8744 = vrot.lane.b32.xlu0 %v8218, 64
    %v8745 = vpop.permute.xlu0 %8744
    %8746 = vrot.lane.b32.xlu0 %v8219, 64
    %v8747 = vpop.permute.xlu0 %8746
    %8748 = vrot.lane.b32.xlu0 %v8220, 64
    %v8749 = vpop.permute.xlu0 %8748
    %8750 = vrot.lane.b32.xlu0 %v8221, 64
    %v8751 = vpop.permute.xlu0 %8750
    %8752 = vrot.lane.b32.xlu0 %v8222, 64
    %v8753 = vpop.permute.xlu0 %8752
    %8754 = vrot.lane.b32.xlu0 %v8223, 64
    %v8755 = vpop.permute.xlu0 %8754
    %8756 = vrot.lane.b32.xlu0 %v8224, 64
    %v8757 = vpop.permute.xlu0 %8756
    %8758 = vrot.lane.b32.xlu0 %v8225, 64
    %v8759 = vpop.permute.xlu0 %8758
    %8760 = vrot.lane.b32.xlu0 %v8226, 64
    %v8761 = vpop.permute.xlu0 %8760
    %8762 = vrot.lane.b32.xlu0 %v8227, 64
    %v8763 = vpop.permute.xlu0 %8762
    %8764 = vrot.lane.b32.xlu0 %v8228, 64
    %v8765 = vpop.permute.xlu0 %8764
    %8766 = vrot.lane.b32.xlu0 %v8229, 64
    %v8767 = vpop.permute.xlu0 %8766
    %8768 = vrot.lane.b32.xlu0 %v8230, 64
    %v8769 = vpop.permute.xlu0 %8768
    %8770 = vrot.lane.b32.xlu0 %v8231, 64
    %v8771 = vpop.permute.xlu0 %8770
    %8772 = vrot.lane.b32.xlu0 %v8232, 64
    %v8773 = vpop.permute.xlu0 %8772
    %8774 = vrot.lane.b32.xlu0 %v8233, 64
    %v8775 = vpop.permute.xlu0 %8774
    %8776 = vrot.lane.b32.xlu0 %v8234, 64
    %v8777 = vpop.permute.xlu0 %8776
    %8778 = vrot.lane.b32.xlu0 %v8235, 64
    %v8779 = vpop.permute.xlu0 %8778
    %8780 = vrot.lane.b32.xlu0 %v8236, 64
    %v8781 = vpop.permute.xlu0 %8780
    %8782 = vrot.lane.b32.xlu0 %v8237, 64
    %v8783 = vpop.permute.xlu0 %8782
    %8784 = vrot.lane.b32.xlu0 %v8238, 64
    %v8785 = vpop.permute.xlu0 %8784
    %8786 = vrot.lane.b32.xlu0 %v8239, 64
    %v8787 = vpop.permute.xlu0 %8786
    %8788 = vrot.lane.b32.xlu0 %v8240, 64
    %v8789 = vpop.permute.xlu0 %8788
    %8790 = vrot.lane.b32.xlu0 %v8241, 64
    %v8791 = vpop.permute.xlu0 %8790
    %8792 = vrot.lane.b32.xlu0 %v8242, 64
    %v8793 = vpop.permute.xlu0 %8792
    %8794 = vrot.lane.b32.xlu0 %v8243, 64
    %v8795 = vpop.permute.xlu0 %8794
    %8796 = vrot.lane.b32.xlu0 %v8244, 64
    %v8797 = vpop.permute.xlu0 %8796
    %8798 = vrot.lane.b32.xlu0 %v8245, 64
    %v8799 = vpop.permute.xlu0 %8798
    %8800 = vrot.lane.b32.xlu0 %v8246, 64
    %v8801 = vpop.permute.xlu0 %8800
    %8802 = vrot.lane.b32.xlu0 %v8247, 64
    %v8803 = vpop.permute.xlu0 %8802
    %8804 = vrot.lane.b32.xlu0 %v8248, 64
    %v8805 = vpop.permute.xlu0 %8804
    %8806 = vrot.lane.b32.xlu0 %v8249, 64
    %v8807 = vpop.permute.xlu0 %8806
    %8808 = vrot.lane.b32.xlu0 %v8250, 64
    %v8809 = vpop.permute.xlu0 %8808
    %8810 = vrot.lane.b32.xlu0 %v8251, 64
    %v8811 = vpop.permute.xlu0 %8810
    %8812 = vrot.lane.b32.xlu0 %v8252, 64
    %v8813 = vpop.permute.xlu0 %8812
    %8814 = vrot.lane.b32.xlu0 %v8253, 64
    %v8815 = vpop.permute.xlu0 %8814
    %8816 = vrot.lane.b32.xlu0 %v8254, 64
    %v8817 = vpop.permute.xlu0 %8816
    %8818 = vrot.lane.b32.xlu0 %v8255, 64
    %v8819 = vpop.permute.xlu0 %8818
    %8820 = vrot.lane.b32.xlu0 %v8256, 64
    %v8821 = vpop.permute.xlu0 %8820
    %8822 = vrot.lane.b32.xlu0 %v8257, 64
    %v8823 = vpop.permute.xlu0 %8822
    %8824 = vrot.lane.b32.xlu0 %v8258, 64
    %v8825 = vpop.permute.xlu0 %8824
    %8826 = vrot.lane.b32.xlu0 %v8259, 64
    %v8827 = vpop.permute.xlu0 %8826
    %8828 = vrot.lane.b32.xlu0 %v8260, 64
    %v8829 = vpop.permute.xlu0 %8828
    %8830 = vrot.lane.b32.xlu0 %v8261, 64
    %v8831 = vpop.permute.xlu0 %8830
    %8832 = vrot.lane.b32.xlu0 %v8262, 64
    %v8833 = vpop.permute.xlu0 %8832
    %8834 = vrot.lane.b32.xlu0 %v8263, 64
    %v8835 = vpop.permute.xlu0 %8834
    %8836 = vrot.lane.b32.xlu0 %v8264, 64
    %v8837 = vpop.permute.xlu0 %8836
    %8838 = vrot.lane.b32.xlu0 %v8265, 64
    %v8839 = vpop.permute.xlu0 %8838
    %8840 = vrot.lane.b32.xlu0 %v8266, 64
    %v8841 = vpop.permute.xlu0 %8840
    %8842 = vrot.lane.b32.xlu0 %v8267, 64
    %v8843 = vpop.permute.xlu0 %8842
    %8844 = vrot.lane.b32.xlu0 %v8268, 64
    %v8845 = vpop.permute.xlu0 %8844
    %8846 = vrot.lane.b32.xlu0 %v8269, 64
    %v8847 = vpop.permute.xlu0 %8846
    %8848 = vrot.lane.b32.xlu0 %v8270, 64
    %v8849 = vpop.permute.xlu0 %8848
    %8850 = vrot.lane.b32.xlu0 %v8271, 64
    %v8851 = vpop.permute.xlu0 %8850
    %8852 = vrot.lane.b32.xlu0 %v8272, 64
    %v8853 = vpop.permute.xlu0 %8852
    %8854 = vrot.lane.b32.xlu0 %v8273, 64
    %v8855 = vpop.permute.xlu0 %8854
    %8856 = vrot.lane.b32.xlu0 %v8274, 64
    %v8857 = vpop.permute.xlu0 %8856
    %8858 = vrot.lane.b32.xlu0 %v8275, 64
    %v8859 = vpop.permute.xlu0 %8858
    %8860 = vrot.lane.b32.xlu0 %v8276, 64
    %v8861 = vpop.permute.xlu0 %8860
    %8862 = vrot.lane.b32.xlu0 %v8277, 64
    %v8863 = vpop.permute.xlu0 %8862
    %8864 = vrot.lane.b32.xlu0 %v8278, 64
    %v8865 = vpop.permute.xlu0 %8864
    %8866 = vrot.lane.b32.xlu0 %v8279, 64
    %v8867 = vpop.permute.xlu0 %8866
    %8868 = vrot.lane.b32.xlu0 %v8280, 64
    %v8869 = vpop.permute.xlu0 %8868
    %8870 = vrot.lane.b32.xlu0 %v8281, 64
    %v8871 = vpop.permute.xlu0 %8870
    %8872 = vrot.lane.b32.xlu0 %v8282, 64
    %v8873 = vpop.permute.xlu0 %8872
    %8874 = vrot.lane.b32.xlu0 %v8283, 64
    %v8875 = vpop.permute.xlu0 %8874
    %8876 = vrot.lane.b32.xlu0 %v8284, 64
    %v8877 = vpop.permute.xlu0 %8876
    %8878 = vrot.lane.b32.xlu0 %v8285, 64
    %v8879 = vpop.permute.xlu0 %8878
    %8880 = vrot.lane.b32.xlu0 %v8286, 64
    %v8881 = vpop.permute.xlu0 %8880
    %8882 = vrot.lane.b32.xlu0 %v8287, 64
    %v8883 = vpop.permute.xlu0 %8882
    %8884 = vrot.lane.b32.xlu0 %v8288, 64
    %v8885 = vpop.permute.xlu0 %8884
    %8886 = vrot.lane.b32.xlu0 %v8289, 64
    %v8887 = vpop.permute.xlu0 %8886
    %8888 = vrot.lane.b32.xlu0 %v8290, 64
    %v8889 = vpop.permute.xlu0 %8888
    %8890 = vrot.lane.b32.xlu0 %v8291, 64
    %v8891 = vpop.permute.xlu0 %8890
    %8892 = vrot.lane.b32.xlu0 %v8292, 64
    %v8893 = vpop.permute.xlu0 %8892
    %8894 = vrot.lane.b32.xlu0 %v8293, 64
    %v8895 = vpop.permute.xlu0 %8894
    %8896 = vrot.lane.b32.xlu0 %v8294, 64
    %v8897 = vpop.permute.xlu0 %8896
    %8898 = vrot.lane.b32.xlu0 %v8295, 64
    %v8899 = vpop.permute.xlu0 %8898
    %8900 = vrot.lane.b32.xlu0 %v8296, 64
    %v8901 = vpop.permute.xlu0 %8900
    %8902 = vrot.lane.b32.xlu0 %v8297, 64
    %v8903 = vpop.permute.xlu0 %8902
    %8904 = vrot.lane.b32.xlu0 %v8298, 64
    %v8905 = vpop.permute.xlu0 %8904
    %8906 = vrot.lane.b32.xlu0 %v8299, 64
    %v8907 = vpop.permute.xlu0 %8906
    %8908 = vrot.lane.b32.xlu0 %v8300, 64
    %v8909 = vpop.permute.xlu0 %8908
    %8910 = vrot.lane.b32.xlu0 %v8301, 64
    %v8911 = vpop.permute.xlu0 %8910
    %8912 = vrot.lane.b32.xlu0 %v8302, 64
    %v8913 = vpop.permute.xlu0 %8912
    %8914 = vrot.lane.b32.xlu0 %v8303, 64
    %v8915 = vpop.permute.xlu0 %8914
    %8916 = vrot.lane.b32.xlu0 %v8304, 64
    %v8917 = vpop.permute.xlu0 %8916
    %8918 = vrot.lane.b32.xlu0 %v8305, 64
    %v8919 = vpop.permute.xlu0 %8918
    %8920 = vrot.lane.b32.xlu0 %v8306, 64
    %v8921 = vpop.permute.xlu0 %8920
    %8922 = vrot.lane.b32.xlu0 %v8307, 64
    %v8923 = vpop.permute.xlu0 %8922
    %8924 = vrot.lane.b32.xlu0 %v8308, 64
    %v8925 = vpop.permute.xlu0 %8924
    %8926 = vrot.lane.b32.xlu0 %v8309, 64
    %v8927 = vpop.permute.xlu0 %8926
    %8928 = vrot.lane.b32.xlu0 %v8310, 64
    %v8929 = vpop.permute.xlu0 %8928
    %8930 = vrot.lane.b32.xlu0 %v8311, 64
    %v8931 = vpop.permute.xlu0 %8930
    %8932 = vrot.lane.b32.xlu0 %v8312, 64
    %v8933 = vpop.permute.xlu0 %8932
    %8934 = vrot.lane.b32.xlu0 %v8313, 64
    %v8935 = vpop.permute.xlu0 %8934
    %8936 = vrot.lane.b32.xlu0 %v8314, 64
    %v8937 = vpop.permute.xlu0 %8936
    %8938 = vrot.lane.b32.xlu0 %v8315, 64
    %v8939 = vpop.permute.xlu0 %8938
    %8940 = vrot.lane.b32.xlu0 %v8316, 64
    %v8941 = vpop.permute.xlu0 %8940
    %8942 = vrot.lane.b32.xlu0 %v8317, 64
    %v8943 = vpop.permute.xlu0 %8942
    %8944 = vrot.lane.b32.xlu0 %v8318, 64
    %v8945 = vpop.permute.xlu0 %8944
    %8946 = vrot.lane.b32.xlu0 %v8319, 64
    %v8947 = vpop.permute.xlu0 %8946
    %8948 = vrot.lane.b32.xlu0 %v8320, 64
    %v8949 = vpop.permute.xlu0 %8948
    %8950 = vrot.lane.b32.xlu0 %v8321, 64
    %v8951 = vpop.permute.xlu0 %8950
    %8952 = vrot.lane.b32.xlu0 %v8322, 64
    %v8953 = vpop.permute.xlu0 %8952
    %8954 = vrot.lane.b32.xlu0 %v8323, 64
    %v8955 = vpop.permute.xlu0 %8954
    %8956 = vrot.lane.b32.xlu0 %v8324, 64
    %v8957 = vpop.permute.xlu0 %8956
    %8958 = vrot.lane.b32.xlu0 %v8325, 64
    %v8959 = vpop.permute.xlu0 %8958
    %8960 = vrot.lane.b32.xlu0 %v8326, 64
    %v8961 = vpop.permute.xlu0 %8960
    %8962 = vrot.lane.b32.xlu0 %v8327, 64
    %v8963 = vpop.permute.xlu0 %8962
    %8964 = vrot.lane.b32.xlu0 %v8328, 64
    %v8965 = vpop.permute.xlu0 %8964
    %8966 = vrot.lane.b32.xlu0 %v8329, 64
    %v8967 = vpop.permute.xlu0 %8966
    %8968 = vrot.lane.b32.xlu0 %v8330, 64
    %v8969 = vpop.permute.xlu0 %8968
    %8970 = vrot.lane.b32.xlu0 %v8331, 64
    %v8971 = vpop.permute.xlu0 %8970
    %8972 = vrot.lane.b32.xlu0 %v8332, 64
    %v8973 = vpop.permute.xlu0 %8972
    %8974 = vrot.lane.b32.xlu0 %v8333, 64
    %v8975 = vpop.permute.xlu0 %8974
    %8976 = vrot.lane.b32.xlu0 %v8334, 64
    %v8977 = vpop.permute.xlu0 %8976
    %8978 = vrot.lane.b32.xlu0 %v8335, 64
    %v8979 = vpop.permute.xlu0 %8978
    %8980 = vrot.lane.b32.xlu0 %v8336, 64
    %v8981 = vpop.permute.xlu0 %8980
    %8982 = vrot.lane.b32.xlu0 %v8337, 64
    %v8983 = vpop.permute.xlu0 %8982
    %8984 = vrot.lane.b32.xlu0 %v8338, 64
    %v8985 = vpop.permute.xlu0 %8984
    %8986 = vrot.lane.b32.xlu0 %v8339, 64
    %v8987 = vpop.permute.xlu0 %8986
    %8988 = vrot.lane.b32.xlu0 %v8340, 64
    %v8989 = vpop.permute.xlu0 %8988
    %8990 = vrot.lane.b32.xlu0 %v8341, 64
    %v8991 = vpop.permute.xlu0 %8990
    %8992 = vrot.lane.b32.xlu0 %v8342, 64
    %v8993 = vpop.permute.xlu0 %8992
    %8994 = vrot.lane.b32.xlu0 %v8343, 64
    %v8995 = vpop.permute.xlu0 %8994
    %8996 = vrot.lane.b32.xlu0 %v8344, 64
    %v8997 = vpop.permute.xlu0 %8996
    %8998 = vrot.lane.b32.xlu0 %v8345, 64
    %v8999 = vpop.permute.xlu0 %8998
    %9000 = vrot.lane.b32.xlu0 %v8346, 64
    %v9001 = vpop.permute.xlu0 %9000
    %9002 = vrot.lane.b32.xlu0 %v8347, 64
    %v9003 = vpop.permute.xlu0 %9002
    %9004 = vrot.lane.b32.xlu0 %v8348, 64
    %v9005 = vpop.permute.xlu0 %9004
    %9006 = vrot.lane.b32.xlu0 %v8349, 64
    %v9007 = vpop.permute.xlu0 %9006
    %9008 = vrot.lane.b32.xlu0 %v8350, 64
    %v9009 = vpop.permute.xlu0 %9008
    %9010 = vrot.lane.b32.xlu0 %v8351, 64
    %v9011 = vpop.permute.xlu0 %9010
    %9012 = vrot.lane.b32.xlu0 %v8352, 64
    %v9013 = vpop.permute.xlu0 %9012
    %9014 = vrot.lane.b32.xlu0 %v8353, 64
    %v9015 = vpop.permute.xlu0 %9014
    %9016 = vrot.lane.b32.xlu0 %v8354, 64
    %v9017 = vpop.permute.xlu0 %9016
    %9018 = vrot.lane.b32.xlu0 %v8355, 64
    %v9019 = vpop.permute.xlu0 %9018
    %9020 = vrot.lane.b32.xlu0 %v8356, 64
    %v9021 = vpop.permute.xlu0 %9020
    %9022 = vrot.lane.b32.xlu0 %v8357, 64
    %v9023 = vpop.permute.xlu0 %9022
    %9024 = vrot.lane.b32.xlu0 %v8358, 64
    %v9025 = vpop.permute.xlu0 %9024
    %9026 = vrot.lane.b32.xlu0 %v8359, 64
    %v9027 = vpop.permute.xlu0 %9026
    %9028 = vrot.lane.b32.xlu0 %v8360, 64
    %v9029 = vpop.permute.xlu0 %9028
    %9030 = vrot.lane.b32.xlu0 %v8361, 64
    %v9031 = vpop.permute.xlu0 %9030
    %9032 = vrot.lane.b32.xlu0 %v8362, 64
    %v9033 = vpop.permute.xlu0 %9032
    %9034 = vrot.lane.b32.xlu0 %v8363, 64
    %v9035 = vpop.permute.xlu0 %9034
    %9036 = vrot.lane.b32.xlu0 %v8364, 64
    %v9037 = vpop.permute.xlu0 %9036
    %9038 = vrot.lane.b32.xlu0 %v8365, 64
    %v9039 = vpop.permute.xlu0 %9038
    %9040 = vrot.lane.b32.xlu0 %v8366, 64
    %v9041 = vpop.permute.xlu0 %9040
    %9042 = vrot.lane.b32.xlu0 %v8367, 64
    %v9043 = vpop.permute.xlu0 %9042
    %9044 = vrot.lane.b32.xlu0 %v8368, 64
    %v9045 = vpop.permute.xlu0 %9044
    %9046 = vrot.lane.b32.xlu0 %v8369, 64
    %v9047 = vpop.permute.xlu0 %9046
    %9048 = vrot.lane.b32.xlu0 %v8370, 64
    %v9049 = vpop.permute.xlu0 %9048
    %9050 = vrot.lane.b32.xlu0 %v8371, 64
    %v9051 = vpop.permute.xlu0 %9050
    %9052 = vrot.lane.b32.xlu0 %v8372, 64
    %v9053 = vpop.permute.xlu0 %9052
    %9054 = vrot.lane.b32.xlu0 %v8373, 64
    %v9055 = vpop.permute.xlu0 %9054
    %9056 = vrot.lane.b32.xlu0 %v8374, 64
    %v9057 = vpop.permute.xlu0 %9056
    %9058 = vrot.lane.b32.xlu0 %v8375, 64
    %v9059 = vpop.permute.xlu0 %9058
    %9060 = vrot.lane.b32.xlu0 %v8376, 64
    %v9061 = vpop.permute.xlu0 %9060
    %9062 = vrot.lane.b32.xlu0 %v8377, 64
    %v9063 = vpop.permute.xlu0 %9062
    %9064 = vrot.lane.b32.xlu0 %v8378, 64
    %v9065 = vpop.permute.xlu0 %9064
    %9066 = vrot.lane.b32.xlu0 %v8379, 64
    %v9067 = vpop.permute.xlu0 %9066
    %9068 = vrot.lane.b32.xlu0 %v8380, 64
    %v9069 = vpop.permute.xlu0 %9068
    %9070 = vrot.lane.b32.xlu0 %v8381, 64
    %v9071 = vpop.permute.xlu0 %9070
    %9072 = vrot.lane.b32.xlu0 %v8382, 64
    %v9073 = vpop.permute.xlu0 %9072
    %9074 = vrot.lane.b32.xlu0 %v8383, 64
    %v9075 = vpop.permute.xlu0 %9074
    %9076 = vrot.lane.b32.xlu0 %v8384, 64
    %v9077 = vpop.permute.xlu0 %9076
    %9078 = vrot.lane.b32.xlu0 %v8385, 64
    %v9079 = vpop.permute.xlu0 %9078
    %9080 = vrot.lane.b32.xlu0 %v8386, 64
    %v9081 = vpop.permute.xlu0 %9080
    %9082 = vrot.lane.b32.xlu0 %v8387, 64
    %v9083 = vpop.permute.xlu0 %9082
    %9084 = vrot.lane.b32.xlu0 %v8388, 64
    %v9085 = vpop.permute.xlu0 %9084
    %9086 = vrot.lane.b32.xlu0 %v8389, 64
    %v9087 = vpop.permute.xlu0 %9086
    %9088 = vrot.lane.b32.xlu0 %v8390, 64
    %v9089 = vpop.permute.xlu0 %9088
    %9090 = vrot.lane.b32.xlu0 %v8391, 64
    %v9091 = vpop.permute.xlu0 %9090
    %9092 = vrot.lane.b32.xlu0 %v8392, 64
    %v9093 = vpop.permute.xlu0 %9092
    %9094 = vrot.lane.b32.xlu0 %v8393, 64
    %v9095 = vpop.permute.xlu0 %9094
    %9096 = vrot.lane.b32.xlu0 %v8394, 64
    %v9097 = vpop.permute.xlu0 %9096
    %9098 = vrot.lane.b32.xlu0 %v8395, 64
    %v9099 = vpop.permute.xlu0 %9098
    %9100 = vrot.lane.b32.xlu0 %v8396, 64
    %v9101 = vpop.permute.xlu0 %9100
    %9102 = vrot.lane.b32.xlu0 %v8397, 64
    %v9103 = vpop.permute.xlu0 %9102
    %9104 = vrot.lane.b32.xlu0 %v8398, 64
    %v9105 = vpop.permute.xlu0 %9104
    %9106 = vrot.lane.b32.xlu0 %v8399, 64
    %v9107 = vpop.permute.xlu0 %9106
    %9108 = vrot.lane.b32.xlu0 %v8400, 64
    %v9109 = vpop.permute.xlu0 %9108
    %9110 = vrot.lane.b32.xlu0 %v8401, 64
    %v9111 = vpop.permute.xlu0 %9110
    %9112 = vrot.lane.b32.xlu0 %v8402, 64
    %v9113 = vpop.permute.xlu0 %9112
    %9114 = vrot.lane.b32.xlu0 %v8403, 64
    %v9115 = vpop.permute.xlu0 %9114
    %9116 = vrot.lane.b32.xlu0 %v8404, 64
    %v9117 = vpop.permute.xlu0 %9116
    %9118 = vrot.lane.b32.xlu0 %v8405, 64
    %v9119 = vpop.permute.xlu0 %9118
    %9120 = vrot.lane.b32.xlu0 %v8406, 64
    %v9121 = vpop.permute.xlu0 %9120
    %9122 = vrot.lane.b32.xlu0 %v8407, 64
    %v9123 = vpop.permute.xlu0 %9122
    %9124 = vrot.lane.b32.xlu0 %v8408, 64
    %v9125 = vpop.permute.xlu0 %9124
    %9126 = vrot.lane.b32.xlu0 %v8409, 64
    %v9127 = vpop.permute.xlu0 %9126
    %9128 = vrot.lane.b32.xlu0 %v8410, 64
    %v9129 = vpop.permute.xlu0 %9128
    %9130 = vrot.lane.b32.xlu0 %v8411, 64
    %v9131 = vpop.permute.xlu0 %9130
    %9132 = vrot.lane.b32.xlu0 %v8412, 64
    %v9133 = vpop.permute.xlu0 %9132
    %9134 = vrot.lane.b32.xlu0 %v8413, 64
    %v9135 = vpop.permute.xlu0 %9134
    %9136 = vrot.lane.b32.xlu0 %v8414, 64
    %v9137 = vpop.permute.xlu0 %9136
    %9138 = vrot.lane.b32.xlu0 %v8415, 64
    %v9139 = vpop.permute.xlu0 %9138
    %9140 = vrot.lane.b32.xlu0 %v8416, 64
    %v9141 = vpop.permute.xlu0 %9140
    %9142 = vrot.lane.b32.xlu0 %v8417, 64
    %v9143 = vpop.permute.xlu0 %9142
    %9144 = vrot.lane.b32.xlu0 %v8418, 64
    %v9145 = vpop.permute.xlu0 %9144
    %9146 = vrot.lane.b32.xlu0 %v8419, 64
    %v9147 = vpop.permute.xlu0 %9146
    %9148 = vrot.lane.b32.xlu0 %v8420, 64
    %v9149 = vpop.permute.xlu0 %9148
    %9150 = vrot.lane.b32.xlu0 %v8421, 64
    %v9151 = vpop.permute.xlu0 %9150
    %9152 = vrot.lane.b32.xlu0 %v8422, 64
    %v9153 = vpop.permute.xlu0 %9152
    %9154 = vrot.lane.b32.xlu0 %v8423, 64
    %v9155 = vpop.permute.xlu0 %9154
    %9156 = vrot.lane.b32.xlu0 %v8424, 64
    %v9157 = vpop.permute.xlu0 %9156
    %9158 = vrot.lane.b32.xlu0 %v8425, 64
    %v9159 = vpop.permute.xlu0 %9158
    %9160 = vrot.lane.b32.xlu0 %v8426, 64
    %v9161 = vpop.permute.xlu0 %9160
    %9162 = vrot.lane.b32.xlu0 %v8427, 64
    %v9163 = vpop.permute.xlu0 %9162
    %9164 = vrot.lane.b32.xlu0 %v8428, 64
    %v9165 = vpop.permute.xlu0 %9164
    %9166 = vrot.lane.b32.xlu0 %v8429, 64
    %v9167 = vpop.permute.xlu0 %9166
    %9168 = vrot.lane.b32.xlu0 %v8430, 64
    %v9169 = vpop.permute.xlu0 %9168
    %9170 = vrot.lane.b32.xlu0 %v8431, 64
    %v9171 = vpop.permute.xlu0 %9170
    %9172 = vrot.lane.b32.xlu0 %v8432, 64
    %v9173 = vpop.permute.xlu0 %9172
    %9174 = vrot.lane.b32.xlu0 %v8433, 64
    %v9175 = vpop.permute.xlu0 %9174
    %9176 = vrot.lane.b32.xlu0 %v8434, 64
    %v9177 = vpop.permute.xlu0 %9176
    %9178 = vrot.lane.b32.xlu0 %v8435, 64
    %v9179 = vpop.permute.xlu0 %9178
    %9180 = vrot.lane.b32.xlu0 %v8436, 64
    %v9181 = vpop.permute.xlu0 %9180
    %9182 = vrot.lane.b32.xlu0 %v8437, 64
    %v9183 = vpop.permute.xlu0 %9182
    %9184 = vrot.lane.b32.xlu0 %v8438, 64
    %v9185 = vpop.permute.xlu0 %9184
    %9186 = vrot.lane.b32.xlu0 %v8439, 64
    %v9187 = vpop.permute.xlu0 %9186
    %9188 = vrot.lane.b32.xlu0 %v8440, 64
    %v9189 = vpop.permute.xlu0 %9188
    %9190 = vrot.lane.b32.xlu0 %v8441, 64
    %v9191 = vpop.permute.xlu0 %9190
    %9192 = vrot.lane.b32.xlu0 %v8442, 64
    %v9193 = vpop.permute.xlu0 %9192
    %9194 = vrot.lane.b32.xlu0 %v8443, 64
    %v9195 = vpop.permute.xlu0 %9194
    %9196 = vrot.lane.b32.xlu0 %v8444, 64
    %v9197 = vpop.permute.xlu0 %9196
    %9198 = vrot.lane.b32.xlu0 %v8445, 64
    %v9199 = vpop.permute.xlu0 %9198
    %9200 = vrot.lane.b32.xlu0 %v8446, 64
    %v9201 = vpop.permute.xlu0 %9200
    %9202 = vrot.lane.b32.xlu0 %v8447, 64
    %v9203 = vpop.permute.xlu0 %9202
    %9204 = vrot.lane.b32.xlu0 %v8448, 64
    %v9205 = vpop.permute.xlu0 %9204
    %9206 = vrot.lane.b32.xlu0 %v8449, 64
    %v9207 = vpop.permute.xlu0 %9206
    %9208 = vrot.lane.b32.xlu0 %v8450, 64
    %v9209 = vpop.permute.xlu0 %9208
    %9210 = vrot.lane.b32.xlu0 %v8451, 64
    %v9211 = vpop.permute.xlu0 %9210
    %9212 = vrot.lane.b32.xlu0 %v8452, 64
    %v9213 = vpop.permute.xlu0 %9212
    %9214 = vrot.lane.b32.xlu0 %v8453, 64
    %v9215 = vpop.permute.xlu0 %9214
    %9216 = vrot.lane.b32.xlu0 %v8454, 64
    %v9217 = vpop.permute.xlu0 %9216
    %9218 = vrot.lane.b32.xlu0 %v8455, 64
    %v9219 = vpop.permute.xlu0 %9218
    %9220 = vrot.lane.b32.xlu0 %v8456, 64
    %v9221 = vpop.permute.xlu0 %9220
    %9222 = vrot.lane.b32.xlu0 %v8457, 64
    %v9223 = vpop.permute.xlu0 %9222
    %9224 = vrot.lane.b32.xlu0 %v8458, 64
    %v9225 = vpop.permute.xlu0 %9224
    %9226 = vrot.lane.b32.xlu0 %v8459, 64
    %v9227 = vpop.permute.xlu0 %9226
    %v9484 = vmul.f32 %v8204, %v4623
    %v9485 = vmul.f32 %v8205, %v4627
    %v9486 = vmul.f32 %v8206, %v4631
    %v9487 = vmul.f32 %v8207, %v4635
    %v9488 = vmul.f32 %v8208, %v4639
    %v9489 = vmul.f32 %v8209, %v4643
    %v9490 = vmul.f32 %v8210, %v4647
    %v9491 = vmul.f32 %v8211, %v4651
    %v9492 = vmul.f32 %v8212, %v4655
    %v9493 = vmul.f32 %v8213, %v4659
    %v9494 = vmul.f32 %v8214, %v4663
    %v9495 = vmul.f32 %v8215, %v4667
    %v9496 = vmul.f32 %v8216, %v4671
    %v9497 = vmul.f32 %v8217, %v4675
    %v9498 = vmul.f32 %v8218, %v4679
    %v9499 = vmul.f32 %v8219, %v4683
    %v9500 = vmul.f32 %v8220, %v4687
    %v9501 = vmul.f32 %v8221, %v4691
    %v9502 = vmul.f32 %v8222, %v4695
    %v9503 = vmul.f32 %v8223, %v4699
    %v9504 = vmul.f32 %v8224, %v4703
    %v9505 = vmul.f32 %v8225, %v4707
    %v9506 = vmul.f32 %v8226, %v4711
    %v9507 = vmul.f32 %v8227, %v4715
    %v9508 = vmul.f32 %v8228, %v4719
    %v9509 = vmul.f32 %v8229, %v4723
    %v9510 = vmul.f32 %v8230, %v4727
    %v9511 = vmul.f32 %v8231, %v4731
    %v9512 = vmul.f32 %v8232, %v4735
    %v9513 = vmul.f32 %v8233, %v4739
    %v9514 = vmul.f32 %v8234, %v4743
    %v9515 = vmul.f32 %v8235, %v4747
    %v9516 = vmul.f32 %v8236, %v4751
    %v9517 = vmul.f32 %v8237, %v4755
    %v9518 = vmul.f32 %v8238, %v4759
    %v9519 = vmul.f32 %v8239, %v4763
    %v9520 = vmul.f32 %v8240, %v4767
    %v9521 = vmul.f32 %v8241, %v4771
    %v9522 = vmul.f32 %v8242, %v4775
    %v9523 = vmul.f32 %v8243, %v4779
    %v9524 = vmul.f32 %v8244, %v4783
    %v9525 = vmul.f32 %v8245, %v4787
    %v9526 = vmul.f32 %v8246, %v4791
    %v9527 = vmul.f32 %v8247, %v4795
    %v9528 = vmul.f32 %v8248, %v4799
    %v9529 = vmul.f32 %v8249, %v4803
    %v9530 = vmul.f32 %v8250, %v4807
    %v9531 = vmul.f32 %v8251, %v4811
    %v9532 = vmul.f32 %v8252, %v4815
    %v9533 = vmul.f32 %v8253, %v4819
    %v9534 = vmul.f32 %v8254, %v4823
    %v9535 = vmul.f32 %v8255, %v4827
    %v9536 = vmul.f32 %v8256, %v4831
    %v9537 = vmul.f32 %v8257, %v4835
    %v9538 = vmul.f32 %v8258, %v4839
    %v9539 = vmul.f32 %v8259, %v4843
    %v9540 = vmul.f32 %v8260, %v4847
    %v9541 = vmul.f32 %v8261, %v4851
    %v9542 = vmul.f32 %v8262, %v4855
    %v9543 = vmul.f32 %v8263, %v4859
    %v9544 = vmul.f32 %v8264, %v4863
    %v9545 = vmul.f32 %v8265, %v4867
    %v9546 = vmul.f32 %v8266, %v4871
    %v9547 = vmul.f32 %v8267, %v4875
    %v9548 = vmul.f32 %v8268, %v4879
    %v9549 = vmul.f32 %v8269, %v4883
    %v9550 = vmul.f32 %v8270, %v4887
    %v9551 = vmul.f32 %v8271, %v4891
    %v9552 = vmul.f32 %v8272, %v4895
    %v9553 = vmul.f32 %v8273, %v4899
    %v9554 = vmul.f32 %v8274, %v4903
    %v9555 = vmul.f32 %v8275, %v4907
    %v9556 = vmul.f32 %v8276, %v4911
    %v9557 = vmul.f32 %v8277, %v4915
    %v9558 = vmul.f32 %v8278, %v4919
    %v9559 = vmul.f32 %v8279, %v4923
    %v9560 = vmul.f32 %v8280, %v4927
    %v9561 = vmul.f32 %v8281, %v4931
    %v9562 = vmul.f32 %v8282, %v4935
    %v9563 = vmul.f32 %v8283, %v4939
    %v9564 = vmul.f32 %v8284, %v4943
    %v9565 = vmul.f32 %v8285, %v4947
    %v9566 = vmul.f32 %v8286, %v4951
    %v9567 = vmul.f32 %v8287, %v4955
    %v9568 = vmul.f32 %v8288, %v4959
    %v9569 = vmul.f32 %v8289, %v4963
    %v9570 = vmul.f32 %v8290, %v4967
    %v9571 = vmul.f32 %v8291, %v4971
    %v9572 = vmul.f32 %v8292, %v4975
    %v9573 = vmul.f32 %v8293, %v4979
    %v9574 = vmul.f32 %v8294, %v4983
    %v9575 = vmul.f32 %v8295, %v4987
    %v9576 = vmul.f32 %v8296, %v4991
    %v9577 = vmul.f32 %v8297, %v4995
    %v9578 = vmul.f32 %v8298, %v4999
    %v9579 = vmul.f32 %v8299, %v5003
    %v9580 = vmul.f32 %v8300, %v5007
    %v9581 = vmul.f32 %v8301, %v5011
    %v9582 = vmul.f32 %v8302, %v5015
    %v9583 = vmul.f32 %v8303, %v5019
    %v9584 = vmul.f32 %v8304, %v5023
    %v9585 = vmul.f32 %v8305, %v5027
    %v9586 = vmul.f32 %v8306, %v5031
    %v9587 = vmul.f32 %v8307, %v5035
    %v9588 = vmul.f32 %v8308, %v5039
    %v9589 = vmul.f32 %v8309, %v5043
    %v9590 = vmul.f32 %v8310, %v5047
    %v9591 = vmul.f32 %v8311, %v5051
    %v9592 = vmul.f32 %v8312, %v5055
    %v9593 = vmul.f32 %v8313, %v5059
    %v9594 = vmul.f32 %v8314, %v5063
    %v9595 = vmul.f32 %v8315, %v5067
    %v9596 = vmul.f32 %v8316, %v5071
    %v9597 = vmul.f32 %v8317, %v5075
    %v9598 = vmul.f32 %v8318, %v5079
    %v9599 = vmul.f32 %v8319, %v5083
    %v9600 = vmul.f32 %v8320, %v5087
    %v9601 = vmul.f32 %v8321, %v5091
    %v9602 = vmul.f32 %v8322, %v5095
    %v9603 = vmul.f32 %v8323, %v5099
    %v9604 = vmul.f32 %v8324, %v5103
    %v9605 = vmul.f32 %v8325, %v5107
    %v9606 = vmul.f32 %v8326, %v5111
    %v9607 = vmul.f32 %v8327, %v5115
    %v9608 = vmul.f32 %v8328, %v5119
    %v9609 = vmul.f32 %v8329, %v5123
    %v9610 = vmul.f32 %v8330, %v5127
    %v9611 = vmul.f32 %v8331, %v5131
    %v9612 = vmul.f32 %v8332, %v5135
    %v9613 = vmul.f32 %v8333, %v5139
    %v9614 = vmul.f32 %v8334, %v5143
    %v9615 = vmul.f32 %v8335, %v5147
    %v9616 = vmul.f32 %v8336, %v5151
    %v9617 = vmul.f32 %v8337, %v5155
    %v9618 = vmul.f32 %v8338, %v5159
    %v9619 = vmul.f32 %v8339, %v5163
    %v9620 = vmul.f32 %v8340, %v5167
    %v9621 = vmul.f32 %v8341, %v5171
    %v9622 = vmul.f32 %v8342, %v5175
    %v9623 = vmul.f32 %v8343, %v5179
    %v9624 = vmul.f32 %v8344, %v5183
    %v9625 = vmul.f32 %v8345, %v5187
    %v9626 = vmul.f32 %v8346, %v5191
    %v9627 = vmul.f32 %v8347, %v5195
    %v9628 = vmul.f32 %v8348, %v5199
    %v9629 = vmul.f32 %v8349, %v5203
    %v9630 = vmul.f32 %v8350, %v5207
    %v9631 = vmul.f32 %v8351, %v5211
    %v9632 = vmul.f32 %v8352, %v5215
    %v9633 = vmul.f32 %v8353, %v5219
    %v9634 = vmul.f32 %v8354, %v5223
    %v9635 = vmul.f32 %v8355, %v5227
    %v9636 = vmul.f32 %v8356, %v5231
    %v9637 = vmul.f32 %v8357, %v5235
    %v9638 = vmul.f32 %v8358, %v5239
    %v9639 = vmul.f32 %v8359, %v5243
    %v9640 = vmul.f32 %v8360, %v5247
    %v9641 = vmul.f32 %v8361, %v5251
    %v9642 = vmul.f32 %v8362, %v5255
    %v9643 = vmul.f32 %v8363, %v5259
    %v9644 = vmul.f32 %v8364, %v5263
    %v9645 = vmul.f32 %v8365, %v5267
    %v9646 = vmul.f32 %v8366, %v5271
    %v9647 = vmul.f32 %v8367, %v5275
    %v9648 = vmul.f32 %v8368, %v5279
    %v9649 = vmul.f32 %v8369, %v5283
    %v9650 = vmul.f32 %v8370, %v5287
    %v9651 = vmul.f32 %v8371, %v5291
    %v9652 = vmul.f32 %v8372, %v5295
    %v9653 = vmul.f32 %v8373, %v5299
    %v9654 = vmul.f32 %v8374, %v5303
    %v9655 = vmul.f32 %v8375, %v5307
    %v9656 = vmul.f32 %v8376, %v5311
    %v9657 = vmul.f32 %v8377, %v5315
    %v9658 = vmul.f32 %v8378, %v5319
    %v9659 = vmul.f32 %v8379, %v5323
    %v9660 = vmul.f32 %v8380, %v5327
    %v9661 = vmul.f32 %v8381, %v5331
    %v9662 = vmul.f32 %v8382, %v5335
    %v9663 = vmul.f32 %v8383, %v5339
    %v9664 = vmul.f32 %v8384, %v5343
    %v9665 = vmul.f32 %v8385, %v5347
    %v9666 = vmul.f32 %v8386, %v5351
    %v9667 = vmul.f32 %v8387, %v5355
    %v9668 = vmul.f32 %v8388, %v5359
    %v9669 = vmul.f32 %v8389, %v5363
    %v9670 = vmul.f32 %v8390, %v5367
    %v9671 = vmul.f32 %v8391, %v5371
    %v9672 = vmul.f32 %v8392, %v5375
    %v9673 = vmul.f32 %v8393, %v5379
    %v9674 = vmul.f32 %v8394, %v5383
    %v9675 = vmul.f32 %v8395, %v5387
    %v9676 = vmul.f32 %v8396, %v5391
    %v9677 = vmul.f32 %v8397, %v5395
    %v9678 = vmul.f32 %v8398, %v5399
    %v9679 = vmul.f32 %v8399, %v5403
    %v9680 = vmul.f32 %v8400, %v5407
    %v9681 = vmul.f32 %v8401, %v5411
    %v9682 = vmul.f32 %v8402, %v5415
    %v9683 = vmul.f32 %v8403, %v5419
    %v9684 = vmul.f32 %v8404, %v5423
    %v9685 = vmul.f32 %v8405, %v5427
    %v9686 = vmul.f32 %v8406, %v5431
    %v9687 = vmul.f32 %v8407, %v5435
    %v9688 = vmul.f32 %v8408, %v5439
    %v9689 = vmul.f32 %v8409, %v5443
    %v9690 = vmul.f32 %v8410, %v5447
    %v9691 = vmul.f32 %v8411, %v5451
    %v9692 = vmul.f32 %v8412, %v5455
    %v9693 = vmul.f32 %v8413, %v5459
    %v9694 = vmul.f32 %v8414, %v5463
    %v9695 = vmul.f32 %v8415, %v5467
    %v9696 = vmul.f32 %v8416, %v5471
    %v9697 = vmul.f32 %v8417, %v5475
    %v9698 = vmul.f32 %v8418, %v5479
    %v9699 = vmul.f32 %v8419, %v5483
    %v9700 = vmul.f32 %v8420, %v5487
    %v9701 = vmul.f32 %v8421, %v5491
    %v9702 = vmul.f32 %v8422, %v5495
    %v9703 = vmul.f32 %v8423, %v5499
    %v9704 = vmul.f32 %v8424, %v5503
    %v9705 = vmul.f32 %v8425, %v5507
    %v9706 = vmul.f32 %v8426, %v5511
    %v9707 = vmul.f32 %v8427, %v5515
    %v9708 = vmul.f32 %v8428, %v5519
    %v9709 = vmul.f32 %v8429, %v5523
    %v9710 = vmul.f32 %v8430, %v5527
    %v9711 = vmul.f32 %v8431, %v5531
    %v9712 = vmul.f32 %v8432, %v5535
    %v9713 = vmul.f32 %v8433, %v5539
    %v9714 = vmul.f32 %v8434, %v5543
    %v9715 = vmul.f32 %v8435, %v5547
    %v9716 = vmul.f32 %v8436, %v5551
    %v9717 = vmul.f32 %v8437, %v5555
    %v9718 = vmul.f32 %v8438, %v5559
    %v9719 = vmul.f32 %v8439, %v5563
    %v9720 = vmul.f32 %v8440, %v5567
    %v9721 = vmul.f32 %v8441, %v5571
    %v9722 = vmul.f32 %v8442, %v5575
    %v9723 = vmul.f32 %v8443, %v5579
    %v9724 = vmul.f32 %v8444, %v5583
    %v9725 = vmul.f32 %v8445, %v5587
    %v9726 = vmul.f32 %v8446, %v5591
    %v9727 = vmul.f32 %v8447, %v5595
    %v9728 = vmul.f32 %v8448, %v5599
    %v9729 = vmul.f32 %v8449, %v5603
    %v9730 = vmul.f32 %v8450, %v5607
    %v9731 = vmul.f32 %v8451, %v5611
    %v9732 = vmul.f32 %v8452, %v5615
    %v9733 = vmul.f32 %v8453, %v5619
    %v9734 = vmul.f32 %v8454, %v5623
    %v9735 = vmul.f32 %v8455, %v5627
    %v9736 = vmul.f32 %v8456, %v5631
    %v9737 = vmul.f32 %v8457, %v5635
    %v9738 = vmul.f32 %v8458, %v5639
    %v9739 = vmul.f32 %v8459, %v5643
    %v9740 = vmul.f32 %v8717, %v6159
    %v9741 = vmul.f32 %v8719, %v6163
    %v9742 = vmul.f32 %v8721, %v6167
    %v9743 = vmul.f32 %v8723, %v6171
    %v9744 = vmul.f32 %v8725, %v6175
    %v9745 = vmul.f32 %v8727, %v6179
    %v9746 = vmul.f32 %v8729, %v6183
    %v9747 = vmul.f32 %v8731, %v6187
    %v9748 = vmul.f32 %v8733, %v6191
    %v9749 = vmul.f32 %v8735, %v6195
    %v9750 = vmul.f32 %v8737, %v6199
    %v9751 = vmul.f32 %v8739, %v6203
    %v9752 = vmul.f32 %v8741, %v6207
    %v9753 = vmul.f32 %v8743, %v6211
    %v9754 = vmul.f32 %v8745, %v6215
    %v9755 = vmul.f32 %v8747, %v6219
    %v9756 = vmul.f32 %v8749, %v6223
    %v9757 = vmul.f32 %v8751, %v6227
    %v9758 = vmul.f32 %v8753, %v6231
    %v9759 = vmul.f32 %v8755, %v6235
    %v9760 = vmul.f32 %v8757, %v6239
    %v9761 = vmul.f32 %v8759, %v6243
    %v9762 = vmul.f32 %v8761, %v6247
    %v9763 = vmul.f32 %v8763, %v6251
    %v9764 = vmul.f32 %v8765, %v6255
    %v9765 = vmul.f32 %v8767, %v6259
    %v9766 = vmul.f32 %v8769, %v6263
    %v9767 = vmul.f32 %v8771, %v6267
    %v9768 = vmul.f32 %v8773, %v6271
    %v9769 = vmul.f32 %v8775, %v6275
    %v9770 = vmul.f32 %v8777, %v6279
    %v9771 = vmul.f32 %v8779, %v6283
    %v9772 = vmul.f32 %v8781, %v6287
    %v9773 = vmul.f32 %v8783, %v6291
    %v9774 = vmul.f32 %v8785, %v6295
    %v9775 = vmul.f32 %v8787, %v6299
    %v9776 = vmul.f32 %v8789, %v6303
    %v9777 = vmul.f32 %v8791, %v6307
    %v9778 = vmul.f32 %v8793, %v6311
    %v9779 = vmul.f32 %v8795, %v6315
    %v9780 = vmul.f32 %v8797, %v6319
    %v9781 = vmul.f32 %v8799, %v6323
    %v9782 = vmul.f32 %v8801, %v6327
    %v9783 = vmul.f32 %v8803, %v6331
    %v9784 = vmul.f32 %v8805, %v6335
    %v9785 = vmul.f32 %v8807, %v6339
    %v9786 = vmul.f32 %v8809, %v6343
    %v9787 = vmul.f32 %v8811, %v6347
    %v9788 = vmul.f32 %v8813, %v6351
    %v9789 = vmul.f32 %v8815, %v6355
    %v9790 = vmul.f32 %v8817, %v6359
    %v9791 = vmul.f32 %v8819, %v6363
    %v9792 = vmul.f32 %v8821, %v6367
    %v9793 = vmul.f32 %v8823, %v6371
    %v9794 = vmul.f32 %v8825, %v6375
    %v9795 = vmul.f32 %v8827, %v6379
    %v9796 = vmul.f32 %v8829, %v6383
    %v9797 = vmul.f32 %v8831, %v6387
    %v9798 = vmul.f32 %v8833, %v6391
    %v9799 = vmul.f32 %v8835, %v6395
    %v9800 = vmul.f32 %v8837, %v6399
    %v9801 = vmul.f32 %v8839, %v6403
    %v9802 = vmul.f32 %v8841, %v6407
    %v9803 = vmul.f32 %v8843, %v6411
    %v9804 = vmul.f32 %v8845, %v6415
    %v9805 = vmul.f32 %v8847, %v6419
    %v9806 = vmul.f32 %v8849, %v6423
    %v9807 = vmul.f32 %v8851, %v6427
    %v9808 = vmul.f32 %v8853, %v6431
    %v9809 = vmul.f32 %v8855, %v6435
    %v9810 = vmul.f32 %v8857, %v6439
    %v9811 = vmul.f32 %v8859, %v6443
    %v9812 = vmul.f32 %v8861, %v6447
    %v9813 = vmul.f32 %v8863, %v6451
    %v9814 = vmul.f32 %v8865, %v6455
    %v9815 = vmul.f32 %v8867, %v6459
    %v9816 = vmul.f32 %v8869, %v6463
    %v9817 = vmul.f32 %v8871, %v6467
    %v9818 = vmul.f32 %v8873, %v6471
    %v9819 = vmul.f32 %v8875, %v6475
    %v9820 = vmul.f32 %v8877, %v6479
    %v9821 = vmul.f32 %v8879, %v6483
    %v9822 = vmul.f32 %v8881, %v6487
    %v9823 = vmul.f32 %v8883, %v6491
    %v9824 = vmul.f32 %v8885, %v6495
    %v9825 = vmul.f32 %v8887, %v6499
    %v9826 = vmul.f32 %v8889, %v6503
    %v9827 = vmul.f32 %v8891, %v6507
    %v9828 = vmul.f32 %v8893, %v6511
    %v9829 = vmul.f32 %v8895, %v6515
    %v9830 = vmul.f32 %v8897, %v6519
    %v9831 = vmul.f32 %v8899, %v6523
    %v9832 = vmul.f32 %v8901, %v6527
    %v9833 = vmul.f32 %v8903, %v6531
    %v9834 = vmul.f32 %v8905, %v6535
    %v9835 = vmul.f32 %v8907, %v6539
    %v9836 = vmul.f32 %v8909, %v6543
    %v9837 = vmul.f32 %v8911, %v6547
    %v9838 = vmul.f32 %v8913, %v6551
    %v9839 = vmul.f32 %v8915, %v6555
    %v9840 = vmul.f32 %v8917, %v6559
    %v9841 = vmul.f32 %v8919, %v6563
    %v9842 = vmul.f32 %v8921, %v6567
    %v9843 = vmul.f32 %v8923, %v6571
    %v9844 = vmul.f32 %v8925, %v6575
    %v9845 = vmul.f32 %v8927, %v6579
    %v9846 = vmul.f32 %v8929, %v6583
    %v9847 = vmul.f32 %v8931, %v6587
    %v9848 = vmul.f32 %v8933, %v6591
    %v9849 = vmul.f32 %v8935, %v6595
    %v9850 = vmul.f32 %v8937, %v6599
    %v9851 = vmul.f32 %v8939, %v6603
    %v9852 = vmul.f32 %v8941, %v6607
    %v9853 = vmul.f32 %v8943, %v6611
    %v9854 = vmul.f32 %v8945, %v6615
    %v9855 = vmul.f32 %v8947, %v6619
    %v9856 = vmul.f32 %v8949, %v6623
    %v9857 = vmul.f32 %v8951, %v6627
    %v9858 = vmul.f32 %v8953, %v6631
    %v9859 = vmul.f32 %v8955, %v6635
    %v9860 = vmul.f32 %v8957, %v6639
    %v9861 = vmul.f32 %v8959, %v6643
    %v9862 = vmul.f32 %v8961, %v6647
    %v9863 = vmul.f32 %v8963, %v6651
    %v9864 = vmul.f32 %v8965, %v6655
    %v9865 = vmul.f32 %v8967, %v6659
    %v9866 = vmul.f32 %v8969, %v6663
    %v9867 = vmul.f32 %v8971, %v6667
    %v9868 = vmul.f32 %v8973, %v6671
    %v9869 = vmul.f32 %v8975, %v6675
    %v9870 = vmul.f32 %v8977, %v6679
    %v9871 = vmul.f32 %v8979, %v6683
    %v9872 = vmul.f32 %v8981, %v6687
    %v9873 = vmul.f32 %v8983, %v6691
    %v9874 = vmul.f32 %v8985, %v6695
    %v9875 = vmul.f32 %v8987, %v6699
    %v9876 = vmul.f32 %v8989, %v6703
    %v9877 = vmul.f32 %v8991, %v6707
    %v9878 = vmul.f32 %v8993, %v6711
    %v9879 = vmul.f32 %v8995, %v6715
    %v9880 = vmul.f32 %v8997, %v6719
    %v9881 = vmul.f32 %v8999, %v6723
    %v9882 = vmul.f32 %v9001, %v6727
    %v9883 = vmul.f32 %v9003, %v6731
    %v9884 = vmul.f32 %v9005, %v6735
    %v9885 = vmul.f32 %v9007, %v6739
    %v9886 = vmul.f32 %v9009, %v6743
    %v9887 = vmul.f32 %v9011, %v6747
    %v9888 = vmul.f32 %v9013, %v6751
    %v9889 = vmul.f32 %v9015, %v6755
    %v9890 = vmul.f32 %v9017, %v6759
    %v9891 = vmul.f32 %v9019, %v6763
    %v9892 = vmul.f32 %v9021, %v6767
    %v9893 = vmul.f32 %v9023, %v6771
    %v9894 = vmul.f32 %v9025, %v6775
    %v9895 = vmul.f32 %v9027, %v6779
    %v9896 = vmul.f32 %v9029, %v6783
    %v9897 = vmul.f32 %v9031, %v6787
    %v9898 = vmul.f32 %v9033, %v6791
    %v9899 = vmul.f32 %v9035, %v6795
    %v9900 = vmul.f32 %v9037, %v6799
    %v9901 = vmul.f32 %v9039, %v6803
    %v9902 = vmul.f32 %v9041, %v6807
    %v9903 = vmul.f32 %v9043, %v6811
    %v9904 = vmul.f32 %v9045, %v6815
    %v9905 = vmul.f32 %v9047, %v6819
    %v9906 = vmul.f32 %v9049, %v6823
    %v9907 = vmul.f32 %v9051, %v6827
    %v9908 = vmul.f32 %v9053, %v6831
    %v9909 = vmul.f32 %v9055, %v6835
    %v9910 = vmul.f32 %v9057, %v6839
    %v9911 = vmul.f32 %v9059, %v6843
    %v9912 = vmul.f32 %v9061, %v6847
    %v9913 = vmul.f32 %v9063, %v6851
    %v9914 = vmul.f32 %v9065, %v6855
    %v9915 = vmul.f32 %v9067, %v6859
    %v9916 = vmul.f32 %v9069, %v6863
    %v9917 = vmul.f32 %v9071, %v6867
    %v9918 = vmul.f32 %v9073, %v6871
    %v9919 = vmul.f32 %v9075, %v6875
    %v9920 = vmul.f32 %v9077, %v6879
    %v9921 = vmul.f32 %v9079, %v6883
    %v9922 = vmul.f32 %v9081, %v6887
    %v9923 = vmul.f32 %v9083, %v6891
    %v9924 = vmul.f32 %v9085, %v6895
    %v9925 = vmul.f32 %v9087, %v6899
    %v9926 = vmul.f32 %v9089, %v6903
    %v9927 = vmul.f32 %v9091, %v6907
    %v9928 = vmul.f32 %v9093, %v6911
    %v9929 = vmul.f32 %v9095, %v6915
    %v9930 = vmul.f32 %v9097, %v6919
    %v9931 = vmul.f32 %v9099, %v6923
    %v9932 = vmul.f32 %v9101, %v6927
    %v9933 = vmul.f32 %v9103, %v6931
    %v9934 = vmul.f32 %v9105, %v6935
    %v9935 = vmul.f32 %v9107, %v6939
    %v9936 = vmul.f32 %v9109, %v6943
    %v9937 = vmul.f32 %v9111, %v6947
    %v9938 = vmul.f32 %v9113, %v6951
    %v9939 = vmul.f32 %v9115, %v6955
    %v9940 = vmul.f32 %v9117, %v6959
    %v9941 = vmul.f32 %v9119, %v6963
    %v9942 = vmul.f32 %v9121, %v6967
    %v9943 = vmul.f32 %v9123, %v6971
    %v9944 = vmul.f32 %v9125, %v6975
    %v9945 = vmul.f32 %v9127, %v6979
    %v9946 = vmul.f32 %v9129, %v6983
    %v9947 = vmul.f32 %v9131, %v6987
    %v9948 = vmul.f32 %v9133, %v6991
    %v9949 = vmul.f32 %v9135, %v6995
    %v9950 = vmul.f32 %v9137, %v6999
    %v9951 = vmul.f32 %v9139, %v7003
    %v9952 = vmul.f32 %v9141, %v7007
    %v9953 = vmul.f32 %v9143, %v7011
    %v9954 = vmul.f32 %v9145, %v7015
    %v9955 = vmul.f32 %v9147, %v7019
    %v9956 = vmul.f32 %v9149, %v7023
    %v9957 = vmul.f32 %v9151, %v7027
    %v9958 = vmul.f32 %v9153, %v7031
    %v9959 = vmul.f32 %v9155, %v7035
    %v9960 = vmul.f32 %v9157, %v7039
    %v9961 = vmul.f32 %v9159, %v7043
    %v9962 = vmul.f32 %v9161, %v7047
    %v9963 = vmul.f32 %v9163, %v7051
    %v9964 = vmul.f32 %v9165, %v7055
    %v9965 = vmul.f32 %v9167, %v7059
    %v9966 = vmul.f32 %v9169, %v7063
    %v9967 = vmul.f32 %v9171, %v7067
    %v9968 = vmul.f32 %v9173, %v7071
    %v9969 = vmul.f32 %v9175, %v7075
    %v9970 = vmul.f32 %v9177, %v7079
    %v9971 = vmul.f32 %v9179, %v7083
    %v9972 = vmul.f32 %v9181, %v7087
    %v9973 = vmul.f32 %v9183, %v7091
    %v9974 = vmul.f32 %v9185, %v7095
    %v9975 = vmul.f32 %v9187, %v7099
    %v9976 = vmul.f32 %v9189, %v7103
    %v9977 = vmul.f32 %v9191, %v7107
    %v9978 = vmul.f32 %v9193, %v7111
    %v9979 = vmul.f32 %v9195, %v7115
    %v9980 = vmul.f32 %v9197, %v7119
    %v9981 = vmul.f32 %v9199, %v7123
    %v9982 = vmul.f32 %v9201, %v7127
    %v9983 = vmul.f32 %v9203, %v7131
    %v9984 = vmul.f32 %v9205, %v7135
    %v9985 = vmul.f32 %v9207, %v7139
    %v9986 = vmul.f32 %v9209, %v7143
    %v9987 = vmul.f32 %v9211, %v7147
    %v9988 = vmul.f32 %v9213, %v7151
    %v9989 = vmul.f32 %v9215, %v7155
    %v9990 = vmul.f32 %v9217, %v7159
    %v9991 = vmul.f32 %v9219, %v7163
    %v9992 = vmul.f32 %v9221, %v7167
    %v9993 = vmul.f32 %v9223, %v7171
    %v9994 = vmul.f32 %v9225, %v7175
    %v9995 = vmul.f32 %v9227, %v7179
    %v9996 = vadd.f32 %v9484, %v9740
    %v9997 = vadd.f32 %v9485, %v9741
    %v9998 = vadd.f32 %v9486, %v9742
    %v9999 = vadd.f32 %v9487, %v9743
    %v10000 = vadd.f32 %v9488, %v9744
    %v10001 = vadd.f32 %v9489, %v9745
    %v10002 = vadd.f32 %v9490, %v9746
    %v10003 = vadd.f32 %v9491, %v9747
    %v10004 = vadd.f32 %v9492, %v9748
    %v10005 = vadd.f32 %v9493, %v9749
    %v10006 = vadd.f32 %v9494, %v9750
    %v10007 = vadd.f32 %v9495, %v9751
    %v10008 = vadd.f32 %v9496, %v9752
    %v10009 = vadd.f32 %v9497, %v9753
    %v10010 = vadd.f32 %v9498, %v9754
    %v10011 = vadd.f32 %v9499, %v9755
    %v10012 = vadd.f32 %v9500, %v9756
    %v10013 = vadd.f32 %v9501, %v9757
    %v10014 = vadd.f32 %v9502, %v9758
    %v10015 = vadd.f32 %v9503, %v9759
    %v10016 = vadd.f32 %v9504, %v9760
    %v10017 = vadd.f32 %v9505, %v9761
    %v10018 = vadd.f32 %v9506, %v9762
    %v10019 = vadd.f32 %v9507, %v9763
    %v10020 = vadd.f32 %v9508, %v9764
    %v10021 = vadd.f32 %v9509, %v9765
    %v10022 = vadd.f32 %v9510, %v9766
    %v10023 = vadd.f32 %v9511, %v9767
    %v10024 = vadd.f32 %v9512, %v9768
    %v10025 = vadd.f32 %v9513, %v9769
    %v10026 = vadd.f32 %v9514, %v9770
    %v10027 = vadd.f32 %v9515, %v9771
    %v10028 = vadd.f32 %v9516, %v9772
    %v10029 = vadd.f32 %v9517, %v9773
    %v10030 = vadd.f32 %v9518, %v9774
    %v10031 = vadd.f32 %v9519, %v9775
    %v10032 = vadd.f32 %v9520, %v9776
    %v10033 = vadd.f32 %v9521, %v9777
    %v10034 = vadd.f32 %v9522, %v9778
    %v10035 = vadd.f32 %v9523, %v9779
    %v10036 = vadd.f32 %v9524, %v9780
    %v10037 = vadd.f32 %v9525, %v9781
    %v10038 = vadd.f32 %v9526, %v9782
    %v10039 = vadd.f32 %v9527, %v9783
    %v10040 = vadd.f32 %v9528, %v9784
    %v10041 = vadd.f32 %v9529, %v9785
    %v10042 = vadd.f32 %v9530, %v9786
    %v10043 = vadd.f32 %v9531, %v9787
    %v10044 = vadd.f32 %v9532, %v9788
    %v10045 = vadd.f32 %v9533, %v9789
    %v10046 = vadd.f32 %v9534, %v9790
    %v10047 = vadd.f32 %v9535, %v9791
    %v10048 = vadd.f32 %v9536, %v9792
    %v10049 = vadd.f32 %v9537, %v9793
    %v10050 = vadd.f32 %v9538, %v9794
    %v10051 = vadd.f32 %v9539, %v9795
    %v10052 = vadd.f32 %v9540, %v9796
    %v10053 = vadd.f32 %v9541, %v9797
    %v10054 = vadd.f32 %v9542, %v9798
    %v10055 = vadd.f32 %v9543, %v9799
    %v10056 = vadd.f32 %v9544, %v9800
    %v10057 = vadd.f32 %v9545, %v9801
    %v10058 = vadd.f32 %v9546, %v9802
    %v10059 = vadd.f32 %v9547, %v9803
    %v10060 = vadd.f32 %v9548, %v9804
    %v10061 = vadd.f32 %v9549, %v9805
    %v10062 = vadd.f32 %v9550, %v9806
    %v10063 = vadd.f32 %v9551, %v9807
    %v10064 = vadd.f32 %v9552, %v9808
    %v10065 = vadd.f32 %v9553, %v9809
    %v10066 = vadd.f32 %v9554, %v9810
    %v10067 = vadd.f32 %v9555, %v9811
    %v10068 = vadd.f32 %v9556, %v9812
    %v10069 = vadd.f32 %v9557, %v9813
    %v10070 = vadd.f32 %v9558, %v9814
    %v10071 = vadd.f32 %v9559, %v9815
    %v10072 = vadd.f32 %v9560, %v9816
    %v10073 = vadd.f32 %v9561, %v9817
    %v10074 = vadd.f32 %v9562, %v9818
    %v10075 = vadd.f32 %v9563, %v9819
    %v10076 = vadd.f32 %v9564, %v9820
    %v10077 = vadd.f32 %v9565, %v9821
    %v10078 = vadd.f32 %v9566, %v9822
    %v10079 = vadd.f32 %v9567, %v9823
    %v10080 = vadd.f32 %v9568, %v9824
    %v10081 = vadd.f32 %v9569, %v9825
    %v10082 = vadd.f32 %v9570, %v9826
    %v10083 = vadd.f32 %v9571, %v9827
    %v10084 = vadd.f32 %v9572, %v9828
    %v10085 = vadd.f32 %v9573, %v9829
    %v10086 = vadd.f32 %v9574, %v9830
    %v10087 = vadd.f32 %v9575, %v9831
    %v10088 = vadd.f32 %v9576, %v9832
    %v10089 = vadd.f32 %v9577, %v9833
    %v10090 = vadd.f32 %v9578, %v9834
    %v10091 = vadd.f32 %v9579, %v9835
    %v10092 = vadd.f32 %v9580, %v9836
    %v10093 = vadd.f32 %v9581, %v9837
    %v10094 = vadd.f32 %v9582, %v9838
    %v10095 = vadd.f32 %v9583, %v9839
    %v10096 = vadd.f32 %v9584, %v9840
    %v10097 = vadd.f32 %v9585, %v9841
    %v10098 = vadd.f32 %v9586, %v9842
    %v10099 = vadd.f32 %v9587, %v9843
    %v10100 = vadd.f32 %v9588, %v9844
    %v10101 = vadd.f32 %v9589, %v9845
    %v10102 = vadd.f32 %v9590, %v9846
    %v10103 = vadd.f32 %v9591, %v9847
    %v10104 = vadd.f32 %v9592, %v9848
    %v10105 = vadd.f32 %v9593, %v9849
    %v10106 = vadd.f32 %v9594, %v9850
    %v10107 = vadd.f32 %v9595, %v9851
    %v10108 = vadd.f32 %v9596, %v9852
    %v10109 = vadd.f32 %v9597, %v9853
    %v10110 = vadd.f32 %v9598, %v9854
    %v10111 = vadd.f32 %v9599, %v9855
    %v10112 = vadd.f32 %v9600, %v9856
    %v10113 = vadd.f32 %v9601, %v9857
    %v10114 = vadd.f32 %v9602, %v9858
    %v10115 = vadd.f32 %v9603, %v9859
    %v10116 = vadd.f32 %v9604, %v9860
    %v10117 = vadd.f32 %v9605, %v9861
    %v10118 = vadd.f32 %v9606, %v9862
    %v10119 = vadd.f32 %v9607, %v9863
    %v10120 = vadd.f32 %v9608, %v9864
    %v10121 = vadd.f32 %v9609, %v9865
    %v10122 = vadd.f32 %v9610, %v9866
    %v10123 = vadd.f32 %v9611, %v9867
    %v10124 = vadd.f32 %v9612, %v9868
    %v10125 = vadd.f32 %v9613, %v9869
    %v10126 = vadd.f32 %v9614, %v9870
    %v10127 = vadd.f32 %v9615, %v9871
    %v10128 = vadd.f32 %v9616, %v9872
    %v10129 = vadd.f32 %v9617, %v9873
    %v10130 = vadd.f32 %v9618, %v9874
    %v10131 = vadd.f32 %v9619, %v9875
    %v10132 = vadd.f32 %v9620, %v9876
    %v10133 = vadd.f32 %v9621, %v9877
    %v10134 = vadd.f32 %v9622, %v9878
    %v10135 = vadd.f32 %v9623, %v9879
    %v10136 = vadd.f32 %v9624, %v9880
    %v10137 = vadd.f32 %v9625, %v9881
    %v10138 = vadd.f32 %v9626, %v9882
    %v10139 = vadd.f32 %v9627, %v9883
    %v10140 = vadd.f32 %v9628, %v9884
    %v10141 = vadd.f32 %v9629, %v9885
    %v10142 = vadd.f32 %v9630, %v9886
    %v10143 = vadd.f32 %v9631, %v9887
    %v10144 = vadd.f32 %v9632, %v9888
    %v10145 = vadd.f32 %v9633, %v9889
    %v10146 = vadd.f32 %v9634, %v9890
    %v10147 = vadd.f32 %v9635, %v9891
    %v10148 = vadd.f32 %v9636, %v9892
    %v10149 = vadd.f32 %v9637, %v9893
    %v10150 = vadd.f32 %v9638, %v9894
    %v10151 = vadd.f32 %v9639, %v9895
    %v10152 = vadd.f32 %v9640, %v9896
    %v10153 = vadd.f32 %v9641, %v9897
    %v10154 = vadd.f32 %v9642, %v9898
    %v10155 = vadd.f32 %v9643, %v9899
    %v10156 = vadd.f32 %v9644, %v9900
    %v10157 = vadd.f32 %v9645, %v9901
    %v10158 = vadd.f32 %v9646, %v9902
    %v10159 = vadd.f32 %v9647, %v9903
    %v10160 = vadd.f32 %v9648, %v9904
    %v10161 = vadd.f32 %v9649, %v9905
    %v10162 = vadd.f32 %v9650, %v9906
    %v10163 = vadd.f32 %v9651, %v9907
    %v10164 = vadd.f32 %v9652, %v9908
    %v10165 = vadd.f32 %v9653, %v9909
    %v10166 = vadd.f32 %v9654, %v9910
    %v10167 = vadd.f32 %v9655, %v9911
    %v10168 = vadd.f32 %v9656, %v9912
    %v10169 = vadd.f32 %v9657, %v9913
    %v10170 = vadd.f32 %v9658, %v9914
    %v10171 = vadd.f32 %v9659, %v9915
    %v10172 = vadd.f32 %v9660, %v9916
    %v10173 = vadd.f32 %v9661, %v9917
    %v10174 = vadd.f32 %v9662, %v9918
    %v10175 = vadd.f32 %v9663, %v9919
    %v10176 = vadd.f32 %v9664, %v9920
    %v10177 = vadd.f32 %v9665, %v9921
    %v10178 = vadd.f32 %v9666, %v9922
    %v10179 = vadd.f32 %v9667, %v9923
    %v10180 = vadd.f32 %v9668, %v9924
    %v10181 = vadd.f32 %v9669, %v9925
    %v10182 = vadd.f32 %v9670, %v9926
    %v10183 = vadd.f32 %v9671, %v9927
    %v10184 = vadd.f32 %v9672, %v9928
    %v10185 = vadd.f32 %v9673, %v9929
    %v10186 = vadd.f32 %v9674, %v9930
    %v10187 = vadd.f32 %v9675, %v9931
    %v10188 = vadd.f32 %v9676, %v9932
    %v10189 = vadd.f32 %v9677, %v9933
    %v10190 = vadd.f32 %v9678, %v9934
    %v10191 = vadd.f32 %v9679, %v9935
    %v10192 = vadd.f32 %v9680, %v9936
    %v10193 = vadd.f32 %v9681, %v9937
    %v10194 = vadd.f32 %v9682, %v9938
    %v10195 = vadd.f32 %v9683, %v9939
    %v10196 = vadd.f32 %v9684, %v9940
    %v10197 = vadd.f32 %v9685, %v9941
    %v10198 = vadd.f32 %v9686, %v9942
    %v10199 = vadd.f32 %v9687, %v9943
    %v10200 = vadd.f32 %v9688, %v9944
    %v10201 = vadd.f32 %v9689, %v9945
    %v10202 = vadd.f32 %v9690, %v9946
    %v10203 = vadd.f32 %v9691, %v9947
    %v10204 = vadd.f32 %v9692, %v9948
    %v10205 = vadd.f32 %v9693, %v9949
    %v10206 = vadd.f32 %v9694, %v9950
    %v10207 = vadd.f32 %v9695, %v9951
    %v10208 = vadd.f32 %v9696, %v9952
    %v10209 = vadd.f32 %v9697, %v9953
    %v10210 = vadd.f32 %v9698, %v9954
    %v10211 = vadd.f32 %v9699, %v9955
    %v10212 = vadd.f32 %v9700, %v9956
    %v10213 = vadd.f32 %v9701, %v9957
    %v10214 = vadd.f32 %v9702, %v9958
    %v10215 = vadd.f32 %v9703, %v9959
    %v10216 = vadd.f32 %v9704, %v9960
    %v10217 = vadd.f32 %v9705, %v9961
    %v10218 = vadd.f32 %v9706, %v9962
    %v10219 = vadd.f32 %v9707, %v9963
    %v10220 = vadd.f32 %v9708, %v9964
    %v10221 = vadd.f32 %v9709, %v9965
    %v10222 = vadd.f32 %v9710, %v9966
    %v10223 = vadd.f32 %v9711, %v9967
    %v10224 = vadd.f32 %v9712, %v9968
    %v10225 = vadd.f32 %v9713, %v9969
    %v10226 = vadd.f32 %v9714, %v9970
    %v10227 = vadd.f32 %v9715, %v9971
    %v10228 = vadd.f32 %v9716, %v9972
    %v10229 = vadd.f32 %v9717, %v9973
    %v10230 = vadd.f32 %v9718, %v9974
    %v10231 = vadd.f32 %v9719, %v9975
    %v10232 = vadd.f32 %v9720, %v9976
    %v10233 = vadd.f32 %v9721, %v9977
    %v10234 = vadd.f32 %v9722, %v9978
    %v10235 = vadd.f32 %v9723, %v9979
    %v10236 = vadd.f32 %v9724, %v9980
    %v10237 = vadd.f32 %v9725, %v9981
    %v10238 = vadd.f32 %v9726, %v9982
    %v10239 = vadd.f32 %v9727, %v9983
    %v10240 = vadd.f32 %v9728, %v9984
    %v10241 = vadd.f32 %v9729, %v9985
    %v10242 = vadd.f32 %v9730, %v9986
    %v10243 = vadd.f32 %v9731, %v9987
    %v10244 = vadd.f32 %v9732, %v9988
    %v10245 = vadd.f32 %v9733, %v9989
    %v10246 = vadd.f32 %v9734, %v9990
    %v10247 = vadd.f32 %v9735, %v9991
    %v10248 = vadd.f32 %v9736, %v9992
    %v10249 = vadd.f32 %v9737, %v9993
    %v10250 = vadd.f32 %v9738, %v9994
    %v10251 = vadd.f32 %v9739, %v9995
    %10252 = vst [vmem:[#allocation11] sm:$0xff] %v9996
    %10253 = vst [vmem:[#allocation11 + $0x8] sm:$0xff] %v9997
    %10254 = vst [vmem:[#allocation11 + $0x10] sm:$0xff] %v9998
    %10255 = vst [vmem:[#allocation11 + $0x18] sm:$0xff] %v9999
    %10256 = vst [vmem:[#allocation11 + $0x20] sm:$0xff] %v10000
    %10257 = vst [vmem:[#allocation11 + $0x28] sm:$0xff] %v10001
    %10258 = vst [vmem:[#allocation11 + $0x30] sm:$0xff] %v10002
    %10259 = vst [vmem:[#allocation11 + $0x38] sm:$0xff] %v10003
    %10260 = vst [vmem:[#allocation11 + $0x40] sm:$0xff] %v10004
    %10261 = vst [vmem:[#allocation11 + $0x48] sm:$0xff] %v10005
    %10262 = vst [vmem:[#allocation11 + $0x50] sm:$0xff] %v10006
    %10263 = vst [vmem:[#allocation11 + $0x58] sm:$0xff] %v10007
    %10264 = vst [vmem:[#allocation11 + $0x60] sm:$0xff] %v10008
    %10265 = vst [vmem:[#allocation11 + $0x68] sm:$0xff] %v10009
    %10266 = vst [vmem:[#allocation11 + $0x70] sm:$0xff] %v10010
    %10267 = vst [vmem:[#allocation11 + $0x78] sm:$0xff] %v10011
    %10268 = vst [vmem:[#allocation11 + $0x80] sm:$0xff] %v10012
    %10269 = vst [vmem:[#allocation11 + $0x88] sm:$0xff] %v10013
    %10270 = vst [vmem:[#allocation11 + $0x90] sm:$0xff] %v10014
    %10271 = vst [vmem:[#allocation11 + $0x98] sm:$0xff] %v10015
    %10272 = vst [vmem:[#allocation11 + $0xa0] sm:$0xff] %v10016
    %10273 = vst [vmem:[#allocation11 + $0xa8] sm:$0xff] %v10017
    %10274 = vst [vmem:[#allocation11 + $0xb0] sm:$0xff] %v10018
    %10275 = vst [vmem:[#allocation11 + $0xb8] sm:$0xff] %v10019
    %10276 = vst [vmem:[#allocation11 + $0xc0] sm:$0xff] %v10020
    %10277 = vst [vmem:[#allocation11 + $0xc8] sm:$0xff] %v10021
    %10278 = vst [vmem:[#allocation11 + $0xd0] sm:$0xff] %v10022
    %10279 = vst [vmem:[#allocation11 + $0xd8] sm:$0xff] %v10023
    %10280 = vst [vmem:[#allocation11 + $0xe0] sm:$0xff] %v10024
    %10281 = vst [vmem:[#allocation11 + $0xe8] sm:$0xff] %v10025
    %10282 = vst [vmem:[#allocation11 + $0xf0] sm:$0xff] %v10026
    %10283 = vst [vmem:[#allocation11 + $0xf8] sm:$0xff] %v10027
    %10284 = vst [vmem:[#allocation11 + $0x100] sm:$0xff] %v10028
    %10285 = vst [vmem:[#allocation11 + $0x108] sm:$0xff] %v10029
    %10286 = vst [vmem:[#allocation11 + $0x110] sm:$0xff] %v10030
    %10287 = vst [vmem:[#allocation11 + $0x118] sm:$0xff] %v10031
    %10288 = vst [vmem:[#allocation11 + $0x120] sm:$0xff] %v10032
    %10289 = vst [vmem:[#allocation11 + $0x128] sm:$0xff] %v10033
    %10290 = vst [vmem:[#allocation11 + $0x130] sm:$0xff] %v10034
    %10291 = vst [vmem:[#allocation11 + $0x138] sm:$0xff] %v10035
    %10292 = vst [vmem:[#allocation11 + $0x140] sm:$0xff] %v10036
    %10293 = vst [vmem:[#allocation11 + $0x148] sm:$0xff] %v10037
    %10294 = vst [vmem:[#allocation11 + $0x150] sm:$0xff] %v10038
    %10295 = vst [vmem:[#allocation11 + $0x158] sm:$0xff] %v10039
    %10296 = vst [vmem:[#allocation11 + $0x160] sm:$0xff] %v10040
    %10297 = vst [vmem:[#allocation11 + $0x168] sm:$0xff] %v10041
    %10298 = vst [vmem:[#allocation11 + $0x170] sm:$0xff] %v10042
    %10299 = vst [vmem:[#allocation11 + $0x178] sm:$0xff] %v10043
    %10300 = vst [vmem:[#allocation11 + $0x180] sm:$0xff] %v10044
    %10301 = vst [vmem:[#allocation11 + $0x188] sm:$0xff] %v10045
    %10302 = vst [vmem:[#allocation11 + $0x190] sm:$0xff] %v10046
    %10303 = vst [vmem:[#allocation11 + $0x198] sm:$0xff] %v10047
    %10304 = vst [vmem:[#allocation11 + $0x1a0] sm:$0xff] %v10048
    %10305 = vst [vmem:[#allocation11 + $0x1a8] sm:$0xff] %v10049
    %10306 = vst [vmem:[#allocation11 + $0x1b0] sm:$0xff] %v10050
    %10307 = vst [vmem:[#allocation11 + $0x1b8] sm:$0xff] %v10051
    %10308 = vst [vmem:[#allocation11 + $0x1c0] sm:$0xff] %v10052
    %10309 = vst [vmem:[#allocation11 + $0x1c8] sm:$0xff] %v10053
    %10310 = vst [vmem:[#allocation11 + $0x1d0] sm:$0xff] %v10054
    %10311 = vst [vmem:[#allocation11 + $0x1d8] sm:$0xff] %v10055
    %10312 = vst [vmem:[#allocation11 + $0x1e0] sm:$0xff] %v10056
    %10313 = vst [vmem:[#allocation11 + $0x1e8] sm:$0xff] %v10057
    %10314 = vst [vmem:[#allocation11 + $0x1f0] sm:$0xff] %v10058
    %10315 = vst [vmem:[#allocation11 + $0x1f8] sm:$0xff] %v10059
    %10316 = vst [vmem:[#allocation11 + $0x200] sm:$0xff] %v10060
    %10317 = vst [vmem:[#allocation11 + $0x208] sm:$0xff] %v10061
    %10318 = vst [vmem:[#allocation11 + $0x210] sm:$0xff] %v10062
    %10319 = vst [vmem:[#allocation11 + $0x218] sm:$0xff] %v10063
    %10320 = vst [vmem:[#allocation11 + $0x220] sm:$0xff] %v10064
    %10321 = vst [vmem:[#allocation11 + $0x228] sm:$0xff] %v10065
    %10322 = vst [vmem:[#allocation11 + $0x230] sm:$0xff] %v10066
    %10323 = vst [vmem:[#allocation11 + $0x238] sm:$0xff] %v10067
    %10324 = vst [vmem:[#allocation11 + $0x240] sm:$0xff] %v10068
    %10325 = vst [vmem:[#allocation11 + $0x248] sm:$0xff] %v10069
    %10326 = vst [vmem:[#allocation11 + $0x250] sm:$0xff] %v10070
    %10327 = vst [vmem:[#allocation11 + $0x258] sm:$0xff] %v10071
    %10328 = vst [vmem:[#allocation11 + $0x260] sm:$0xff] %v10072
    %10329 = vst [vmem:[#allocation11 + $0x268] sm:$0xff] %v10073
    %10330 = vst [vmem:[#allocation11 + $0x270] sm:$0xff] %v10074
    %10331 = vst [vmem:[#allocation11 + $0x278] sm:$0xff] %v10075
    %10332 = vst [vmem:[#allocation11 + $0x280] sm:$0xff] %v10076
    %10333 = vst [vmem:[#allocation11 + $0x288] sm:$0xff] %v10077
    %10334 = vst [vmem:[#allocation11 + $0x290] sm:$0xff] %v10078
    %10335 = vst [vmem:[#allocation11 + $0x298] sm:$0xff] %v10079
    %10336 = vst [vmem:[#allocation11 + $0x2a0] sm:$0xff] %v10080
    %10337 = vst [vmem:[#allocation11 + $0x2a8] sm:$0xff] %v10081
    %10338 = vst [vmem:[#allocation11 + $0x2b0] sm:$0xff] %v10082
    %10339 = vst [vmem:[#allocation11 + $0x2b8] sm:$0xff] %v10083
    %10340 = vst [vmem:[#allocation11 + $0x2c0] sm:$0xff] %v10084
    %10341 = vst [vmem:[#allocation11 + $0x2c8] sm:$0xff] %v10085
    %10342 = vst [vmem:[#allocation11 + $0x2d0] sm:$0xff] %v10086
    %10343 = vst [vmem:[#allocation11 + $0x2d8] sm:$0xff] %v10087
    %10344 = vst [vmem:[#allocation11 + $0x2e0] sm:$0xff] %v10088
    %10345 = vst [vmem:[#allocation11 + $0x2e8] sm:$0xff] %v10089
    %10346 = vst [vmem:[#allocation11 + $0x2f0] sm:$0xff] %v10090
    %10347 = vst [vmem:[#allocation11 + $0x2f8] sm:$0xff] %v10091
    %10348 = vst [vmem:[#allocation11 + $0x300] sm:$0xff] %v10092
    %10349 = vst [vmem:[#allocation11 + $0x308] sm:$0xff] %v10093
    %10350 = vst [vmem:[#allocation11 + $0x310] sm:$0xff] %v10094
    %10351 = vst [vmem:[#allocation11 + $0x318] sm:$0xff] %v10095
    %10352 = vst [vmem:[#allocation11 + $0x320] sm:$0xff] %v10096
    %10353 = vst [vmem:[#allocation11 + $0x328] sm:$0xff] %v10097
    %10354 = vst [vmem:[#allocation11 + $0x330] sm:$0xff] %v10098
    %10355 = vst [vmem:[#allocation11 + $0x338] sm:$0xff] %v10099
    %10356 = vst [vmem:[#allocation11 + $0x340] sm:$0xff] %v10100
    %10357 = vst [vmem:[#allocation11 + $0x348] sm:$0xff] %v10101
    %10358 = vst [vmem:[#allocation11 + $0x350] sm:$0xff] %v10102
    %10359 = vst [vmem:[#allocation11 + $0x358] sm:$0xff] %v10103
    %10360 = vst [vmem:[#allocation11 + $0x360] sm:$0xff] %v10104
    %10361 = vst [vmem:[#allocation11 + $0x368] sm:$0xff] %v10105
    %10362 = vst [vmem:[#allocation11 + $0x370] sm:$0xff] %v10106
    %10363 = vst [vmem:[#allocation11 + $0x378] sm:$0xff] %v10107
    %10364 = vst [vmem:[#allocation11 + $0x380] sm:$0xff] %v10108
    %10365 = vst [vmem:[#allocation11 + $0x388] sm:$0xff] %v10109
    %10366 = vst [vmem:[#allocation11 + $0x390] sm:$0xff] %v10110
    %10367 = vst [vmem:[#allocation11 + $0x398] sm:$0xff] %v10111
    %10368 = vst [vmem:[#allocation11 + $0x3a0] sm:$0xff] %v10112
    %10369 = vst [vmem:[#allocation11 + $0x3a8] sm:$0xff] %v10113
    %10370 = vst [vmem:[#allocation11 + $0x3b0] sm:$0xff] %v10114
    %10371 = vst [vmem:[#allocation11 + $0x3b8] sm:$0xff] %v10115
    %10372 = vst [vmem:[#allocation11 + $0x3c0] sm:$0xff] %v10116
    %10373 = vst [vmem:[#allocation11 + $0x3c8] sm:$0xff] %v10117
    %10374 = vst [vmem:[#allocation11 + $0x3d0] sm:$0xff] %v10118
    %10375 = vst [vmem:[#allocation11 + $0x3d8] sm:$0xff] %v10119
    %10376 = vst [vmem:[#allocation11 + $0x3e0] sm:$0xff] %v10120
    %10377 = vst [vmem:[#allocation11 + $0x3e8] sm:$0xff] %v10121
    %10378 = vst [vmem:[#allocation11 + $0x3f0] sm:$0xff] %v10122
    %10379 = vst [vmem:[#allocation11 + $0x3f8] sm:$0xff] %v10123
    %10380 = vst [vmem:[#allocation11 + $0x400] sm:$0xff] %v10124
    %10381 = vst [vmem:[#allocation11 + $0x408] sm:$0xff] %v10125
    %10382 = vst [vmem:[#allocation11 + $0x410] sm:$0xff] %v10126
    %10383 = vst [vmem:[#allocation11 + $0x418] sm:$0xff] %v10127
    %10384 = vst [vmem:[#allocation11 + $0x420] sm:$0xff] %v10128
    %10385 = vst [vmem:[#allocation11 + $0x428] sm:$0xff] %v10129
    %10386 = vst [vmem:[#allocation11 + $0x430] sm:$0xff] %v10130
    %10387 = vst [vmem:[#allocation11 + $0x438] sm:$0xff] %v10131
    %10388 = vst [vmem:[#allocation11 + $0x440] sm:$0xff] %v10132
    %10389 = vst [vmem:[#allocation11 + $0x448] sm:$0xff] %v10133
    %10390 = vst [vmem:[#allocation11 + $0x450] sm:$0xff] %v10134
    %10391 = vst [vmem:[#allocation11 + $0x458] sm:$0xff] %v10135
    %10392 = vst [vmem:[#allocation11 + $0x460] sm:$0xff] %v10136
    %10393 = vst [vmem:[#allocation11 + $0x468] sm:$0xff] %v10137
    %10394 = vst [vmem:[#allocation11 + $0x470] sm:$0xff] %v10138
    %10395 = vst [vmem:[#allocation11 + $0x478] sm:$0xff] %v10139
    %10396 = vst [vmem:[#allocation11 + $0x480] sm:$0xff] %v10140
    %10397 = vst [vmem:[#allocation11 + $0x488] sm:$0xff] %v10141
    %10398 = vst [vmem:[#allocation11 + $0x490] sm:$0xff] %v10142
    %10399 = vst [vmem:[#allocation11 + $0x498] sm:$0xff] %v10143
    %10400 = vst [vmem:[#allocation11 + $0x4a0] sm:$0xff] %v10144
    %10401 = vst [vmem:[#allocation11 + $0x4a8] sm:$0xff] %v10145
    %10402 = vst [vmem:[#allocation11 + $0x4b0] sm:$0xff] %v10146
    %10403 = vst [vmem:[#allocation11 + $0x4b8] sm:$0xff] %v10147
    %10404 = vst [vmem:[#allocation11 + $0x4c0] sm:$0xff] %v10148
    %10405 = vst [vmem:[#allocation11 + $0x4c8] sm:$0xff] %v10149
    %10406 = vst [vmem:[#allocation11 + $0x4d0] sm:$0xff] %v10150
    %10407 = vst [vmem:[#allocation11 + $0x4d8] sm:$0xff] %v10151
    %10408 = vst [vmem:[#allocation11 + $0x4e0] sm:$0xff] %v10152
    %10409 = vst [vmem:[#allocation11 + $0x4e8] sm:$0xff] %v10153
    %10410 = vst [vmem:[#allocation11 + $0x4f0] sm:$0xff] %v10154
    %10411 = vst [vmem:[#allocation11 + $0x4f8] sm:$0xff] %v10155
    %10412 = vst [vmem:[#allocation11 + $0x500] sm:$0xff] %v10156
    %10413 = vst [vmem:[#allocation11 + $0x508] sm:$0xff] %v10157
    %10414 = vst [vmem:[#allocation11 + $0x510] sm:$0xff] %v10158
    %10415 = vst [vmem:[#allocation11 + $0x518] sm:$0xff] %v10159
    %10416 = vst [vmem:[#allocation11 + $0x520] sm:$0xff] %v10160
    %10417 = vst [vmem:[#allocation11 + $0x528] sm:$0xff] %v10161
    %10418 = vst [vmem:[#allocation11 + $0x530] sm:$0xff] %v10162
    %10419 = vst [vmem:[#allocation11 + $0x538] sm:$0xff] %v10163
    %10420 = vst [vmem:[#allocation11 + $0x540] sm:$0xff] %v10164
    %10421 = vst [vmem:[#allocation11 + $0x548] sm:$0xff] %v10165
    %10422 = vst [vmem:[#allocation11 + $0x550] sm:$0xff] %v10166
    %10423 = vst [vmem:[#allocation11 + $0x558] sm:$0xff] %v10167
    %10424 = vst [vmem:[#allocation11 + $0x560] sm:$0xff] %v10168
    %10425 = vst [vmem:[#allocation11 + $0x568] sm:$0xff] %v10169
    %10426 = vst [vmem:[#allocation11 + $0x570] sm:$0xff] %v10170
    %10427 = vst [vmem:[#allocation11 + $0x578] sm:$0xff] %v10171
    %10428 = vst [vmem:[#allocation11 + $0x580] sm:$0xff] %v10172
    %10429 = vst [vmem:[#allocation11 + $0x588] sm:$0xff] %v10173
    %10430 = vst [vmem:[#allocation11 + $0x590] sm:$0xff] %v10174
    %10431 = vst [vmem:[#allocation11 + $0x598] sm:$0xff] %v10175
    %10432 = vst [vmem:[#allocation11 + $0x5a0] sm:$0xff] %v10176
    %10433 = vst [vmem:[#allocation11 + $0x5a8] sm:$0xff] %v10177
    %10434 = vst [vmem:[#allocation11 + $0x5b0] sm:$0xff] %v10178
    %10435 = vst [vmem:[#allocation11 + $0x5b8] sm:$0xff] %v10179
    %10436 = vst [vmem:[#allocation11 + $0x5c0] sm:$0xff] %v10180
    %10437 = vst [vmem:[#allocation11 + $0x5c8] sm:$0xff] %v10181
    %10438 = vst [vmem:[#allocation11 + $0x5d0] sm:$0xff] %v10182
    %10439 = vst [vmem:[#allocation11 + $0x5d8] sm:$0xff] %v10183
    %10440 = vst [vmem:[#allocation11 + $0x5e0] sm:$0xff] %v10184
    %10441 = vst [vmem:[#allocation11 + $0x5e8] sm:$0xff] %v10185
    %10442 = vst [vmem:[#allocation11 + $0x5f0] sm:$0xff] %v10186
    %10443 = vst [vmem:[#allocation11 + $0x5f8] sm:$0xff] %v10187
    %10444 = vst [vmem:[#allocation11 + $0x600] sm:$0xff] %v10188
    %10445 = vst [vmem:[#allocation11 + $0x608] sm:$0xff] %v10189
    %10446 = vst [vmem:[#allocation11 + $0x610] sm:$0xff] %v10190
    %10447 = vst [vmem:[#allocation11 + $0x618] sm:$0xff] %v10191
    %10448 = vst [vmem:[#allocation11 + $0x620] sm:$0xff] %v10192
    %10449 = vst [vmem:[#allocation11 + $0x628] sm:$0xff] %v10193
    %10450 = vst [vmem:[#allocation11 + $0x630] sm:$0xff] %v10194
    %10451 = vst [vmem:[#allocation11 + $0x638] sm:$0xff] %v10195
    %10452 = vst [vmem:[#allocation11 + $0x640] sm:$0xff] %v10196
    %10453 = vst [vmem:[#allocation11 + $0x648] sm:$0xff] %v10197
    %10454 = vst [vmem:[#allocation11 + $0x650] sm:$0xff] %v10198
    %10455 = vst [vmem:[#allocation11 + $0x658] sm:$0xff] %v10199
    %10456 = vst [vmem:[#allocation11 + $0x660] sm:$0xff] %v10200
    %10457 = vst [vmem:[#allocation11 + $0x668] sm:$0xff] %v10201
    %10458 = vst [vmem:[#allocation11 + $0x670] sm:$0xff] %v10202
    %10459 = vst [vmem:[#allocation11 + $0x678] sm:$0xff] %v10203
    %10460 = vst [vmem:[#allocation11 + $0x680] sm:$0xff] %v10204
    %10461 = vst [vmem:[#allocation11 + $0x688] sm:$0xff] %v10205
    %10462 = vst [vmem:[#allocation11 + $0x690] sm:$0xff] %v10206
    %10463 = vst [vmem:[#allocation11 + $0x698] sm:$0xff] %v10207
    %10464 = vst [vmem:[#allocation11 + $0x6a0] sm:$0xff] %v10208
    %10465 = vst [vmem:[#allocation11 + $0x6a8] sm:$0xff] %v10209
    %10466 = vst [vmem:[#allocation11 + $0x6b0] sm:$0xff] %v10210
    %10467 = vst [vmem:[#allocation11 + $0x6b8] sm:$0xff] %v10211
    %10468 = vst [vmem:[#allocation11 + $0x6c0] sm:$0xff] %v10212
    %10469 = vst [vmem:[#allocation11 + $0x6c8] sm:$0xff] %v10213
    %10470 = vst [vmem:[#allocation11 + $0x6d0] sm:$0xff] %v10214
    %10471 = vst [vmem:[#allocation11 + $0x6d8] sm:$0xff] %v10215
    %10472 = vst [vmem:[#allocation11 + $0x6e0] sm:$0xff] %v10216
    %10473 = vst [vmem:[#allocation11 + $0x6e8] sm:$0xff] %v10217
    %10474 = vst [vmem:[#allocation11 + $0x6f0] sm:$0xff] %v10218
    %10475 = vst [vmem:[#allocation11 + $0x6f8] sm:$0xff] %v10219
    %10476 = vst [vmem:[#allocation11 + $0x700] sm:$0xff] %v10220
    %10477 = vst [vmem:[#allocation11 + $0x708] sm:$0xff] %v10221
    %10478 = vst [vmem:[#allocation11 + $0x710] sm:$0xff] %v10222
    %10479 = vst [vmem:[#allocation11 + $0x718] sm:$0xff] %v10223
    %10480 = vst [vmem:[#allocation11 + $0x720] sm:$0xff] %v10224
    %10481 = vst [vmem:[#allocation11 + $0x728] sm:$0xff] %v10225
    %10482 = vst [vmem:[#allocation11 + $0x730] sm:$0xff] %v10226
    %10483 = vst [vmem:[#allocation11 + $0x738] sm:$0xff] %v10227
    %10484 = vst [vmem:[#allocation11 + $0x740] sm:$0xff] %v10228
    %10485 = vst [vmem:[#allocation11 + $0x748] sm:$0xff] %v10229
    %10486 = vst [vmem:[#allocation11 + $0x750] sm:$0xff] %v10230
    %10487 = vst [vmem:[#allocation11 + $0x758] sm:$0xff] %v10231
    %10488 = vst [vmem:[#allocation11 + $0x760] sm:$0xff] %v10232
    %10489 = vst [vmem:[#allocation11 + $0x768] sm:$0xff] %v10233
    %10490 = vst [vmem:[#allocation11 + $0x770] sm:$0xff] %v10234
    %10491 = vst [vmem:[#allocation11 + $0x778] sm:$0xff] %v10235
    %10492 = vst [vmem:[#allocation11 + $0x780] sm:$0xff] %v10236
    %10493 = vst [vmem:[#allocation11 + $0x788] sm:$0xff] %v10237
    %10494 = vst [vmem:[#allocation11 + $0x790] sm:$0xff] %v10238
    %10495 = vst [vmem:[#allocation11 + $0x798] sm:$0xff] %v10239
    %10496 = vst [vmem:[#allocation11 + $0x7a0] sm:$0xff] %v10240
    %10497 = vst [vmem:[#allocation11 + $0x7a8] sm:$0xff] %v10241
    %10498 = vst [vmem:[#allocation11 + $0x7b0] sm:$0xff] %v10242
    %10499 = vst [vmem:[#allocation11 + $0x7b8] sm:$0xff] %v10243
    %10500 = vst [vmem:[#allocation11 + $0x7c0] sm:$0xff] %v10244
    %10501 = vst [vmem:[#allocation11 + $0x7c8] sm:$0xff] %v10245
    %10502 = vst [vmem:[#allocation11 + $0x7d0] sm:$0xff] %v10246
    %10503 = vst [vmem:[#allocation11 + $0x7d8] sm:$0xff] %v10247
    %10504 = vst [vmem:[#allocation11 + $0x7e0] sm:$0xff] %v10248
    %10505 = vst [vmem:[#allocation11 + $0x7e8] sm:$0xff] %v10249
    %10506 = vst [vmem:[#allocation11 + $0x7f0] sm:$0xff] %v10250
    %10507 = vst [vmem:[#allocation11 + $0x7f8] sm:$0xff] %v10251
    // Predicated region
    $region34: #{tpu_custom_call.1} parent=1 // pred_check
      _
    $region35: #{tpu_custom_call.1} parent=1 // pred_check_branch
      %10509 = sbr.rel (0) target = $region37
    $region36: #{tpu_custom_call.1} parent=1 // pred_region
      %s10511 = ssub.s32 32768, 32768
      %10512 = vsyncadd [#allocation4], %s10511
      %s10513 = sshll.u32 [#allocation10], 4
      %s10514 = int_to_ptr.vmem [resolvable:$true] %s10513
      %10519 = dma.vmem_to_hbm [thread:$0]  %s10514, 32768, %s4, [#allocation4], 128, 128, 8
    $region37: #{tpu_custom_call.1} parent=1 // pred_fallthru
      _
    // Predicated region
    $region38: #{tpu_custom_call.1} parent=1 // pred_check
      _
    $region39: #{tpu_custom_call.1} parent=1 // pred_check_branch
      %10521 = sbr.rel (0) target = $region41
    $region40: #{tpu_custom_call.1} parent=1 // pred_region
      %s10523 = ssub.s32 32768, 32768
      %10524 = vsyncadd [#allocation12], %s10523
      %s10525 = sshll.u32 [#allocation11], 4
      %s10526 = int_to_ptr.vmem [resolvable:$true] %s10525
      %10531 = dma.vmem_to_hbm [thread:$0]  %s10526, 32768, %s5, [#allocation12], 128, 128, 8
    $region41: #{tpu_custom_call.1} parent=1 // pred_fallthru
      _
    // Predicated region
    $region42: #{tpu_custom_call.1} parent=1 // pred_check
      _
    $region43: #{tpu_custom_call.1} parent=1 // pred_check_branch
      %10533 = sbr.rel (0) target = $region45
    $region44: #{tpu_custom_call.1} parent=1 // pred_region
      %10534 = dma.done [#allocation4], 32768
    $region45: #{tpu_custom_call.1} parent=1 // pred_fallthru
      _
    // Predicated region
    $region46: #{tpu_custom_call.1} parent=1 // pred_check
      _
    $region47: #{tpu_custom_call.1} parent=1 // pred_check_branch
      %10536 = sbr.rel (0) target = $region49
    $region48: #{tpu_custom_call.1} parent=1 // pred_region
      %10537 = dma.done [#allocation12], 32768
    $region49: #{tpu_custom_call.1} parent=1 // pred_fallthru
      _
    %10538 = vsyncpa [#allocation3], 1
    %10539 = vsyncpa [#allocation6], 1
    %10540 = vsyncpa [#allocation9], 1
    %10541 = vsyncpa [#allocation4], 1
    %10542 = vsyncpa [#allocation12], 1

</llo_original>
